<compile_context>
chip_gen: v7x
topology: tpu7x:2x2x1
jax: 0.10.0
libtpu: 0.0.40
codegen_flags: <defaults>
</compile_context>

<pallas_src>
import functools

import jax
import jax.numpy as jnp
from jax.experimental import pallas as pl
from jax.experimental.pallas import tpu as pltpu

_SQRT_2_OVER_PI = 0.7978845608028654


def _gelu_tanh(z):
    return 0.5 * z * (1.0 + jnp.tanh(_SQRT_2_OVER_PI * (z + 0.044715 * z * z * z)))


def _round_up(n, m):
    return ((n + m - 1) // m) * m


def _pool_bounds(n, i, p):
    """AdaptiveMaxPool cell bounds [start, end) for output index i of p."""
    return (i * n) // p, -(-((i + 1) * n) // p)


# ---------------------------------------------------------------------------
# Kernel 1: conv1 (in-VMEM patch taps, K*K accumulated MXU matmuls) + BN + GELU
# ---------------------------------------------------------------------------
def _make_conv1_bn_gelu_kernel(K, S, th, W1, Cin):
    band_rows = (th - 1) * S + K              # input rows needed for one band

    def kernel(x_ref, w_ref, scale_ref, shift_ref, o_ref, acc_ref):
        r = pl.program_id(1)
        row0 = r * (th * S)
        band = x_ref[0, pl.ds(row0, band_rows), :, :]        # (band_rows, Wxp, Cin)
        idx = 0
        for dy in range(K):                                   # K*K static taps
            for dx in range(K):
                win = band[dy:dy + S * (th - 1) + 1:S,
                           dx:dx + S * (W1 - 1) + 1:S, :]     # (th, W1, Cin)
                part = jnp.dot(win.reshape(th * W1, Cin),
                               w_ref[dy * K + dx],
                               preferred_element_type=jnp.float32)
                if idx == 0:
                    acc_ref[...] = part
                else:
                    acc_ref[...] += part
                idx += 1
        z = acc_ref[...] * scale_ref[...] + shift_ref[...]    # folded bias + BN
        o_ref[...] = _gelu_tanh(z).astype(o_ref.dtype)

    return kernel


# ---------------------------------------------------------------------------
# Kernel 2: depthwise KxK conv + bias + adaptive max pool, pool-row bands
#           streamed from HBM with double-buffered manual DMA.
# ---------------------------------------------------------------------------
def _make_dw_pool_kernel(K, S, H2, W2, p_out):
    def kernel(y_hbm, w_ref, b_ref, o_ref, buf, sem, acc_ref):
        b = pl.program_id(0)

        def band_copy(i, slot):
            r0, r1 = _pool_bounds(H2, i, p_out)
            rows = (r1 - r0 - 1) * S + K
            return pltpu.make_async_copy(
                y_hbm.at[b, pl.ds(r0 * S, rows)],
                buf.at[slot, pl.ds(0, rows)],
                sem.at[slot])

        band_copy(0, 0).start()
        for i in range(p_out):                         # static pool-row loop
            slot = i & 1
            if i + 1 < p_out:                          # prefetch next band
                band_copy(i + 1, 1 - slot).start()
            band_copy(i, slot).wait()

            r0, r1 = _pool_bounds(H2, i, p_out)
            hb = r1 - r0
            idx = 0
            for dy in range(K):                        # depthwise conv: K*K VPU MACs
                for dx in range(K):
                    if S == 1:
                        win = buf[slot, dy:dy + hb, dx:dx + W2, :]
                    else:
                        win = buf[slot, dy:dy + S * (hb - 1) + 1,
                                  dx:dx + S * (W2 - 1) + 1, :][::S, ::S, :]
                    t = dy * K + dx
                    term = win.astype(jnp.float32) * w_ref[t:t + 1, :]
                    if idx == 0:
                        acc_ref[0:hb] = term
                    else:
                        acc_ref[0:hb] += term
                    idx += 1

            cells = []
            for j in range(p_out):                     # fused adaptive max pool
                c0, c1 = _pool_bounds(W2, j, p_out)
                cell = acc_ref[0:hb, c0:c1, :]
                cell = jnp.max(cell, axis=0)
                cell = jnp.max(cell, axis=0, keepdims=True)      # (1, Ep)
                cells.append(cell)
            # per-channel bias commutes with the spatial max
            row = jnp.concatenate(cells, axis=0) + b_ref[...]    # (p_out, Ep)
            o_ref[0, i] = row.astype(o_ref.dtype)

    return kernel


# ---------------------------------------------------------------------------
# Wrapper
# ---------------------------------------------------------------------------
@functools.partial(
    jax.jit,
    static_argnames=("kernel_size", "stride", "padding", "patch_size", "eps"),
)
def conv_embed_forward(x, w1, b1, gamma, beta, run_mean, run_var, w2, b2, *,
                       kernel_size, stride, padding, patch_size, eps=1e-5):
    """ConvEmbed.forward.  x: (B, Cin, H, W) NCHW -> (B, E, p, p) NCHW."""
    K, S, P = kernel_size, stride, padding
    B, Cin, H, W = x.shape
    E = w1.shape[0]
    p_out = patch_size // 7
    Ep = _round_up(E, 128)

    # conv1 output geometry
    H1 = (H + 2 * P - K) // S + 1
    W1 = (W + 2 * P - K) // S + 1

    # Row-band size for kernel 1: ~512 output tokens per grid step, multiple of 8.
    th = min(_round_up(H1, 8), max(8, _round_up(-(-512 // W1), 8)))
    n_bands = -(-H1 // th)
    H1pad = n_bands * th
    tokens = th * W1

    # ---- layout plumbing: NCHW -> NHWC (channels lane-dense), halo pad, bf16 ----
    Hxp = max((H1pad - 1) * S + K, H + 2 * P)
    Wxp = max((W1 - 1) * S + K, W + 2 * P)
    x_nhwc = jnp.transpose(x, (0, 2, 3, 1)).astype(jnp.bfloat16)
    x_p = jnp.pad(x_nhwc, ((0, 0), (P, Hxp - H - P), (P, Wxp - W - P), (0, 0)))

    w1_k = jnp.transpose(w1, (2, 3, 1, 0)).reshape(K * K, Cin, E)    # tap-major
    w1_k = jnp.pad(w1_k, ((0, 0), (0, 0), (0, Ep - E))).astype(jnp.bfloat16)
    bn_scale = gamma / jnp.sqrt(run_var + eps)
    eff_scale = jnp.pad(bn_scale, (0, Ep - E)).reshape(1, Ep).astype(jnp.float32)
    eff_shift = jnp.pad((b1 - run_mean) * bn_scale + beta,
                        (0, Ep - E)).reshape(1, Ep).astype(jnp.float32)

    y1 = pl.pallas_call(
        _make_conv1_bn_gelu_kernel(K, S, th, W1, Cin),
        out_shape=jax.ShapeDtypeStruct((B * n_bands * tokens, Ep), jnp.bfloat16),
        grid=(B, n_bands),
        in_specs=[
            pl.BlockSpec((1, Hxp, Wxp, Cin), lambda b, r: (b, 0, 0, 0)),  # image (resident per b)
            pl.BlockSpec((K * K, Cin, Ep), lambda b, r: (0, 0, 0)),       # weights (grid-invariant)
            pl.BlockSpec((1, Ep), lambda b, r: (0, 0)),                   # folded BN scale
            pl.BlockSpec((1, Ep), lambda b, r: (0, 0)),                   # folded bias + BN shift
        ],
        out_specs=pl.BlockSpec((tokens, Ep), lambda b, r: (b * n_bands + r, 0)),
        scratch_shapes=[pltpu.VMEM((tokens, Ep), jnp.float32)],
        compiler_params=pltpu.CompilerParams(
            dimension_semantics=("parallel", "parallel")),
        cost_estimate=pl.CostEstimate(
            flops=2 * B * n_bands * tokens * K * K * Cin * Ep,
            transcendentals=B * n_bands * tokens * Ep,
            bytes_accessed=2 * (B * Hxp * Wxp * Cin + K * K * Cin * Ep
                                + B * n_bands * tokens * Ep) + 8 * Ep),
    )(x_p, w1_k, eff_scale, eff_shift)

    y1 = y1.reshape(B, H1pad, W1, Ep)[:, :H1]        # drop row padding (bf16 NHWC)

    # ---- depthwise conv + adaptive max pool ----
    H2 = (H1 + 2 * P - K) // S + 1
    W2 = (W1 + 2 * P - K) // S + 1
    Wp = _round_up(W1 + 2 * P, 8)                    # sublane-aligned padded width
    y1p = jnp.pad(y1, ((0, 0), (P, P), (P, Wp - W1 - P), (0, 0)))

    band_bounds = [_pool_bounds(H2, i, p_out) for i in range(p_out)]
    max_hb = max(r1 - r0 for r0, r1 in band_bounds)
    max_rows = max((r1 - r0 - 1) * S + K for r0, r1 in band_bounds)

    w2_k = jnp.transpose(w2[:, 0], (1, 2, 0)).reshape(K * K, E)
    w2_k = jnp.pad(w2_k, ((0, 0), (0, Ep - E))).astype(jnp.float32)
    b2_row = jnp.pad(b2, (0, Ep - E)).reshape(1, Ep).astype(jnp.float32)

    pooled = pl.pallas_call(
        _make_dw_pool_kernel(K, S, H2, W2, p_out),
        out_shape=jax.ShapeDtypeStruct((B, p_out, p_out, Ep), x.dtype),
        grid=(B,),
        in_specs=[
            pl.BlockSpec(memory_space=pl.ANY),            # intermediate stays in HBM
            pl.BlockSpec((K * K, Ep), lambda b: (0, 0)),  # depthwise weights
            pl.BlockSpec((1, Ep), lambda b: (0, 0)),      # depthwise bias
        ],
        out_specs=pl.BlockSpec((1, p_out, p_out, Ep), lambda b: (b, 0, 0, 0)),
        scratch_shapes=[
            pltpu.VMEM((2, max_rows, Wp, Ep), jnp.bfloat16),   # double-buffered band
            pltpu.SemaphoreType.DMA((2,)),
            pltpu.VMEM((max_hb, W2, Ep), jnp.float32),         # f32 conv accumulator
        ],
        compiler_params=pltpu.CompilerParams(dimension_semantics=("parallel",)),
    )(y1p, w2_k, b2_row)

    pooled = pooled[..., :E]                      # drop channel lane-padding
    return jnp.transpose(pooled, (0, 3, 1, 2))    # back to NCHW (B, E, p, p)


# ---------------------------------------------------------------------------
# Pure-JAX reference (PyTorch semantics, eval-mode BN, tanh GELU)
# ---------------------------------------------------------------------------
def _reference_conv_embed(x, w1, b1, gamma, beta, run_mean, run_var, w2, b2, *,
                          kernel_size, stride, padding, patch_size, eps=1e-5):
    K, S, P = kernel_size, stride, padding
    E = w1.shape[0]
    hp = jax.lax.Precision.HIGHEST
    y = jax.lax.conv_general_dilated(
        x, w1, window_strides=(S, S), padding=[(P, P), (P, P)],
        dimension_numbers=("NCHW", "OIHW", "NCHW"), precision=hp)
    y = y + b1[None, :, None, None]
    scale = gamma / jnp.sqrt(run_var + eps)
    y = (y - run_mean[None, :, None, None]) * scale[None, :, None, None] \
        + beta[None, :, None, None]
    y = _gelu_tanh(y)
    y = jax.lax.conv_general_dilated(
        y, w2, window_strides=(S, S), padding=[(P, P), (P, P)],
        dimension_numbers=("NCHW", "OIHW", "NCHW"), feature_group_count=E,
        precision=hp)
    y = y + b2[None, :, None, None]
    p = patch_size // 7
    _, _, H2, W2 = y.shape
    rows = []
    for i in range(p):
        r0, r1 = _pool_bounds(H2, i, p)
        cols = []
        for j in range(p):
            c0, c1 = _pool_bounds(W2, j, p)
            cols.append(jnp.max(y[:, :, r0:r1, c0:c1], axis=(2, 3)))
        rows.append(jnp.stack(cols, axis=-1))
    return jnp.stack(rows, axis=-2)               # (B, E, p, p)


if __name__ == "__main__":
    # Small shapes consistent with ConvEmbed: image 16x16, 4 in-channels,
    # embed_dim 32, 3x3 kernel, stride 1, padding 1, patch_size 14 -> 2x2 pool.
    image_size, patch_size = 16, 14
    kernel_size, stride, padding = 3, 1, 1
    B, Cin, E = 2, 4, 32
    eps = 1e-5

    key = jax.random.PRNGKey(0)
    ks = jax.random.split(key, 9)
    x = jax.random.normal(ks[0], (B, Cin, image_size, image_size), jnp.float32)
    # Deterministic synthetic parameters (no checkpoint loading), PyTorch layouts.
    w1 = jax.random.normal(ks[1], (E, Cin, kernel_size, kernel_size), jnp.float32) * 0.1
    b1 = jax.random.normal(ks[2], (E,), jnp.float32) * 0.1
    gamma = 1.0 + 0.1 * jax.random.normal(ks[3], (E,), jnp.float32)
    beta = 0.1 * jax.random.normal(ks[4], (E,), jnp.float32)
    run_mean = 0.1 * jax.random.normal(ks[5], (E,), jnp.float32)
    run_var = jnp.abs(jax.random.normal(ks[6], (E,), jnp.float32)) * 0.5 + 0.5
    w2 = jax.random.normal(ks[7], (E, 1, kernel_size, kernel_size), jnp.float32) * 0.1
    b2 = jax.random.normal(ks[8], (E,), jnp.float32) * 0.1

    out = conv_embed_forward(
        x, w1, b1, gamma, beta, run_mean, run_var, w2, b2,
        kernel_size=kernel_size, stride=stride, padding=padding,
        patch_size=patch_size, eps=eps)
    out = jax.block_until_ready(out)

    ref = _reference_conv_embed(
        x, w1, b1, gamma, beta, run_mean, run_var, w2, b2,
        kernel_size=kernel_size, stride=stride, padding=padding,
        patch_size=patch_size, eps=eps)

    p_out = patch_size // 7
    assert out.shape == (B, E, p_out, p_out), out.shape
    # bf16 inputs/weights/intermediate (f32 accumulation) -> loosen f32 tolerance.
    assert jnp.allclose(out, ref, atol=2e-2, rtol=2e-2), \
        f"mismatch vs reference, max abs diff = {jnp.max(jnp.abs(out - ref))}"

    print("KERNEL_OK")
</pallas_src>

<mosaic_0001>
module attributes {stable_mosaic.version = 11 : i64} {
  func.func @kernel(%arg0: i32, %arg1: i32, %arg2: memref<1x18x18x4xbf16, #tpu.memory_space<vmem>>, %arg3: memref<9x4x128xbf16, #tpu.memory_space<vmem>>, %arg4: memref<1x128xf32, #tpu.memory_space<vmem>>, %arg5: memref<1x128xf32, #tpu.memory_space<vmem>>, %arg6: memref<256x128xbf16, #tpu.memory_space<vmem>>, %arg7: memref<256x128xf32, #tpu.memory_space<vmem>>) attributes {dimension_semantics = [#tpu.dimension_semantics<parallel>, #tpu.dimension_semantics<parallel>], iteration_bounds = array<i64: 2, 1>, scalar_prefetch = 0 : i64, scratch_operands = 1 : i64, tpu.core_type = #tpu.core_type<tc>, window_params = [{transform_indices = @transform_0, window_bounds = array<i64: 1, 18, 18, 4>}, {pipeline_mode = #tpu.pipeline_mode<synchronous>, transform_indices = @transform_1, window_bounds = array<i64: 9, 4, 128>}, {pipeline_mode = #tpu.pipeline_mode<synchronous>, transform_indices = @transform_2, window_bounds = array<i64: 1, 128>}, {pipeline_mode = #tpu.pipeline_mode<synchronous>, transform_indices = @transform_3, window_bounds = array<i64: 1, 128>}, {transform_indices = @transform_4, window_bounds = array<i64: 256, 128>}]} {
    %c16_i32 = arith.constant 16 : i32
    %0 = arith.muli %arg1, %c16_i32 : i32
    %c0 = arith.constant 0 : index
    %1 = arith.index_cast %0 : i32 to index
    %c0_0 = arith.constant 0 : index
    %c0_1 = arith.constant 0 : index
    %2 = vector.load %arg2[%c0, %1, %c0_0, %c0_1] : memref<1x18x18x4xbf16, #tpu.memory_space<vmem>>, vector<1x18x18x4xbf16>
    %3 = vector.shape_cast %2 : vector<1x18x18x4xbf16> to vector<18x18x4xbf16>
    %4 = vector.extract_strided_slice %3 {offsets = [0, 0, 0], sizes = [16, 16, 4], strides = [1, 1, 1]} : vector<18x18x4xbf16> to vector<16x16x4xbf16>
    %5 = vector.shape_cast %4 : vector<16x16x4xbf16> to vector<256x4xbf16>
    %c0_2 = arith.constant 0 : index
    %c0_3 = arith.constant 0 : index
    %c0_4 = arith.constant 0 : index
    %6 = vector.load %arg3[%c0_2, %c0_3, %c0_4] : memref<9x4x128xbf16, #tpu.memory_space<vmem>>, vector<1x4x128xbf16>
    %7 = vector.shape_cast %6 : vector<1x4x128xbf16> to vector<4x128xbf16>
    %cst = arith.constant dense<0.000000e+00> : vector<256x128xf32>
    %8 = tpu.matmul %5, %7, %cst {dimension_numbers = #tpu.dot_dimension_numbers<[1], [0], [0], [1], [0, 0, 1, 1], [], []>} : vector<256x4xbf16>, vector<4x128xbf16>, vector<256x128xf32> -> vector<256x128xf32>
    %c0_5 = arith.constant 0 : index
    %c0_6 = arith.constant 0 : index
    %9 = vector.load %arg7[%c0_5, %c0_6] : memref<256x128xf32, #tpu.memory_space<vmem>>, vector<256x128xf32>
    tpu.vector_store %arg7[%c0_5, %c0_6], %8 {strides = array<i32>} : memref<256x128xf32, #tpu.memory_space<vmem>>, vector<256x128xf32>,
    %10 = vector.extract_strided_slice %3 {offsets = [0, 1, 0], sizes = [16, 16, 4], strides = [1, 1, 1]} : vector<18x18x4xbf16> to vector<16x16x4xbf16>
    %11 = vector.shape_cast %10 : vector<16x16x4xbf16> to vector<256x4xbf16>
    %c1 = arith.constant 1 : index
    %c0_7 = arith.constant 0 : index
    %c0_8 = arith.constant 0 : index
    %12 = vector.load %arg3[%c1, %c0_7, %c0_8] : memref<9x4x128xbf16, #tpu.memory_space<vmem>>, vector<1x4x128xbf16>
    %13 = vector.shape_cast %12 : vector<1x4x128xbf16> to vector<4x128xbf16>
    %cst_9 = arith.constant dense<0.000000e+00> : vector<256x128xf32>
    %14 = tpu.matmul %11, %13, %cst_9 {dimension_numbers = #tpu.dot_dimension_numbers<[1], [0], [0], [1], [0, 0, 1, 1], [], []>} : vector<256x4xbf16>, vector<4x128xbf16>, vector<256x128xf32> -> vector<256x128xf32>
    %c0_10 = arith.constant 0 : index
    %c0_11 = arith.constant 0 : index
    %15 = vector.load %arg7[%c0_10, %c0_11] : memref<256x128xf32, #tpu.memory_space<vmem>>, vector<256x128xf32>
    %16 = arith.addf %15, %14 : vector<256x128xf32>
    %c0_12 = arith.constant 0 : index
    %c0_13 = arith.constant 0 : index
    %17 = vector.load %arg7[%c0_12, %c0_13] : memref<256x128xf32, #tpu.memory_space<vmem>>, vector<256x128xf32>
    tpu.vector_store %arg7[%c0_12, %c0_13], %16 {strides = array<i32>} : memref<256x128xf32, #tpu.memory_space<vmem>>, vector<256x128xf32>,
    %18 = vector.extract_strided_slice %3 {offsets = [0, 2, 0], sizes = [16, 16, 4], strides = [1, 1, 1]} : vector<18x18x4xbf16> to vector<16x16x4xbf16>
    %19 = vector.shape_cast %18 : vector<16x16x4xbf16> to vector<256x4xbf16>
    %c2 = arith.constant 2 : index
    %c0_14 = arith.constant 0 : index
    %c0_15 = arith.constant 0 : index
    %20 = vector.load %arg3[%c2, %c0_14, %c0_15] : memref<9x4x128xbf16, #tpu.memory_space<vmem>>, vector<1x4x128xbf16>
    %21 = vector.shape_cast %20 : vector<1x4x128xbf16> to vector<4x128xbf16>
    %cst_16 = arith.constant dense<0.000000e+00> : vector<256x128xf32>
    %22 = tpu.matmul %19, %21, %cst_16 {dimension_numbers = #tpu.dot_dimension_numbers<[1], [0], [0], [1], [0, 0, 1, 1], [], []>} : vector<256x4xbf16>, vector<4x128xbf16>, vector<256x128xf32> -> vector<256x128xf32>
    %c0_17 = arith.constant 0 : index
    %c0_18 = arith.constant 0 : index
    %23 = vector.load %arg7[%c0_17, %c0_18] : memref<256x128xf32, #tpu.memory_space<vmem>>, vector<256x128xf32>
    %24 = arith.addf %23, %22 : vector<256x128xf32>
    %c0_19 = arith.constant 0 : index
    %c0_20 = arith.constant 0 : index
    %25 = vector.load %arg7[%c0_19, %c0_20] : memref<256x128xf32, #tpu.memory_space<vmem>>, vector<256x128xf32>
    tpu.vector_store %arg7[%c0_19, %c0_20], %24 {strides = array<i32>} : memref<256x128xf32, #tpu.memory_space<vmem>>, vector<256x128xf32>,
    %26 = vector.extract_strided_slice %3 {offsets = [1, 0, 0], sizes = [16, 16, 4], strides = [1, 1, 1]} : vector<18x18x4xbf16> to vector<16x16x4xbf16>
    %27 = vector.shape_cast %26 : vector<16x16x4xbf16> to vector<256x4xbf16>
    %c3 = arith.constant 3 : index
    %c0_21 = arith.constant 0 : index
    %c0_22 = arith.constant 0 : index
    %28 = vector.load %arg3[%c3, %c0_21, %c0_22] : memref<9x4x128xbf16, #tpu.memory_space<vmem>>, vector<1x4x128xbf16>
    %29 = vector.shape_cast %28 : vector<1x4x128xbf16> to vector<4x128xbf16>
    %cst_23 = arith.constant dense<0.000000e+00> : vector<256x128xf32>
    %30 = tpu.matmul %27, %29, %cst_23 {dimension_numbers = #tpu.dot_dimension_numbers<[1], [0], [0], [1], [0, 0, 1, 1], [], []>} : vector<256x4xbf16>, vector<4x128xbf16>, vector<256x128xf32> -> vector<256x128xf32>
    %c0_24 = arith.constant 0 : index
    %c0_25 = arith.constant 0 : index
    %31 = vector.load %arg7[%c0_24, %c0_25] : memref<256x128xf32, #tpu.memory_space<vmem>>, vector<256x128xf32>
    %32 = arith.addf %31, %30 : vector<256x128xf32>
    %c0_26 = arith.constant 0 : index
    %c0_27 = arith.constant 0 : index
    %33 = vector.load %arg7[%c0_26, %c0_27] : memref<256x128xf32, #tpu.memory_space<vmem>>, vector<256x128xf32>
    tpu.vector_store %arg7[%c0_26, %c0_27], %32 {strides = array<i32>} : memref<256x128xf32, #tpu.memory_space<vmem>>, vector<256x128xf32>,
    %34 = vector.extract_strided_slice %3 {offsets = [1, 1, 0], sizes = [16, 16, 4], strides = [1, 1, 1]} : vector<18x18x4xbf16> to vector<16x16x4xbf16>
    %35 = vector.shape_cast %34 : vector<16x16x4xbf16> to vector<256x4xbf16>
    %c4 = arith.constant 4 : index
    %c0_28 = arith.constant 0 : index
    %c0_29 = arith.constant 0 : index
    %36 = vector.load %arg3[%c4, %c0_28, %c0_29] : memref<9x4x128xbf16, #tpu.memory_space<vmem>>, vector<1x4x128xbf16>
    %37 = vector.shape_cast %36 : vector<1x4x128xbf16> to vector<4x128xbf16>
    %cst_30 = arith.constant dense<0.000000e+00> : vector<256x128xf32>
    %38 = tpu.matmul %35, %37, %cst_30 {dimension_numbers = #tpu.dot_dimension_numbers<[1], [0], [0], [1], [0, 0, 1, 1], [], []>} : vector<256x4xbf16>, vector<4x128xbf16>, vector<256x128xf32> -> vector<256x128xf32>
    %c0_31 = arith.constant 0 : index
    %c0_32 = arith.constant 0 : index
    %39 = vector.load %arg7[%c0_31, %c0_32] : memref<256x128xf32, #tpu.memory_space<vmem>>, vector<256x128xf32>
    %40 = arith.addf %39, %38 : vector<256x128xf32>
    %c0_33 = arith.constant 0 : index
    %c0_34 = arith.constant 0 : index
    %41 = vector.load %arg7[%c0_33, %c0_34] : memref<256x128xf32, #tpu.memory_space<vmem>>, vector<256x128xf32>
    tpu.vector_store %arg7[%c0_33, %c0_34], %40 {strides = array<i32>} : memref<256x128xf32, #tpu.memory_space<vmem>>, vector<256x128xf32>,
    %42 = vector.extract_strided_slice %3 {offsets = [1, 2, 0], sizes = [16, 16, 4], strides = [1, 1, 1]} : vector<18x18x4xbf16> to vector<16x16x4xbf16>
    %43 = vector.shape_cast %42 : vector<16x16x4xbf16> to vector<256x4xbf16>
    %c5 = arith.constant 5 : index
    %c0_35 = arith.constant 0 : index
    %c0_36 = arith.constant 0 : index
    %44 = vector.load %arg3[%c5, %c0_35, %c0_36] : memref<9x4x128xbf16, #tpu.memory_space<vmem>>, vector<1x4x128xbf16>
    %45 = vector.shape_cast %44 : vector<1x4x128xbf16> to vector<4x128xbf16>
    %cst_37 = arith.constant dense<0.000000e+00> : vector<256x128xf32>
    %46 = tpu.matmul %43, %45, %cst_37 {dimension_numbers = #tpu.dot_dimension_numbers<[1], [0], [0], [1], [0, 0, 1, 1], [], []>} : vector<256x4xbf16>, vector<4x128xbf16>, vector<256x128xf32> -> vector<256x128xf32>
    %c0_38 = arith.constant 0 : index
    %c0_39 = arith.constant 0 : index
    %47 = vector.load %arg7[%c0_38, %c0_39] : memref<256x128xf32, #tpu.memory_space<vmem>>, vector<256x128xf32>
    %48 = arith.addf %47, %46 : vector<256x128xf32>
    %c0_40 = arith.constant 0 : index
    %c0_41 = arith.constant 0 : index
    %49 = vector.load %arg7[%c0_40, %c0_41] : memref<256x128xf32, #tpu.memory_space<vmem>>, vector<256x128xf32>
    tpu.vector_store %arg7[%c0_40, %c0_41], %48 {strides = array<i32>} : memref<256x128xf32, #tpu.memory_space<vmem>>, vector<256x128xf32>,
    %50 = vector.extract_strided_slice %3 {offsets = [2, 0, 0], sizes = [16, 16, 4], strides = [1, 1, 1]} : vector<18x18x4xbf16> to vector<16x16x4xbf16>
    %51 = vector.shape_cast %50 : vector<16x16x4xbf16> to vector<256x4xbf16>
    %c6 = arith.constant 6 : index
    %c0_42 = arith.constant 0 : index
    %c0_43 = arith.constant 0 : index
    %52 = vector.load %arg3[%c6, %c0_42, %c0_43] : memref<9x4x128xbf16, #tpu.memory_space<vmem>>, vector<1x4x128xbf16>
    %53 = vector.shape_cast %52 : vector<1x4x128xbf16> to vector<4x128xbf16>
    %cst_44 = arith.constant dense<0.000000e+00> : vector<256x128xf32>
    %54 = tpu.matmul %51, %53, %cst_44 {dimension_numbers = #tpu.dot_dimension_numbers<[1], [0], [0], [1], [0, 0, 1, 1], [], []>} : vector<256x4xbf16>, vector<4x128xbf16>, vector<256x128xf32> -> vector<256x128xf32>
    %c0_45 = arith.constant 0 : index
    %c0_46 = arith.constant 0 : index
    %55 = vector.load %arg7[%c0_45, %c0_46] : memref<256x128xf32, #tpu.memory_space<vmem>>, vector<256x128xf32>
    %56 = arith.addf %55, %54 : vector<256x128xf32>
    %c0_47 = arith.constant 0 : index
    %c0_48 = arith.constant 0 : index
    %57 = vector.load %arg7[%c0_47, %c0_48] : memref<256x128xf32, #tpu.memory_space<vmem>>, vector<256x128xf32>
    tpu.vector_store %arg7[%c0_47, %c0_48], %56 {strides = array<i32>} : memref<256x128xf32, #tpu.memory_space<vmem>>, vector<256x128xf32>,
    %58 = vector.extract_strided_slice %3 {offsets = [2, 1, 0], sizes = [16, 16, 4], strides = [1, 1, 1]} : vector<18x18x4xbf16> to vector<16x16x4xbf16>
    %59 = vector.shape_cast %58 : vector<16x16x4xbf16> to vector<256x4xbf16>
    %c7 = arith.constant 7 : index
    %c0_49 = arith.constant 0 : index
    %c0_50 = arith.constant 0 : index
    %60 = vector.load %arg3[%c7, %c0_49, %c0_50] : memref<9x4x128xbf16, #tpu.memory_space<vmem>>, vector<1x4x128xbf16>
    %61 = vector.shape_cast %60 : vector<1x4x128xbf16> to vector<4x128xbf16>
    %cst_51 = arith.constant dense<0.000000e+00> : vector<256x128xf32>
    %62 = tpu.matmul %59, %61, %cst_51 {dimension_numbers = #tpu.dot_dimension_numbers<[1], [0], [0], [1], [0, 0, 1, 1], [], []>} : vector<256x4xbf16>, vector<4x128xbf16>, vector<256x128xf32> -> vector<256x128xf32>
    %c0_52 = arith.constant 0 : index
    %c0_53 = arith.constant 0 : index
    %63 = vector.load %arg7[%c0_52, %c0_53] : memref<256x128xf32, #tpu.memory_space<vmem>>, vector<256x128xf32>
    %64 = arith.addf %63, %62 : vector<256x128xf32>
    %c0_54 = arith.constant 0 : index
    %c0_55 = arith.constant 0 : index
    %65 = vector.load %arg7[%c0_54, %c0_55] : memref<256x128xf32, #tpu.memory_space<vmem>>, vector<256x128xf32>
    tpu.vector_store %arg7[%c0_54, %c0_55], %64 {strides = array<i32>} : memref<256x128xf32, #tpu.memory_space<vmem>>, vector<256x128xf32>,
    %66 = vector.extract_strided_slice %3 {offsets = [2, 2, 0], sizes = [16, 16, 4], strides = [1, 1, 1]} : vector<18x18x4xbf16> to vector<16x16x4xbf16>
    %67 = vector.shape_cast %66 : vector<16x16x4xbf16> to vector<256x4xbf16>
    %c8 = arith.constant 8 : index
    %c0_56 = arith.constant 0 : index
    %c0_57 = arith.constant 0 : index
    %68 = vector.load %arg3[%c8, %c0_56, %c0_57] : memref<9x4x128xbf16, #tpu.memory_space<vmem>>, vector<1x4x128xbf16>
    %69 = vector.shape_cast %68 : vector<1x4x128xbf16> to vector<4x128xbf16>
    %cst_58 = arith.constant dense<0.000000e+00> : vector<256x128xf32>
    %70 = tpu.matmul %67, %69, %cst_58 {dimension_numbers = #tpu.dot_dimension_numbers<[1], [0], [0], [1], [0, 0, 1, 1], [], []>} : vector<256x4xbf16>, vector<4x128xbf16>, vector<256x128xf32> -> vector<256x128xf32>
    %c0_59 = arith.constant 0 : index
    %c0_60 = arith.constant 0 : index
    %71 = vector.load %arg7[%c0_59, %c0_60] : memref<256x128xf32, #tpu.memory_space<vmem>>, vector<256x128xf32>
    %72 = arith.addf %71, %70 : vector<256x128xf32>
    %c0_61 = arith.constant 0 : index
    %c0_62 = arith.constant 0 : index
    %73 = vector.load %arg7[%c0_61, %c0_62] : memref<256x128xf32, #tpu.memory_space<vmem>>, vector<256x128xf32>
    tpu.vector_store %arg7[%c0_61, %c0_62], %72 {strides = array<i32>} : memref<256x128xf32, #tpu.memory_space<vmem>>, vector<256x128xf32>,
    %c0_63 = arith.constant 0 : index
    %c0_64 = arith.constant 0 : index
    %74 = vector.load %arg7[%c0_63, %c0_64] : memref<256x128xf32, #tpu.memory_space<vmem>>, vector<256x128xf32>
    %c0_65 = arith.constant 0 : index
    %c0_66 = arith.constant 0 : index
    %75 = vector.load %arg4[%c0_65, %c0_66] : memref<1x128xf32, #tpu.memory_space<vmem>>, vector<1x128xf32>
    %76 = vector.broadcast %75 : vector<1x128xf32> to vector<256x128xf32>
    %77 = arith.mulf %74, %76 : vector<256x128xf32>
    %c0_67 = arith.constant 0 : index
    %c0_68 = arith.constant 0 : index
    %78 = vector.load %arg5[%c0_67, %c0_68] : memref<1x128xf32, #tpu.memory_space<vmem>>, vector<1x128xf32>
    %79 = vector.broadcast %78 : vector<1x128xf32> to vector<256x128xf32>
    %80 = arith.addf %77, %79 : vector<256x128xf32>
    %cst_69 = arith.constant 5.000000e-01 : f32
    %81 = vector.broadcast %cst_69 : f32 to vector<256x128xf32>
    %82 = arith.mulf %81, %80 : vector<256x128xf32>
    %cst_70 = arith.constant 4.471500e-02 : f32
    %83 = vector.broadcast %cst_70 : f32 to vector<256x128xf32>
    %84 = arith.mulf %83, %80 : vector<256x128xf32>
    %85 = arith.mulf %84, %80 : vector<256x128xf32>
    %86 = arith.mulf %85, %80 : vector<256x128xf32>
    %87 = arith.addf %80, %86 : vector<256x128xf32>
    %cst_71 = arith.constant 0.797884583 : f32
    %88 = vector.broadcast %cst_71 : f32 to vector<256x128xf32>
    %89 = arith.mulf %88, %87 : vector<256x128xf32>
    %90 = math.tanh %89 : vector<256x128xf32>
    %cst_72 = arith.constant 1.000000e+00 : f32
    %91 = vector.broadcast %cst_72 : f32 to vector<256x128xf32>
    %92 = arith.addf %91, %90 : vector<256x128xf32>
    %93 = arith.mulf %82, %92 : vector<256x128xf32>
    %94 = arith.truncf %93 : vector<256x128xf32> to vector<256x128xbf16>
    %c0_73 = arith.constant 0 : index
    %c0_74 = arith.constant 0 : index
    %95 = vector.load %arg6[%c0_73, %c0_74] : memref<256x128xbf16, #tpu.memory_space<vmem>>, vector<256x128xbf16>
    tpu.vector_store %arg6[%c0_73, %c0_74], %94 {strides = array<i32>} : memref<256x128xbf16, #tpu.memory_space<vmem>>, vector<256x128xbf16>,
    return
  }
  func.func @transform_0(%arg0: i32, %arg1: i32) -> (i32, i32, i32, i32) {
    %c0_i32 = arith.constant 0 : i32
    %c0_i32_0 = arith.constant 0 : i32
    %c0_i32_1 = arith.constant 0 : i32
    %c0_i32_2 = arith.constant 0 : i32
    return %arg0, %c0_i32, %c0_i32_0, %c0_i32_1 : i32, i32, i32, i32
  }
  func.func @transform_1(%arg0: i32, %arg1: i32) -> (i32, i32, i32) {
    %c0_i32 = arith.constant 0 : i32
    %c0_i32_0 = arith.constant 0 : i32
    %c0_i32_1 = arith.constant 0 : i32
    %c0_i32_2 = arith.constant 0 : i32
    return %c0_i32, %c0_i32_0, %c0_i32_1 : i32, i32, i32
  }
  func.func @transform_2(%arg0: i32, %arg1: i32) -> (i32, i32) {
    %c0_i32 = arith.constant 0 : i32
    %c0_i32_0 = arith.constant 0 : i32
    %c0_i32_1 = arith.constant 0 : i32
    return %c0_i32, %c0_i32_0 : i32, i32
  }
  func.func @transform_3(%arg0: i32, %arg1: i32) -> (i32, i32) {
    %c0_i32 = arith.constant 0 : i32
    %c0_i32_0 = arith.constant 0 : i32
    %c0_i32_1 = arith.constant 0 : i32
    return %c0_i32, %c0_i32_0 : i32, i32
  }
  func.func @transform_4(%arg0: i32, %arg1: i32) -> (i32, i32) {
    %c1_i32 = arith.constant 1 : i32
    %0 = arith.muli %arg0, %c1_i32 : i32
    %1 = arith.addi %0, %arg1 : i32
    %c0_i32 = arith.constant 0 : i32
    %c0_i32_0 = arith.constant 0 : i32
    return %1, %c0_i32 : i32, i32
  }
}

module attributes {stable_mosaic.version = 11 : i64} {
  func.func @kernel(%arg0: i32, %arg1: memref<2x18x24x128xbf16, #tpu.memory_space<any>>, %arg2: memref<9x128xf32, #tpu.memory_space<vmem>>, %arg3: memref<1x128xf32, #tpu.memory_space<vmem>>, %arg4: memref<1x2x2x128xf32, #tpu.memory_space<vmem>>, %arg5: memref<2x10x24x128xbf16, #tpu.memory_space<vmem>>, %arg6: memref<2x!tpu.dma_semaphore, #tpu.memory_space<semaphore_mem>>, %arg7: memref<8x16x128xf32, #tpu.memory_space<vmem>>) attributes {dimension_semantics = [#tpu.dimension_semantics<parallel>], iteration_bounds = array<i64: 2>, scalar_prefetch = 0 : i64, scratch_operands = 3 : i64, tpu.core_type = #tpu.core_type<tc>, window_params = [{}, {pipeline_mode = #tpu.pipeline_mode<synchronous>, transform_indices = @transform_1, window_bounds = array<i64: 9, 128>}, {pipeline_mode = #tpu.pipeline_mode<synchronous>, transform_indices = @transform_2, window_bounds = array<i64: 1, 128>}, {transform_indices = @transform_3, window_bounds = array<i64: 1, 2, 2, 128>}]} {
    %c0_i32 = arith.constant 0 : i32
    %c0_i32_0 = arith.constant 0 : i32
    %c0_i32_1 = arith.constant 0 : i32
    %c0_i32_2 = arith.constant 0 : i32
    %c0_i32_3 = arith.constant 0 : i32
    %0 = tpu.memref_slice %arg1[%arg0, %c0_i32_1, %c0_i32_2, %c0_i32_3] : memref<2x18x24x128xbf16, #tpu.memory_space<any>> -> memref<1x10x24x128xbf16, #tpu.memory_space<any>>
    %1 = tpu.memref_squeeze %0 : memref<1x10x24x128xbf16, #tpu.memory_space<any>> -> memref<10x24x128xbf16, #tpu.memory_space<any>>
    %c0_i32_4 = arith.constant 0 : i32
    %c0_i32_5 = arith.constant 0 : i32
    %c0_i32_6 = arith.constant 0 : i32
    %2 = tpu.memref_slice %arg5[%c0_i32, %c0_i32_4, %c0_i32_5, %c0_i32_6] : memref<2x10x24x128xbf16, #tpu.memory_space<vmem>> -> memref<1x10x24x128xbf16, #tpu.memory_space<vmem>>
    %3 = tpu.memref_squeeze %2 : memref<1x10x24x128xbf16, #tpu.memory_space<vmem>> -> memref<10x24x128xbf16, #tpu.memory_space<vmem>>
    %4 = tpu.memref_slice %arg6[%c0_i32_0] : memref<2x!tpu.dma_semaphore, #tpu.memory_space<semaphore_mem>> -> memref<1x!tpu.dma_semaphore, #tpu.memory_space<semaphore_mem>>
    %5 = tpu.memref_squeeze %4 : memref<1x!tpu.dma_semaphore, #tpu.memory_space<semaphore_mem>> -> memref<!tpu.dma_semaphore, #tpu.memory_space<semaphore_mem>>
    tpu.enqueue_dma source(%1 : memref<10x24x128xbf16, #tpu.memory_space<any>>) target(%3 : memref<10x24x128xbf16, #tpu.memory_space<vmem>>) target_semaphore(%5 : memref<!tpu.dma_semaphore, #tpu.memory_space<semaphore_mem>>)
    %c1_i32 = arith.constant 1 : i32
    %c1_i32_7 = arith.constant 1 : i32
    %c8_i32 = arith.constant 8 : i32
    %c0_i32_8 = arith.constant 0 : i32
    %c0_i32_9 = arith.constant 0 : i32
    %6 = tpu.memref_slice %arg1[%arg0, %c8_i32, %c0_i32_8, %c0_i32_9] : memref<2x18x24x128xbf16, #tpu.memory_space<any>> -> memref<1x10x24x128xbf16, #tpu.memory_space<any>>
    %7 = tpu.memref_squeeze %6 : memref<1x10x24x128xbf16, #tpu.memory_space<any>> -> memref<10x24x128xbf16, #tpu.memory_space<any>>
    %c0_i32_10 = arith.constant 0 : i32
    %c0_i32_11 = arith.constant 0 : i32
    %c0_i32_12 = arith.constant 0 : i32
    %8 = tpu.memref_slice %arg5[%c1_i32, %c0_i32_10, %c0_i32_11, %c0_i32_12] : memref<2x10x24x128xbf16, #tpu.memory_space<vmem>> -> memref<1x10x24x128xbf16, #tpu.memory_space<vmem>>
    %9 = tpu.memref_squeeze %8 : memref<1x10x24x128xbf16, #tpu.memory_space<vmem>> -> memref<10x24x128xbf16, #tpu.memory_space<vmem>>
    %10 = tpu.memref_slice %arg6[%c1_i32_7] : memref<2x!tpu.dma_semaphore, #tpu.memory_space<semaphore_mem>> -> memref<1x!tpu.dma_semaphore, #tpu.memory_space<semaphore_mem>>
    %11 = tpu.memref_squeeze %10 : memref<1x!tpu.dma_semaphore, #tpu.memory_space<semaphore_mem>> -> memref<!tpu.dma_semaphore, #tpu.memory_space<semaphore_mem>>
    tpu.enqueue_dma source(%7 : memref<10x24x128xbf16, #tpu.memory_space<any>>) target(%9 : memref<10x24x128xbf16, #tpu.memory_space<vmem>>) target_semaphore(%11 : memref<!tpu.dma_semaphore, #tpu.memory_space<semaphore_mem>>)
    %c0_i32_13 = arith.constant 0 : i32
    %c0_i32_14 = arith.constant 0 : i32
    %c0_i32_15 = arith.constant 0 : i32
    %c0_i32_16 = arith.constant 0 : i32
    %c0_i32_17 = arith.constant 0 : i32
    %12 = tpu.memref_slice %arg1[%arg0, %c0_i32_15, %c0_i32_16, %c0_i32_17] : memref<2x18x24x128xbf16, #tpu.memory_space<any>> -> memref<1x10x24x128xbf16, #tpu.memory_space<any>>
    %13 = tpu.memref_squeeze %12 : memref<1x10x24x128xbf16, #tpu.memory_space<any>> -> memref<10x24x128xbf16, #tpu.memory_space<any>>
    %c0_i32_18 = arith.constant 0 : i32
    %c0_i32_19 = arith.constant 0 : i32
    %c0_i32_20 = arith.constant 0 : i32
    %14 = tpu.memref_slice %arg5[%c0_i32_13, %c0_i32_18, %c0_i32_19, %c0_i32_20] : memref<2x10x24x128xbf16, #tpu.memory_space<vmem>> -> memref<1x10x24x128xbf16, #tpu.memory_space<vmem>>
    %15 = tpu.memref_squeeze %14 : memref<1x10x24x128xbf16, #tpu.memory_space<vmem>> -> memref<10x24x128xbf16, #tpu.memory_space<vmem>>
    %16 = tpu.memref_slice %arg6[%c0_i32_14] : memref<2x!tpu.dma_semaphore, #tpu.memory_space<semaphore_mem>> -> memref<1x!tpu.dma_semaphore, #tpu.memory_space<semaphore_mem>>
    %17 = tpu.memref_squeeze %16 : memref<1x!tpu.dma_semaphore, #tpu.memory_space<semaphore_mem>> -> memref<!tpu.dma_semaphore, #tpu.memory_space<semaphore_mem>>
    tpu.wait_dma2 semaphore(%17 : memref<!tpu.dma_semaphore, #tpu.memory_space<semaphore_mem>>) src(%13 : memref<10x24x128xbf16, #tpu.memory_space<any>>) dst(%15 : memref<10x24x128xbf16, #tpu.memory_space<vmem>>)
    %c0 = arith.constant 0 : index
    %c0_21 = arith.constant 0 : index
    %c0_22 = arith.constant 0 : index
    %c0_23 = arith.constant 0 : index
    %18 = vector.load %arg5[%c0, %c0_21, %c0_22, %c0_23] : memref<2x10x24x128xbf16, #tpu.memory_space<vmem>>, vector<1x8x16x128xbf16>
    %19 = vector.shape_cast %18 : vector<1x8x16x128xbf16> to vector<8x16x128xbf16>
    %20 = arith.extf %19 : vector<8x16x128xbf16> to vector<8x16x128xf32>
    %c0_24 = arith.constant 0 : index
    %c0_25 = arith.constant 0 : index
    %21 = vector.load %arg2[%c0_24, %c0_25] : memref<9x128xf32, #tpu.memory_space<vmem>>, vector<1x128xf32>
    %22 = vector.shape_cast %21 : vector<1x128xf32> to vector<1x1x128xf32>
    %23 = vector.broadcast %22 : vector<1x1x128xf32> to vector<8x16x128xf32>
    %24 = arith.mulf %20, %23 : vector<8x16x128xf32>
    %c0_26 = arith.constant 0 : index
    %c0_27 = arith.constant 0 : index
    %c0_28 = arith.constant 0 : index
    %25 = vector.load %arg7[%c0_26, %c0_27, %c0_28] : memref<8x16x128xf32, #tpu.memory_space<vmem>>, vector<8x16x128xf32>
    tpu.vector_store %arg7[%c0_26, %c0_27, %c0_28], %24 {strides = array<i32>} : memref<8x16x128xf32, #tpu.memory_space<vmem>>, vector<8x16x128xf32>,
    %c0_29 = arith.constant 0 : index
    %c0_30 = arith.constant 0 : index
    %c1 = arith.constant 1 : index
    %c0_31 = arith.constant 0 : index
    %26 = vector.load %arg5[%c0_29, %c0_30, %c1, %c0_31] : memref<2x10x24x128xbf16, #tpu.memory_space<vmem>>, vector<1x8x16x128xbf16>
    %27 = vector.shape_cast %26 : vector<1x8x16x128xbf16> to vector<8x16x128xbf16>
    %28 = arith.extf %27 : vector<8x16x128xbf16> to vector<8x16x128xf32>
    %c1_32 = arith.constant 1 : index
    %c0_33 = arith.constant 0 : index
    %29 = vector.load %arg2[%c1_32, %c0_33] : memref<9x128xf32, #tpu.memory_space<vmem>>, vector<1x128xf32>
    %30 = vector.shape_cast %29 : vector<1x128xf32> to vector<1x1x128xf32>
    %31 = vector.broadcast %30 : vector<1x1x128xf32> to vector<8x16x128xf32>
    %32 = arith.mulf %28, %31 : vector<8x16x128xf32>
    %c0_34 = arith.constant 0 : index
    %c0_35 = arith.constant 0 : index
    %c0_36 = arith.constant 0 : index
    %33 = vector.load %arg7[%c0_34, %c0_35, %c0_36] : memref<8x16x128xf32, #tpu.memory_space<vmem>>, vector<8x16x128xf32>
    %34 = arith.addf %33, %32 : vector<8x16x128xf32>
    %c0_37 = arith.constant 0 : index
    %c0_38 = arith.constant 0 : index
    %c0_39 = arith.constant 0 : index
    %35 = vector.load %arg7[%c0_37, %c0_38, %c0_39] : memref<8x16x128xf32, #tpu.memory_space<vmem>>, vector<8x16x128xf32>
    tpu.vector_store %arg7[%c0_37, %c0_38, %c0_39], %34 {strides = array<i32>} : memref<8x16x128xf32, #tpu.memory_space<vmem>>, vector<8x16x128xf32>,
    %c0_40 = arith.constant 0 : index
    %c0_41 = arith.constant 0 : index
    %c2 = arith.constant 2 : index
    %c0_42 = arith.constant 0 : index
    %36 = vector.load %arg5[%c0_40, %c0_41, %c2, %c0_42] : memref<2x10x24x128xbf16, #tpu.memory_space<vmem>>, vector<1x8x16x128xbf16>
    %37 = vector.shape_cast %36 : vector<1x8x16x128xbf16> to vector<8x16x128xbf16>
    %38 = arith.extf %37 : vector<8x16x128xbf16> to vector<8x16x128xf32>
    %c2_43 = arith.constant 2 : index
    %c0_44 = arith.constant 0 : index
    %39 = vector.load %arg2[%c2_43, %c0_44] : memref<9x128xf32, #tpu.memory_space<vmem>>, vector<1x128xf32>
    %40 = vector.shape_cast %39 : vector<1x128xf32> to vector<1x1x128xf32>
    %41 = vector.broadcast %40 : vector<1x1x128xf32> to vector<8x16x128xf32>
    %42 = arith.mulf %38, %41 : vector<8x16x128xf32>
    %c0_45 = arith.constant 0 : index
    %c0_46 = arith.constant 0 : index
    %c0_47 = arith.constant 0 : index
    %43 = vector.load %arg7[%c0_45, %c0_46, %c0_47] : memref<8x16x128xf32, #tpu.memory_space<vmem>>, vector<8x16x128xf32>
    %44 = arith.addf %43, %42 : vector<8x16x128xf32>
    %c0_48 = arith.constant 0 : index
    %c0_49 = arith.constant 0 : index
    %c0_50 = arith.constant 0 : index
    %45 = vector.load %arg7[%c0_48, %c0_49, %c0_50] : memref<8x16x128xf32, #tpu.memory_space<vmem>>, vector<8x16x128xf32>
    tpu.vector_store %arg7[%c0_48, %c0_49, %c0_50], %44 {strides = array<i32>} : memref<8x16x128xf32, #tpu.memory_space<vmem>>, vector<8x16x128xf32>,
    %c0_51 = arith.constant 0 : index
    %c1_52 = arith.constant 1 : index
    %c0_53 = arith.constant 0 : index
    %c0_54 = arith.constant 0 : index
    %46 = vector.load %arg5[%c0_51, %c1_52, %c0_53, %c0_54] : memref<2x10x24x128xbf16, #tpu.memory_space<vmem>>, vector<1x8x16x128xbf16>
    %47 = vector.shape_cast %46 : vector<1x8x16x128xbf16> to vector<8x16x128xbf16>
    %48 = arith.extf %47 : vector<8x16x128xbf16> to vector<8x16x128xf32>
    %c3 = arith.constant 3 : index
    %c0_55 = arith.constant 0 : index
    %49 = vector.load %arg2[%c3, %c0_55] : memref<9x128xf32, #tpu.memory_space<vmem>>, vector<1x128xf32>
    %50 = vector.shape_cast %49 : vector<1x128xf32> to vector<1x1x128xf32>
    %51 = vector.broadcast %50 : vector<1x1x128xf32> to vector<8x16x128xf32>
    %52 = arith.mulf %48, %51 : vector<8x16x128xf32>
    %c0_56 = arith.constant 0 : index
    %c0_57 = arith.constant 0 : index
    %c0_58 = arith.constant 0 : index
    %53 = vector.load %arg7[%c0_56, %c0_57, %c0_58] : memref<8x16x128xf32, #tpu.memory_space<vmem>>, vector<8x16x128xf32>
    %54 = arith.addf %53, %52 : vector<8x16x128xf32>
    %c0_59 = arith.constant 0 : index
    %c0_60 = arith.constant 0 : index
    %c0_61 = arith.constant 0 : index
    %55 = vector.load %arg7[%c0_59, %c0_60, %c0_61] : memref<8x16x128xf32, #tpu.memory_space<vmem>>, vector<8x16x128xf32>
    tpu.vector_store %arg7[%c0_59, %c0_60, %c0_61], %54 {strides = array<i32>} : memref<8x16x128xf32, #tpu.memory_space<vmem>>, vector<8x16x128xf32>,
    %c0_62 = arith.constant 0 : index
    %c1_63 = arith.constant 1 : index
    %c1_64 = arith.constant 1 : index
    %c0_65 = arith.constant 0 : index
    %56 = vector.load %arg5[%c0_62, %c1_63, %c1_64, %c0_65] : memref<2x10x24x128xbf16, #tpu.memory_space<vmem>>, vector<1x8x16x128xbf16>
    %57 = vector.shape_cast %56 : vector<1x8x16x128xbf16> to vector<8x16x128xbf16>
    %58 = arith.extf %57 : vector<8x16x128xbf16> to vector<8x16x128xf32>
    %c4 = arith.constant 4 : index
    %c0_66 = arith.constant 0 : index
    %59 = vector.load %arg2[%c4, %c0_66] : memref<9x128xf32, #tpu.memory_space<vmem>>, vector<1x128xf32>
    %60 = vector.shape_cast %59 : vector<1x128xf32> to vector<1x1x128xf32>
    %61 = vector.broadcast %60 : vector<1x1x128xf32> to vector<8x16x128xf32>
    %62 = arith.mulf %58, %61 : vector<8x16x128xf32>
    %c0_67 = arith.constant 0 : index
    %c0_68 = arith.constant 0 : index
    %c0_69 = arith.constant 0 : index
    %63 = vector.load %arg7[%c0_67, %c0_68, %c0_69] : memref<8x16x128xf32, #tpu.memory_space<vmem>>, vector<8x16x128xf32>
    %64 = arith.addf %63, %62 : vector<8x16x128xf32>
    %c0_70 = arith.constant 0 : index
    %c0_71 = arith.constant 0 : index
    %c0_72 = arith.constant 0 : index
    %65 = vector.load %arg7[%c0_70, %c0_71, %c0_72] : memref<8x16x128xf32, #tpu.memory_space<vmem>>, vector<8x16x128xf32>
    tpu.vector_store %arg7[%c0_70, %c0_71, %c0_72], %64 {strides = array<i32>} : memref<8x16x128xf32, #tpu.memory_space<vmem>>, vector<8x16x128xf32>,
    %c0_73 = arith.constant 0 : index
    %c1_74 = arith.constant 1 : index
    %c2_75 = arith.constant 2 : index
    %c0_76 = arith.constant 0 : index
    %66 = vector.load %arg5[%c0_73, %c1_74, %c2_75, %c0_76] : memref<2x10x24x128xbf16, #tpu.memory_space<vmem>>, vector<1x8x16x128xbf16>
    %67 = vector.shape_cast %66 : vector<1x8x16x128xbf16> to vector<8x16x128xbf16>
    %68 = arith.extf %67 : vector<8x16x128xbf16> to vector<8x16x128xf32>
    %c5 = arith.constant 5 : index
    %c0_77 = arith.constant 0 : index
    %69 = vector.load %arg2[%c5, %c0_77] : memref<9x128xf32, #tpu.memory_space<vmem>>, vector<1x128xf32>
    %70 = vector.shape_cast %69 : vector<1x128xf32> to vector<1x1x128xf32>
    %71 = vector.broadcast %70 : vector<1x1x128xf32> to vector<8x16x128xf32>
    %72 = arith.mulf %68, %71 : vector<8x16x128xf32>
    %c0_78 = arith.constant 0 : index
    %c0_79 = arith.constant 0 : index
    %c0_80 = arith.constant 0 : index
    %73 = vector.load %arg7[%c0_78, %c0_79, %c0_80] : memref<8x16x128xf32, #tpu.memory_space<vmem>>, vector<8x16x128xf32>
    %74 = arith.addf %73, %72 : vector<8x16x128xf32>
    %c0_81 = arith.constant 0 : index
    %c0_82 = arith.constant 0 : index
    %c0_83 = arith.constant 0 : index
    %75 = vector.load %arg7[%c0_81, %c0_82, %c0_83] : memref<8x16x128xf32, #tpu.memory_space<vmem>>, vector<8x16x128xf32>
    tpu.vector_store %arg7[%c0_81, %c0_82, %c0_83], %74 {strides = array<i32>} : memref<8x16x128xf32, #tpu.memory_space<vmem>>, vector<8x16x128xf32>,
    %c0_84 = arith.constant 0 : index
    %c2_85 = arith.constant 2 : index
    %c0_86 = arith.constant 0 : index
    %c0_87 = arith.constant 0 : index
    %76 = vector.load %arg5[%c0_84, %c2_85, %c0_86, %c0_87] : memref<2x10x24x128xbf16, #tpu.memory_space<vmem>>, vector<1x8x16x128xbf16>
    %77 = vector.shape_cast %76 : vector<1x8x16x128xbf16> to vector<8x16x128xbf16>
    %78 = arith.extf %77 : vector<8x16x128xbf16> to vector<8x16x128xf32>
    %c6 = arith.constant 6 : index
    %c0_88 = arith.constant 0 : index
    %79 = vector.load %arg2[%c6, %c0_88] : memref<9x128xf32, #tpu.memory_space<vmem>>, vector<1x128xf32>
    %80 = vector.shape_cast %79 : vector<1x128xf32> to vector<1x1x128xf32>
    %81 = vector.broadcast %80 : vector<1x1x128xf32> to vector<8x16x128xf32>
    %82 = arith.mulf %78, %81 : vector<8x16x128xf32>
    %c0_89 = arith.constant 0 : index
    %c0_90 = arith.constant 0 : index
    %c0_91 = arith.constant 0 : index
    %83 = vector.load %arg7[%c0_89, %c0_90, %c0_91] : memref<8x16x128xf32, #tpu.memory_space<vmem>>, vector<8x16x128xf32>
    %84 = arith.addf %83, %82 : vector<8x16x128xf32>
    %c0_92 = arith.constant 0 : index
    %c0_93 = arith.constant 0 : index
    %c0_94 = arith.constant 0 : index
    %85 = vector.load %arg7[%c0_92, %c0_93, %c0_94] : memref<8x16x128xf32, #tpu.memory_space<vmem>>, vector<8x16x128xf32>
    tpu.vector_store %arg7[%c0_92, %c0_93, %c0_94], %84 {strides = array<i32>} : memref<8x16x128xf32, #tpu.memory_space<vmem>>, vector<8x16x128xf32>,
    %c0_95 = arith.constant 0 : index
    %c2_96 = arith.constant 2 : index
    %c1_97 = arith.constant 1 : index
    %c0_98 = arith.constant 0 : index
    %86 = vector.load %arg5[%c0_95, %c2_96, %c1_97, %c0_98] : memref<2x10x24x128xbf16, #tpu.memory_space<vmem>>, vector<1x8x16x128xbf16>
    %87 = vector.shape_cast %86 : vector<1x8x16x128xbf16> to vector<8x16x128xbf16>
    %88 = arith.extf %87 : vector<8x16x128xbf16> to vector<8x16x128xf32>
    %c7 = arith.constant 7 : index
    %c0_99 = arith.constant 0 : index
    %89 = vector.load %arg2[%c7, %c0_99] : memref<9x128xf32, #tpu.memory_space<vmem>>, vector<1x128xf32>
    %90 = vector.shape_cast %89 : vector<1x128xf32> to vector<1x1x128xf32>
    %91 = vector.broadcast %90 : vector<1x1x128xf32> to vector<8x16x128xf32>
    %92 = arith.mulf %88, %91 : vector<8x16x128xf32>
    %c0_100 = arith.constant 0 : index
    %c0_101 = arith.constant 0 : index
    %c0_102 = arith.constant 0 : index
    %93 = vector.load %arg7[%c0_100, %c0_101, %c0_102] : memref<8x16x128xf32, #tpu.memory_space<vmem>>, vector<8x16x128xf32>
    %94 = arith.addf %93, %92 : vector<8x16x128xf32>
    %c0_103 = arith.constant 0 : index
    %c0_104 = arith.constant 0 : index
    %c0_105 = arith.constant 0 : index
    %95 = vector.load %arg7[%c0_103, %c0_104, %c0_105] : memref<8x16x128xf32, #tpu.memory_space<vmem>>, vector<8x16x128xf32>
    tpu.vector_store %arg7[%c0_103, %c0_104, %c0_105], %94 {strides = array<i32>} : memref<8x16x128xf32, #tpu.memory_space<vmem>>, vector<8x16x128xf32>,
    %c0_106 = arith.constant 0 : index
    %c2_107 = arith.constant 2 : index
    %c2_108 = arith.constant 2 : index
    %c0_109 = arith.constant 0 : index
    %96 = vector.load %arg5[%c0_106, %c2_107, %c2_108, %c0_109] : memref<2x10x24x128xbf16, #tpu.memory_space<vmem>>, vector<1x8x16x128xbf16>
    %97 = vector.shape_cast %96 : vector<1x8x16x128xbf16> to vector<8x16x128xbf16>
    %98 = arith.extf %97 : vector<8x16x128xbf16> to vector<8x16x128xf32>
    %c8 = arith.constant 8 : index
    %c0_110 = arith.constant 0 : index
    %99 = vector.load %arg2[%c8, %c0_110] : memref<9x128xf32, #tpu.memory_space<vmem>>, vector<1x128xf32>
    %100 = vector.shape_cast %99 : vector<1x128xf32> to vector<1x1x128xf32>
    %101 = vector.broadcast %100 : vector<1x1x128xf32> to vector<8x16x128xf32>
    %102 = arith.mulf %98, %101 : vector<8x16x128xf32>
    %c0_111 = arith.constant 0 : index
    %c0_112 = arith.constant 0 : index
    %c0_113 = arith.constant 0 : index
    %103 = vector.load %arg7[%c0_111, %c0_112, %c0_113] : memref<8x16x128xf32, #tpu.memory_space<vmem>>, vector<8x16x128xf32>
    %104 = arith.addf %103, %102 : vector<8x16x128xf32>
    %c0_114 = arith.constant 0 : index
    %c0_115 = arith.constant 0 : index
    %c0_116 = arith.constant 0 : index
    %105 = vector.load %arg7[%c0_114, %c0_115, %c0_116] : memref<8x16x128xf32, #tpu.memory_space<vmem>>, vector<8x16x128xf32>
    tpu.vector_store %arg7[%c0_114, %c0_115, %c0_116], %104 {strides = array<i32>} : memref<8x16x128xf32, #tpu.memory_space<vmem>>, vector<8x16x128xf32>,
    %c0_117 = arith.constant 0 : index
    %c0_118 = arith.constant 0 : index
    %c0_119 = arith.constant 0 : index
    %106 = vector.load %arg7[%c0_117, %c0_118, %c0_119] : memref<8x16x128xf32, #tpu.memory_space<vmem>>, vector<8x8x128xf32>
    %cst = arith.constant dense<0xFF800000> : vector<8x128xf32>
    %107 = vector.multi_reduction <maximumf>, %106, %cst [0] : vector<8x8x128xf32> to vector<8x128xf32>
    %cst_120 = arith.constant dense<0xFF800000> : vector<128xf32>
    %108 = vector.multi_reduction <maximumf>, %107, %cst_120 [0] : vector<8x128xf32> to vector<128xf32>
    %109 = vector.shape_cast %108 : vector<128xf32> to vector<1x128xf32>
    %c0_121 = arith.constant 0 : index
    %c8_122 = arith.constant 8 : index
    %c0_123 = arith.constant 0 : index
    %110 = vector.load %arg7[%c0_121, %c8_122, %c0_123] : memref<8x16x128xf32, #tpu.memory_space<vmem>>, vector<8x8x128xf32>
    %cst_124 = arith.constant dense<0xFF800000> : vector<8x128xf32>
    %111 = vector.multi_reduction <maximumf>, %110, %cst_124 [0] : vector<8x8x128xf32> to vector<8x128xf32>
    %cst_125 = arith.constant dense<0xFF800000> : vector<128xf32>
    %112 = vector.multi_reduction <maximumf>, %111, %cst_125 [0] : vector<8x128xf32> to vector<128xf32>
    %113 = vector.shape_cast %112 : vector<128xf32> to vector<1x128xf32>
    %114 = tpu.concatenate %109, %113 in 0 : vector<1x128xf32>, vector<1x128xf32> -> vector<2x128xf32>
    %c0_126 = arith.constant 0 : index
    %c0_127 = arith.constant 0 : index
    %115 = vector.load %arg3[%c0_126, %c0_127] : memref<1x128xf32, #tpu.memory_space<vmem>>, vector<1x128xf32>
    %116 = vector.broadcast %115 : vector<1x128xf32> to vector<2x128xf32>
    %117 = arith.addf %114, %116 : vector<2x128xf32>
    %c0_128 = arith.constant 0 : index
    %c0_129 = arith.constant 0 : index
    %c0_130 = arith.constant 0 : index
    %c0_131 = arith.constant 0 : index
    %118 = vector.load %arg4[%c0_128, %c0_129, %c0_130, %c0_131] : memref<1x2x2x128xf32, #tpu.memory_space<vmem>>, vector<1x1x2x128xf32>
    %119 = vector.shape_cast %118 : vector<1x1x2x128xf32> to vector<2x128xf32>
    %120 = vector.shape_cast %117 : vector<2x128xf32> to vector<1x1x2x128xf32>
    tpu.vector_store %arg4[%c0_128, %c0_129, %c0_130, %c0_131], %120 {strides = array<i32>} : memref<1x2x2x128xf32, #tpu.memory_space<vmem>>, vector<1x1x2x128xf32>,
    %c1_i32_132 = arith.constant 1 : i32
    %c1_i32_133 = arith.constant 1 : i32
    %c8_i32_134 = arith.constant 8 : i32
    %c0_i32_135 = arith.constant 0 : i32
    %c0_i32_136 = arith.constant 0 : i32
    %121 = tpu.memref_slice %arg1[%arg0, %c8_i32_134, %c0_i32_135, %c0_i32_136] : memref<2x18x24x128xbf16, #tpu.memory_space<any>> -> memref<1x10x24x128xbf16, #tpu.memory_space<any>>
    %122 = tpu.memref_squeeze %121 : memref<1x10x24x128xbf16, #tpu.memory_space<any>> -> memref<10x24x128xbf16, #tpu.memory_space<any>>
    %c0_i32_137 = arith.constant 0 : i32
    %c0_i32_138 = arith.constant 0 : i32
    %c0_i32_139 = arith.constant 0 : i32
    %123 = tpu.memref_slice %arg5[%c1_i32_132, %c0_i32_137, %c0_i32_138, %c0_i32_139] : memref<2x10x24x128xbf16, #tpu.memory_space<vmem>> -> memref<1x10x24x128xbf16, #tpu.memory_space<vmem>>
    %124 = tpu.memref_squeeze %123 : memref<1x10x24x128xbf16, #tpu.memory_space<vmem>> -> memref<10x24x128xbf16, #tpu.memory_space<vmem>>
    %125 = tpu.memref_slice %arg6[%c1_i32_133] : memref<2x!tpu.dma_semaphore, #tpu.memory_space<semaphore_mem>> -> memref<1x!tpu.dma_semaphore, #tpu.memory_space<semaphore_mem>>
    %126 = tpu.memref_squeeze %125 : memref<1x!tpu.dma_semaphore, #tpu.memory_space<semaphore_mem>> -> memref<!tpu.dma_semaphore, #tpu.memory_space<semaphore_mem>>
    tpu.wait_dma2 semaphore(%126 : memref<!tpu.dma_semaphore, #tpu.memory_space<semaphore_mem>>) src(%122 : memref<10x24x128xbf16, #tpu.memory_space<any>>) dst(%124 : memref<10x24x128xbf16, #tpu.memory_space<vmem>>)
    %c1_140 = arith.constant 1 : index
    %c0_141 = arith.constant 0 : index
    %c0_142 = arith.constant 0 : index
    %c0_143 = arith.constant 0 : index
    %127 = vector.load %arg5[%c1_140, %c0_141, %c0_142, %c0_143] : memref<2x10x24x128xbf16, #tpu.memory_space<vmem>>, vector<1x8x16x128xbf16>
    %128 = vector.shape_cast %127 : vector<1x8x16x128xbf16> to vector<8x16x128xbf16>
    %129 = arith.extf %128 : vector<8x16x128xbf16> to vector<8x16x128xf32>
    %c0_144 = arith.constant 0 : index
    %c0_145 = arith.constant 0 : index
    %130 = vector.load %arg2[%c0_144, %c0_145] : memref<9x128xf32, #tpu.memory_space<vmem>>, vector<1x128xf32>
    %131 = vector.shape_cast %130 : vector<1x128xf32> to vector<1x1x128xf32>
    %132 = vector.broadcast %131 : vector<1x1x128xf32> to vector<8x16x128xf32>
    %133 = arith.mulf %129, %132 : vector<8x16x128xf32>
    %c0_146 = arith.constant 0 : index
    %c0_147 = arith.constant 0 : index
    %c0_148 = arith.constant 0 : index
    %134 = vector.load %arg7[%c0_146, %c0_147, %c0_148] : memref<8x16x128xf32, #tpu.memory_space<vmem>>, vector<8x16x128xf32>
    tpu.vector_store %arg7[%c0_146, %c0_147, %c0_148], %133 {strides = array<i32>} : memref<8x16x128xf32, #tpu.memory_space<vmem>>, vector<8x16x128xf32>,
    %c1_149 = arith.constant 1 : index
    %c0_150 = arith.constant 0 : index
    %c1_151 = arith.constant 1 : index
    %c0_152 = arith.constant 0 : index
    %135 = vector.load %arg5[%c1_149, %c0_150, %c1_151, %c0_152] : memref<2x10x24x128xbf16, #tpu.memory_space<vmem>>, vector<1x8x16x128xbf16>
    %136 = vector.shape_cast %135 : vector<1x8x16x128xbf16> to vector<8x16x128xbf16>
    %137 = arith.extf %136 : vector<8x16x128xbf16> to vector<8x16x128xf32>
    %c1_153 = arith.constant 1 : index
    %c0_154 = arith.constant 0 : index
    %138 = vector.load %arg2[%c1_153, %c0_154] : memref<9x128xf32, #tpu.memory_space<vmem>>, vector<1x128xf32>
    %139 = vector.shape_cast %138 : vector<1x128xf32> to vector<1x1x128xf32>
    %140 = vector.broadcast %139 : vector<1x1x128xf32> to vector<8x16x128xf32>
    %141 = arith.mulf %137, %140 : vector<8x16x128xf32>
    %c0_155 = arith.constant 0 : index
    %c0_156 = arith.constant 0 : index
    %c0_157 = arith.constant 0 : index
    %142 = vector.load %arg7[%c0_155, %c0_156, %c0_157] : memref<8x16x128xf32, #tpu.memory_space<vmem>>, vector<8x16x128xf32>
    %143 = arith.addf %142, %141 : vector<8x16x128xf32>
    %c0_158 = arith.constant 0 : index
    %c0_159 = arith.constant 0 : index
    %c0_160 = arith.constant 0 : index
    %144 = vector.load %arg7[%c0_158, %c0_159, %c0_160] : memref<8x16x128xf32, #tpu.memory_space<vmem>>, vector<8x16x128xf32>
    tpu.vector_store %arg7[%c0_158, %c0_159, %c0_160], %143 {strides = array<i32>} : memref<8x16x128xf32, #tpu.memory_space<vmem>>, vector<8x16x128xf32>,
    %c1_161 = arith.constant 1 : index
    %c0_162 = arith.constant 0 : index
    %c2_163 = arith.constant 2 : index
    %c0_164 = arith.constant 0 : index
    %145 = vector.load %arg5[%c1_161, %c0_162, %c2_163, %c0_164] : memref<2x10x24x128xbf16, #tpu.memory_space<vmem>>, vector<1x8x16x128xbf16>
    %146 = vector.shape_cast %145 : vector<1x8x16x128xbf16> to vector<8x16x128xbf16>
    %147 = arith.extf %146 : vector<8x16x128xbf16> to vector<8x16x128xf32>
    %c2_165 = arith.constant 2 : index
    %c0_166 = arith.constant 0 : index
    %148 = vector.load %arg2[%c2_165, %c0_166] : memref<9x128xf32, #tpu.memory_space<vmem>>, vector<1x128xf32>
    %149 = vector.shape_cast %148 : vector<1x128xf32> to vector<1x1x128xf32>
    %150 = vector.broadcast %149 : vector<1x1x128xf32> to vector<8x16x128xf32>
    %151 = arith.mulf %147, %150 : vector<8x16x128xf32>
    %c0_167 = arith.constant 0 : index
    %c0_168 = arith.constant 0 : index
    %c0_169 = arith.constant 0 : index
    %152 = vector.load %arg7[%c0_167, %c0_168, %c0_169] : memref<8x16x128xf32, #tpu.memory_space<vmem>>, vector<8x16x128xf32>
    %153 = arith.addf %152, %151 : vector<8x16x128xf32>
    %c0_170 = arith.constant 0 : index
    %c0_171 = arith.constant 0 : index
    %c0_172 = arith.constant 0 : index
    %154 = vector.load %arg7[%c0_170, %c0_171, %c0_172] : memref<8x16x128xf32, #tpu.memory_space<vmem>>, vector<8x16x128xf32>
    tpu.vector_store %arg7[%c0_170, %c0_171, %c0_172], %153 {strides = array<i32>} : memref<8x16x128xf32, #tpu.memory_space<vmem>>, vector<8x16x128xf32>,
    %c1_173 = arith.constant 1 : index
    %c1_174 = arith.constant 1 : index
    %c0_175 = arith.constant 0 : index
    %c0_176 = arith.constant 0 : index
    %155 = vector.load %arg5[%c1_173, %c1_174, %c0_175, %c0_176] : memref<2x10x24x128xbf16, #tpu.memory_space<vmem>>, vector<1x8x16x128xbf16>
    %156 = vector.shape_cast %155 : vector<1x8x16x128xbf16> to vector<8x16x128xbf16>
    %157 = arith.extf %156 : vector<8x16x128xbf16> to vector<8x16x128xf32>
    %c3_177 = arith.constant 3 : index
    %c0_178 = arith.constant 0 : index
    %158 = vector.load %arg2[%c3_177, %c0_178] : memref<9x128xf32, #tpu.memory_space<vmem>>, vector<1x128xf32>
    %159 = vector.shape_cast %158 : vector<1x128xf32> to vector<1x1x128xf32>
    %160 = vector.broadcast %159 : vector<1x1x128xf32> to vector<8x16x128xf32>
    %161 = arith.mulf %157, %160 : vector<8x16x128xf32>
    %c0_179 = arith.constant 0 : index
    %c0_180 = arith.constant 0 : index
    %c0_181 = arith.constant 0 : index
    %162 = vector.load %arg7[%c0_179, %c0_180, %c0_181] : memref<8x16x128xf32, #tpu.memory_space<vmem>>, vector<8x16x128xf32>
    %163 = arith.addf %162, %161 : vector<8x16x128xf32>
    %c0_182 = arith.constant 0 : index
    %c0_183 = arith.constant 0 : index
    %c0_184 = arith.constant 0 : index
    %164 = vector.load %arg7[%c0_182, %c0_183, %c0_184] : memref<8x16x128xf32, #tpu.memory_space<vmem>>, vector<8x16x128xf32>
    tpu.vector_store %arg7[%c0_182, %c0_183, %c0_184], %163 {strides = array<i32>} : memref<8x16x128xf32, #tpu.memory_space<vmem>>, vector<8x16x128xf32>,
    %c1_185 = arith.constant 1 : index
    %c1_186 = arith.constant 1 : index
    %c1_187 = arith.constant 1 : index
    %c0_188 = arith.constant 0 : index
    %165 = vector.load %arg5[%c1_185, %c1_186, %c1_187, %c0_188] : memref<2x10x24x128xbf16, #tpu.memory_space<vmem>>, vector<1x8x16x128xbf16>
    %166 = vector.shape_cast %165 : vector<1x8x16x128xbf16> to vector<8x16x128xbf16>
    %167 = arith.extf %166 : vector<8x16x128xbf16> to vector<8x16x128xf32>
    %c4_189 = arith.constant 4 : index
    %c0_190 = arith.constant 0 : index
    %168 = vector.load %arg2[%c4_189, %c0_190] : memref<9x128xf32, #tpu.memory_space<vmem>>, vector<1x128xf32>
    %169 = vector.shape_cast %168 : vector<1x128xf32> to vector<1x1x128xf32>
    %170 = vector.broadcast %169 : vector<1x1x128xf32> to vector<8x16x128xf32>
    %171 = arith.mulf %167, %170 : vector<8x16x128xf32>
    %c0_191 = arith.constant 0 : index
    %c0_192 = arith.constant 0 : index
    %c0_193 = arith.constant 0 : index
    %172 = vector.load %arg7[%c0_191, %c0_192, %c0_193] : memref<8x16x128xf32, #tpu.memory_space<vmem>>, vector<8x16x128xf32>
    %173 = arith.addf %172, %171 : vector<8x16x128xf32>
    %c0_194 = arith.constant 0 : index
    %c0_195 = arith.constant 0 : index
    %c0_196 = arith.constant 0 : index
    %174 = vector.load %arg7[%c0_194, %c0_195, %c0_196] : memref<8x16x128xf32, #tpu.memory_space<vmem>>, vector<8x16x128xf32>
    tpu.vector_store %arg7[%c0_194, %c0_195, %c0_196], %173 {strides = array<i32>} : memref<8x16x128xf32, #tpu.memory_space<vmem>>, vector<8x16x128xf32>,
    %c1_197 = arith.constant 1 : index
    %c1_198 = arith.constant 1 : index
    %c2_199 = arith.constant 2 : index
    %c0_200 = arith.constant 0 : index
    %175 = vector.load %arg5[%c1_197, %c1_198, %c2_199, %c0_200] : memref<2x10x24x128xbf16, #tpu.memory_space<vmem>>, vector<1x8x16x128xbf16>
    %176 = vector.shape_cast %175 : vector<1x8x16x128xbf16> to vector<8x16x128xbf16>
    %177 = arith.extf %176 : vector<8x16x128xbf16> to vector<8x16x128xf32>
    %c5_201 = arith.constant 5 : index
    %c0_202 = arith.constant 0 : index
    %178 = vector.load %arg2[%c5_201, %c0_202] : memref<9x128xf32, #tpu.memory_space<vmem>>, vector<1x128xf32>
    %179 = vector.shape_cast %178 : vector<1x128xf32> to vector<1x1x128xf32>
    %180 = vector.broadcast %179 : vector<1x1x128xf32> to vector<8x16x128xf32>
    %181 = arith.mulf %177, %180 : vector<8x16x128xf32>
    %c0_203 = arith.constant 0 : index
    %c0_204 = arith.constant 0 : index
    %c0_205 = arith.constant 0 : index
    %182 = vector.load %arg7[%c0_203, %c0_204, %c0_205] : memref<8x16x128xf32, #tpu.memory_space<vmem>>, vector<8x16x128xf32>
    %183 = arith.addf %182, %181 : vector<8x16x128xf32>
    %c0_206 = arith.constant 0 : index
    %c0_207 = arith.constant 0 : index
    %c0_208 = arith.constant 0 : index
    %184 = vector.load %arg7[%c0_206, %c0_207, %c0_208] : memref<8x16x128xf32, #tpu.memory_space<vmem>>, vector<8x16x128xf32>
    tpu.vector_store %arg7[%c0_206, %c0_207, %c0_208], %183 {strides = array<i32>} : memref<8x16x128xf32, #tpu.memory_space<vmem>>, vector<8x16x128xf32>,
    %c1_209 = arith.constant 1 : index
    %c2_210 = arith.constant 2 : index
    %c0_211 = arith.constant 0 : index
    %c0_212 = arith.constant 0 : index
    %185 = vector.load %arg5[%c1_209, %c2_210, %c0_211, %c0_212] : memref<2x10x24x128xbf16, #tpu.memory_space<vmem>>, vector<1x8x16x128xbf16>
    %186 = vector.shape_cast %185 : vector<1x8x16x128xbf16> to vector<8x16x128xbf16>
    %187 = arith.extf %186 : vector<8x16x128xbf16> to vector<8x16x128xf32>
    %c6_213 = arith.constant 6 : index
    %c0_214 = arith.constant 0 : index
    %188 = vector.load %arg2[%c6_213, %c0_214] : memref<9x128xf32, #tpu.memory_space<vmem>>, vector<1x128xf32>
    %189 = vector.shape_cast %188 : vector<1x128xf32> to vector<1x1x128xf32>
    %190 = vector.broadcast %189 : vector<1x1x128xf32> to vector<8x16x128xf32>
    %191 = arith.mulf %187, %190 : vector<8x16x128xf32>
    %c0_215 = arith.constant 0 : index
    %c0_216 = arith.constant 0 : index
    %c0_217 = arith.constant 0 : index
    %192 = vector.load %arg7[%c0_215, %c0_216, %c0_217] : memref<8x16x128xf32, #tpu.memory_space<vmem>>, vector<8x16x128xf32>
    %193 = arith.addf %192, %191 : vector<8x16x128xf32>
    %c0_218 = arith.constant 0 : index
    %c0_219 = arith.constant 0 : index
    %c0_220 = arith.constant 0 : index
    %194 = vector.load %arg7[%c0_218, %c0_219, %c0_220] : memref<8x16x128xf32, #tpu.memory_space<vmem>>, vector<8x16x128xf32>
    tpu.vector_store %arg7[%c0_218, %c0_219, %c0_220], %193 {strides = array<i32>} : memref<8x16x128xf32, #tpu.memory_space<vmem>>, vector<8x16x128xf32>,
    %c1_221 = arith.constant 1 : index
    %c2_222 = arith.constant 2 : index
    %c1_223 = arith.constant 1 : index
    %c0_224 = arith.constant 0 : index
    %195 = vector.load %arg5[%c1_221, %c2_222, %c1_223, %c0_224] : memref<2x10x24x128xbf16, #tpu.memory_space<vmem>>, vector<1x8x16x128xbf16>
    %196 = vector.shape_cast %195 : vector<1x8x16x128xbf16> to vector<8x16x128xbf16>
    %197 = arith.extf %196 : vector<8x16x128xbf16> to vector<8x16x128xf32>
    %c7_225 = arith.constant 7 : index
    %c0_226 = arith.constant 0 : index
    %198 = vector.load %arg2[%c7_225, %c0_226] : memref<9x128xf32, #tpu.memory_space<vmem>>, vector<1x128xf32>
    %199 = vector.shape_cast %198 : vector<1x128xf32> to vector<1x1x128xf32>
    %200 = vector.broadcast %199 : vector<1x1x128xf32> to vector<8x16x128xf32>
    %201 = arith.mulf %197, %200 : vector<8x16x128xf32>
    %c0_227 = arith.constant 0 : index
    %c0_228 = arith.constant 0 : index
    %c0_229 = arith.constant 0 : index
    %202 = vector.load %arg7[%c0_227, %c0_228, %c0_229] : memref<8x16x128xf32, #tpu.memory_space<vmem>>, vector<8x16x128xf32>
    %203 = arith.addf %202, %201 : vector<8x16x128xf32>
    %c0_230 = arith.constant 0 : index
    %c0_231 = arith.constant 0 : index
    %c0_232 = arith.constant 0 : index
    %204 = vector.load %arg7[%c0_230, %c0_231, %c0_232] : memref<8x16x128xf32, #tpu.memory_space<vmem>>, vector<8x16x128xf32>
    tpu.vector_store %arg7[%c0_230, %c0_231, %c0_232], %203 {strides = array<i32>} : memref<8x16x128xf32, #tpu.memory_space<vmem>>, vector<8x16x128xf32>,
    %c1_233 = arith.constant 1 : index
    %c2_234 = arith.constant 2 : index
    %c2_235 = arith.constant 2 : index
    %c0_236 = arith.constant 0 : index
    %205 = vector.load %arg5[%c1_233, %c2_234, %c2_235, %c0_236] : memref<2x10x24x128xbf16, #tpu.memory_space<vmem>>, vector<1x8x16x128xbf16>
    %206 = vector.shape_cast %205 : vector<1x8x16x128xbf16> to vector<8x16x128xbf16>
    %207 = arith.extf %206 : vector<8x16x128xbf16> to vector<8x16x128xf32>
    %c8_237 = arith.constant 8 : index
    %c0_238 = arith.constant 0 : index
    %208 = vector.load %arg2[%c8_237, %c0_238] : memref<9x128xf32, #tpu.memory_space<vmem>>, vector<1x128xf32>
    %209 = vector.shape_cast %208 : vector<1x128xf32> to vector<1x1x128xf32>
    %210 = vector.broadcast %209 : vector<1x1x128xf32> to vector<8x16x128xf32>
    %211 = arith.mulf %207, %210 : vector<8x16x128xf32>
    %c0_239 = arith.constant 0 : index
    %c0_240 = arith.constant 0 : index
    %c0_241 = arith.constant 0 : index
    %212 = vector.load %arg7[%c0_239, %c0_240, %c0_241] : memref<8x16x128xf32, #tpu.memory_space<vmem>>, vector<8x16x128xf32>
    %213 = arith.addf %212, %211 : vector<8x16x128xf32>
    %c0_242 = arith.constant 0 : index
    %c0_243 = arith.constant 0 : index
    %c0_244 = arith.constant 0 : index
    %214 = vector.load %arg7[%c0_242, %c0_243, %c0_244] : memref<8x16x128xf32, #tpu.memory_space<vmem>>, vector<8x16x128xf32>
    tpu.vector_store %arg7[%c0_242, %c0_243, %c0_244], %213 {strides = array<i32>} : memref<8x16x128xf32, #tpu.memory_space<vmem>>, vector<8x16x128xf32>,
    %c0_245 = arith.constant 0 : index
    %c0_246 = arith.constant 0 : index
    %c0_247 = arith.constant 0 : index
    %215 = vector.load %arg7[%c0_245, %c0_246, %c0_247] : memref<8x16x128xf32, #tpu.memory_space<vmem>>, vector<8x8x128xf32>
    %cst_248 = arith.constant dense<0xFF800000> : vector<8x128xf32>
    %216 = vector.multi_reduction <maximumf>, %215, %cst_248 [0] : vector<8x8x128xf32> to vector<8x128xf32>
    %cst_249 = arith.constant dense<0xFF800000> : vector<128xf32>
    %217 = vector.multi_reduction <maximumf>, %216, %cst_249 [0] : vector<8x128xf32> to vector<128xf32>
    %218 = vector.shape_cast %217 : vector<128xf32> to vector<1x128xf32>
    %c0_250 = arith.constant 0 : index
    %c8_251 = arith.constant 8 : index
    %c0_252 = arith.constant 0 : index
    %219 = vector.load %arg7[%c0_250, %c8_251, %c0_252] : memref<8x16x128xf32, #tpu.memory_space<vmem>>, vector<8x8x128xf32>
    %cst_253 = arith.constant dense<0xFF800000> : vector<8x128xf32>
    %220 = vector.multi_reduction <maximumf>, %219, %cst_253 [0] : vector<8x8x128xf32> to vector<8x128xf32>
    %cst_254 = arith.constant dense<0xFF800000> : vector<128xf32>
    %221 = vector.multi_reduction <maximumf>, %220, %cst_254 [0] : vector<8x128xf32> to vector<128xf32>
    %222 = vector.shape_cast %221 : vector<128xf32> to vector<1x128xf32>
    %223 = tpu.concatenate %218, %222 in 0 : vector<1x128xf32>, vector<1x128xf32> -> vector<2x128xf32>
    %c0_255 = arith.constant 0 : index
    %c0_256 = arith.constant 0 : index
    %224 = vector.load %arg3[%c0_255, %c0_256] : memref<1x128xf32, #tpu.memory_space<vmem>>, vector<1x128xf32>
    %225 = vector.broadcast %224 : vector<1x128xf32> to vector<2x128xf32>
    %226 = arith.addf %223, %225 : vector<2x128xf32>
    %c0_257 = arith.constant 0 : index
    %c1_258 = arith.constant 1 : index
    %c0_259 = arith.constant 0 : index
    %c0_260 = arith.constant 0 : index
    %227 = vector.load %arg4[%c0_257, %c1_258, %c0_259, %c0_260] : memref<1x2x2x128xf32, #tpu.memory_space<vmem>>, vector<1x1x2x128xf32>
    %228 = vector.shape_cast %227 : vector<1x1x2x128xf32> to vector<2x128xf32>
    %229 = vector.shape_cast %226 : vector<2x128xf32> to vector<1x1x2x128xf32>
    tpu.vector_store %arg4[%c0_257, %c1_258, %c0_259, %c0_260], %229 {strides = array<i32>} : memref<1x2x2x128xf32, #tpu.memory_space<vmem>>, vector<1x1x2x128xf32>,
    return
  }
  func.func @transform_1(%arg0: i32) -> (i32, i32) {
    %c0_i32 = arith.constant 0 : i32
    %c0_i32_0 = arith.constant 0 : i32
    %c0_i32_1 = arith.constant 0 : i32
    return %c0_i32, %c0_i32_0 : i32, i32
  }
  func.func @transform_2(%arg0: i32) -> (i32, i32) {
    %c0_i32 = arith.constant 0 : i32
    %c0_i32_0 = arith.constant 0 : i32
    %c0_i32_1 = arith.constant 0 : i32
    return %c0_i32, %c0_i32_0 : i32, i32
  }
  func.func @transform_3(%arg0: i32) -> (i32, i32, i32, i32) {
    %c0_i32 = arith.constant 0 : i32
    %c0_i32_0 = arith.constant 0 : i32
    %c0_i32_1 = arith.constant 0 : i32
    %c0_i32_2 = arith.constant 0 : i32
    return %arg0, %c0_i32, %c0_i32_0, %c0_i32_1 : i32, i32, i32, i32
  }
}

</mosaic_0001>

<llo_original>
// kernel: conv_embed_forward.3
$region0: #{conv_embed_forward.3}
  #allocation0 [shape = 'u32[]', space=smem, size = 0x4, offset = 0x4, fixed_abs, tag = 'smem constant byte address 0x4 - core index']
  #allocation1 [shape = 'u32[144,128]{1,0:T(1,128)}', space=vmem, size = 0x12000, scoped, tag = 'internal scratch']
  #allocation2 [shape = 'bf16[2,10,24,128]{3,2,1,0:T(8,128)(2,1)}', space=vmem, size = 0x1e000, scoped, tag = 'scratch operand']
  #allocation3 [shape = 's32[2]{0}', space=sflag, size = 0x8, scoped, tag = 'scratch operand']
  #allocation4 [shape = 'f32[8,16,128]{2,1,0:T(8,128)}', space=vmem, size = 0x10000, scoped, tag = 'scratch operand']
  #allocation5 [shape = 's32[]', space=sflag, size = 0x4, offset = 0, fixed_abs, tag = 'sflag constant byte address 0x0 - dummy sync flag']
  #allocation6 [shape = 's32[]', space=sflag, size = 0x4, offset = 0, fixed_abs, tag = 'sflag constant byte address 0x0 - dummy sync flag']
  %s0 = inlined_call_operand.vmem [shape: bf16[2,18,24,128], index: 0, kind: input, shape index: {}]
  %s1 = inlined_call_operand.vmem [shape: f32[9,128], index: 1, kind: input, shape index: {}]
  %s2 = inlined_call_operand.vmem [shape: f32[1,128], index: 2, kind: input, shape index: {}]
  %s3 = inlined_call_operand.vmem [shape: f32[2,2,2,128], index: 3, kind: output, shape index: {}]
  %s4 = sld [smem:[#allocation0]]
  $region109: #{conv_embed_forward.3} parent=0
    _
  %s6 = ssub.s32 1, %s4
  %s7 = scalar_select 0, %s6, %s4
  loop: start=0, step=1, limit=4
  $region2: #{conv_embed_forward.3} parent=0 // loop_pre_header
    _
  $region3: #{conv_embed_forward.3} parent=0 // loop_header
    %s9 = sphi 0, %s13
    %p10 = scmp.ge.s32.totalorder %s9, 4
    %s17 = sphi 0, %s17
    %s19 = sphi 0, %s17
    %s20 = sphi 0, %s19
    %s34 = sphi 0, %s20
    %s38 = sphi 0, %s38
    %s40 = sphi 0, %s38
    %s41 = sphi 0, %s40
    %s55 = sphi 0, %s41
    %s61 = sphi 0, %s63
    %s64 = sphi 0, %s61
    %s65 = sphi 0, %s64
    %s81 = sphi 0, %s65
  $region4: #{conv_embed_forward.3} parent=0 // loop_header_branch
    %12 = sbr.rel (%p10) target = $region8
  $region5: #{conv_embed_forward.3} parent=0 // loop_body
    %s14 = ssub.s32 %s9, 1
    %s15 = ssub.s32 %s9, 2
    %s16 = sadd.s32 %s9, 1
    %s18 = sadd.s32 %s17, 1
    %p21 = scmp.eq.s32.totalorder %s9, 1
    %p22 = scmp.ne.s32.totalorder %s17, %s19
    %p23 = scmp.eq.s32.totalorder %s9, 0
    %p24 = por %p22, %p23
    %p25 = scmp.ne.s32.totalorder %s17, %s19
    %p26 = scmp.eq.s32.totalorder %s14, 1
    %p27 = por %p25, %p26
    %p28 = scmp.ne.s32.totalorder %s19, %s20
    %p29 = scmp.eq.s32.totalorder %s14, 0
    %p30 = por %p28, %p29
    %p31 = scmp.ne.s32.totalorder %s19, %s20
    %p32 = scmp.eq.s32.totalorder %s15, 1
    %p33 = por %p31, %p32
    %p35 = scmp.ne.s32.totalorder %s20, %s34
    %p36 = scmp.eq.s32.totalorder %s15, 0
    %p37 = por %p35, %p36
    %s39 = sadd.s32 %s38, 1
    %p42 = scmp.eq.s32.totalorder %s9, 1
    %p43 = scmp.ne.s32.totalorder %s38, %s40
    %p44 = scmp.eq.s32.totalorder %s9, 0
    %p45 = por %p43, %p44
    %p46 = scmp.ne.s32.totalorder %s38, %s40
    %p47 = scmp.eq.s32.totalorder %s14, 1
    %p48 = por %p46, %p47
    %p49 = scmp.ne.s32.totalorder %s40, %s41
    %p50 = scmp.eq.s32.totalorder %s14, 0
    %p51 = por %p49, %p50
    %p52 = scmp.ne.s32.totalorder %s40, %s41
    %p53 = scmp.eq.s32.totalorder %s15, 1
    %p54 = por %p52, %p53
    %p56 = scmp.ne.s32.totalorder %s41, %s55
    %p57 = scmp.eq.s32.totalorder %s15, 0
    %p58 = por %p56, %p57
    %s59 = ssub.s32 %s9, %s16
    %p60 = scmp.eq.s32.totalorder %s59, 0
    %s62 = sadd.s32 %s61, 1
    %s63 = scalar_select %p60, %s61, %s62
    %p66 = pneg %p60
    %p67 = scmp.eq.s32.totalorder %s9, 1
    %p68 = por %p66, %p67
    %p69 = scmp.ne.s32.totalorder %s61, %s64
    %p70 = scmp.eq.s32.totalorder %s9, 0
    %p71 = por %p69, %p70
    %p72 = scmp.ne.s32.totalorder %s61, %s64
    %p73 = scmp.eq.s32.totalorder %s14, 1
    %p74 = por %p72, %p73
    %p75 = scmp.ne.s32.totalorder %s64, %s65
    %p76 = scmp.eq.s32.totalorder %s14, 0
    %p77 = por %p75, %p76
    %p78 = scmp.ne.s32.totalorder %s64, %s65
    %p79 = scmp.eq.s32.totalorder %s15, 1
    %p80 = por %p78, %p79
    %p82 = scmp.ne.s32.totalorder %s65, %s81
    %p83 = scmp.eq.s32.totalorder %s15, 0
    %p84 = por %p82, %p83
    %p85 = scmp.le.s32.totalorder 1, %s9
    %p86 = scmp.lt.s32.totalorder %s9, 3
    %p87 = pnand %p85, %p86
    %p88 = pneg %p87
    // Predicated region
    $region9: #{conv_embed_forward.3} parent=5 // pred_check
      _
    $region10: #{conv_embed_forward.3} parent=5 // pred_check_branch
      %90 = sbr.rel (%p87) target = $region12
    $region11: #{conv_embed_forward.3} parent=5 // pred_region
      %s91 = ssub.s32 %s9, 1
      // Predicated region
      $region13: #{conv_embed_forward.3} parent=11 // pred_check
        %p92 = pneg %p30
      $region14: #{conv_embed_forward.3} parent=11 // pred_check_branch
        %94 = sbr.rel (%p92) target = $region16
      $region15: #{conv_embed_forward.3} parent=11 // pred_region
        _
      $region16: #{conv_embed_forward.3} parent=11 // pred_fallthru
        _
      // Predicated region
      $region17: #{conv_embed_forward.3} parent=11 // pred_check
        %p95 = pneg %p51
      $region18: #{conv_embed_forward.3} parent=11 // pred_check_branch
        %97 = sbr.rel (%p95) target = $region20
      $region19: #{conv_embed_forward.3} parent=11 // pred_region
        _
      $region20: #{conv_embed_forward.3} parent=11 // pred_fallthru
        _
    $region12: #{conv_embed_forward.3} parent=5 // pred_fallthru
      _
    %p98 = scmp.lt.s32.totalorder %s9, 2
    // Predicated region
    $region21: #{conv_embed_forward.3} parent=5 // pred_check
      %p99 = pneg %p98
    $region22: #{conv_embed_forward.3} parent=5 // pred_check_branch
      %101 = sbr.rel (%p99) target = $region24
    $region23: #{conv_embed_forward.3} parent=5 // pred_region
      _
    $region24: #{conv_embed_forward.3} parent=5 // pred_fallthru
      _
    %p102 = scmp.le.s32.totalorder 1, %s9
    %p103 = scmp.lt.s32.totalorder %s9, 3
    %p104 = pnand %p102, %p103
    %p105 = pneg %p104
    // Predicated region
    $region25: #{conv_embed_forward.3} parent=5 // pred_check
      _
    $region26: #{conv_embed_forward.3} parent=5 // pred_check_branch
      %107 = sbr.rel (%p104) target = $region28
    $region27: #{conv_embed_forward.3} parent=5 // pred_region
      %s108 = ssub.s32 %s9, 1
      %p109 = pneg %p30
      %p110 = pneg %p27
      %p111 = pneg %p51
      %p112 = pneg %p48
      %p113 = pneg %p77
      %p114 = pneg %p74
      %p115 = scmp.lt.s32.totalorder %s14, 1
      %s116 = scalar_select %p115, %s14, 1
      %s117 = smul.addr %s116, 2
      %s118 = smul.addr %s117, 2
      %s119 = scalar_lea.vmem %s3, %s118
      %p120 = scmp.lt.s32.totalorder %s14, 1
      %s121 = scalar_select %p120, %s14, 1
      %s122 = smul.addr %s121, 2
      %s123 = smul.addr %s122, 2
      %s124 = scalar_lea.vmem %s3, %s123
      %s125 = smul.u32 %s14, 54
      %s126 = smul.addr %s125, 4
      %s127 = scalar_lea.vmem %s0, %s126
      %p129 = scmp.lt.u32.totalorder 120, 8
      %p130 = pneg %p129
      // Predicated region
      $region29: #{conv_embed_forward.3} parent=27 // pred_check
        _
      $region30: #{conv_embed_forward.3} parent=27 // pred_check_branch
        %132 = sbr.rel (%p129) target = $region32
      $region31: #{conv_embed_forward.3} parent=27 // pred_region
        %s147 = sand.u32 120, 7
        %p148 = scmp.eq.s32.totalorder %s147, 0
        // Predicated region
        $region44: #{conv_embed_forward.3} parent=31 // pred_check
          %p149 = pneg %p148
        $region45: #{conv_embed_forward.3} parent=31 // pred_check_branch
          %151 = sbr.rel (%p149) target = $region47
        $region46: #{conv_embed_forward.3} parent=31 // pred_region
          loop: start=0, step=1, limit=1
          $region48: #{conv_embed_forward.3} parent=46 // loop_pre_header
            _
          $region49: #{conv_embed_forward.3} parent=46 // loop_header
            %s153 = sphi 0, %s157
            %p154 = scmp.ge.s32.totalorder %s153, 1
            %s158 = sphi %s127, %s127
            %s159 = sphi [#allocation2], [#allocation2]
          $region50: #{conv_embed_forward.3} parent=46 // loop_header_branch
            %156 = sbr.rel (%p154) target = $region54
          $region51: #{conv_embed_forward.3} parent=46 // loop_body
            %v160 = vld [vmem:[%s158] sm:$0xff]
            %161 = vst [vmem:[%s159] sm:$0xff] %v160
            %v162 = vld [vmem:[%s158 + $0x8] sm:$0xff]
            %163 = vst [vmem:[%s159 + $0x8] sm:$0xff] %v162
            %v164 = vld [vmem:[%s158 + $0x10] sm:$0xff]
            %165 = vst [vmem:[%s159 + $0x10] sm:$0xff] %v164
            %v166 = vld [vmem:[%s158 + $0x18] sm:$0xff]
            %167 = vst [vmem:[%s159 + $0x18] sm:$0xff] %v166
            %v168 = vld [vmem:[%s158 + $0x20] sm:$0xff]
            %169 = vst [vmem:[%s159 + $0x20] sm:$0xff] %v168
            %v170 = vld [vmem:[%s158 + $0x28] sm:$0xff]
            %171 = vst [vmem:[%s159 + $0x28] sm:$0xff] %v170
            %v172 = vld [vmem:[%s158 + $0x30] sm:$0xff]
            %173 = vst [vmem:[%s159 + $0x30] sm:$0xff] %v172
            %v174 = vld [vmem:[%s158 + $0x38] sm:$0xff]
            %175 = vst [vmem:[%s159 + $0x38] sm:$0xff] %v174
            %v176 = vld [vmem:[%s158 + $0x40] sm:$0xff]
            %177 = vst [vmem:[%s159 + $0x40] sm:$0xff] %v176
            %v178 = vld [vmem:[%s158 + $0x48] sm:$0xff]
            %179 = vst [vmem:[%s159 + $0x48] sm:$0xff] %v178
            %v180 = vld [vmem:[%s158 + $0x50] sm:$0xff]
            %181 = vst [vmem:[%s159 + $0x50] sm:$0xff] %v180
            %v182 = vld [vmem:[%s158 + $0x58] sm:$0xff]
            %183 = vst [vmem:[%s159 + $0x58] sm:$0xff] %v182
            %v184 = vld [vmem:[%s158 + $0x60] sm:$0xff]
            %185 = vst [vmem:[%s159 + $0x60] sm:$0xff] %v184
            %v186 = vld [vmem:[%s158 + $0x68] sm:$0xff]
            %187 = vst [vmem:[%s159 + $0x68] sm:$0xff] %v186
            %v188 = vld [vmem:[%s158 + $0x70] sm:$0xff]
            %189 = vst [vmem:[%s159 + $0x70] sm:$0xff] %v188
          $region52: #{conv_embed_forward.3} parent=46 // loop_footer
            %s157 = sadd.s32 1, %s153
          $region53: #{conv_embed_forward.3} parent=46 // loop_footer_branch
            %152 = sbr.rel target = $region49
          $region54: #{conv_embed_forward.3} parent=46 // loop_exit
            _
        $region47: #{conv_embed_forward.3} parent=31 // pred_fallthru
          _
        %p190 = pneg %p148
        // Predicated region
        $region55: #{conv_embed_forward.3} parent=31 // pred_check
          _
        $region56: #{conv_embed_forward.3} parent=31 // pred_check_branch
          %192 = sbr.rel (%p148) target = $region58
        $region57: #{conv_embed_forward.3} parent=31 // pred_region
          %s193 = sand.u32 120, 7
        $region58: #{conv_embed_forward.3} parent=31 // pred_fallthru
          _
      $region32: #{conv_embed_forward.3} parent=27 // pred_fallthru
        _
      // Predicated region
      $region33: #{conv_embed_forward.3} parent=27 // pred_check
        %p133 = pneg %p129
      $region34: #{conv_embed_forward.3} parent=27 // pred_check_branch
        %135 = sbr.rel (%p133) target = $region36
      $region35: #{conv_embed_forward.3} parent=27 // pred_region
        %s136 = sshllo.u32 0, 120
        loop: start=0, step=1, limit=1
        $region37: #{conv_embed_forward.3} parent=35 // loop_pre_header
          _
        $region38: #{conv_embed_forward.3} parent=35 // loop_header
          %s138 = sphi 0, %s142
          %p139 = scmp.ge.s32.totalorder %s138, 1
          %s143 = sphi %s127, %s127
          %s144 = sphi [#allocation2], [#allocation2]
        $region39: #{conv_embed_forward.3} parent=35 // loop_header_branch
          %141 = sbr.rel (%p139) target = $region43
        $region40: #{conv_embed_forward.3} parent=35 // loop_body
          %v145 = vld [vmem:[%s143] sm:%s136]
          %146 = vst [vmem:[%s144] sm:%s136] %v145
        $region41: #{conv_embed_forward.3} parent=35 // loop_footer
          %s142 = sadd.s32 1, %s138
        $region42: #{conv_embed_forward.3} parent=35 // loop_footer_branch
          %137 = sbr.rel target = $region38
        $region43: #{conv_embed_forward.3} parent=35 // loop_exit
          _
      $region36: #{conv_embed_forward.3} parent=27 // pred_fallthru
        _
      // Predicated region
      $region59: #{conv_embed_forward.3} parent=27 // pred_check
        _
      $region60: #{conv_embed_forward.3} parent=27 // pred_check_branch
        %196 = sbr.rel (0) target = $region62
      $region61: #{conv_embed_forward.3} parent=27 // pred_region
        %197 = vsyncadd [#allocation3], 1920
      $region62: #{conv_embed_forward.3} parent=27 // pred_fallthru
        _
      %s198 = sadd.s32 24, %s125
      %s199 = smul.addr %s198, 4
      %s200 = scalar_lea.vmem %s0, %s199
      %s201 = scalar_lea.vmem [#allocation2], 120
      %s202 = scalar_lea.sflag [#allocation3], 1
      %p204 = scmp.lt.u32.totalorder 120, 8
      %p205 = pneg %p204
      // Predicated region
      $region63: #{conv_embed_forward.3} parent=27 // pred_check
        _
      $region64: #{conv_embed_forward.3} parent=27 // pred_check_branch
        %207 = sbr.rel (%p204) target = $region66
      $region65: #{conv_embed_forward.3} parent=27 // pred_region
        %s222 = sand.u32 120, 7
        %p223 = scmp.eq.s32.totalorder %s222, 0
        // Predicated region
        $region78: #{conv_embed_forward.3} parent=65 // pred_check
          %p224 = pneg %p223
        $region79: #{conv_embed_forward.3} parent=65 // pred_check_branch
          %226 = sbr.rel (%p224) target = $region81
        $region80: #{conv_embed_forward.3} parent=65 // pred_region
          loop: start=0, step=1, limit=1
          $region82: #{conv_embed_forward.3} parent=80 // loop_pre_header
            _
          $region83: #{conv_embed_forward.3} parent=80 // loop_header
            %s228 = sphi 0, %s232
            %p229 = scmp.ge.s32.totalorder %s228, 1
            %s233 = sphi %s200, %s200
            %s234 = sphi %s201, %s201
          $region84: #{conv_embed_forward.3} parent=80 // loop_header_branch
            %231 = sbr.rel (%p229) target = $region88
          $region85: #{conv_embed_forward.3} parent=80 // loop_body
            %v235 = vld [vmem:[%s233] sm:$0xff]
            %236 = vst [vmem:[%s234] sm:$0xff] %v235
            %v237 = vld [vmem:[%s233 + $0x8] sm:$0xff]
            %238 = vst [vmem:[%s234 + $0x8] sm:$0xff] %v237
            %v239 = vld [vmem:[%s233 + $0x10] sm:$0xff]
            %240 = vst [vmem:[%s234 + $0x10] sm:$0xff] %v239
            %v241 = vld [vmem:[%s233 + $0x18] sm:$0xff]
            %242 = vst [vmem:[%s234 + $0x18] sm:$0xff] %v241
            %v243 = vld [vmem:[%s233 + $0x20] sm:$0xff]
            %244 = vst [vmem:[%s234 + $0x20] sm:$0xff] %v243
            %v245 = vld [vmem:[%s233 + $0x28] sm:$0xff]
            %246 = vst [vmem:[%s234 + $0x28] sm:$0xff] %v245
            %v247 = vld [vmem:[%s233 + $0x30] sm:$0xff]
            %248 = vst [vmem:[%s234 + $0x30] sm:$0xff] %v247
            %v249 = vld [vmem:[%s233 + $0x38] sm:$0xff]
            %250 = vst [vmem:[%s234 + $0x38] sm:$0xff] %v249
            %v251 = vld [vmem:[%s233 + $0x40] sm:$0xff]
            %252 = vst [vmem:[%s234 + $0x40] sm:$0xff] %v251
            %v253 = vld [vmem:[%s233 + $0x48] sm:$0xff]
            %254 = vst [vmem:[%s234 + $0x48] sm:$0xff] %v253
            %v255 = vld [vmem:[%s233 + $0x50] sm:$0xff]
            %256 = vst [vmem:[%s234 + $0x50] sm:$0xff] %v255
            %v257 = vld [vmem:[%s233 + $0x58] sm:$0xff]
            %258 = vst [vmem:[%s234 + $0x58] sm:$0xff] %v257
            %v259 = vld [vmem:[%s233 + $0x60] sm:$0xff]
            %260 = vst [vmem:[%s234 + $0x60] sm:$0xff] %v259
            %v261 = vld [vmem:[%s233 + $0x68] sm:$0xff]
            %262 = vst [vmem:[%s234 + $0x68] sm:$0xff] %v261
            %v263 = vld [vmem:[%s233 + $0x70] sm:$0xff]
            %264 = vst [vmem:[%s234 + $0x70] sm:$0xff] %v263
          $region86: #{conv_embed_forward.3} parent=80 // loop_footer
            %s232 = sadd.s32 1, %s228
          $region87: #{conv_embed_forward.3} parent=80 // loop_footer_branch
            %227 = sbr.rel target = $region83
          $region88: #{conv_embed_forward.3} parent=80 // loop_exit
            _
        $region81: #{conv_embed_forward.3} parent=65 // pred_fallthru
          _
        %p265 = pneg %p223
        // Predicated region
        $region89: #{conv_embed_forward.3} parent=65 // pred_check
          _
        $region90: #{conv_embed_forward.3} parent=65 // pred_check_branch
          %267 = sbr.rel (%p223) target = $region92
        $region91: #{conv_embed_forward.3} parent=65 // pred_region
          %s268 = sand.u32 120, 7
        $region92: #{conv_embed_forward.3} parent=65 // pred_fallthru
          _
      $region66: #{conv_embed_forward.3} parent=27 // pred_fallthru
        _
      // Predicated region
      $region67: #{conv_embed_forward.3} parent=27 // pred_check
        %p208 = pneg %p204
      $region68: #{conv_embed_forward.3} parent=27 // pred_check_branch
        %210 = sbr.rel (%p208) target = $region70
      $region69: #{conv_embed_forward.3} parent=27 // pred_region
        %s211 = sshllo.u32 0, 120
        loop: start=0, step=1, limit=1
        $region71: #{conv_embed_forward.3} parent=69 // loop_pre_header
          _
        $region72: #{conv_embed_forward.3} parent=69 // loop_header
          %s213 = sphi 0, %s217
          %p214 = scmp.ge.s32.totalorder %s213, 1
          %s218 = sphi %s200, %s200
          %s219 = sphi %s201, %s201
        $region73: #{conv_embed_forward.3} parent=69 // loop_header_branch
          %216 = sbr.rel (%p214) target = $region77
        $region74: #{conv_embed_forward.3} parent=69 // loop_body
          %v220 = vld [vmem:[%s218] sm:%s211]
          %221 = vst [vmem:[%s219] sm:%s211] %v220
        $region75: #{conv_embed_forward.3} parent=69 // loop_footer
          %s217 = sadd.s32 1, %s213
        $region76: #{conv_embed_forward.3} parent=69 // loop_footer_branch
          %212 = sbr.rel target = $region72
        $region77: #{conv_embed_forward.3} parent=69 // loop_exit
          _
      $region70: #{conv_embed_forward.3} parent=27 // pred_fallthru
        _
      // Predicated region
      $region93: #{conv_embed_forward.3} parent=27 // pred_check
        _
      $region94: #{conv_embed_forward.3} parent=27 // pred_check_branch
        %271 = sbr.rel (0) target = $region96
      $region95: #{conv_embed_forward.3} parent=27 // pred_region
        %272 = vsyncadd %s202, 1920
      $region96: #{conv_embed_forward.3} parent=27 // pred_fallthru
        _
      %s273 = smul.u32 4, 10
      %s274 = smul.u32 %s273, 3
      %s275 = smul.u32 %s274, 1
      %s276 = sshll.u32 %s275, 4
      %277 = dma.done [#allocation3], %s276
      %v278 = vld [vmem:[#allocation2] sm:$0xf]
      %v279 = vld [vmem:[#allocation2 + $0x4] sm:$0xf]
      %v280 = vld [vmem:[#allocation2 + $0xc] sm:$0xf]
      %v281 = vld [vmem:[#allocation2 + $0x10] sm:$0xf]
      %v282 = vld [vmem:[#allocation2 + $0x18] sm:$0xf]
      %v283 = vld [vmem:[#allocation2 + $0x1c] sm:$0xf]
      %v284 = vld [vmem:[#allocation2 + $0x24] sm:$0xf]
      %v285 = vld [vmem:[#allocation2 + $0x28] sm:$0xf]
      %v286 = vld [vmem:[#allocation2 + $0x30] sm:$0xf]
      %v287 = vld [vmem:[#allocation2 + $0x34] sm:$0xf]
      %v288 = vld [vmem:[#allocation2 + $0x3c] sm:$0xf]
      %v289 = vld [vmem:[#allocation2 + $0x40] sm:$0xf]
      %v290 = vld [vmem:[#allocation2 + $0x48] sm:$0xf]
      %v291 = vld [vmem:[#allocation2 + $0x4c] sm:$0xf]
      %v292 = vld [vmem:[#allocation2 + $0x54] sm:$0xf]
      %v293 = vld [vmem:[#allocation2 + $0x58] sm:$0xf]
      %v294 = vunpack.c.l.bf16 %v278
      %v295 = vunpack.c.l.bf16 %v279
      %v296 = vunpack.c.l.bf16 %v280
      %v297 = vunpack.c.l.bf16 %v281
      %v298 = vunpack.c.l.bf16 %v282
      %v299 = vunpack.c.l.bf16 %v283
      %v300 = vunpack.c.l.bf16 %v284
      %v301 = vunpack.c.l.bf16 %v285
      %v302 = vunpack.c.l.bf16 %v286
      %v303 = vunpack.c.l.bf16 %v287
      %v304 = vunpack.c.l.bf16 %v288
      %v305 = vunpack.c.l.bf16 %v289
      %v306 = vunpack.c.l.bf16 %v290
      %v307 = vunpack.c.l.bf16 %v291
      %v308 = vunpack.c.l.bf16 %v292
      %v309 = vunpack.c.l.bf16 %v293
      %v310 = vld [vmem:[%s1] sm:$0x1]
      %v311 = vlaneseq
      %v312 = vshrl.u32 %v311, 7
      %v313 = vsub.s32 0, %v312
      %v314 = vrot.slane %v310, %v313
      %v315 = vmul.f32 %v294, %v314
      %v316 = vmul.f32 %v295, %v314
      %v317 = vmul.f32 %v296, %v314
      %v318 = vmul.f32 %v297, %v314
      %v319 = vmul.f32 %v298, %v314
      %v320 = vmul.f32 %v299, %v314
      %v321 = vmul.f32 %v300, %v314
      %v322 = vmul.f32 %v301, %v314
      %v323 = vmul.f32 %v302, %v314
      %v324 = vmul.f32 %v303, %v314
      %v325 = vmul.f32 %v304, %v314
      %v326 = vmul.f32 %v305, %v314
      %v327 = vmul.f32 %v306, %v314
      %v328 = vmul.f32 %v307, %v314
      %v329 = vmul.f32 %v308, %v314
      %v330 = vmul.f32 %v309, %v314
      %331 = vst [vmem:[#allocation4] sm:$0xff] %v315
      %332 = vst [vmem:[#allocation4 + $0x8] sm:$0xff] %v316
      %333 = vst [vmem:[#allocation4 + $0x10] sm:$0xff] %v317
      %334 = vst [vmem:[#allocation4 + $0x18] sm:$0xff] %v318
      %335 = vst [vmem:[#allocation4 + $0x20] sm:$0xff] %v319
      %336 = vst [vmem:[#allocation4 + $0x28] sm:$0xff] %v320
      %337 = vst [vmem:[#allocation4 + $0x30] sm:$0xff] %v321
      %338 = vst [vmem:[#allocation4 + $0x38] sm:$0xff] %v322
      %339 = vst [vmem:[#allocation4 + $0x40] sm:$0xff] %v323
      %340 = vst [vmem:[#allocation4 + $0x48] sm:$0xff] %v324
      %341 = vst [vmem:[#allocation4 + $0x50] sm:$0xff] %v325
      %342 = vst [vmem:[#allocation4 + $0x58] sm:$0xff] %v326
      %343 = vst [vmem:[#allocation4 + $0x60] sm:$0xff] %v327
      %344 = vst [vmem:[#allocation4 + $0x68] sm:$0xff] %v328
      %345 = vst [vmem:[#allocation4 + $0x70] sm:$0xff] %v329
      %346 = vst [vmem:[#allocation4 + $0x78] sm:$0xff] %v330
      %v347 = vld [vmem:[#allocation2] sm:$0xf]
      %v348 = vld [vmem:[#allocation2 + $0x4] sm:$0xf]
      %v349 = vld [vmem:[#allocation2 + $0x8] sm:$0x1]
      %v350 = vld [vmem:[#allocation2 + $0xc] sm:$0xf]
      %v351 = vld [vmem:[#allocation2 + $0x10] sm:$0xf]
      %v352 = vld [vmem:[#allocation2 + $0x14] sm:$0x1]
      %v353 = vld [vmem:[#allocation2 + $0x18] sm:$0xf]
      %v354 = vld [vmem:[#allocation2 + $0x1c] sm:$0xf]
      %v355 = vld [vmem:[#allocation2 + $0x20] sm:$0x1]
      %v356 = vld [vmem:[#allocation2 + $0x24] sm:$0xf]
      %v357 = vld [vmem:[#allocation2 + $0x28] sm:$0xf]
      %v358 = vld [vmem:[#allocation2 + $0x2c] sm:$0x1]
      %v359 = vld [vmem:[#allocation2 + $0x30] sm:$0xf]
      %v360 = vld [vmem:[#allocation2 + $0x34] sm:$0xf]
      %v361 = vld [vmem:[#allocation2 + $0x38] sm:$0x1]
      %v362 = vld [vmem:[#allocation2 + $0x3c] sm:$0xf]
      %v363 = vld [vmem:[#allocation2 + $0x40] sm:$0xf]
      %v364 = vld [vmem:[#allocation2 + $0x44] sm:$0x1]
      %v365 = vld [vmem:[#allocation2 + $0x48] sm:$0xf]
      %v366 = vld [vmem:[#allocation2 + $0x4c] sm:$0xf]
      %v367 = vld [vmem:[#allocation2 + $0x50] sm:$0x1]
      %v368 = vld [vmem:[#allocation2 + $0x54] sm:$0xf]
      %v369 = vld [vmem:[#allocation2 + $0x58] sm:$0xf]
      %v370 = vld [vmem:[#allocation2 + $0x5c] sm:$0x1]
      %v371 = vunpack.c.l.bf16 %v347
      %v372 = vunpack.c.l.bf16 %v348
      %v373 = vunpack.c.l.bf16 %v349
      %v374 = vunpack.c.l.bf16 %v350
      %v375 = vunpack.c.l.bf16 %v351
      %v376 = vunpack.c.l.bf16 %v352
      %v377 = vunpack.c.l.bf16 %v353
      %v378 = vunpack.c.l.bf16 %v354
      %v379 = vunpack.c.l.bf16 %v355
      %v380 = vunpack.c.l.bf16 %v356
      %v381 = vunpack.c.l.bf16 %v357
      %v382 = vunpack.c.l.bf16 %v358
      %v383 = vunpack.c.l.bf16 %v359
      %v384 = vunpack.c.l.bf16 %v360
      %v385 = vunpack.c.l.bf16 %v361
      %v386 = vunpack.c.l.bf16 %v362
      %v387 = vunpack.c.l.bf16 %v363
      %v388 = vunpack.c.l.bf16 %v364
      %v389 = vunpack.c.l.bf16 %v365
      %v390 = vunpack.c.l.bf16 %v366
      %v391 = vunpack.c.l.bf16 %v367
      %v392 = vunpack.c.l.bf16 %v368
      %v393 = vunpack.c.l.bf16 %v369
      %v394 = vunpack.c.l.bf16 %v370
      %v395 = vld [vmem:[%s1 + $0x1] sm:$0x1]
      %v396 = vlaneseq
      %v397 = vshrl.u32 %v396, 7
      %v398 = vsub.s32 0, %v397
      %v399 = vrot.slane %v395, %v398
      %v400 = vmul.f32 %v371, %v399
      %v401 = vmul.f32 %v372, %v399
      %v402 = vmul.f32 %v373, %v399
      %v403 = vmul.f32 %v374, %v399
      %v404 = vmul.f32 %v375, %v399
      %v405 = vmul.f32 %v376, %v399
      %v406 = vmul.f32 %v377, %v399
      %v407 = vmul.f32 %v378, %v399
      %v408 = vmul.f32 %v379, %v399
      %v409 = vmul.f32 %v380, %v399
      %v410 = vmul.f32 %v381, %v399
      %v411 = vmul.f32 %v382, %v399
      %v412 = vmul.f32 %v383, %v399
      %v413 = vmul.f32 %v384, %v399
      %v414 = vmul.f32 %v385, %v399
      %v415 = vmul.f32 %v386, %v399
      %v416 = vmul.f32 %v387, %v399
      %v417 = vmul.f32 %v388, %v399
      %v418 = vmul.f32 %v389, %v399
      %v419 = vmul.f32 %v390, %v399
      %v420 = vmul.f32 %v391, %v399
      %v421 = vmul.f32 %v392, %v399
      %v422 = vmul.f32 %v393, %v399
      %v423 = vmul.f32 %v394, %v399
      %v424 = vld [vmem:[#allocation4] sm:$0xff]
      %v425 = vld [vmem:[#allocation4 + $0x8] sm:$0xff]
      %v426 = vld [vmem:[#allocation4 + $0x10] sm:$0xff]
      %v427 = vld [vmem:[#allocation4 + $0x18] sm:$0xff]
      %v428 = vld [vmem:[#allocation4 + $0x20] sm:$0xff]
      %v429 = vld [vmem:[#allocation4 + $0x28] sm:$0xff]
      %v430 = vld [vmem:[#allocation4 + $0x30] sm:$0xff]
      %v431 = vld [vmem:[#allocation4 + $0x38] sm:$0xff]
      %v432 = vld [vmem:[#allocation4 + $0x40] sm:$0xff]
      %v433 = vld [vmem:[#allocation4 + $0x48] sm:$0xff]
      %v434 = vld [vmem:[#allocation4 + $0x50] sm:$0xff]
      %v435 = vld [vmem:[#allocation4 + $0x58] sm:$0xff]
      %v436 = vld [vmem:[#allocation4 + $0x60] sm:$0xff]
      %v437 = vld [vmem:[#allocation4 + $0x68] sm:$0xff]
      %v438 = vld [vmem:[#allocation4 + $0x70] sm:$0xff]
      %v439 = vld [vmem:[#allocation4 + $0x78] sm:$0xff]
      %vm464 = vcmask 1046528
      %v465 = vrot.slane %v400, 1
      %v466 = vrot.slane %v401, 1
      %v467 = vsel %vm464, %v465, %v466
      %v468 = vrot.slane %v402, 1
      %v469 = vsel %vm464, %v466, %v468
      %v470 = vrot.slane %v403, 1
      %v471 = vrot.slane %v404, 1
      %v472 = vsel %vm464, %v470, %v471
      %v473 = vrot.slane %v405, 1
      %v474 = vsel %vm464, %v471, %v473
      %v475 = vrot.slane %v406, 1
      %v476 = vrot.slane %v407, 1
      %v477 = vsel %vm464, %v475, %v476
      %v478 = vrot.slane %v408, 1
      %v479 = vsel %vm464, %v476, %v478
      %v480 = vrot.slane %v409, 1
      %v481 = vrot.slane %v410, 1
      %v482 = vsel %vm464, %v480, %v481
      %v483 = vrot.slane %v411, 1
      %v484 = vsel %vm464, %v481, %v483
      %v485 = vrot.slane %v412, 1
      %v486 = vrot.slane %v413, 1
      %v487 = vsel %vm464, %v485, %v486
      %v488 = vrot.slane %v414, 1
      %v489 = vsel %vm464, %v486, %v488
      %v490 = vrot.slane %v415, 1
      %v491 = vrot.slane %v416, 1
      %v492 = vsel %vm464, %v490, %v491
      %v493 = vrot.slane %v417, 1
      %v494 = vsel %vm464, %v491, %v493
      %v495 = vrot.slane %v418, 1
      %v496 = vrot.slane %v419, 1
      %v497 = vsel %vm464, %v495, %v496
      %v498 = vrot.slane %v420, 1
      %v499 = vsel %vm464, %v496, %v498
      %v500 = vrot.slane %v421, 1
      %v501 = vrot.slane %v422, 1
      %v502 = vsel %vm464, %v500, %v501
      %v503 = vrot.slane %v423, 1
      %v504 = vsel %vm464, %v501, %v503
      %v521 = vadd.f32 %v424, %v467
      %v522 = vadd.f32 %v425, %v469
      %v523 = vadd.f32 %v426, %v472
      %v524 = vadd.f32 %v427, %v474
      %v525 = vadd.f32 %v428, %v477
      %v526 = vadd.f32 %v429, %v479
      %v527 = vadd.f32 %v430, %v482
      %v528 = vadd.f32 %v431, %v484
      %v529 = vadd.f32 %v432, %v487
      %v530 = vadd.f32 %v433, %v489
      %v531 = vadd.f32 %v434, %v492
      %v532 = vadd.f32 %v435, %v494
      %v533 = vadd.f32 %v436, %v497
      %v534 = vadd.f32 %v437, %v499
      %v535 = vadd.f32 %v438, %v502
      %v536 = vadd.f32 %v439, %v504
      %537 = vst [vmem:[#allocation4] sm:$0xff] %v521
      %538 = vst [vmem:[#allocation4 + $0x8] sm:$0xff] %v522
      %539 = vst [vmem:[#allocation4 + $0x10] sm:$0xff] %v523
      %540 = vst [vmem:[#allocation4 + $0x18] sm:$0xff] %v524
      %541 = vst [vmem:[#allocation4 + $0x20] sm:$0xff] %v525
      %542 = vst [vmem:[#allocation4 + $0x28] sm:$0xff] %v526
      %543 = vst [vmem:[#allocation4 + $0x30] sm:$0xff] %v527
      %544 = vst [vmem:[#allocation4 + $0x38] sm:$0xff] %v528
      %545 = vst [vmem:[#allocation4 + $0x40] sm:$0xff] %v529
      %546 = vst [vmem:[#allocation4 + $0x48] sm:$0xff] %v530
      %547 = vst [vmem:[#allocation4 + $0x50] sm:$0xff] %v531
      %548 = vst [vmem:[#allocation4 + $0x58] sm:$0xff] %v532
      %549 = vst [vmem:[#allocation4 + $0x60] sm:$0xff] %v533
      %550 = vst [vmem:[#allocation4 + $0x68] sm:$0xff] %v534
      %551 = vst [vmem:[#allocation4 + $0x70] sm:$0xff] %v535
      %552 = vst [vmem:[#allocation4 + $0x78] sm:$0xff] %v536
      %v553 = vld [vmem:[#allocation2] sm:$0xe]
      %v554 = vld [vmem:[#allocation2 + $0x4] sm:$0xf]
      %v555 = vld [vmem:[#allocation2 + $0x8] sm:$0x1]
      %v556 = vld [vmem:[#allocation2 + $0xc] sm:$0xe]
      %v557 = vld [vmem:[#allocation2 + $0x10] sm:$0xf]
      %v558 = vld [vmem:[#allocation2 + $0x14] sm:$0x1]
      %v559 = vld [vmem:[#allocation2 + $0x18] sm:$0xe]
      %v560 = vld [vmem:[#allocation2 + $0x1c] sm:$0xf]
      %v561 = vld [vmem:[#allocation2 + $0x20] sm:$0x1]
      %v562 = vld [vmem:[#allocation2 + $0x24] sm:$0xe]
      %v563 = vld [vmem:[#allocation2 + $0x28] sm:$0xf]
      %v564 = vld [vmem:[#allocation2 + $0x2c] sm:$0x1]
      %v565 = vld [vmem:[#allocation2 + $0x30] sm:$0xe]
      %v566 = vld [vmem:[#allocation2 + $0x34] sm:$0xf]
      %v567 = vld [vmem:[#allocation2 + $0x38] sm:$0x1]
      %v568 = vld [vmem:[#allocation2 + $0x3c] sm:$0xe]
      %v569 = vld [vmem:[#allocation2 + $0x40] sm:$0xf]
      %v570 = vld [vmem:[#allocation2 + $0x44] sm:$0x1]
      %v571 = vld [vmem:[#allocation2 + $0x48] sm:$0xe]
      %v572 = vld [vmem:[#allocation2 + $0x4c] sm:$0xf]
      %v573 = vld [vmem:[#allocation2 + $0x50] sm:$0x1]
      %v574 = vld [vmem:[#allocation2 + $0x54] sm:$0xe]
      %v575 = vld [vmem:[#allocation2 + $0x58] sm:$0xf]
      %v576 = vld [vmem:[#allocation2 + $0x5c] sm:$0x1]
      %v577 = vunpack.c.l.bf16 %v553
      %v578 = vunpack.c.l.bf16 %v554
      %v579 = vunpack.c.l.bf16 %v555
      %v580 = vunpack.c.l.bf16 %v556
      %v581 = vunpack.c.l.bf16 %v557
      %v582 = vunpack.c.l.bf16 %v558
      %v583 = vunpack.c.l.bf16 %v559
      %v584 = vunpack.c.l.bf16 %v560
      %v585 = vunpack.c.l.bf16 %v561
      %v586 = vunpack.c.l.bf16 %v562
      %v587 = vunpack.c.l.bf16 %v563
      %v588 = vunpack.c.l.bf16 %v564
      %v589 = vunpack.c.l.bf16 %v565
      %v590 = vunpack.c.l.bf16 %v566
      %v591 = vunpack.c.l.bf16 %v567
      %v592 = vunpack.c.l.bf16 %v568
      %v593 = vunpack.c.l.bf16 %v569
      %v594 = vunpack.c.l.bf16 %v570
      %v595 = vunpack.c.l.bf16 %v571
      %v596 = vunpack.c.l.bf16 %v572
      %v597 = vunpack.c.l.bf16 %v573
      %v598 = vunpack.c.l.bf16 %v574
      %v599 = vunpack.c.l.bf16 %v575
      %v600 = vunpack.c.l.bf16 %v576
      %v601 = vld [vmem:[%s1 + $0x2] sm:$0x1]
      %v602 = vlaneseq
      %v603 = vshrl.u32 %v602, 7
      %v604 = vsub.s32 0, %v603
      %v605 = vrot.slane %v601, %v604
      %v606 = vmul.f32 %v577, %v605
      %v607 = vmul.f32 %v578, %v605
      %v608 = vmul.f32 %v579, %v605
      %v609 = vmul.f32 %v580, %v605
      %v610 = vmul.f32 %v581, %v605
      %v611 = vmul.f32 %v582, %v605
      %v612 = vmul.f32 %v583, %v605
      %v613 = vmul.f32 %v584, %v605
      %v614 = vmul.f32 %v585, %v605
      %v615 = vmul.f32 %v586, %v605
      %v616 = vmul.f32 %v587, %v605
      %v617 = vmul.f32 %v588, %v605
      %v618 = vmul.f32 %v589, %v605
      %v619 = vmul.f32 %v590, %v605
      %v620 = vmul.f32 %v591, %v605
      %v621 = vmul.f32 %v592, %v605
      %v622 = vmul.f32 %v593, %v605
      %v623 = vmul.f32 %v594, %v605
      %v624 = vmul.f32 %v595, %v605
      %v625 = vmul.f32 %v596, %v605
      %v626 = vmul.f32 %v597, %v605
      %v627 = vmul.f32 %v598, %v605
      %v628 = vmul.f32 %v599, %v605
      %v629 = vmul.f32 %v600, %v605
      %v630 = vld [vmem:[#allocation4] sm:$0xff]
      %v631 = vld [vmem:[#allocation4 + $0x8] sm:$0xff]
      %v632 = vld [vmem:[#allocation4 + $0x10] sm:$0xff]
      %v633 = vld [vmem:[#allocation4 + $0x18] sm:$0xff]
      %v634 = vld [vmem:[#allocation4 + $0x20] sm:$0xff]
      %v635 = vld [vmem:[#allocation4 + $0x28] sm:$0xff]
      %v636 = vld [vmem:[#allocation4 + $0x30] sm:$0xff]
      %v637 = vld [vmem:[#allocation4 + $0x38] sm:$0xff]
      %v638 = vld [vmem:[#allocation4 + $0x40] sm:$0xff]
      %v639 = vld [vmem:[#allocation4 + $0x48] sm:$0xff]
      %v640 = vld [vmem:[#allocation4 + $0x50] sm:$0xff]
      %v641 = vld [vmem:[#allocation4 + $0x58] sm:$0xff]
      %v642 = vld [vmem:[#allocation4 + $0x60] sm:$0xff]
      %v643 = vld [vmem:[#allocation4 + $0x68] sm:$0xff]
      %v644 = vld [vmem:[#allocation4 + $0x70] sm:$0xff]
      %v645 = vld [vmem:[#allocation4 + $0x78] sm:$0xff]
      %vm670 = vcmask 1045504
      %v671 = vrot.slane %v606, 2
      %v672 = vrot.slane %v607, 2
      %v673 = vsel %vm670, %v671, %v672
      %v674 = vrot.slane %v608, 2
      %v675 = vsel %vm670, %v672, %v674
      %v676 = vrot.slane %v609, 2
      %v677 = vrot.slane %v610, 2
      %v678 = vsel %vm670, %v676, %v677
      %v679 = vrot.slane %v611, 2
      %v680 = vsel %vm670, %v677, %v679
      %v681 = vrot.slane %v612, 2
      %v682 = vrot.slane %v613, 2
      %v683 = vsel %vm670, %v681, %v682
      %v684 = vrot.slane %v614, 2
      %v685 = vsel %vm670, %v682, %v684
      %v686 = vrot.slane %v615, 2
      %v687 = vrot.slane %v616, 2
      %v688 = vsel %vm670, %v686, %v687
      %v689 = vrot.slane %v617, 2
      %v690 = vsel %vm670, %v687, %v689
      %v691 = vrot.slane %v618, 2
      %v692 = vrot.slane %v619, 2
      %v693 = vsel %vm670, %v691, %v692
      %v694 = vrot.slane %v620, 2
      %v695 = vsel %vm670, %v692, %v694
      %v696 = vrot.slane %v621, 2
      %v697 = vrot.slane %v622, 2
      %v698 = vsel %vm670, %v696, %v697
      %v699 = vrot.slane %v623, 2
      %v700 = vsel %vm670, %v697, %v699
      %v701 = vrot.slane %v624, 2
      %v702 = vrot.slane %v625, 2
      %v703 = vsel %vm670, %v701, %v702
      %v704 = vrot.slane %v626, 2
      %v705 = vsel %vm670, %v702, %v704
      %v706 = vrot.slane %v627, 2
      %v707 = vrot.slane %v628, 2
      %v708 = vsel %vm670, %v706, %v707
      %v709 = vrot.slane %v629, 2
      %v710 = vsel %vm670, %v707, %v709
      %v727 = vadd.f32 %v630, %v673
      %v728 = vadd.f32 %v631, %v675
      %v729 = vadd.f32 %v632, %v678
      %v730 = vadd.f32 %v633, %v680
      %v731 = vadd.f32 %v634, %v683
      %v732 = vadd.f32 %v635, %v685
      %v733 = vadd.f32 %v636, %v688
      %v734 = vadd.f32 %v637, %v690
      %v735 = vadd.f32 %v638, %v693
      %v736 = vadd.f32 %v639, %v695
      %v737 = vadd.f32 %v640, %v698
      %v738 = vadd.f32 %v641, %v700
      %v739 = vadd.f32 %v642, %v703
      %v740 = vadd.f32 %v643, %v705
      %v741 = vadd.f32 %v644, %v708
      %v742 = vadd.f32 %v645, %v710
      %743 = vst [vmem:[#allocation4] sm:$0xff] %v727
      %744 = vst [vmem:[#allocation4 + $0x8] sm:$0xff] %v728
      %745 = vst [vmem:[#allocation4 + $0x10] sm:$0xff] %v729
      %746 = vst [vmem:[#allocation4 + $0x18] sm:$0xff] %v730
      %747 = vst [vmem:[#allocation4 + $0x20] sm:$0xff] %v731
      %748 = vst [vmem:[#allocation4 + $0x28] sm:$0xff] %v732
      %749 = vst [vmem:[#allocation4 + $0x30] sm:$0xff] %v733
      %750 = vst [vmem:[#allocation4 + $0x38] sm:$0xff] %v734
      %751 = vst [vmem:[#allocation4 + $0x40] sm:$0xff] %v735
      %752 = vst [vmem:[#allocation4 + $0x48] sm:$0xff] %v736
      %753 = vst [vmem:[#allocation4 + $0x50] sm:$0xff] %v737
      %754 = vst [vmem:[#allocation4 + $0x58] sm:$0xff] %v738
      %755 = vst [vmem:[#allocation4 + $0x60] sm:$0xff] %v739
      %756 = vst [vmem:[#allocation4 + $0x68] sm:$0xff] %v740
      %757 = vst [vmem:[#allocation4 + $0x70] sm:$0xff] %v741
      %758 = vst [vmem:[#allocation4 + $0x78] sm:$0xff] %v742
      %s759 = scalar_lea.vmem [#allocation2], 12
      %v760 = vld [vmem:[%s759] sm:$0xf]
      %v761 = vld [vmem:[%s759 + $0x4] sm:$0xf]
      %v762 = vld [vmem:[%s759 + $0xc] sm:$0xf]
      %v763 = vld [vmem:[%s759 + $0x10] sm:$0xf]
      %v764 = vld [vmem:[%s759 + $0x18] sm:$0xf]
      %v765 = vld [vmem:[%s759 + $0x1c] sm:$0xf]
      %v766 = vld [vmem:[%s759 + $0x24] sm:$0xf]
      %v767 = vld [vmem:[%s759 + $0x28] sm:$0xf]
      %v768 = vld [vmem:[%s759 + $0x30] sm:$0xf]
      %v769 = vld [vmem:[%s759 + $0x34] sm:$0xf]
      %v770 = vld [vmem:[%s759 + $0x3c] sm:$0xf]
      %v771 = vld [vmem:[%s759 + $0x40] sm:$0xf]
      %v772 = vld [vmem:[%s759 + $0x48] sm:$0xf]
      %v773 = vld [vmem:[%s759 + $0x4c] sm:$0xf]
      %v774 = vld [vmem:[%s759 + $0x54] sm:$0xf]
      %v775 = vld [vmem:[%s759 + $0x58] sm:$0xf]
      %v776 = vunpack.c.l.bf16 %v760
      %v777 = vunpack.c.l.bf16 %v761
      %v778 = vunpack.c.l.bf16 %v762
      %v779 = vunpack.c.l.bf16 %v763
      %v780 = vunpack.c.l.bf16 %v764
      %v781 = vunpack.c.l.bf16 %v765
      %v782 = vunpack.c.l.bf16 %v766
      %v783 = vunpack.c.l.bf16 %v767
      %v784 = vunpack.c.l.bf16 %v768
      %v785 = vunpack.c.l.bf16 %v769
      %v786 = vunpack.c.l.bf16 %v770
      %v787 = vunpack.c.l.bf16 %v771
      %v788 = vunpack.c.l.bf16 %v772
      %v789 = vunpack.c.l.bf16 %v773
      %v790 = vunpack.c.l.bf16 %v774
      %v791 = vunpack.c.l.bf16 %v775
      %v792 = vld [vmem:[%s1 + $0x3] sm:$0x1]
      %v793 = vlaneseq
      %v794 = vshrl.u32 %v793, 7
      %v795 = vsub.s32 0, %v794
      %v796 = vrot.slane %v792, %v795
      %v797 = vmul.f32 %v776, %v796
      %v798 = vmul.f32 %v777, %v796
      %v799 = vmul.f32 %v778, %v796
      %v800 = vmul.f32 %v779, %v796
      %v801 = vmul.f32 %v780, %v796
      %v802 = vmul.f32 %v781, %v796
      %v803 = vmul.f32 %v782, %v796
      %v804 = vmul.f32 %v783, %v796
      %v805 = vmul.f32 %v784, %v796
      %v806 = vmul.f32 %v785, %v796
      %v807 = vmul.f32 %v786, %v796
      %v808 = vmul.f32 %v787, %v796
      %v809 = vmul.f32 %v788, %v796
      %v810 = vmul.f32 %v789, %v796
      %v811 = vmul.f32 %v790, %v796
      %v812 = vmul.f32 %v791, %v796
      %v813 = vld [vmem:[#allocation4] sm:$0xff]
      %v814 = vld [vmem:[#allocation4 + $0x8] sm:$0xff]
      %v815 = vld [vmem:[#allocation4 + $0x10] sm:$0xff]
      %v816 = vld [vmem:[#allocation4 + $0x18] sm:$0xff]
      %v817 = vld [vmem:[#allocation4 + $0x20] sm:$0xff]
      %v818 = vld [vmem:[#allocation4 + $0x28] sm:$0xff]
      %v819 = vld [vmem:[#allocation4 + $0x30] sm:$0xff]
      %v820 = vld [vmem:[#allocation4 + $0x38] sm:$0xff]
      %v821 = vld [vmem:[#allocation4 + $0x40] sm:$0xff]
      %v822 = vld [vmem:[#allocation4 + $0x48] sm:$0xff]
      %v823 = vld [vmem:[#allocation4 + $0x50] sm:$0xff]
      %v824 = vld [vmem:[#allocation4 + $0x58] sm:$0xff]
      %v825 = vld [vmem:[#allocation4 + $0x60] sm:$0xff]
      %v826 = vld [vmem:[#allocation4 + $0x68] sm:$0xff]
      %v827 = vld [vmem:[#allocation4 + $0x70] sm:$0xff]
      %v828 = vld [vmem:[#allocation4 + $0x78] sm:$0xff]
      %v829 = vadd.f32 %v813, %v797
      %v830 = vadd.f32 %v814, %v798
      %v831 = vadd.f32 %v815, %v799
      %v832 = vadd.f32 %v816, %v800
      %v833 = vadd.f32 %v817, %v801
      %v834 = vadd.f32 %v818, %v802
      %v835 = vadd.f32 %v819, %v803
      %v836 = vadd.f32 %v820, %v804
      %v837 = vadd.f32 %v821, %v805
      %v838 = vadd.f32 %v822, %v806
      %v839 = vadd.f32 %v823, %v807
      %v840 = vadd.f32 %v824, %v808
      %v841 = vadd.f32 %v825, %v809
      %v842 = vadd.f32 %v826, %v810
      %v843 = vadd.f32 %v827, %v811
      %v844 = vadd.f32 %v828, %v812
      %845 = vst [vmem:[#allocation4] sm:$0xff] %v829
      %846 = vst [vmem:[#allocation4 + $0x8] sm:$0xff] %v830
      %847 = vst [vmem:[#allocation4 + $0x10] sm:$0xff] %v831
      %848 = vst [vmem:[#allocation4 + $0x18] sm:$0xff] %v832
      %849 = vst [vmem:[#allocation4 + $0x20] sm:$0xff] %v833
      %850 = vst [vmem:[#allocation4 + $0x28] sm:$0xff] %v834
      %851 = vst [vmem:[#allocation4 + $0x30] sm:$0xff] %v835
      %852 = vst [vmem:[#allocation4 + $0x38] sm:$0xff] %v836
      %853 = vst [vmem:[#allocation4 + $0x40] sm:$0xff] %v837
      %854 = vst [vmem:[#allocation4 + $0x48] sm:$0xff] %v838
      %855 = vst [vmem:[#allocation4 + $0x50] sm:$0xff] %v839
      %856 = vst [vmem:[#allocation4 + $0x58] sm:$0xff] %v840
      %857 = vst [vmem:[#allocation4 + $0x60] sm:$0xff] %v841
      %858 = vst [vmem:[#allocation4 + $0x68] sm:$0xff] %v842
      %859 = vst [vmem:[#allocation4 + $0x70] sm:$0xff] %v843
      %860 = vst [vmem:[#allocation4 + $0x78] sm:$0xff] %v844
      %v861 = vld [vmem:[%s759] sm:$0xf]
      %v862 = vld [vmem:[%s759 + $0x4] sm:$0xf]
      %v863 = vld [vmem:[%s759 + $0x8] sm:$0x1]
      %v864 = vld [vmem:[%s759 + $0xc] sm:$0xf]
      %v865 = vld [vmem:[%s759 + $0x10] sm:$0xf]
      %v866 = vld [vmem:[%s759 + $0x14] sm:$0x1]
      %v867 = vld [vmem:[%s759 + $0x18] sm:$0xf]
      %v868 = vld [vmem:[%s759 + $0x1c] sm:$0xf]
      %v869 = vld [vmem:[%s759 + $0x20] sm:$0x1]
      %v870 = vld [vmem:[%s759 + $0x24] sm:$0xf]
      %v871 = vld [vmem:[%s759 + $0x28] sm:$0xf]
      %v872 = vld [vmem:[%s759 + $0x2c] sm:$0x1]
      %v873 = vld [vmem:[%s759 + $0x30] sm:$0xf]
      %v874 = vld [vmem:[%s759 + $0x34] sm:$0xf]
      %v875 = vld [vmem:[%s759 + $0x38] sm:$0x1]
      %v876 = vld [vmem:[%s759 + $0x3c] sm:$0xf]
      %v877 = vld [vmem:[%s759 + $0x40] sm:$0xf]
      %v878 = vld [vmem:[%s759 + $0x44] sm:$0x1]
      %v879 = vld [vmem:[%s759 + $0x48] sm:$0xf]
      %v880 = vld [vmem:[%s759 + $0x4c] sm:$0xf]
      %v881 = vld [vmem:[%s759 + $0x50] sm:$0x1]
      %v882 = vld [vmem:[%s759 + $0x54] sm:$0xf]
      %v883 = vld [vmem:[%s759 + $0x58] sm:$0xf]
      %v884 = vld [vmem:[%s759 + $0x5c] sm:$0x1]
      %v885 = vunpack.c.l.bf16 %v861
      %v886 = vunpack.c.l.bf16 %v862
      %v887 = vunpack.c.l.bf16 %v863
      %v888 = vunpack.c.l.bf16 %v864
      %v889 = vunpack.c.l.bf16 %v865
      %v890 = vunpack.c.l.bf16 %v866
      %v891 = vunpack.c.l.bf16 %v867
      %v892 = vunpack.c.l.bf16 %v868
      %v893 = vunpack.c.l.bf16 %v869
      %v894 = vunpack.c.l.bf16 %v870
      %v895 = vunpack.c.l.bf16 %v871
      %v896 = vunpack.c.l.bf16 %v872
      %v897 = vunpack.c.l.bf16 %v873
      %v898 = vunpack.c.l.bf16 %v874
      %v899 = vunpack.c.l.bf16 %v875
      %v900 = vunpack.c.l.bf16 %v876
      %v901 = vunpack.c.l.bf16 %v877
      %v902 = vunpack.c.l.bf16 %v878
      %v903 = vunpack.c.l.bf16 %v879
      %v904 = vunpack.c.l.bf16 %v880
      %v905 = vunpack.c.l.bf16 %v881
      %v906 = vunpack.c.l.bf16 %v882
      %v907 = vunpack.c.l.bf16 %v883
      %v908 = vunpack.c.l.bf16 %v884
      %v909 = vld [vmem:[%s1 + $0x4] sm:$0x1]
      %v910 = vlaneseq
      %v911 = vshrl.u32 %v910, 7
      %v912 = vsub.s32 0, %v911
      %v913 = vrot.slane %v909, %v912
      %v914 = vmul.f32 %v885, %v913
      %v915 = vmul.f32 %v886, %v913
      %v916 = vmul.f32 %v887, %v913
      %v917 = vmul.f32 %v888, %v913
      %v918 = vmul.f32 %v889, %v913
      %v919 = vmul.f32 %v890, %v913
      %v920 = vmul.f32 %v891, %v913
      %v921 = vmul.f32 %v892, %v913
      %v922 = vmul.f32 %v893, %v913
      %v923 = vmul.f32 %v894, %v913
      %v924 = vmul.f32 %v895, %v913
      %v925 = vmul.f32 %v896, %v913
      %v926 = vmul.f32 %v897, %v913
      %v927 = vmul.f32 %v898, %v913
      %v928 = vmul.f32 %v899, %v913
      %v929 = vmul.f32 %v900, %v913
      %v930 = vmul.f32 %v901, %v913
      %v931 = vmul.f32 %v902, %v913
      %v932 = vmul.f32 %v903, %v913
      %v933 = vmul.f32 %v904, %v913
      %v934 = vmul.f32 %v905, %v913
      %v935 = vmul.f32 %v906, %v913
      %v936 = vmul.f32 %v907, %v913
      %v937 = vmul.f32 %v908, %v913
      %v938 = vld [vmem:[#allocation4] sm:$0xff]
      %v939 = vld [vmem:[#allocation4 + $0x8] sm:$0xff]
      %v940 = vld [vmem:[#allocation4 + $0x10] sm:$0xff]
      %v941 = vld [vmem:[#allocation4 + $0x18] sm:$0xff]
      %v942 = vld [vmem:[#allocation4 + $0x20] sm:$0xff]
      %v943 = vld [vmem:[#allocation4 + $0x28] sm:$0xff]
      %v944 = vld [vmem:[#allocation4 + $0x30] sm:$0xff]
      %v945 = vld [vmem:[#allocation4 + $0x38] sm:$0xff]
      %v946 = vld [vmem:[#allocation4 + $0x40] sm:$0xff]
      %v947 = vld [vmem:[#allocation4 + $0x48] sm:$0xff]
      %v948 = vld [vmem:[#allocation4 + $0x50] sm:$0xff]
      %v949 = vld [vmem:[#allocation4 + $0x58] sm:$0xff]
      %v950 = vld [vmem:[#allocation4 + $0x60] sm:$0xff]
      %v951 = vld [vmem:[#allocation4 + $0x68] sm:$0xff]
      %v952 = vld [vmem:[#allocation4 + $0x70] sm:$0xff]
      %v953 = vld [vmem:[#allocation4 + $0x78] sm:$0xff]
      %v978 = vrot.slane %v914, 1
      %v979 = vrot.slane %v915, 1
      %v980 = vsel %vm464, %v978, %v979
      %v981 = vrot.slane %v916, 1
      %v982 = vsel %vm464, %v979, %v981
      %v983 = vrot.slane %v917, 1
      %v984 = vrot.slane %v918, 1
      %v985 = vsel %vm464, %v983, %v984
      %v986 = vrot.slane %v919, 1
      %v987 = vsel %vm464, %v984, %v986
      %v988 = vrot.slane %v920, 1
      %v989 = vrot.slane %v921, 1
      %v990 = vsel %vm464, %v988, %v989
      %v991 = vrot.slane %v922, 1
      %v992 = vsel %vm464, %v989, %v991
      %v993 = vrot.slane %v923, 1
      %v994 = vrot.slane %v924, 1
      %v995 = vsel %vm464, %v993, %v994
      %v996 = vrot.slane %v925, 1
      %v997 = vsel %vm464, %v994, %v996
      %v998 = vrot.slane %v926, 1
      %v999 = vrot.slane %v927, 1
      %v1000 = vsel %vm464, %v998, %v999
      %v1001 = vrot.slane %v928, 1
      %v1002 = vsel %vm464, %v999, %v1001
      %v1003 = vrot.slane %v929, 1
      %v1004 = vrot.slane %v930, 1
      %v1005 = vsel %vm464, %v1003, %v1004
      %v1006 = vrot.slane %v931, 1
      %v1007 = vsel %vm464, %v1004, %v1006
      %v1008 = vrot.slane %v932, 1
      %v1009 = vrot.slane %v933, 1
      %v1010 = vsel %vm464, %v1008, %v1009
      %v1011 = vrot.slane %v934, 1
      %v1012 = vsel %vm464, %v1009, %v1011
      %v1013 = vrot.slane %v935, 1
      %v1014 = vrot.slane %v936, 1
      %v1015 = vsel %vm464, %v1013, %v1014
      %v1016 = vrot.slane %v937, 1
      %v1017 = vsel %vm464, %v1014, %v1016
      %v1034 = vadd.f32 %v938, %v980
      %v1035 = vadd.f32 %v939, %v982
      %v1036 = vadd.f32 %v940, %v985
      %v1037 = vadd.f32 %v941, %v987
      %v1038 = vadd.f32 %v942, %v990
      %v1039 = vadd.f32 %v943, %v992
      %v1040 = vadd.f32 %v944, %v995
      %v1041 = vadd.f32 %v945, %v997
      %v1042 = vadd.f32 %v946, %v1000
      %v1043 = vadd.f32 %v947, %v1002
      %v1044 = vadd.f32 %v948, %v1005
      %v1045 = vadd.f32 %v949, %v1007
      %v1046 = vadd.f32 %v950, %v1010
      %v1047 = vadd.f32 %v951, %v1012
      %v1048 = vadd.f32 %v952, %v1015
      %v1049 = vadd.f32 %v953, %v1017
      %1050 = vst [vmem:[#allocation4] sm:$0xff] %v1034
      %1051 = vst [vmem:[#allocation4 + $0x8] sm:$0xff] %v1035
      %1052 = vst [vmem:[#allocation4 + $0x10] sm:$0xff] %v1036
      %1053 = vst [vmem:[#allocation4 + $0x18] sm:$0xff] %v1037
      %1054 = vst [vmem:[#allocation4 + $0x20] sm:$0xff] %v1038
      %1055 = vst [vmem:[#allocation4 + $0x28] sm:$0xff] %v1039
      %1056 = vst [vmem:[#allocation4 + $0x30] sm:$0xff] %v1040
      %1057 = vst [vmem:[#allocation4 + $0x38] sm:$0xff] %v1041
      %1058 = vst [vmem:[#allocation4 + $0x40] sm:$0xff] %v1042
      %1059 = vst [vmem:[#allocation4 + $0x48] sm:$0xff] %v1043
      %1060 = vst [vmem:[#allocation4 + $0x50] sm:$0xff] %v1044
      %1061 = vst [vmem:[#allocation4 + $0x58] sm:$0xff] %v1045
      %1062 = vst [vmem:[#allocation4 + $0x60] sm:$0xff] %v1046
      %1063 = vst [vmem:[#allocation4 + $0x68] sm:$0xff] %v1047
      %1064 = vst [vmem:[#allocation4 + $0x70] sm:$0xff] %v1048
      %1065 = vst [vmem:[#allocation4 + $0x78] sm:$0xff] %v1049
      %v1066 = vld [vmem:[%s759] sm:$0xe]
      %v1067 = vld [vmem:[%s759 + $0x4] sm:$0xf]
      %v1068 = vld [vmem:[%s759 + $0x8] sm:$0x1]
      %v1069 = vld [vmem:[%s759 + $0xc] sm:$0xe]
      %v1070 = vld [vmem:[%s759 + $0x10] sm:$0xf]
      %v1071 = vld [vmem:[%s759 + $0x14] sm:$0x1]
      %v1072 = vld [vmem:[%s759 + $0x18] sm:$0xe]
      %v1073 = vld [vmem:[%s759 + $0x1c] sm:$0xf]
      %v1074 = vld [vmem:[%s759 + $0x20] sm:$0x1]
      %v1075 = vld [vmem:[%s759 + $0x24] sm:$0xe]
      %v1076 = vld [vmem:[%s759 + $0x28] sm:$0xf]
      %v1077 = vld [vmem:[%s759 + $0x2c] sm:$0x1]
      %v1078 = vld [vmem:[%s759 + $0x30] sm:$0xe]
      %v1079 = vld [vmem:[%s759 + $0x34] sm:$0xf]
      %v1080 = vld [vmem:[%s759 + $0x38] sm:$0x1]
      %v1081 = vld [vmem:[%s759 + $0x3c] sm:$0xe]
      %v1082 = vld [vmem:[%s759 + $0x40] sm:$0xf]
      %v1083 = vld [vmem:[%s759 + $0x44] sm:$0x1]
      %v1084 = vld [vmem:[%s759 + $0x48] sm:$0xe]
      %v1085 = vld [vmem:[%s759 + $0x4c] sm:$0xf]
      %v1086 = vld [vmem:[%s759 + $0x50] sm:$0x1]
      %v1087 = vld [vmem:[%s759 + $0x54] sm:$0xe]
      %v1088 = vld [vmem:[%s759 + $0x58] sm:$0xf]
      %v1089 = vld [vmem:[%s759 + $0x5c] sm:$0x1]
      %v1090 = vunpack.c.l.bf16 %v1066
      %v1091 = vunpack.c.l.bf16 %v1067
      %v1092 = vunpack.c.l.bf16 %v1068
      %v1093 = vunpack.c.l.bf16 %v1069
      %v1094 = vunpack.c.l.bf16 %v1070
      %v1095 = vunpack.c.l.bf16 %v1071
      %v1096 = vunpack.c.l.bf16 %v1072
      %v1097 = vunpack.c.l.bf16 %v1073
      %v1098 = vunpack.c.l.bf16 %v1074
      %v1099 = vunpack.c.l.bf16 %v1075
      %v1100 = vunpack.c.l.bf16 %v1076
      %v1101 = vunpack.c.l.bf16 %v1077
      %v1102 = vunpack.c.l.bf16 %v1078
      %v1103 = vunpack.c.l.bf16 %v1079
      %v1104 = vunpack.c.l.bf16 %v1080
      %v1105 = vunpack.c.l.bf16 %v1081
      %v1106 = vunpack.c.l.bf16 %v1082
      %v1107 = vunpack.c.l.bf16 %v1083
      %v1108 = vunpack.c.l.bf16 %v1084
      %v1109 = vunpack.c.l.bf16 %v1085
      %v1110 = vunpack.c.l.bf16 %v1086
      %v1111 = vunpack.c.l.bf16 %v1087
      %v1112 = vunpack.c.l.bf16 %v1088
      %v1113 = vunpack.c.l.bf16 %v1089
      %v1114 = vld [vmem:[%s1 + $0x5] sm:$0x1]
      %v1115 = vlaneseq
      %v1116 = vshrl.u32 %v1115, 7
      %v1117 = vsub.s32 0, %v1116
      %v1118 = vrot.slane %v1114, %v1117
      %v1119 = vmul.f32 %v1090, %v1118
      %v1120 = vmul.f32 %v1091, %v1118
      %v1121 = vmul.f32 %v1092, %v1118
      %v1122 = vmul.f32 %v1093, %v1118
      %v1123 = vmul.f32 %v1094, %v1118
      %v1124 = vmul.f32 %v1095, %v1118
      %v1125 = vmul.f32 %v1096, %v1118
      %v1126 = vmul.f32 %v1097, %v1118
      %v1127 = vmul.f32 %v1098, %v1118
      %v1128 = vmul.f32 %v1099, %v1118
      %v1129 = vmul.f32 %v1100, %v1118
      %v1130 = vmul.f32 %v1101, %v1118
      %v1131 = vmul.f32 %v1102, %v1118
      %v1132 = vmul.f32 %v1103, %v1118
      %v1133 = vmul.f32 %v1104, %v1118
      %v1134 = vmul.f32 %v1105, %v1118
      %v1135 = vmul.f32 %v1106, %v1118
      %v1136 = vmul.f32 %v1107, %v1118
      %v1137 = vmul.f32 %v1108, %v1118
      %v1138 = vmul.f32 %v1109, %v1118
      %v1139 = vmul.f32 %v1110, %v1118
      %v1140 = vmul.f32 %v1111, %v1118
      %v1141 = vmul.f32 %v1112, %v1118
      %v1142 = vmul.f32 %v1113, %v1118
      %v1143 = vld [vmem:[#allocation4] sm:$0xff]
      %v1144 = vld [vmem:[#allocation4 + $0x8] sm:$0xff]
      %v1145 = vld [vmem:[#allocation4 + $0x10] sm:$0xff]
      %v1146 = vld [vmem:[#allocation4 + $0x18] sm:$0xff]
      %v1147 = vld [vmem:[#allocation4 + $0x20] sm:$0xff]
      %v1148 = vld [vmem:[#allocation4 + $0x28] sm:$0xff]
      %v1149 = vld [vmem:[#allocation4 + $0x30] sm:$0xff]
      %v1150 = vld [vmem:[#allocation4 + $0x38] sm:$0xff]
      %v1151 = vld [vmem:[#allocation4 + $0x40] sm:$0xff]
      %v1152 = vld [vmem:[#allocation4 + $0x48] sm:$0xff]
      %v1153 = vld [vmem:[#allocation4 + $0x50] sm:$0xff]
      %v1154 = vld [vmem:[#allocation4 + $0x58] sm:$0xff]
      %v1155 = vld [vmem:[#allocation4 + $0x60] sm:$0xff]
      %v1156 = vld [vmem:[#allocation4 + $0x68] sm:$0xff]
      %v1157 = vld [vmem:[#allocation4 + $0x70] sm:$0xff]
      %v1158 = vld [vmem:[#allocation4 + $0x78] sm:$0xff]
      %v1183 = vrot.slane %v1119, 2
      %v1184 = vrot.slane %v1120, 2
      %v1185 = vsel %vm670, %v1183, %v1184
      %v1186 = vrot.slane %v1121, 2
      %v1187 = vsel %vm670, %v1184, %v1186
      %v1188 = vrot.slane %v1122, 2
      %v1189 = vrot.slane %v1123, 2
      %v1190 = vsel %vm670, %v1188, %v1189
      %v1191 = vrot.slane %v1124, 2
      %v1192 = vsel %vm670, %v1189, %v1191
      %v1193 = vrot.slane %v1125, 2
      %v1194 = vrot.slane %v1126, 2
      %v1195 = vsel %vm670, %v1193, %v1194
      %v1196 = vrot.slane %v1127, 2
      %v1197 = vsel %vm670, %v1194, %v1196
      %v1198 = vrot.slane %v1128, 2
      %v1199 = vrot.slane %v1129, 2
      %v1200 = vsel %vm670, %v1198, %v1199
      %v1201 = vrot.slane %v1130, 2
      %v1202 = vsel %vm670, %v1199, %v1201
      %v1203 = vrot.slane %v1131, 2
      %v1204 = vrot.slane %v1132, 2
      %v1205 = vsel %vm670, %v1203, %v1204
      %v1206 = vrot.slane %v1133, 2
      %v1207 = vsel %vm670, %v1204, %v1206
      %v1208 = vrot.slane %v1134, 2
      %v1209 = vrot.slane %v1135, 2
      %v1210 = vsel %vm670, %v1208, %v1209
      %v1211 = vrot.slane %v1136, 2
      %v1212 = vsel %vm670, %v1209, %v1211
      %v1213 = vrot.slane %v1137, 2
      %v1214 = vrot.slane %v1138, 2
      %v1215 = vsel %vm670, %v1213, %v1214
      %v1216 = vrot.slane %v1139, 2
      %v1217 = vsel %vm670, %v1214, %v1216
      %v1218 = vrot.slane %v1140, 2
      %v1219 = vrot.slane %v1141, 2
      %v1220 = vsel %vm670, %v1218, %v1219
      %v1221 = vrot.slane %v1142, 2
      %v1222 = vsel %vm670, %v1219, %v1221
      %v1239 = vadd.f32 %v1143, %v1185
      %v1240 = vadd.f32 %v1144, %v1187
      %v1241 = vadd.f32 %v1145, %v1190
      %v1242 = vadd.f32 %v1146, %v1192
      %v1243 = vadd.f32 %v1147, %v1195
      %v1244 = vadd.f32 %v1148, %v1197
      %v1245 = vadd.f32 %v1149, %v1200
      %v1246 = vadd.f32 %v1150, %v1202
      %v1247 = vadd.f32 %v1151, %v1205
      %v1248 = vadd.f32 %v1152, %v1207
      %v1249 = vadd.f32 %v1153, %v1210
      %v1250 = vadd.f32 %v1154, %v1212
      %v1251 = vadd.f32 %v1155, %v1215
      %v1252 = vadd.f32 %v1156, %v1217
      %v1253 = vadd.f32 %v1157, %v1220
      %v1254 = vadd.f32 %v1158, %v1222
      %1255 = vst [vmem:[#allocation4] sm:$0xff] %v1239
      %1256 = vst [vmem:[#allocation4 + $0x8] sm:$0xff] %v1240
      %1257 = vst [vmem:[#allocation4 + $0x10] sm:$0xff] %v1241
      %1258 = vst [vmem:[#allocation4 + $0x18] sm:$0xff] %v1242
      %1259 = vst [vmem:[#allocation4 + $0x20] sm:$0xff] %v1243
      %1260 = vst [vmem:[#allocation4 + $0x28] sm:$0xff] %v1244
      %1261 = vst [vmem:[#allocation4 + $0x30] sm:$0xff] %v1245
      %1262 = vst [vmem:[#allocation4 + $0x38] sm:$0xff] %v1246
      %1263 = vst [vmem:[#allocation4 + $0x40] sm:$0xff] %v1247
      %1264 = vst [vmem:[#allocation4 + $0x48] sm:$0xff] %v1248
      %1265 = vst [vmem:[#allocation4 + $0x50] sm:$0xff] %v1249
      %1266 = vst [vmem:[#allocation4 + $0x58] sm:$0xff] %v1250
      %1267 = vst [vmem:[#allocation4 + $0x60] sm:$0xff] %v1251
      %1268 = vst [vmem:[#allocation4 + $0x68] sm:$0xff] %v1252
      %1269 = vst [vmem:[#allocation4 + $0x70] sm:$0xff] %v1253
      %1270 = vst [vmem:[#allocation4 + $0x78] sm:$0xff] %v1254
      %s1271 = scalar_lea.vmem [#allocation2], 24
      %v1272 = vld [vmem:[%s1271] sm:$0xf]
      %v1273 = vld [vmem:[%s1271 + $0x4] sm:$0xf]
      %v1274 = vld [vmem:[%s1271 + $0xc] sm:$0xf]
      %v1275 = vld [vmem:[%s1271 + $0x10] sm:$0xf]
      %v1276 = vld [vmem:[%s1271 + $0x18] sm:$0xf]
      %v1277 = vld [vmem:[%s1271 + $0x1c] sm:$0xf]
      %v1278 = vld [vmem:[%s1271 + $0x24] sm:$0xf]
      %v1279 = vld [vmem:[%s1271 + $0x28] sm:$0xf]
      %v1280 = vld [vmem:[%s1271 + $0x30] sm:$0xf]
      %v1281 = vld [vmem:[%s1271 + $0x34] sm:$0xf]
      %v1282 = vld [vmem:[%s1271 + $0x3c] sm:$0xf]
      %v1283 = vld [vmem:[%s1271 + $0x40] sm:$0xf]
      %v1284 = vld [vmem:[%s1271 + $0x48] sm:$0xf]
      %v1285 = vld [vmem:[%s1271 + $0x4c] sm:$0xf]
      %v1286 = vld [vmem:[%s1271 + $0x54] sm:$0xf]
      %v1287 = vld [vmem:[%s1271 + $0x58] sm:$0xf]
      %v1288 = vunpack.c.l.bf16 %v1272
      %v1289 = vunpack.c.l.bf16 %v1273
      %v1290 = vunpack.c.l.bf16 %v1274
      %v1291 = vunpack.c.l.bf16 %v1275
      %v1292 = vunpack.c.l.bf16 %v1276
      %v1293 = vunpack.c.l.bf16 %v1277
      %v1294 = vunpack.c.l.bf16 %v1278
      %v1295 = vunpack.c.l.bf16 %v1279
      %v1296 = vunpack.c.l.bf16 %v1280
      %v1297 = vunpack.c.l.bf16 %v1281
      %v1298 = vunpack.c.l.bf16 %v1282
      %v1299 = vunpack.c.l.bf16 %v1283
      %v1300 = vunpack.c.l.bf16 %v1284
      %v1301 = vunpack.c.l.bf16 %v1285
      %v1302 = vunpack.c.l.bf16 %v1286
      %v1303 = vunpack.c.l.bf16 %v1287
      %v1304 = vld [vmem:[%s1 + $0x6] sm:$0x1]
      %v1305 = vlaneseq
      %v1306 = vshrl.u32 %v1305, 7
      %v1307 = vsub.s32 0, %v1306
      %v1308 = vrot.slane %v1304, %v1307
      %v1309 = vmul.f32 %v1288, %v1308
      %v1310 = vmul.f32 %v1289, %v1308
      %v1311 = vmul.f32 %v1290, %v1308
      %v1312 = vmul.f32 %v1291, %v1308
      %v1313 = vmul.f32 %v1292, %v1308
      %v1314 = vmul.f32 %v1293, %v1308
      %v1315 = vmul.f32 %v1294, %v1308
      %v1316 = vmul.f32 %v1295, %v1308
      %v1317 = vmul.f32 %v1296, %v1308
      %v1318 = vmul.f32 %v1297, %v1308
      %v1319 = vmul.f32 %v1298, %v1308
      %v1320 = vmul.f32 %v1299, %v1308
      %v1321 = vmul.f32 %v1300, %v1308
      %v1322 = vmul.f32 %v1301, %v1308
      %v1323 = vmul.f32 %v1302, %v1308
      %v1324 = vmul.f32 %v1303, %v1308
      %v1325 = vld [vmem:[#allocation4] sm:$0xff]
      %v1326 = vld [vmem:[#allocation4 + $0x8] sm:$0xff]
      %v1327 = vld [vmem:[#allocation4 + $0x10] sm:$0xff]
      %v1328 = vld [vmem:[#allocation4 + $0x18] sm:$0xff]
      %v1329 = vld [vmem:[#allocation4 + $0x20] sm:$0xff]
      %v1330 = vld [vmem:[#allocation4 + $0x28] sm:$0xff]
      %v1331 = vld [vmem:[#allocation4 + $0x30] sm:$0xff]
      %v1332 = vld [vmem:[#allocation4 + $0x38] sm:$0xff]
      %v1333 = vld [vmem:[#allocation4 + $0x40] sm:$0xff]
      %v1334 = vld [vmem:[#allocation4 + $0x48] sm:$0xff]
      %v1335 = vld [vmem:[#allocation4 + $0x50] sm:$0xff]
      %v1336 = vld [vmem:[#allocation4 + $0x58] sm:$0xff]
      %v1337 = vld [vmem:[#allocation4 + $0x60] sm:$0xff]
      %v1338 = vld [vmem:[#allocation4 + $0x68] sm:$0xff]
      %v1339 = vld [vmem:[#allocation4 + $0x70] sm:$0xff]
      %v1340 = vld [vmem:[#allocation4 + $0x78] sm:$0xff]
      %v1341 = vadd.f32 %v1325, %v1309
      %v1342 = vadd.f32 %v1326, %v1310
      %v1343 = vadd.f32 %v1327, %v1311
      %v1344 = vadd.f32 %v1328, %v1312
      %v1345 = vadd.f32 %v1329, %v1313
      %v1346 = vadd.f32 %v1330, %v1314
      %v1347 = vadd.f32 %v1331, %v1315
      %v1348 = vadd.f32 %v1332, %v1316
      %v1349 = vadd.f32 %v1333, %v1317
      %v1350 = vadd.f32 %v1334, %v1318
      %v1351 = vadd.f32 %v1335, %v1319
      %v1352 = vadd.f32 %v1336, %v1320
      %v1353 = vadd.f32 %v1337, %v1321
      %v1354 = vadd.f32 %v1338, %v1322
      %v1355 = vadd.f32 %v1339, %v1323
      %v1356 = vadd.f32 %v1340, %v1324
      %1357 = vst [vmem:[#allocation4] sm:$0xff] %v1341
      %1358 = vst [vmem:[#allocation4 + $0x8] sm:$0xff] %v1342
      %1359 = vst [vmem:[#allocation4 + $0x10] sm:$0xff] %v1343
      %1360 = vst [vmem:[#allocation4 + $0x18] sm:$0xff] %v1344
      %1361 = vst [vmem:[#allocation4 + $0x20] sm:$0xff] %v1345
      %1362 = vst [vmem:[#allocation4 + $0x28] sm:$0xff] %v1346
      %1363 = vst [vmem:[#allocation4 + $0x30] sm:$0xff] %v1347
      %1364 = vst [vmem:[#allocation4 + $0x38] sm:$0xff] %v1348
      %1365 = vst [vmem:[#allocation4 + $0x40] sm:$0xff] %v1349
      %1366 = vst [vmem:[#allocation4 + $0x48] sm:$0xff] %v1350
      %1367 = vst [vmem:[#allocation4 + $0x50] sm:$0xff] %v1351
      %1368 = vst [vmem:[#allocation4 + $0x58] sm:$0xff] %v1352
      %1369 = vst [vmem:[#allocation4 + $0x60] sm:$0xff] %v1353
      %1370 = vst [vmem:[#allocation4 + $0x68] sm:$0xff] %v1354
      %1371 = vst [vmem:[#allocation4 + $0x70] sm:$0xff] %v1355
      %1372 = vst [vmem:[#allocation4 + $0x78] sm:$0xff] %v1356
      %v1373 = vld [vmem:[%s1271] sm:$0xf]
      %v1374 = vld [vmem:[%s1271 + $0x4] sm:$0xf]
      %v1375 = vld [vmem:[%s1271 + $0x8] sm:$0x1]
      %v1376 = vld [vmem:[%s1271 + $0xc] sm:$0xf]
      %v1377 = vld [vmem:[%s1271 + $0x10] sm:$0xf]
      %v1378 = vld [vmem:[%s1271 + $0x14] sm:$0x1]
      %v1379 = vld [vmem:[%s1271 + $0x18] sm:$0xf]
      %v1380 = vld [vmem:[%s1271 + $0x1c] sm:$0xf]
      %v1381 = vld [vmem:[%s1271 + $0x20] sm:$0x1]
      %v1382 = vld [vmem:[%s1271 + $0x24] sm:$0xf]
      %v1383 = vld [vmem:[%s1271 + $0x28] sm:$0xf]
      %v1384 = vld [vmem:[%s1271 + $0x2c] sm:$0x1]
      %v1385 = vld [vmem:[%s1271 + $0x30] sm:$0xf]
      %v1386 = vld [vmem:[%s1271 + $0x34] sm:$0xf]
      %v1387 = vld [vmem:[%s1271 + $0x38] sm:$0x1]
      %v1388 = vld [vmem:[%s1271 + $0x3c] sm:$0xf]
      %v1389 = vld [vmem:[%s1271 + $0x40] sm:$0xf]
      %v1390 = vld [vmem:[%s1271 + $0x44] sm:$0x1]
      %v1391 = vld [vmem:[%s1271 + $0x48] sm:$0xf]
      %v1392 = vld [vmem:[%s1271 + $0x4c] sm:$0xf]
      %v1393 = vld [vmem:[%s1271 + $0x50] sm:$0x1]
      %v1394 = vld [vmem:[%s1271 + $0x54] sm:$0xf]
      %v1395 = vld [vmem:[%s1271 + $0x58] sm:$0xf]
      %v1396 = vld [vmem:[%s1271 + $0x5c] sm:$0x1]
      %v1397 = vunpack.c.l.bf16 %v1373
      %v1398 = vunpack.c.l.bf16 %v1374
      %v1399 = vunpack.c.l.bf16 %v1375
      %v1400 = vunpack.c.l.bf16 %v1376
      %v1401 = vunpack.c.l.bf16 %v1377
      %v1402 = vunpack.c.l.bf16 %v1378
      %v1403 = vunpack.c.l.bf16 %v1379
      %v1404 = vunpack.c.l.bf16 %v1380
      %v1405 = vunpack.c.l.bf16 %v1381
      %v1406 = vunpack.c.l.bf16 %v1382
      %v1407 = vunpack.c.l.bf16 %v1383
      %v1408 = vunpack.c.l.bf16 %v1384
      %v1409 = vunpack.c.l.bf16 %v1385
      %v1410 = vunpack.c.l.bf16 %v1386
      %v1411 = vunpack.c.l.bf16 %v1387
      %v1412 = vunpack.c.l.bf16 %v1388
      %v1413 = vunpack.c.l.bf16 %v1389
      %v1414 = vunpack.c.l.bf16 %v1390
      %v1415 = vunpack.c.l.bf16 %v1391
      %v1416 = vunpack.c.l.bf16 %v1392
      %v1417 = vunpack.c.l.bf16 %v1393
      %v1418 = vunpack.c.l.bf16 %v1394
      %v1419 = vunpack.c.l.bf16 %v1395
      %v1420 = vunpack.c.l.bf16 %v1396
      %v1421 = vld [vmem:[%s1 + $0x7] sm:$0x1]
      %v1422 = vlaneseq
      %v1423 = vshrl.u32 %v1422, 7
      %v1424 = vsub.s32 0, %v1423
      %v1425 = vrot.slane %v1421, %v1424
      %v1426 = vmul.f32 %v1397, %v1425
      %v1427 = vmul.f32 %v1398, %v1425
      %v1428 = vmul.f32 %v1399, %v1425
      %v1429 = vmul.f32 %v1400, %v1425
      %v1430 = vmul.f32 %v1401, %v1425
      %v1431 = vmul.f32 %v1402, %v1425
      %v1432 = vmul.f32 %v1403, %v1425
      %v1433 = vmul.f32 %v1404, %v1425
      %v1434 = vmul.f32 %v1405, %v1425
      %v1435 = vmul.f32 %v1406, %v1425
      %v1436 = vmul.f32 %v1407, %v1425
      %v1437 = vmul.f32 %v1408, %v1425
      %v1438 = vmul.f32 %v1409, %v1425
      %v1439 = vmul.f32 %v1410, %v1425
      %v1440 = vmul.f32 %v1411, %v1425
      %v1441 = vmul.f32 %v1412, %v1425
      %v1442 = vmul.f32 %v1413, %v1425
      %v1443 = vmul.f32 %v1414, %v1425
      %v1444 = vmul.f32 %v1415, %v1425
      %v1445 = vmul.f32 %v1416, %v1425
      %v1446 = vmul.f32 %v1417, %v1425
      %v1447 = vmul.f32 %v1418, %v1425
      %v1448 = vmul.f32 %v1419, %v1425
      %v1449 = vmul.f32 %v1420, %v1425
      %v1450 = vld [vmem:[#allocation4] sm:$0xff]
      %v1451 = vld [vmem:[#allocation4 + $0x8] sm:$0xff]
      %v1452 = vld [vmem:[#allocation4 + $0x10] sm:$0xff]
      %v1453 = vld [vmem:[#allocation4 + $0x18] sm:$0xff]
      %v1454 = vld [vmem:[#allocation4 + $0x20] sm:$0xff]
      %v1455 = vld [vmem:[#allocation4 + $0x28] sm:$0xff]
      %v1456 = vld [vmem:[#allocation4 + $0x30] sm:$0xff]
      %v1457 = vld [vmem:[#allocation4 + $0x38] sm:$0xff]
      %v1458 = vld [vmem:[#allocation4 + $0x40] sm:$0xff]
      %v1459 = vld [vmem:[#allocation4 + $0x48] sm:$0xff]
      %v1460 = vld [vmem:[#allocation4 + $0x50] sm:$0xff]
      %v1461 = vld [vmem:[#allocation4 + $0x58] sm:$0xff]
      %v1462 = vld [vmem:[#allocation4 + $0x60] sm:$0xff]
      %v1463 = vld [vmem:[#allocation4 + $0x68] sm:$0xff]
      %v1464 = vld [vmem:[#allocation4 + $0x70] sm:$0xff]
      %v1465 = vld [vmem:[#allocation4 + $0x78] sm:$0xff]
      %v1490 = vrot.slane %v1426, 1
      %v1491 = vrot.slane %v1427, 1
      %v1492 = vsel %vm464, %v1490, %v1491
      %v1493 = vrot.slane %v1428, 1
      %v1494 = vsel %vm464, %v1491, %v1493
      %v1495 = vrot.slane %v1429, 1
      %v1496 = vrot.slane %v1430, 1
      %v1497 = vsel %vm464, %v1495, %v1496
      %v1498 = vrot.slane %v1431, 1
      %v1499 = vsel %vm464, %v1496, %v1498
      %v1500 = vrot.slane %v1432, 1
      %v1501 = vrot.slane %v1433, 1
      %v1502 = vsel %vm464, %v1500, %v1501
      %v1503 = vrot.slane %v1434, 1
      %v1504 = vsel %vm464, %v1501, %v1503
      %v1505 = vrot.slane %v1435, 1
      %v1506 = vrot.slane %v1436, 1
      %v1507 = vsel %vm464, %v1505, %v1506
      %v1508 = vrot.slane %v1437, 1
      %v1509 = vsel %vm464, %v1506, %v1508
      %v1510 = vrot.slane %v1438, 1
      %v1511 = vrot.slane %v1439, 1
      %v1512 = vsel %vm464, %v1510, %v1511
      %v1513 = vrot.slane %v1440, 1
      %v1514 = vsel %vm464, %v1511, %v1513
      %v1515 = vrot.slane %v1441, 1
      %v1516 = vrot.slane %v1442, 1
      %v1517 = vsel %vm464, %v1515, %v1516
      %v1518 = vrot.slane %v1443, 1
      %v1519 = vsel %vm464, %v1516, %v1518
      %v1520 = vrot.slane %v1444, 1
      %v1521 = vrot.slane %v1445, 1
      %v1522 = vsel %vm464, %v1520, %v1521
      %v1523 = vrot.slane %v1446, 1
      %v1524 = vsel %vm464, %v1521, %v1523
      %v1525 = vrot.slane %v1447, 1
      %v1526 = vrot.slane %v1448, 1
      %v1527 = vsel %vm464, %v1525, %v1526
      %v1528 = vrot.slane %v1449, 1
      %v1529 = vsel %vm464, %v1526, %v1528
      %v1546 = vadd.f32 %v1450, %v1492
      %v1547 = vadd.f32 %v1451, %v1494
      %v1548 = vadd.f32 %v1452, %v1497
      %v1549 = vadd.f32 %v1453, %v1499
      %v1550 = vadd.f32 %v1454, %v1502
      %v1551 = vadd.f32 %v1455, %v1504
      %v1552 = vadd.f32 %v1456, %v1507
      %v1553 = vadd.f32 %v1457, %v1509
      %v1554 = vadd.f32 %v1458, %v1512
      %v1555 = vadd.f32 %v1459, %v1514
      %v1556 = vadd.f32 %v1460, %v1517
      %v1557 = vadd.f32 %v1461, %v1519
      %v1558 = vadd.f32 %v1462, %v1522
      %v1559 = vadd.f32 %v1463, %v1524
      %v1560 = vadd.f32 %v1464, %v1527
      %v1561 = vadd.f32 %v1465, %v1529
      %1562 = vst [vmem:[#allocation4] sm:$0xff] %v1546
      %1563 = vst [vmem:[#allocation4 + $0x8] sm:$0xff] %v1547
      %1564 = vst [vmem:[#allocation4 + $0x10] sm:$0xff] %v1548
      %1565 = vst [vmem:[#allocation4 + $0x18] sm:$0xff] %v1549
      %1566 = vst [vmem:[#allocation4 + $0x20] sm:$0xff] %v1550
      %1567 = vst [vmem:[#allocation4 + $0x28] sm:$0xff] %v1551
      %1568 = vst [vmem:[#allocation4 + $0x30] sm:$0xff] %v1552
      %1569 = vst [vmem:[#allocation4 + $0x38] sm:$0xff] %v1553
      %1570 = vst [vmem:[#allocation4 + $0x40] sm:$0xff] %v1554
      %1571 = vst [vmem:[#allocation4 + $0x48] sm:$0xff] %v1555
      %1572 = vst [vmem:[#allocation4 + $0x50] sm:$0xff] %v1556
      %1573 = vst [vmem:[#allocation4 + $0x58] sm:$0xff] %v1557
      %1574 = vst [vmem:[#allocation4 + $0x60] sm:$0xff] %v1558
      %1575 = vst [vmem:[#allocation4 + $0x68] sm:$0xff] %v1559
      %1576 = vst [vmem:[#allocation4 + $0x70] sm:$0xff] %v1560
      %1577 = vst [vmem:[#allocation4 + $0x78] sm:$0xff] %v1561
      %v1578 = vld [vmem:[%s1271] sm:$0xe]
      %v1579 = vld [vmem:[%s1271 + $0x4] sm:$0xf]
      %v1580 = vld [vmem:[%s1271 + $0x8] sm:$0x1]
      %v1581 = vld [vmem:[%s1271 + $0xc] sm:$0xe]
      %v1582 = vld [vmem:[%s1271 + $0x10] sm:$0xf]
      %v1583 = vld [vmem:[%s1271 + $0x14] sm:$0x1]
      %v1584 = vld [vmem:[%s1271 + $0x18] sm:$0xe]
      %v1585 = vld [vmem:[%s1271 + $0x1c] sm:$0xf]
      %v1586 = vld [vmem:[%s1271 + $0x20] sm:$0x1]
      %v1587 = vld [vmem:[%s1271 + $0x24] sm:$0xe]
      %v1588 = vld [vmem:[%s1271 + $0x28] sm:$0xf]
      %v1589 = vld [vmem:[%s1271 + $0x2c] sm:$0x1]
      %v1590 = vld [vmem:[%s1271 + $0x30] sm:$0xe]
      %v1591 = vld [vmem:[%s1271 + $0x34] sm:$0xf]
      %v1592 = vld [vmem:[%s1271 + $0x38] sm:$0x1]
      %v1593 = vld [vmem:[%s1271 + $0x3c] sm:$0xe]
      %v1594 = vld [vmem:[%s1271 + $0x40] sm:$0xf]
      %v1595 = vld [vmem:[%s1271 + $0x44] sm:$0x1]
      %v1596 = vld [vmem:[%s1271 + $0x48] sm:$0xe]
      %v1597 = vld [vmem:[%s1271 + $0x4c] sm:$0xf]
      %v1598 = vld [vmem:[%s1271 + $0x50] sm:$0x1]
      %v1599 = vld [vmem:[%s1271 + $0x54] sm:$0xe]
      %v1600 = vld [vmem:[%s1271 + $0x58] sm:$0xf]
      %v1601 = vld [vmem:[%s1271 + $0x5c] sm:$0x1]
      %v1602 = vunpack.c.l.bf16 %v1578
      %v1603 = vunpack.c.l.bf16 %v1579
      %v1604 = vunpack.c.l.bf16 %v1580
      %v1605 = vunpack.c.l.bf16 %v1581
      %v1606 = vunpack.c.l.bf16 %v1582
      %v1607 = vunpack.c.l.bf16 %v1583
      %v1608 = vunpack.c.l.bf16 %v1584
      %v1609 = vunpack.c.l.bf16 %v1585
      %v1610 = vunpack.c.l.bf16 %v1586
      %v1611 = vunpack.c.l.bf16 %v1587
      %v1612 = vunpack.c.l.bf16 %v1588
      %v1613 = vunpack.c.l.bf16 %v1589
      %v1614 = vunpack.c.l.bf16 %v1590
      %v1615 = vunpack.c.l.bf16 %v1591
      %v1616 = vunpack.c.l.bf16 %v1592
      %v1617 = vunpack.c.l.bf16 %v1593
      %v1618 = vunpack.c.l.bf16 %v1594
      %v1619 = vunpack.c.l.bf16 %v1595
      %v1620 = vunpack.c.l.bf16 %v1596
      %v1621 = vunpack.c.l.bf16 %v1597
      %v1622 = vunpack.c.l.bf16 %v1598
      %v1623 = vunpack.c.l.bf16 %v1599
      %v1624 = vunpack.c.l.bf16 %v1600
      %v1625 = vunpack.c.l.bf16 %v1601
      %v1626 = vld [vmem:[%s1 + $0x8] sm:$0x1]
      %v1627 = vlaneseq
      %v1628 = vshrl.u32 %v1627, 7
      %v1629 = vsub.s32 0, %v1628
      %v1630 = vrot.slane %v1626, %v1629
      %v1631 = vmul.f32 %v1602, %v1630
      %v1632 = vmul.f32 %v1603, %v1630
      %v1633 = vmul.f32 %v1604, %v1630
      %v1634 = vmul.f32 %v1605, %v1630
      %v1635 = vmul.f32 %v1606, %v1630
      %v1636 = vmul.f32 %v1607, %v1630
      %v1637 = vmul.f32 %v1608, %v1630
      %v1638 = vmul.f32 %v1609, %v1630
      %v1639 = vmul.f32 %v1610, %v1630
      %v1640 = vmul.f32 %v1611, %v1630
      %v1641 = vmul.f32 %v1612, %v1630
      %v1642 = vmul.f32 %v1613, %v1630
      %v1643 = vmul.f32 %v1614, %v1630
      %v1644 = vmul.f32 %v1615, %v1630
      %v1645 = vmul.f32 %v1616, %v1630
      %v1646 = vmul.f32 %v1617, %v1630
      %v1647 = vmul.f32 %v1618, %v1630
      %v1648 = vmul.f32 %v1619, %v1630
      %v1649 = vmul.f32 %v1620, %v1630
      %v1650 = vmul.f32 %v1621, %v1630
      %v1651 = vmul.f32 %v1622, %v1630
      %v1652 = vmul.f32 %v1623, %v1630
      %v1653 = vmul.f32 %v1624, %v1630
      %v1654 = vmul.f32 %v1625, %v1630
      %v1655 = vld [vmem:[#allocation4] sm:$0xff]
      %v1656 = vld [vmem:[#allocation4 + $0x8] sm:$0xff]
      %v1657 = vld [vmem:[#allocation4 + $0x10] sm:$0xff]
      %v1658 = vld [vmem:[#allocation4 + $0x18] sm:$0xff]
      %v1659 = vld [vmem:[#allocation4 + $0x20] sm:$0xff]
      %v1660 = vld [vmem:[#allocation4 + $0x28] sm:$0xff]
      %v1661 = vld [vmem:[#allocation4 + $0x30] sm:$0xff]
      %v1662 = vld [vmem:[#allocation4 + $0x38] sm:$0xff]
      %v1663 = vld [vmem:[#allocation4 + $0x40] sm:$0xff]
      %v1664 = vld [vmem:[#allocation4 + $0x48] sm:$0xff]
      %v1665 = vld [vmem:[#allocation4 + $0x50] sm:$0xff]
      %v1666 = vld [vmem:[#allocation4 + $0x58] sm:$0xff]
      %v1667 = vld [vmem:[#allocation4 + $0x60] sm:$0xff]
      %v1668 = vld [vmem:[#allocation4 + $0x68] sm:$0xff]
      %v1669 = vld [vmem:[#allocation4 + $0x70] sm:$0xff]
      %v1670 = vld [vmem:[#allocation4 + $0x78] sm:$0xff]
      %v1695 = vrot.slane %v1631, 2
      %v1696 = vrot.slane %v1632, 2
      %v1697 = vsel %vm670, %v1695, %v1696
      %v1698 = vrot.slane %v1633, 2
      %v1699 = vsel %vm670, %v1696, %v1698
      %v1700 = vrot.slane %v1634, 2
      %v1701 = vrot.slane %v1635, 2
      %v1702 = vsel %vm670, %v1700, %v1701
      %v1703 = vrot.slane %v1636, 2
      %v1704 = vsel %vm670, %v1701, %v1703
      %v1705 = vrot.slane %v1637, 2
      %v1706 = vrot.slane %v1638, 2
      %v1707 = vsel %vm670, %v1705, %v1706
      %v1708 = vrot.slane %v1639, 2
      %v1709 = vsel %vm670, %v1706, %v1708
      %v1710 = vrot.slane %v1640, 2
      %v1711 = vrot.slane %v1641, 2
      %v1712 = vsel %vm670, %v1710, %v1711
      %v1713 = vrot.slane %v1642, 2
      %v1714 = vsel %vm670, %v1711, %v1713
      %v1715 = vrot.slane %v1643, 2
      %v1716 = vrot.slane %v1644, 2
      %v1717 = vsel %vm670, %v1715, %v1716
      %v1718 = vrot.slane %v1645, 2
      %v1719 = vsel %vm670, %v1716, %v1718
      %v1720 = vrot.slane %v1646, 2
      %v1721 = vrot.slane %v1647, 2
      %v1722 = vsel %vm670, %v1720, %v1721
      %v1723 = vrot.slane %v1648, 2
      %v1724 = vsel %vm670, %v1721, %v1723
      %v1725 = vrot.slane %v1649, 2
      %v1726 = vrot.slane %v1650, 2
      %v1727 = vsel %vm670, %v1725, %v1726
      %v1728 = vrot.slane %v1651, 2
      %v1729 = vsel %vm670, %v1726, %v1728
      %v1730 = vrot.slane %v1652, 2
      %v1731 = vrot.slane %v1653, 2
      %v1732 = vsel %vm670, %v1730, %v1731
      %v1733 = vrot.slane %v1654, 2
      %v1734 = vsel %vm670, %v1731, %v1733
      %v1751 = vadd.f32 %v1655, %v1697
      %v1752 = vadd.f32 %v1656, %v1699
      %v1753 = vadd.f32 %v1657, %v1702
      %v1754 = vadd.f32 %v1658, %v1704
      %v1755 = vadd.f32 %v1659, %v1707
      %v1756 = vadd.f32 %v1660, %v1709
      %v1757 = vadd.f32 %v1661, %v1712
      %v1758 = vadd.f32 %v1662, %v1714
      %v1759 = vadd.f32 %v1663, %v1717
      %v1760 = vadd.f32 %v1664, %v1719
      %v1761 = vadd.f32 %v1665, %v1722
      %v1762 = vadd.f32 %v1666, %v1724
      %v1763 = vadd.f32 %v1667, %v1727
      %v1764 = vadd.f32 %v1668, %v1729
      %v1765 = vadd.f32 %v1669, %v1732
      %v1766 = vadd.f32 %v1670, %v1734
      %1767 = vst [vmem:[#allocation4] sm:$0xff] %v1751
      %1768 = vst [vmem:[#allocation4 + $0x8] sm:$0xff] %v1752
      %1769 = vst [vmem:[#allocation4 + $0x10] sm:$0xff] %v1753
      %1770 = vst [vmem:[#allocation4 + $0x18] sm:$0xff] %v1754
      %1771 = vst [vmem:[#allocation4 + $0x20] sm:$0xff] %v1755
      %1772 = vst [vmem:[#allocation4 + $0x28] sm:$0xff] %v1756
      %1773 = vst [vmem:[#allocation4 + $0x30] sm:$0xff] %v1757
      %1774 = vst [vmem:[#allocation4 + $0x38] sm:$0xff] %v1758
      %1775 = vst [vmem:[#allocation4 + $0x40] sm:$0xff] %v1759
      %1776 = vst [vmem:[#allocation4 + $0x48] sm:$0xff] %v1760
      %1777 = vst [vmem:[#allocation4 + $0x50] sm:$0xff] %v1761
      %1778 = vst [vmem:[#allocation4 + $0x58] sm:$0xff] %v1762
      %1779 = vst [vmem:[#allocation4 + $0x60] sm:$0xff] %v1763
      %1780 = vst [vmem:[#allocation4 + $0x68] sm:$0xff] %v1764
      %1781 = vst [vmem:[#allocation4 + $0x70] sm:$0xff] %v1765
      %1782 = vst [vmem:[#allocation4 + $0x78] sm:$0xff] %v1766
      %v1783 = vld [vmem:[#allocation4] sm:$0xff]
      %v1784 = vld [vmem:[#allocation4 + $0x10] sm:$0xff]
      %v1785 = vld [vmem:[#allocation4 + $0x20] sm:$0xff]
      %v1786 = vld [vmem:[#allocation4 + $0x30] sm:$0xff]
      %v1787 = vld [vmem:[#allocation4 + $0x40] sm:$0xff]
      %v1788 = vld [vmem:[#allocation4 + $0x50] sm:$0xff]
      %v1789 = vld [vmem:[#allocation4 + $0x60] sm:$0xff]
      %v1790 = vld [vmem:[#allocation4 + $0x70] sm:$0xff]
      %v1791 = vmax.f32 %v1783, %v1787
      %v1792 = vmax.f32 %v1784, %v1788
      %v1793 = vmax.f32 %v1785, %v1789
      %v1794 = vmax.f32 %v1786, %v1790
      %v1795 = vmax.f32 %v1791, %v1792
      %v1796 = vmax.f32 %v1793, %v1794
      %v1797 = vmax.f32 %v1795, %v1796
      %v1798 = vrot.slane %v1797, 4
      %v1799 = vmax.f32 %v1797, %v1798
      %v1800 = vrot.slane %v1799, 2
      %v1801 = vmax.f32 %v1799, %v1800
      %v1802 = vrot.slane %v1801, 1
      %v1803 = vmax.f32 %v1801, %v1802
      %v1804 = vld [vmem:[#allocation4 + $0x8] sm:$0xff]
      %v1805 = vld [vmem:[#allocation4 + $0x18] sm:$0xff]
      %v1806 = vld [vmem:[#allocation4 + $0x28] sm:$0xff]
      %v1807 = vld [vmem:[#allocation4 + $0x38] sm:$0xff]
      %v1808 = vld [vmem:[#allocation4 + $0x48] sm:$0xff]
      %v1809 = vld [vmem:[#allocation4 + $0x58] sm:$0xff]
      %v1810 = vld [vmem:[#allocation4 + $0x68] sm:$0xff]
      %v1811 = vld [vmem:[#allocation4 + $0x78] sm:$0xff]
      %v1812 = vmax.f32 %v1804, %v1808
      %v1813 = vmax.f32 %v1805, %v1809
      %v1814 = vmax.f32 %v1806, %v1810
      %v1815 = vmax.f32 %v1807, %v1811
      %v1816 = vmax.f32 %v1812, %v1813
      %v1817 = vmax.f32 %v1814, %v1815
      %v1818 = vmax.f32 %v1816, %v1817
      %v1819 = vrot.slane %v1818, 4
      %v1820 = vmax.f32 %v1818, %v1819
      %v1821 = vrot.slane %v1820, 2
      %v1822 = vmax.f32 %v1820, %v1821
      %v1823 = vrot.slane %v1822, 1
      %v1824 = vmax.f32 %v1822, %v1823
      %vm1825 = vcmask 1040384
      %v1826 = vsel %vm1825, %v1803, %v1824
      %v1827 = vld [vmem:[%s2] sm:$0x1]
      %v1829 = vlaneseq
      %v1830 = vshrl.u32 %v1829, 7
      %v1831 = vsub.s32 0, %v1830
      %v1832 = vrot.slane %v1827, %v1831
      %v1834 = vadd.f32 %v1826, %v1832
      %1835 = vst [vmem:[%s124] sm:$0x3] %v1834
      %s1836 = sshll.u32 %s275, 4
      %1837 = dma.done %s202, %s1836
      %v1838 = vld [vmem:[%s201] sm:$0xf]
      %v1839 = vld [vmem:[%s201 + $0x4] sm:$0xf]
      %v1840 = vld [vmem:[%s201 + $0xc] sm:$0xf]
      %v1841 = vld [vmem:[%s201 + $0x10] sm:$0xf]
      %v1842 = vld [vmem:[%s201 + $0x18] sm:$0xf]
      %v1843 = vld [vmem:[%s201 + $0x1c] sm:$0xf]
      %v1844 = vld [vmem:[%s201 + $0x24] sm:$0xf]
      %v1845 = vld [vmem:[%s201 + $0x28] sm:$0xf]
      %v1846 = vld [vmem:[%s201 + $0x30] sm:$0xf]
      %v1847 = vld [vmem:[%s201 + $0x34] sm:$0xf]
      %v1848 = vld [vmem:[%s201 + $0x3c] sm:$0xf]
      %v1849 = vld [vmem:[%s201 + $0x40] sm:$0xf]
      %v1850 = vld [vmem:[%s201 + $0x48] sm:$0xf]
      %v1851 = vld [vmem:[%s201 + $0x4c] sm:$0xf]
      %v1852 = vld [vmem:[%s201 + $0x54] sm:$0xf]
      %v1853 = vld [vmem:[%s201 + $0x58] sm:$0xf]
      %v1854 = vunpack.c.l.bf16 %v1838
      %v1855 = vunpack.c.l.bf16 %v1839
      %v1856 = vunpack.c.l.bf16 %v1840
      %v1857 = vunpack.c.l.bf16 %v1841
      %v1858 = vunpack.c.l.bf16 %v1842
      %v1859 = vunpack.c.l.bf16 %v1843
      %v1860 = vunpack.c.l.bf16 %v1844
      %v1861 = vunpack.c.l.bf16 %v1845
      %v1862 = vunpack.c.l.bf16 %v1846
      %v1863 = vunpack.c.l.bf16 %v1847
      %v1864 = vunpack.c.l.bf16 %v1848
      %v1865 = vunpack.c.l.bf16 %v1849
      %v1866 = vunpack.c.l.bf16 %v1850
      %v1867 = vunpack.c.l.bf16 %v1851
      %v1868 = vunpack.c.l.bf16 %v1852
      %v1869 = vunpack.c.l.bf16 %v1853
      %v1870 = vld [vmem:[%s1] sm:$0x1]
      %v1871 = vlaneseq
      %v1872 = vshrl.u32 %v1871, 7
      %v1873 = vsub.s32 0, %v1872
      %v1874 = vrot.slane %v1870, %v1873
      %v1875 = vmul.f32 %v1854, %v1874
      %v1876 = vmul.f32 %v1855, %v1874
      %v1877 = vmul.f32 %v1856, %v1874
      %v1878 = vmul.f32 %v1857, %v1874
      %v1879 = vmul.f32 %v1858, %v1874
      %v1880 = vmul.f32 %v1859, %v1874
      %v1881 = vmul.f32 %v1860, %v1874
      %v1882 = vmul.f32 %v1861, %v1874
      %v1883 = vmul.f32 %v1862, %v1874
      %v1884 = vmul.f32 %v1863, %v1874
      %v1885 = vmul.f32 %v1864, %v1874
      %v1886 = vmul.f32 %v1865, %v1874
      %v1887 = vmul.f32 %v1866, %v1874
      %v1888 = vmul.f32 %v1867, %v1874
      %v1889 = vmul.f32 %v1868, %v1874
      %v1890 = vmul.f32 %v1869, %v1874
      %1891 = vst [vmem:[#allocation4] sm:$0xff] %v1875
      %1892 = vst [vmem:[#allocation4 + $0x8] sm:$0xff] %v1876
      %1893 = vst [vmem:[#allocation4 + $0x10] sm:$0xff] %v1877
      %1894 = vst [vmem:[#allocation4 + $0x18] sm:$0xff] %v1878
      %1895 = vst [vmem:[#allocation4 + $0x20] sm:$0xff] %v1879
      %1896 = vst [vmem:[#allocation4 + $0x28] sm:$0xff] %v1880
      %1897 = vst [vmem:[#allocation4 + $0x30] sm:$0xff] %v1881
      %1898 = vst [vmem:[#allocation4 + $0x38] sm:$0xff] %v1882
      %1899 = vst [vmem:[#allocation4 + $0x40] sm:$0xff] %v1883
      %1900 = vst [vmem:[#allocation4 + $0x48] sm:$0xff] %v1884
      %1901 = vst [vmem:[#allocation4 + $0x50] sm:$0xff] %v1885
      %1902 = vst [vmem:[#allocation4 + $0x58] sm:$0xff] %v1886
      %1903 = vst [vmem:[#allocation4 + $0x60] sm:$0xff] %v1887
      %1904 = vst [vmem:[#allocation4 + $0x68] sm:$0xff] %v1888
      %1905 = vst [vmem:[#allocation4 + $0x70] sm:$0xff] %v1889
      %1906 = vst [vmem:[#allocation4 + $0x78] sm:$0xff] %v1890
      %v1907 = vld [vmem:[%s201] sm:$0xf]
      %v1908 = vld [vmem:[%s201 + $0x4] sm:$0xf]
      %v1909 = vld [vmem:[%s201 + $0x8] sm:$0x1]
      %v1910 = vld [vmem:[%s201 + $0xc] sm:$0xf]
      %v1911 = vld [vmem:[%s201 + $0x10] sm:$0xf]
      %v1912 = vld [vmem:[%s201 + $0x14] sm:$0x1]
      %v1913 = vld [vmem:[%s201 + $0x18] sm:$0xf]
      %v1914 = vld [vmem:[%s201 + $0x1c] sm:$0xf]
      %v1915 = vld [vmem:[%s201 + $0x20] sm:$0x1]
      %v1916 = vld [vmem:[%s201 + $0x24] sm:$0xf]
      %v1917 = vld [vmem:[%s201 + $0x28] sm:$0xf]
      %v1918 = vld [vmem:[%s201 + $0x2c] sm:$0x1]
      %v1919 = vld [vmem:[%s201 + $0x30] sm:$0xf]
      %v1920 = vld [vmem:[%s201 + $0x34] sm:$0xf]
      %v1921 = vld [vmem:[%s201 + $0x38] sm:$0x1]
      %v1922 = vld [vmem:[%s201 + $0x3c] sm:$0xf]
      %v1923 = vld [vmem:[%s201 + $0x40] sm:$0xf]
      %v1924 = vld [vmem:[%s201 + $0x44] sm:$0x1]
      %v1925 = vld [vmem:[%s201 + $0x48] sm:$0xf]
      %v1926 = vld [vmem:[%s201 + $0x4c] sm:$0xf]
      %v1927 = vld [vmem:[%s201 + $0x50] sm:$0x1]
      %v1928 = vld [vmem:[%s201 + $0x54] sm:$0xf]
      %v1929 = vld [vmem:[%s201 + $0x58] sm:$0xf]
      %v1930 = vld [vmem:[%s201 + $0x5c] sm:$0x1]
      %v1931 = vunpack.c.l.bf16 %v1907
      %v1932 = vunpack.c.l.bf16 %v1908
      %v1933 = vunpack.c.l.bf16 %v1909
      %v1934 = vunpack.c.l.bf16 %v1910
      %v1935 = vunpack.c.l.bf16 %v1911
      %v1936 = vunpack.c.l.bf16 %v1912
      %v1937 = vunpack.c.l.bf16 %v1913
      %v1938 = vunpack.c.l.bf16 %v1914
      %v1939 = vunpack.c.l.bf16 %v1915
      %v1940 = vunpack.c.l.bf16 %v1916
      %v1941 = vunpack.c.l.bf16 %v1917
      %v1942 = vunpack.c.l.bf16 %v1918
      %v1943 = vunpack.c.l.bf16 %v1919
      %v1944 = vunpack.c.l.bf16 %v1920
      %v1945 = vunpack.c.l.bf16 %v1921
      %v1946 = vunpack.c.l.bf16 %v1922
      %v1947 = vunpack.c.l.bf16 %v1923
      %v1948 = vunpack.c.l.bf16 %v1924
      %v1949 = vunpack.c.l.bf16 %v1925
      %v1950 = vunpack.c.l.bf16 %v1926
      %v1951 = vunpack.c.l.bf16 %v1927
      %v1952 = vunpack.c.l.bf16 %v1928
      %v1953 = vunpack.c.l.bf16 %v1929
      %v1954 = vunpack.c.l.bf16 %v1930
      %v1955 = vld [vmem:[%s1 + $0x1] sm:$0x1]
      %v1956 = vlaneseq
      %v1957 = vshrl.u32 %v1956, 7
      %v1958 = vsub.s32 0, %v1957
      %v1959 = vrot.slane %v1955, %v1958
      %v1960 = vmul.f32 %v1931, %v1959
      %v1961 = vmul.f32 %v1932, %v1959
      %v1962 = vmul.f32 %v1933, %v1959
      %v1963 = vmul.f32 %v1934, %v1959
      %v1964 = vmul.f32 %v1935, %v1959
      %v1965 = vmul.f32 %v1936, %v1959
      %v1966 = vmul.f32 %v1937, %v1959
      %v1967 = vmul.f32 %v1938, %v1959
      %v1968 = vmul.f32 %v1939, %v1959
      %v1969 = vmul.f32 %v1940, %v1959
      %v1970 = vmul.f32 %v1941, %v1959
      %v1971 = vmul.f32 %v1942, %v1959
      %v1972 = vmul.f32 %v1943, %v1959
      %v1973 = vmul.f32 %v1944, %v1959
      %v1974 = vmul.f32 %v1945, %v1959
      %v1975 = vmul.f32 %v1946, %v1959
      %v1976 = vmul.f32 %v1947, %v1959
      %v1977 = vmul.f32 %v1948, %v1959
      %v1978 = vmul.f32 %v1949, %v1959
      %v1979 = vmul.f32 %v1950, %v1959
      %v1980 = vmul.f32 %v1951, %v1959
      %v1981 = vmul.f32 %v1952, %v1959
      %v1982 = vmul.f32 %v1953, %v1959
      %v1983 = vmul.f32 %v1954, %v1959
      %v1984 = vld [vmem:[#allocation4] sm:$0xff]
      %v1985 = vld [vmem:[#allocation4 + $0x8] sm:$0xff]
      %v1986 = vld [vmem:[#allocation4 + $0x10] sm:$0xff]
      %v1987 = vld [vmem:[#allocation4 + $0x18] sm:$0xff]
      %v1988 = vld [vmem:[#allocation4 + $0x20] sm:$0xff]
      %v1989 = vld [vmem:[#allocation4 + $0x28] sm:$0xff]
      %v1990 = vld [vmem:[#allocation4 + $0x30] sm:$0xff]
      %v1991 = vld [vmem:[#allocation4 + $0x38] sm:$0xff]
      %v1992 = vld [vmem:[#allocation4 + $0x40] sm:$0xff]
      %v1993 = vld [vmem:[#allocation4 + $0x48] sm:$0xff]
      %v1994 = vld [vmem:[#allocation4 + $0x50] sm:$0xff]
      %v1995 = vld [vmem:[#allocation4 + $0x58] sm:$0xff]
      %v1996 = vld [vmem:[#allocation4 + $0x60] sm:$0xff]
      %v1997 = vld [vmem:[#allocation4 + $0x68] sm:$0xff]
      %v1998 = vld [vmem:[#allocation4 + $0x70] sm:$0xff]
      %v1999 = vld [vmem:[#allocation4 + $0x78] sm:$0xff]
      %v2024 = vrot.slane %v1960, 1
      %v2025 = vrot.slane %v1961, 1
      %v2026 = vsel %vm464, %v2024, %v2025
      %v2027 = vrot.slane %v1962, 1
      %v2028 = vsel %vm464, %v2025, %v2027
      %v2029 = vrot.slane %v1963, 1
      %v2030 = vrot.slane %v1964, 1
      %v2031 = vsel %vm464, %v2029, %v2030
      %v2032 = vrot.slane %v1965, 1
      %v2033 = vsel %vm464, %v2030, %v2032
      %v2034 = vrot.slane %v1966, 1
      %v2035 = vrot.slane %v1967, 1
      %v2036 = vsel %vm464, %v2034, %v2035
      %v2037 = vrot.slane %v1968, 1
      %v2038 = vsel %vm464, %v2035, %v2037
      %v2039 = vrot.slane %v1969, 1
      %v2040 = vrot.slane %v1970, 1
      %v2041 = vsel %vm464, %v2039, %v2040
      %v2042 = vrot.slane %v1971, 1
      %v2043 = vsel %vm464, %v2040, %v2042
      %v2044 = vrot.slane %v1972, 1
      %v2045 = vrot.slane %v1973, 1
      %v2046 = vsel %vm464, %v2044, %v2045
      %v2047 = vrot.slane %v1974, 1
      %v2048 = vsel %vm464, %v2045, %v2047
      %v2049 = vrot.slane %v1975, 1
      %v2050 = vrot.slane %v1976, 1
      %v2051 = vsel %vm464, %v2049, %v2050
      %v2052 = vrot.slane %v1977, 1
      %v2053 = vsel %vm464, %v2050, %v2052
      %v2054 = vrot.slane %v1978, 1
      %v2055 = vrot.slane %v1979, 1
      %v2056 = vsel %vm464, %v2054, %v2055
      %v2057 = vrot.slane %v1980, 1
      %v2058 = vsel %vm464, %v2055, %v2057
      %v2059 = vrot.slane %v1981, 1
      %v2060 = vrot.slane %v1982, 1
      %v2061 = vsel %vm464, %v2059, %v2060
      %v2062 = vrot.slane %v1983, 1
      %v2063 = vsel %vm464, %v2060, %v2062
      %v2080 = vadd.f32 %v1984, %v2026
      %v2081 = vadd.f32 %v1985, %v2028
      %v2082 = vadd.f32 %v1986, %v2031
      %v2083 = vadd.f32 %v1987, %v2033
      %v2084 = vadd.f32 %v1988, %v2036
      %v2085 = vadd.f32 %v1989, %v2038
      %v2086 = vadd.f32 %v1990, %v2041
      %v2087 = vadd.f32 %v1991, %v2043
      %v2088 = vadd.f32 %v1992, %v2046
      %v2089 = vadd.f32 %v1993, %v2048
      %v2090 = vadd.f32 %v1994, %v2051
      %v2091 = vadd.f32 %v1995, %v2053
      %v2092 = vadd.f32 %v1996, %v2056
      %v2093 = vadd.f32 %v1997, %v2058
      %v2094 = vadd.f32 %v1998, %v2061
      %v2095 = vadd.f32 %v1999, %v2063
      %2096 = vst [vmem:[#allocation4] sm:$0xff] %v2080
      %2097 = vst [vmem:[#allocation4 + $0x8] sm:$0xff] %v2081
      %2098 = vst [vmem:[#allocation4 + $0x10] sm:$0xff] %v2082
      %2099 = vst [vmem:[#allocation4 + $0x18] sm:$0xff] %v2083
      %2100 = vst [vmem:[#allocation4 + $0x20] sm:$0xff] %v2084
      %2101 = vst [vmem:[#allocation4 + $0x28] sm:$0xff] %v2085
      %2102 = vst [vmem:[#allocation4 + $0x30] sm:$0xff] %v2086
      %2103 = vst [vmem:[#allocation4 + $0x38] sm:$0xff] %v2087
      %2104 = vst [vmem:[#allocation4 + $0x40] sm:$0xff] %v2088
      %2105 = vst [vmem:[#allocation4 + $0x48] sm:$0xff] %v2089
      %2106 = vst [vmem:[#allocation4 + $0x50] sm:$0xff] %v2090
      %2107 = vst [vmem:[#allocation4 + $0x58] sm:$0xff] %v2091
      %2108 = vst [vmem:[#allocation4 + $0x60] sm:$0xff] %v2092
      %2109 = vst [vmem:[#allocation4 + $0x68] sm:$0xff] %v2093
      %2110 = vst [vmem:[#allocation4 + $0x70] sm:$0xff] %v2094
      %2111 = vst [vmem:[#allocation4 + $0x78] sm:$0xff] %v2095
      %v2112 = vld [vmem:[%s201] sm:$0xe]
      %v2113 = vld [vmem:[%s201 + $0x4] sm:$0xf]
      %v2114 = vld [vmem:[%s201 + $0x8] sm:$0x1]
      %v2115 = vld [vmem:[%s201 + $0xc] sm:$0xe]
      %v2116 = vld [vmem:[%s201 + $0x10] sm:$0xf]
      %v2117 = vld [vmem:[%s201 + $0x14] sm:$0x1]
      %v2118 = vld [vmem:[%s201 + $0x18] sm:$0xe]
      %v2119 = vld [vmem:[%s201 + $0x1c] sm:$0xf]
      %v2120 = vld [vmem:[%s201 + $0x20] sm:$0x1]
      %v2121 = vld [vmem:[%s201 + $0x24] sm:$0xe]
      %v2122 = vld [vmem:[%s201 + $0x28] sm:$0xf]
      %v2123 = vld [vmem:[%s201 + $0x2c] sm:$0x1]
      %v2124 = vld [vmem:[%s201 + $0x30] sm:$0xe]
      %v2125 = vld [vmem:[%s201 + $0x34] sm:$0xf]
      %v2126 = vld [vmem:[%s201 + $0x38] sm:$0x1]
      %v2127 = vld [vmem:[%s201 + $0x3c] sm:$0xe]
      %v2128 = vld [vmem:[%s201 + $0x40] sm:$0xf]
      %v2129 = vld [vmem:[%s201 + $0x44] sm:$0x1]
      %v2130 = vld [vmem:[%s201 + $0x48] sm:$0xe]
      %v2131 = vld [vmem:[%s201 + $0x4c] sm:$0xf]
      %v2132 = vld [vmem:[%s201 + $0x50] sm:$0x1]
      %v2133 = vld [vmem:[%s201 + $0x54] sm:$0xe]
      %v2134 = vld [vmem:[%s201 + $0x58] sm:$0xf]
      %v2135 = vld [vmem:[%s201 + $0x5c] sm:$0x1]
      %v2136 = vunpack.c.l.bf16 %v2112
      %v2137 = vunpack.c.l.bf16 %v2113
      %v2138 = vunpack.c.l.bf16 %v2114
      %v2139 = vunpack.c.l.bf16 %v2115
      %v2140 = vunpack.c.l.bf16 %v2116
      %v2141 = vunpack.c.l.bf16 %v2117
      %v2142 = vunpack.c.l.bf16 %v2118
      %v2143 = vunpack.c.l.bf16 %v2119
      %v2144 = vunpack.c.l.bf16 %v2120
      %v2145 = vunpack.c.l.bf16 %v2121
      %v2146 = vunpack.c.l.bf16 %v2122
      %v2147 = vunpack.c.l.bf16 %v2123
      %v2148 = vunpack.c.l.bf16 %v2124
      %v2149 = vunpack.c.l.bf16 %v2125
      %v2150 = vunpack.c.l.bf16 %v2126
      %v2151 = vunpack.c.l.bf16 %v2127
      %v2152 = vunpack.c.l.bf16 %v2128
      %v2153 = vunpack.c.l.bf16 %v2129
      %v2154 = vunpack.c.l.bf16 %v2130
      %v2155 = vunpack.c.l.bf16 %v2131
      %v2156 = vunpack.c.l.bf16 %v2132
      %v2157 = vunpack.c.l.bf16 %v2133
      %v2158 = vunpack.c.l.bf16 %v2134
      %v2159 = vunpack.c.l.bf16 %v2135
      %v2160 = vld [vmem:[%s1 + $0x2] sm:$0x1]
      %v2161 = vlaneseq
      %v2162 = vshrl.u32 %v2161, 7
      %v2163 = vsub.s32 0, %v2162
      %v2164 = vrot.slane %v2160, %v2163
      %v2165 = vmul.f32 %v2136, %v2164
      %v2166 = vmul.f32 %v2137, %v2164
      %v2167 = vmul.f32 %v2138, %v2164
      %v2168 = vmul.f32 %v2139, %v2164
      %v2169 = vmul.f32 %v2140, %v2164
      %v2170 = vmul.f32 %v2141, %v2164
      %v2171 = vmul.f32 %v2142, %v2164
      %v2172 = vmul.f32 %v2143, %v2164
      %v2173 = vmul.f32 %v2144, %v2164
      %v2174 = vmul.f32 %v2145, %v2164
      %v2175 = vmul.f32 %v2146, %v2164
      %v2176 = vmul.f32 %v2147, %v2164
      %v2177 = vmul.f32 %v2148, %v2164
      %v2178 = vmul.f32 %v2149, %v2164
      %v2179 = vmul.f32 %v2150, %v2164
      %v2180 = vmul.f32 %v2151, %v2164
      %v2181 = vmul.f32 %v2152, %v2164
      %v2182 = vmul.f32 %v2153, %v2164
      %v2183 = vmul.f32 %v2154, %v2164
      %v2184 = vmul.f32 %v2155, %v2164
      %v2185 = vmul.f32 %v2156, %v2164
      %v2186 = vmul.f32 %v2157, %v2164
      %v2187 = vmul.f32 %v2158, %v2164
      %v2188 = vmul.f32 %v2159, %v2164
      %v2189 = vld [vmem:[#allocation4] sm:$0xff]
      %v2190 = vld [vmem:[#allocation4 + $0x8] sm:$0xff]
      %v2191 = vld [vmem:[#allocation4 + $0x10] sm:$0xff]
      %v2192 = vld [vmem:[#allocation4 + $0x18] sm:$0xff]
      %v2193 = vld [vmem:[#allocation4 + $0x20] sm:$0xff]
      %v2194 = vld [vmem:[#allocation4 + $0x28] sm:$0xff]
      %v2195 = vld [vmem:[#allocation4 + $0x30] sm:$0xff]
      %v2196 = vld [vmem:[#allocation4 + $0x38] sm:$0xff]
      %v2197 = vld [vmem:[#allocation4 + $0x40] sm:$0xff]
      %v2198 = vld [vmem:[#allocation4 + $0x48] sm:$0xff]
      %v2199 = vld [vmem:[#allocation4 + $0x50] sm:$0xff]
      %v2200 = vld [vmem:[#allocation4 + $0x58] sm:$0xff]
      %v2201 = vld [vmem:[#allocation4 + $0x60] sm:$0xff]
      %v2202 = vld [vmem:[#allocation4 + $0x68] sm:$0xff]
      %v2203 = vld [vmem:[#allocation4 + $0x70] sm:$0xff]
      %v2204 = vld [vmem:[#allocation4 + $0x78] sm:$0xff]
      %v2229 = vrot.slane %v2165, 2
      %v2230 = vrot.slane %v2166, 2
      %v2231 = vsel %vm670, %v2229, %v2230
      %v2232 = vrot.slane %v2167, 2
      %v2233 = vsel %vm670, %v2230, %v2232
      %v2234 = vrot.slane %v2168, 2
      %v2235 = vrot.slane %v2169, 2
      %v2236 = vsel %vm670, %v2234, %v2235
      %v2237 = vrot.slane %v2170, 2
      %v2238 = vsel %vm670, %v2235, %v2237
      %v2239 = vrot.slane %v2171, 2
      %v2240 = vrot.slane %v2172, 2
      %v2241 = vsel %vm670, %v2239, %v2240
      %v2242 = vrot.slane %v2173, 2
      %v2243 = vsel %vm670, %v2240, %v2242
      %v2244 = vrot.slane %v2174, 2
      %v2245 = vrot.slane %v2175, 2
      %v2246 = vsel %vm670, %v2244, %v2245
      %v2247 = vrot.slane %v2176, 2
      %v2248 = vsel %vm670, %v2245, %v2247
      %v2249 = vrot.slane %v2177, 2
      %v2250 = vrot.slane %v2178, 2
      %v2251 = vsel %vm670, %v2249, %v2250
      %v2252 = vrot.slane %v2179, 2
      %v2253 = vsel %vm670, %v2250, %v2252
      %v2254 = vrot.slane %v2180, 2
      %v2255 = vrot.slane %v2181, 2
      %v2256 = vsel %vm670, %v2254, %v2255
      %v2257 = vrot.slane %v2182, 2
      %v2258 = vsel %vm670, %v2255, %v2257
      %v2259 = vrot.slane %v2183, 2
      %v2260 = vrot.slane %v2184, 2
      %v2261 = vsel %vm670, %v2259, %v2260
      %v2262 = vrot.slane %v2185, 2
      %v2263 = vsel %vm670, %v2260, %v2262
      %v2264 = vrot.slane %v2186, 2
      %v2265 = vrot.slane %v2187, 2
      %v2266 = vsel %vm670, %v2264, %v2265
      %v2267 = vrot.slane %v2188, 2
      %v2268 = vsel %vm670, %v2265, %v2267
      %v2285 = vadd.f32 %v2189, %v2231
      %v2286 = vadd.f32 %v2190, %v2233
      %v2287 = vadd.f32 %v2191, %v2236
      %v2288 = vadd.f32 %v2192, %v2238
      %v2289 = vadd.f32 %v2193, %v2241
      %v2290 = vadd.f32 %v2194, %v2243
      %v2291 = vadd.f32 %v2195, %v2246
      %v2292 = vadd.f32 %v2196, %v2248
      %v2293 = vadd.f32 %v2197, %v2251
      %v2294 = vadd.f32 %v2198, %v2253
      %v2295 = vadd.f32 %v2199, %v2256
      %v2296 = vadd.f32 %v2200, %v2258
      %v2297 = vadd.f32 %v2201, %v2261
      %v2298 = vadd.f32 %v2202, %v2263
      %v2299 = vadd.f32 %v2203, %v2266
      %v2300 = vadd.f32 %v2204, %v2268
      %2301 = vst [vmem:[#allocation4] sm:$0xff] %v2285
      %2302 = vst [vmem:[#allocation4 + $0x8] sm:$0xff] %v2286
      %2303 = vst [vmem:[#allocation4 + $0x10] sm:$0xff] %v2287
      %2304 = vst [vmem:[#allocation4 + $0x18] sm:$0xff] %v2288
      %2305 = vst [vmem:[#allocation4 + $0x20] sm:$0xff] %v2289
      %2306 = vst [vmem:[#allocation4 + $0x28] sm:$0xff] %v2290
      %2307 = vst [vmem:[#allocation4 + $0x30] sm:$0xff] %v2291
      %2308 = vst [vmem:[#allocation4 + $0x38] sm:$0xff] %v2292
      %2309 = vst [vmem:[#allocation4 + $0x40] sm:$0xff] %v2293
      %2310 = vst [vmem:[#allocation4 + $0x48] sm:$0xff] %v2294
      %2311 = vst [vmem:[#allocation4 + $0x50] sm:$0xff] %v2295
      %2312 = vst [vmem:[#allocation4 + $0x58] sm:$0xff] %v2296
      %2313 = vst [vmem:[#allocation4 + $0x60] sm:$0xff] %v2297
      %2314 = vst [vmem:[#allocation4 + $0x68] sm:$0xff] %v2298
      %2315 = vst [vmem:[#allocation4 + $0x70] sm:$0xff] %v2299
      %2316 = vst [vmem:[#allocation4 + $0x78] sm:$0xff] %v2300
      %s2317 = scalar_lea.vmem [#allocation2], 132
      %v2318 = vld [vmem:[%s2317] sm:$0xf]
      %v2319 = vld [vmem:[%s2317 + $0x4] sm:$0xf]
      %v2320 = vld [vmem:[%s2317 + $0xc] sm:$0xf]
      %v2321 = vld [vmem:[%s2317 + $0x10] sm:$0xf]
      %v2322 = vld [vmem:[%s2317 + $0x18] sm:$0xf]
      %v2323 = vld [vmem:[%s2317 + $0x1c] sm:$0xf]
      %v2324 = vld [vmem:[%s2317 + $0x24] sm:$0xf]
      %v2325 = vld [vmem:[%s2317 + $0x28] sm:$0xf]
      %v2326 = vld [vmem:[%s2317 + $0x30] sm:$0xf]
      %v2327 = vld [vmem:[%s2317 + $0x34] sm:$0xf]
      %v2328 = vld [vmem:[%s2317 + $0x3c] sm:$0xf]
      %v2329 = vld [vmem:[%s2317 + $0x40] sm:$0xf]
      %v2330 = vld [vmem:[%s2317 + $0x48] sm:$0xf]
      %v2331 = vld [vmem:[%s2317 + $0x4c] sm:$0xf]
      %v2332 = vld [vmem:[%s2317 + $0x54] sm:$0xf]
      %v2333 = vld [vmem:[%s2317 + $0x58] sm:$0xf]
      %v2334 = vunpack.c.l.bf16 %v2318
      %v2335 = vunpack.c.l.bf16 %v2319
      %v2336 = vunpack.c.l.bf16 %v2320
      %v2337 = vunpack.c.l.bf16 %v2321
      %v2338 = vunpack.c.l.bf16 %v2322
      %v2339 = vunpack.c.l.bf16 %v2323
      %v2340 = vunpack.c.l.bf16 %v2324
      %v2341 = vunpack.c.l.bf16 %v2325
      %v2342 = vunpack.c.l.bf16 %v2326
      %v2343 = vunpack.c.l.bf16 %v2327
      %v2344 = vunpack.c.l.bf16 %v2328
      %v2345 = vunpack.c.l.bf16 %v2329
      %v2346 = vunpack.c.l.bf16 %v2330
      %v2347 = vunpack.c.l.bf16 %v2331
      %v2348 = vunpack.c.l.bf16 %v2332
      %v2349 = vunpack.c.l.bf16 %v2333
      %v2350 = vld [vmem:[%s1 + $0x3] sm:$0x1]
      %v2351 = vlaneseq
      %v2352 = vshrl.u32 %v2351, 7
      %v2353 = vsub.s32 0, %v2352
      %v2354 = vrot.slane %v2350, %v2353
      %v2355 = vmul.f32 %v2334, %v2354
      %v2356 = vmul.f32 %v2335, %v2354
      %v2357 = vmul.f32 %v2336, %v2354
      %v2358 = vmul.f32 %v2337, %v2354
      %v2359 = vmul.f32 %v2338, %v2354
      %v2360 = vmul.f32 %v2339, %v2354
      %v2361 = vmul.f32 %v2340, %v2354
      %v2362 = vmul.f32 %v2341, %v2354
      %v2363 = vmul.f32 %v2342, %v2354
      %v2364 = vmul.f32 %v2343, %v2354
      %v2365 = vmul.f32 %v2344, %v2354
      %v2366 = vmul.f32 %v2345, %v2354
      %v2367 = vmul.f32 %v2346, %v2354
      %v2368 = vmul.f32 %v2347, %v2354
      %v2369 = vmul.f32 %v2348, %v2354
      %v2370 = vmul.f32 %v2349, %v2354
      %v2371 = vld [vmem:[#allocation4] sm:$0xff]
      %v2372 = vld [vmem:[#allocation4 + $0x8] sm:$0xff]
      %v2373 = vld [vmem:[#allocation4 + $0x10] sm:$0xff]
      %v2374 = vld [vmem:[#allocation4 + $0x18] sm:$0xff]
      %v2375 = vld [vmem:[#allocation4 + $0x20] sm:$0xff]
      %v2376 = vld [vmem:[#allocation4 + $0x28] sm:$0xff]
      %v2377 = vld [vmem:[#allocation4 + $0x30] sm:$0xff]
      %v2378 = vld [vmem:[#allocation4 + $0x38] sm:$0xff]
      %v2379 = vld [vmem:[#allocation4 + $0x40] sm:$0xff]
      %v2380 = vld [vmem:[#allocation4 + $0x48] sm:$0xff]
      %v2381 = vld [vmem:[#allocation4 + $0x50] sm:$0xff]
      %v2382 = vld [vmem:[#allocation4 + $0x58] sm:$0xff]
      %v2383 = vld [vmem:[#allocation4 + $0x60] sm:$0xff]
      %v2384 = vld [vmem:[#allocation4 + $0x68] sm:$0xff]
      %v2385 = vld [vmem:[#allocation4 + $0x70] sm:$0xff]
      %v2386 = vld [vmem:[#allocation4 + $0x78] sm:$0xff]
      %v2387 = vadd.f32 %v2371, %v2355
      %v2388 = vadd.f32 %v2372, %v2356
      %v2389 = vadd.f32 %v2373, %v2357
      %v2390 = vadd.f32 %v2374, %v2358
      %v2391 = vadd.f32 %v2375, %v2359
      %v2392 = vadd.f32 %v2376, %v2360
      %v2393 = vadd.f32 %v2377, %v2361
      %v2394 = vadd.f32 %v2378, %v2362
      %v2395 = vadd.f32 %v2379, %v2363
      %v2396 = vadd.f32 %v2380, %v2364
      %v2397 = vadd.f32 %v2381, %v2365
      %v2398 = vadd.f32 %v2382, %v2366
      %v2399 = vadd.f32 %v2383, %v2367
      %v2400 = vadd.f32 %v2384, %v2368
      %v2401 = vadd.f32 %v2385, %v2369
      %v2402 = vadd.f32 %v2386, %v2370
      %2403 = vst [vmem:[#allocation4] sm:$0xff] %v2387
      %2404 = vst [vmem:[#allocation4 + $0x8] sm:$0xff] %v2388
      %2405 = vst [vmem:[#allocation4 + $0x10] sm:$0xff] %v2389
      %2406 = vst [vmem:[#allocation4 + $0x18] sm:$0xff] %v2390
      %2407 = vst [vmem:[#allocation4 + $0x20] sm:$0xff] %v2391
      %2408 = vst [vmem:[#allocation4 + $0x28] sm:$0xff] %v2392
      %2409 = vst [vmem:[#allocation4 + $0x30] sm:$0xff] %v2393
      %2410 = vst [vmem:[#allocation4 + $0x38] sm:$0xff] %v2394
      %2411 = vst [vmem:[#allocation4 + $0x40] sm:$0xff] %v2395
      %2412 = vst [vmem:[#allocation4 + $0x48] sm:$0xff] %v2396
      %2413 = vst [vmem:[#allocation4 + $0x50] sm:$0xff] %v2397
      %2414 = vst [vmem:[#allocation4 + $0x58] sm:$0xff] %v2398
      %2415 = vst [vmem:[#allocation4 + $0x60] sm:$0xff] %v2399
      %2416 = vst [vmem:[#allocation4 + $0x68] sm:$0xff] %v2400
      %2417 = vst [vmem:[#allocation4 + $0x70] sm:$0xff] %v2401
      %2418 = vst [vmem:[#allocation4 + $0x78] sm:$0xff] %v2402
      %v2419 = vld [vmem:[%s2317] sm:$0xf]
      %v2420 = vld [vmem:[%s2317 + $0x4] sm:$0xf]
      %v2421 = vld [vmem:[%s2317 + $0x8] sm:$0x1]
      %v2422 = vld [vmem:[%s2317 + $0xc] sm:$0xf]
      %v2423 = vld [vmem:[%s2317 + $0x10] sm:$0xf]
      %v2424 = vld [vmem:[%s2317 + $0x14] sm:$0x1]
      %v2425 = vld [vmem:[%s2317 + $0x18] sm:$0xf]
      %v2426 = vld [vmem:[%s2317 + $0x1c] sm:$0xf]
      %v2427 = vld [vmem:[%s2317 + $0x20] sm:$0x1]
      %v2428 = vld [vmem:[%s2317 + $0x24] sm:$0xf]
      %v2429 = vld [vmem:[%s2317 + $0x28] sm:$0xf]
      %v2430 = vld [vmem:[%s2317 + $0x2c] sm:$0x1]
      %v2431 = vld [vmem:[%s2317 + $0x30] sm:$0xf]
      %v2432 = vld [vmem:[%s2317 + $0x34] sm:$0xf]
      %v2433 = vld [vmem:[%s2317 + $0x38] sm:$0x1]
      %v2434 = vld [vmem:[%s2317 + $0x3c] sm:$0xf]
      %v2435 = vld [vmem:[%s2317 + $0x40] sm:$0xf]
      %v2436 = vld [vmem:[%s2317 + $0x44] sm:$0x1]
      %v2437 = vld [vmem:[%s2317 + $0x48] sm:$0xf]
      %v2438 = vld [vmem:[%s2317 + $0x4c] sm:$0xf]
      %v2439 = vld [vmem:[%s2317 + $0x50] sm:$0x1]
      %v2440 = vld [vmem:[%s2317 + $0x54] sm:$0xf]
      %v2441 = vld [vmem:[%s2317 + $0x58] sm:$0xf]
      %v2442 = vld [vmem:[%s2317 + $0x5c] sm:$0x1]
      %v2443 = vunpack.c.l.bf16 %v2419
      %v2444 = vunpack.c.l.bf16 %v2420
      %v2445 = vunpack.c.l.bf16 %v2421
      %v2446 = vunpack.c.l.bf16 %v2422
      %v2447 = vunpack.c.l.bf16 %v2423
      %v2448 = vunpack.c.l.bf16 %v2424
      %v2449 = vunpack.c.l.bf16 %v2425
      %v2450 = vunpack.c.l.bf16 %v2426
      %v2451 = vunpack.c.l.bf16 %v2427
      %v2452 = vunpack.c.l.bf16 %v2428
      %v2453 = vunpack.c.l.bf16 %v2429
      %v2454 = vunpack.c.l.bf16 %v2430
      %v2455 = vunpack.c.l.bf16 %v2431
      %v2456 = vunpack.c.l.bf16 %v2432
      %v2457 = vunpack.c.l.bf16 %v2433
      %v2458 = vunpack.c.l.bf16 %v2434
      %v2459 = vunpack.c.l.bf16 %v2435
      %v2460 = vunpack.c.l.bf16 %v2436
      %v2461 = vunpack.c.l.bf16 %v2437
      %v2462 = vunpack.c.l.bf16 %v2438
      %v2463 = vunpack.c.l.bf16 %v2439
      %v2464 = vunpack.c.l.bf16 %v2440
      %v2465 = vunpack.c.l.bf16 %v2441
      %v2466 = vunpack.c.l.bf16 %v2442
      %v2467 = vld [vmem:[%s1 + $0x4] sm:$0x1]
      %v2468 = vlaneseq
      %v2469 = vshrl.u32 %v2468, 7
      %v2470 = vsub.s32 0, %v2469
      %v2471 = vrot.slane %v2467, %v2470
      %v2472 = vmul.f32 %v2443, %v2471
      %v2473 = vmul.f32 %v2444, %v2471
      %v2474 = vmul.f32 %v2445, %v2471
      %v2475 = vmul.f32 %v2446, %v2471
      %v2476 = vmul.f32 %v2447, %v2471
      %v2477 = vmul.f32 %v2448, %v2471
      %v2478 = vmul.f32 %v2449, %v2471
      %v2479 = vmul.f32 %v2450, %v2471
      %v2480 = vmul.f32 %v2451, %v2471
      %v2481 = vmul.f32 %v2452, %v2471
      %v2482 = vmul.f32 %v2453, %v2471
      %v2483 = vmul.f32 %v2454, %v2471
      %v2484 = vmul.f32 %v2455, %v2471
      %v2485 = vmul.f32 %v2456, %v2471
      %v2486 = vmul.f32 %v2457, %v2471
      %v2487 = vmul.f32 %v2458, %v2471
      %v2488 = vmul.f32 %v2459, %v2471
      %v2489 = vmul.f32 %v2460, %v2471
      %v2490 = vmul.f32 %v2461, %v2471
      %v2491 = vmul.f32 %v2462, %v2471
      %v2492 = vmul.f32 %v2463, %v2471
      %v2493 = vmul.f32 %v2464, %v2471
      %v2494 = vmul.f32 %v2465, %v2471
      %v2495 = vmul.f32 %v2466, %v2471
      %v2496 = vld [vmem:[#allocation4] sm:$0xff]
      %v2497 = vld [vmem:[#allocation4 + $0x8] sm:$0xff]
      %v2498 = vld [vmem:[#allocation4 + $0x10] sm:$0xff]
      %v2499 = vld [vmem:[#allocation4 + $0x18] sm:$0xff]
      %v2500 = vld [vmem:[#allocation4 + $0x20] sm:$0xff]
      %v2501 = vld [vmem:[#allocation4 + $0x28] sm:$0xff]
      %v2502 = vld [vmem:[#allocation4 + $0x30] sm:$0xff]
      %v2503 = vld [vmem:[#allocation4 + $0x38] sm:$0xff]
      %v2504 = vld [vmem:[#allocation4 + $0x40] sm:$0xff]
      %v2505 = vld [vmem:[#allocation4 + $0x48] sm:$0xff]
      %v2506 = vld [vmem:[#allocation4 + $0x50] sm:$0xff]
      %v2507 = vld [vmem:[#allocation4 + $0x58] sm:$0xff]
      %v2508 = vld [vmem:[#allocation4 + $0x60] sm:$0xff]
      %v2509 = vld [vmem:[#allocation4 + $0x68] sm:$0xff]
      %v2510 = vld [vmem:[#allocation4 + $0x70] sm:$0xff]
      %v2511 = vld [vmem:[#allocation4 + $0x78] sm:$0xff]
      %v2536 = vrot.slane %v2472, 1
      %v2537 = vrot.slane %v2473, 1
      %v2538 = vsel %vm464, %v2536, %v2537
      %v2539 = vrot.slane %v2474, 1
      %v2540 = vsel %vm464, %v2537, %v2539
      %v2541 = vrot.slane %v2475, 1
      %v2542 = vrot.slane %v2476, 1
      %v2543 = vsel %vm464, %v2541, %v2542
      %v2544 = vrot.slane %v2477, 1
      %v2545 = vsel %vm464, %v2542, %v2544
      %v2546 = vrot.slane %v2478, 1
      %v2547 = vrot.slane %v2479, 1
      %v2548 = vsel %vm464, %v2546, %v2547
      %v2549 = vrot.slane %v2480, 1
      %v2550 = vsel %vm464, %v2547, %v2549
      %v2551 = vrot.slane %v2481, 1
      %v2552 = vrot.slane %v2482, 1
      %v2553 = vsel %vm464, %v2551, %v2552
      %v2554 = vrot.slane %v2483, 1
      %v2555 = vsel %vm464, %v2552, %v2554
      %v2556 = vrot.slane %v2484, 1
      %v2557 = vrot.slane %v2485, 1
      %v2558 = vsel %vm464, %v2556, %v2557
      %v2559 = vrot.slane %v2486, 1
      %v2560 = vsel %vm464, %v2557, %v2559
      %v2561 = vrot.slane %v2487, 1
      %v2562 = vrot.slane %v2488, 1
      %v2563 = vsel %vm464, %v2561, %v2562
      %v2564 = vrot.slane %v2489, 1
      %v2565 = vsel %vm464, %v2562, %v2564
      %v2566 = vrot.slane %v2490, 1
      %v2567 = vrot.slane %v2491, 1
      %v2568 = vsel %vm464, %v2566, %v2567
      %v2569 = vrot.slane %v2492, 1
      %v2570 = vsel %vm464, %v2567, %v2569
      %v2571 = vrot.slane %v2493, 1
      %v2572 = vrot.slane %v2494, 1
      %v2573 = vsel %vm464, %v2571, %v2572
      %v2574 = vrot.slane %v2495, 1
      %v2575 = vsel %vm464, %v2572, %v2574
      %v2592 = vadd.f32 %v2496, %v2538
      %v2593 = vadd.f32 %v2497, %v2540
      %v2594 = vadd.f32 %v2498, %v2543
      %v2595 = vadd.f32 %v2499, %v2545
      %v2596 = vadd.f32 %v2500, %v2548
      %v2597 = vadd.f32 %v2501, %v2550
      %v2598 = vadd.f32 %v2502, %v2553
      %v2599 = vadd.f32 %v2503, %v2555
      %v2600 = vadd.f32 %v2504, %v2558
      %v2601 = vadd.f32 %v2505, %v2560
      %v2602 = vadd.f32 %v2506, %v2563
      %v2603 = vadd.f32 %v2507, %v2565
      %v2604 = vadd.f32 %v2508, %v2568
      %v2605 = vadd.f32 %v2509, %v2570
      %v2606 = vadd.f32 %v2510, %v2573
      %v2607 = vadd.f32 %v2511, %v2575
      %2608 = vst [vmem:[#allocation4] sm:$0xff] %v2592
      %2609 = vst [vmem:[#allocation4 + $0x8] sm:$0xff] %v2593
      %2610 = vst [vmem:[#allocation4 + $0x10] sm:$0xff] %v2594
      %2611 = vst [vmem:[#allocation4 + $0x18] sm:$0xff] %v2595
      %2612 = vst [vmem:[#allocation4 + $0x20] sm:$0xff] %v2596
      %2613 = vst [vmem:[#allocation4 + $0x28] sm:$0xff] %v2597
      %2614 = vst [vmem:[#allocation4 + $0x30] sm:$0xff] %v2598
      %2615 = vst [vmem:[#allocation4 + $0x38] sm:$0xff] %v2599
      %2616 = vst [vmem:[#allocation4 + $0x40] sm:$0xff] %v2600
      %2617 = vst [vmem:[#allocation4 + $0x48] sm:$0xff] %v2601
      %2618 = vst [vmem:[#allocation4 + $0x50] sm:$0xff] %v2602
      %2619 = vst [vmem:[#allocation4 + $0x58] sm:$0xff] %v2603
      %2620 = vst [vmem:[#allocation4 + $0x60] sm:$0xff] %v2604
      %2621 = vst [vmem:[#allocation4 + $0x68] sm:$0xff] %v2605
      %2622 = vst [vmem:[#allocation4 + $0x70] sm:$0xff] %v2606
      %2623 = vst [vmem:[#allocation4 + $0x78] sm:$0xff] %v2607
      %v2624 = vld [vmem:[%s2317] sm:$0xe]
      %v2625 = vld [vmem:[%s2317 + $0x4] sm:$0xf]
      %v2626 = vld [vmem:[%s2317 + $0x8] sm:$0x1]
      %v2627 = vld [vmem:[%s2317 + $0xc] sm:$0xe]
      %v2628 = vld [vmem:[%s2317 + $0x10] sm:$0xf]
      %v2629 = vld [vmem:[%s2317 + $0x14] sm:$0x1]
      %v2630 = vld [vmem:[%s2317 + $0x18] sm:$0xe]
      %v2631 = vld [vmem:[%s2317 + $0x1c] sm:$0xf]
      %v2632 = vld [vmem:[%s2317 + $0x20] sm:$0x1]
      %v2633 = vld [vmem:[%s2317 + $0x24] sm:$0xe]
      %v2634 = vld [vmem:[%s2317 + $0x28] sm:$0xf]
      %v2635 = vld [vmem:[%s2317 + $0x2c] sm:$0x1]
      %v2636 = vld [vmem:[%s2317 + $0x30] sm:$0xe]
      %v2637 = vld [vmem:[%s2317 + $0x34] sm:$0xf]
      %v2638 = vld [vmem:[%s2317 + $0x38] sm:$0x1]
      %v2639 = vld [vmem:[%s2317 + $0x3c] sm:$0xe]
      %v2640 = vld [vmem:[%s2317 + $0x40] sm:$0xf]
      %v2641 = vld [vmem:[%s2317 + $0x44] sm:$0x1]
      %v2642 = vld [vmem:[%s2317 + $0x48] sm:$0xe]
      %v2643 = vld [vmem:[%s2317 + $0x4c] sm:$0xf]
      %v2644 = vld [vmem:[%s2317 + $0x50] sm:$0x1]
      %v2645 = vld [vmem:[%s2317 + $0x54] sm:$0xe]
      %v2646 = vld [vmem:[%s2317 + $0x58] sm:$0xf]
      %v2647 = vld [vmem:[%s2317 + $0x5c] sm:$0x1]
      %v2648 = vunpack.c.l.bf16 %v2624
      %v2649 = vunpack.c.l.bf16 %v2625
      %v2650 = vunpack.c.l.bf16 %v2626
      %v2651 = vunpack.c.l.bf16 %v2627
      %v2652 = vunpack.c.l.bf16 %v2628
      %v2653 = vunpack.c.l.bf16 %v2629
      %v2654 = vunpack.c.l.bf16 %v2630
      %v2655 = vunpack.c.l.bf16 %v2631
      %v2656 = vunpack.c.l.bf16 %v2632
      %v2657 = vunpack.c.l.bf16 %v2633
      %v2658 = vunpack.c.l.bf16 %v2634
      %v2659 = vunpack.c.l.bf16 %v2635
      %v2660 = vunpack.c.l.bf16 %v2636
      %v2661 = vunpack.c.l.bf16 %v2637
      %v2662 = vunpack.c.l.bf16 %v2638
      %v2663 = vunpack.c.l.bf16 %v2639
      %v2664 = vunpack.c.l.bf16 %v2640
      %v2665 = vunpack.c.l.bf16 %v2641
      %v2666 = vunpack.c.l.bf16 %v2642
      %v2667 = vunpack.c.l.bf16 %v2643
      %v2668 = vunpack.c.l.bf16 %v2644
      %v2669 = vunpack.c.l.bf16 %v2645
      %v2670 = vunpack.c.l.bf16 %v2646
      %v2671 = vunpack.c.l.bf16 %v2647
      %v2672 = vld [vmem:[%s1 + $0x5] sm:$0x1]
      %v2673 = vlaneseq
      %v2674 = vshrl.u32 %v2673, 7
      %v2675 = vsub.s32 0, %v2674
      %v2676 = vrot.slane %v2672, %v2675
      %v2677 = vmul.f32 %v2648, %v2676
      %v2678 = vmul.f32 %v2649, %v2676
      %v2679 = vmul.f32 %v2650, %v2676
      %v2680 = vmul.f32 %v2651, %v2676
      %v2681 = vmul.f32 %v2652, %v2676
      %v2682 = vmul.f32 %v2653, %v2676
      %v2683 = vmul.f32 %v2654, %v2676
      %v2684 = vmul.f32 %v2655, %v2676
      %v2685 = vmul.f32 %v2656, %v2676
      %v2686 = vmul.f32 %v2657, %v2676
      %v2687 = vmul.f32 %v2658, %v2676
      %v2688 = vmul.f32 %v2659, %v2676
      %v2689 = vmul.f32 %v2660, %v2676
      %v2690 = vmul.f32 %v2661, %v2676
      %v2691 = vmul.f32 %v2662, %v2676
      %v2692 = vmul.f32 %v2663, %v2676
      %v2693 = vmul.f32 %v2664, %v2676
      %v2694 = vmul.f32 %v2665, %v2676
      %v2695 = vmul.f32 %v2666, %v2676
      %v2696 = vmul.f32 %v2667, %v2676
      %v2697 = vmul.f32 %v2668, %v2676
      %v2698 = vmul.f32 %v2669, %v2676
      %v2699 = vmul.f32 %v2670, %v2676
      %v2700 = vmul.f32 %v2671, %v2676
      %v2701 = vld [vmem:[#allocation4] sm:$0xff]
      %v2702 = vld [vmem:[#allocation4 + $0x8] sm:$0xff]
      %v2703 = vld [vmem:[#allocation4 + $0x10] sm:$0xff]
      %v2704 = vld [vmem:[#allocation4 + $0x18] sm:$0xff]
      %v2705 = vld [vmem:[#allocation4 + $0x20] sm:$0xff]
      %v2706 = vld [vmem:[#allocation4 + $0x28] sm:$0xff]
      %v2707 = vld [vmem:[#allocation4 + $0x30] sm:$0xff]
      %v2708 = vld [vmem:[#allocation4 + $0x38] sm:$0xff]
      %v2709 = vld [vmem:[#allocation4 + $0x40] sm:$0xff]
      %v2710 = vld [vmem:[#allocation4 + $0x48] sm:$0xff]
      %v2711 = vld [vmem:[#allocation4 + $0x50] sm:$0xff]
      %v2712 = vld [vmem:[#allocation4 + $0x58] sm:$0xff]
      %v2713 = vld [vmem:[#allocation4 + $0x60] sm:$0xff]
      %v2714 = vld [vmem:[#allocation4 + $0x68] sm:$0xff]
      %v2715 = vld [vmem:[#allocation4 + $0x70] sm:$0xff]
      %v2716 = vld [vmem:[#allocation4 + $0x78] sm:$0xff]
      %v2741 = vrot.slane %v2677, 2
      %v2742 = vrot.slane %v2678, 2
      %v2743 = vsel %vm670, %v2741, %v2742
      %v2744 = vrot.slane %v2679, 2
      %v2745 = vsel %vm670, %v2742, %v2744
      %v2746 = vrot.slane %v2680, 2
      %v2747 = vrot.slane %v2681, 2
      %v2748 = vsel %vm670, %v2746, %v2747
      %v2749 = vrot.slane %v2682, 2
      %v2750 = vsel %vm670, %v2747, %v2749
      %v2751 = vrot.slane %v2683, 2
      %v2752 = vrot.slane %v2684, 2
      %v2753 = vsel %vm670, %v2751, %v2752
      %v2754 = vrot.slane %v2685, 2
      %v2755 = vsel %vm670, %v2752, %v2754
      %v2756 = vrot.slane %v2686, 2
      %v2757 = vrot.slane %v2687, 2
      %v2758 = vsel %vm670, %v2756, %v2757
      %v2759 = vrot.slane %v2688, 2
      %v2760 = vsel %vm670, %v2757, %v2759
      %v2761 = vrot.slane %v2689, 2
      %v2762 = vrot.slane %v2690, 2
      %v2763 = vsel %vm670, %v2761, %v2762
      %v2764 = vrot.slane %v2691, 2
      %v2765 = vsel %vm670, %v2762, %v2764
      %v2766 = vrot.slane %v2692, 2
      %v2767 = vrot.slane %v2693, 2
      %v2768 = vsel %vm670, %v2766, %v2767
      %v2769 = vrot.slane %v2694, 2
      %v2770 = vsel %vm670, %v2767, %v2769
      %v2771 = vrot.slane %v2695, 2
      %v2772 = vrot.slane %v2696, 2
      %v2773 = vsel %vm670, %v2771, %v2772
      %v2774 = vrot.slane %v2697, 2
      %v2775 = vsel %vm670, %v2772, %v2774
      %v2776 = vrot.slane %v2698, 2
      %v2777 = vrot.slane %v2699, 2
      %v2778 = vsel %vm670, %v2776, %v2777
      %v2779 = vrot.slane %v2700, 2
      %v2780 = vsel %vm670, %v2777, %v2779
      %v2797 = vadd.f32 %v2701, %v2743
      %v2798 = vadd.f32 %v2702, %v2745
      %v2799 = vadd.f32 %v2703, %v2748
      %v2800 = vadd.f32 %v2704, %v2750
      %v2801 = vadd.f32 %v2705, %v2753
      %v2802 = vadd.f32 %v2706, %v2755
      %v2803 = vadd.f32 %v2707, %v2758
      %v2804 = vadd.f32 %v2708, %v2760
      %v2805 = vadd.f32 %v2709, %v2763
      %v2806 = vadd.f32 %v2710, %v2765
      %v2807 = vadd.f32 %v2711, %v2768
      %v2808 = vadd.f32 %v2712, %v2770
      %v2809 = vadd.f32 %v2713, %v2773
      %v2810 = vadd.f32 %v2714, %v2775
      %v2811 = vadd.f32 %v2715, %v2778
      %v2812 = vadd.f32 %v2716, %v2780
      %2813 = vst [vmem:[#allocation4] sm:$0xff] %v2797
      %2814 = vst [vmem:[#allocation4 + $0x8] sm:$0xff] %v2798
      %2815 = vst [vmem:[#allocation4 + $0x10] sm:$0xff] %v2799
      %2816 = vst [vmem:[#allocation4 + $0x18] sm:$0xff] %v2800
      %2817 = vst [vmem:[#allocation4 + $0x20] sm:$0xff] %v2801
      %2818 = vst [vmem:[#allocation4 + $0x28] sm:$0xff] %v2802
      %2819 = vst [vmem:[#allocation4 + $0x30] sm:$0xff] %v2803
      %2820 = vst [vmem:[#allocation4 + $0x38] sm:$0xff] %v2804
      %2821 = vst [vmem:[#allocation4 + $0x40] sm:$0xff] %v2805
      %2822 = vst [vmem:[#allocation4 + $0x48] sm:$0xff] %v2806
      %2823 = vst [vmem:[#allocation4 + $0x50] sm:$0xff] %v2807
      %2824 = vst [vmem:[#allocation4 + $0x58] sm:$0xff] %v2808
      %2825 = vst [vmem:[#allocation4 + $0x60] sm:$0xff] %v2809
      %2826 = vst [vmem:[#allocation4 + $0x68] sm:$0xff] %v2810
      %2827 = vst [vmem:[#allocation4 + $0x70] sm:$0xff] %v2811
      %2828 = vst [vmem:[#allocation4 + $0x78] sm:$0xff] %v2812
      %s2829 = scalar_lea.vmem [#allocation2], 144
      %v2830 = vld [vmem:[%s2829] sm:$0xf]
      %v2831 = vld [vmem:[%s2829 + $0x4] sm:$0xf]
      %v2832 = vld [vmem:[%s2829 + $0xc] sm:$0xf]
      %v2833 = vld [vmem:[%s2829 + $0x10] sm:$0xf]
      %v2834 = vld [vmem:[%s2829 + $0x18] sm:$0xf]
      %v2835 = vld [vmem:[%s2829 + $0x1c] sm:$0xf]
      %v2836 = vld [vmem:[%s2829 + $0x24] sm:$0xf]
      %v2837 = vld [vmem:[%s2829 + $0x28] sm:$0xf]
      %v2838 = vld [vmem:[%s2829 + $0x30] sm:$0xf]
      %v2839 = vld [vmem:[%s2829 + $0x34] sm:$0xf]
      %v2840 = vld [vmem:[%s2829 + $0x3c] sm:$0xf]
      %v2841 = vld [vmem:[%s2829 + $0x40] sm:$0xf]
      %v2842 = vld [vmem:[%s2829 + $0x48] sm:$0xf]
      %v2843 = vld [vmem:[%s2829 + $0x4c] sm:$0xf]
      %v2844 = vld [vmem:[%s2829 + $0x54] sm:$0xf]
      %v2845 = vld [vmem:[%s2829 + $0x58] sm:$0xf]
      %v2846 = vunpack.c.l.bf16 %v2830
      %v2847 = vunpack.c.l.bf16 %v2831
      %v2848 = vunpack.c.l.bf16 %v2832
      %v2849 = vunpack.c.l.bf16 %v2833
      %v2850 = vunpack.c.l.bf16 %v2834
      %v2851 = vunpack.c.l.bf16 %v2835
      %v2852 = vunpack.c.l.bf16 %v2836
      %v2853 = vunpack.c.l.bf16 %v2837
      %v2854 = vunpack.c.l.bf16 %v2838
      %v2855 = vunpack.c.l.bf16 %v2839
      %v2856 = vunpack.c.l.bf16 %v2840
      %v2857 = vunpack.c.l.bf16 %v2841
      %v2858 = vunpack.c.l.bf16 %v2842
      %v2859 = vunpack.c.l.bf16 %v2843
      %v2860 = vunpack.c.l.bf16 %v2844
      %v2861 = vunpack.c.l.bf16 %v2845
      %v2862 = vld [vmem:[%s1 + $0x6] sm:$0x1]
      %v2863 = vlaneseq
      %v2864 = vshrl.u32 %v2863, 7
      %v2865 = vsub.s32 0, %v2864
      %v2866 = vrot.slane %v2862, %v2865
      %v2867 = vmul.f32 %v2846, %v2866
      %v2868 = vmul.f32 %v2847, %v2866
      %v2869 = vmul.f32 %v2848, %v2866
      %v2870 = vmul.f32 %v2849, %v2866
      %v2871 = vmul.f32 %v2850, %v2866
      %v2872 = vmul.f32 %v2851, %v2866
      %v2873 = vmul.f32 %v2852, %v2866
      %v2874 = vmul.f32 %v2853, %v2866
      %v2875 = vmul.f32 %v2854, %v2866
      %v2876 = vmul.f32 %v2855, %v2866
      %v2877 = vmul.f32 %v2856, %v2866
      %v2878 = vmul.f32 %v2857, %v2866
      %v2879 = vmul.f32 %v2858, %v2866
      %v2880 = vmul.f32 %v2859, %v2866
      %v2881 = vmul.f32 %v2860, %v2866
      %v2882 = vmul.f32 %v2861, %v2866
      %v2883 = vld [vmem:[#allocation4] sm:$0xff]
      %v2884 = vld [vmem:[#allocation4 + $0x8] sm:$0xff]
      %v2885 = vld [vmem:[#allocation4 + $0x10] sm:$0xff]
      %v2886 = vld [vmem:[#allocation4 + $0x18] sm:$0xff]
      %v2887 = vld [vmem:[#allocation4 + $0x20] sm:$0xff]
      %v2888 = vld [vmem:[#allocation4 + $0x28] sm:$0xff]
      %v2889 = vld [vmem:[#allocation4 + $0x30] sm:$0xff]
      %v2890 = vld [vmem:[#allocation4 + $0x38] sm:$0xff]
      %v2891 = vld [vmem:[#allocation4 + $0x40] sm:$0xff]
      %v2892 = vld [vmem:[#allocation4 + $0x48] sm:$0xff]
      %v2893 = vld [vmem:[#allocation4 + $0x50] sm:$0xff]
      %v2894 = vld [vmem:[#allocation4 + $0x58] sm:$0xff]
      %v2895 = vld [vmem:[#allocation4 + $0x60] sm:$0xff]
      %v2896 = vld [vmem:[#allocation4 + $0x68] sm:$0xff]
      %v2897 = vld [vmem:[#allocation4 + $0x70] sm:$0xff]
      %v2898 = vld [vmem:[#allocation4 + $0x78] sm:$0xff]
      %v2899 = vadd.f32 %v2883, %v2867
      %v2900 = vadd.f32 %v2884, %v2868
      %v2901 = vadd.f32 %v2885, %v2869
      %v2902 = vadd.f32 %v2886, %v2870
      %v2903 = vadd.f32 %v2887, %v2871
      %v2904 = vadd.f32 %v2888, %v2872
      %v2905 = vadd.f32 %v2889, %v2873
      %v2906 = vadd.f32 %v2890, %v2874
      %v2907 = vadd.f32 %v2891, %v2875
      %v2908 = vadd.f32 %v2892, %v2876
      %v2909 = vadd.f32 %v2893, %v2877
      %v2910 = vadd.f32 %v2894, %v2878
      %v2911 = vadd.f32 %v2895, %v2879
      %v2912 = vadd.f32 %v2896, %v2880
      %v2913 = vadd.f32 %v2897, %v2881
      %v2914 = vadd.f32 %v2898, %v2882
      %2915 = vst [vmem:[#allocation4] sm:$0xff] %v2899
      %2916 = vst [vmem:[#allocation4 + $0x8] sm:$0xff] %v2900
      %2917 = vst [vmem:[#allocation4 + $0x10] sm:$0xff] %v2901
      %2918 = vst [vmem:[#allocation4 + $0x18] sm:$0xff] %v2902
      %2919 = vst [vmem:[#allocation4 + $0x20] sm:$0xff] %v2903
      %2920 = vst [vmem:[#allocation4 + $0x28] sm:$0xff] %v2904
      %2921 = vst [vmem:[#allocation4 + $0x30] sm:$0xff] %v2905
      %2922 = vst [vmem:[#allocation4 + $0x38] sm:$0xff] %v2906
      %2923 = vst [vmem:[#allocation4 + $0x40] sm:$0xff] %v2907
      %2924 = vst [vmem:[#allocation4 + $0x48] sm:$0xff] %v2908
      %2925 = vst [vmem:[#allocation4 + $0x50] sm:$0xff] %v2909
      %2926 = vst [vmem:[#allocation4 + $0x58] sm:$0xff] %v2910
      %2927 = vst [vmem:[#allocation4 + $0x60] sm:$0xff] %v2911
      %2928 = vst [vmem:[#allocation4 + $0x68] sm:$0xff] %v2912
      %2929 = vst [vmem:[#allocation4 + $0x70] sm:$0xff] %v2913
      %2930 = vst [vmem:[#allocation4 + $0x78] sm:$0xff] %v2914
      %v2931 = vld [vmem:[%s2829] sm:$0xf]
      %v2932 = vld [vmem:[%s2829 + $0x4] sm:$0xf]
      %v2933 = vld [vmem:[%s2829 + $0x8] sm:$0x1]
      %v2934 = vld [vmem:[%s2829 + $0xc] sm:$0xf]
      %v2935 = vld [vmem:[%s2829 + $0x10] sm:$0xf]
      %v2936 = vld [vmem:[%s2829 + $0x14] sm:$0x1]
      %v2937 = vld [vmem:[%s2829 + $0x18] sm:$0xf]
      %v2938 = vld [vmem:[%s2829 + $0x1c] sm:$0xf]
      %v2939 = vld [vmem:[%s2829 + $0x20] sm:$0x1]
      %v2940 = vld [vmem:[%s2829 + $0x24] sm:$0xf]
      %v2941 = vld [vmem:[%s2829 + $0x28] sm:$0xf]
      %v2942 = vld [vmem:[%s2829 + $0x2c] sm:$0x1]
      %v2943 = vld [vmem:[%s2829 + $0x30] sm:$0xf]
      %v2944 = vld [vmem:[%s2829 + $0x34] sm:$0xf]
      %v2945 = vld [vmem:[%s2829 + $0x38] sm:$0x1]
      %v2946 = vld [vmem:[%s2829 + $0x3c] sm:$0xf]
      %v2947 = vld [vmem:[%s2829 + $0x40] sm:$0xf]
      %v2948 = vld [vmem:[%s2829 + $0x44] sm:$0x1]
      %v2949 = vld [vmem:[%s2829 + $0x48] sm:$0xf]
      %v2950 = vld [vmem:[%s2829 + $0x4c] sm:$0xf]
      %v2951 = vld [vmem:[%s2829 + $0x50] sm:$0x1]
      %v2952 = vld [vmem:[%s2829 + $0x54] sm:$0xf]
      %v2953 = vld [vmem:[%s2829 + $0x58] sm:$0xf]
      %v2954 = vld [vmem:[%s2829 + $0x5c] sm:$0x1]
      %v2955 = vunpack.c.l.bf16 %v2931
      %v2956 = vunpack.c.l.bf16 %v2932
      %v2957 = vunpack.c.l.bf16 %v2933
      %v2958 = vunpack.c.l.bf16 %v2934
      %v2959 = vunpack.c.l.bf16 %v2935
      %v2960 = vunpack.c.l.bf16 %v2936
      %v2961 = vunpack.c.l.bf16 %v2937
      %v2962 = vunpack.c.l.bf16 %v2938
      %v2963 = vunpack.c.l.bf16 %v2939
      %v2964 = vunpack.c.l.bf16 %v2940
      %v2965 = vunpack.c.l.bf16 %v2941
      %v2966 = vunpack.c.l.bf16 %v2942
      %v2967 = vunpack.c.l.bf16 %v2943
      %v2968 = vunpack.c.l.bf16 %v2944
      %v2969 = vunpack.c.l.bf16 %v2945
      %v2970 = vunpack.c.l.bf16 %v2946
      %v2971 = vunpack.c.l.bf16 %v2947
      %v2972 = vunpack.c.l.bf16 %v2948
      %v2973 = vunpack.c.l.bf16 %v2949
      %v2974 = vunpack.c.l.bf16 %v2950
      %v2975 = vunpack.c.l.bf16 %v2951
      %v2976 = vunpack.c.l.bf16 %v2952
      %v2977 = vunpack.c.l.bf16 %v2953
      %v2978 = vunpack.c.l.bf16 %v2954
      %v2979 = vld [vmem:[%s1 + $0x7] sm:$0x1]
      %v2980 = vlaneseq
      %v2981 = vshrl.u32 %v2980, 7
      %v2982 = vsub.s32 0, %v2981
      %v2983 = vrot.slane %v2979, %v2982
      %v2984 = vmul.f32 %v2955, %v2983
      %v2985 = vmul.f32 %v2956, %v2983
      %v2986 = vmul.f32 %v2957, %v2983
      %v2987 = vmul.f32 %v2958, %v2983
      %v2988 = vmul.f32 %v2959, %v2983
      %v2989 = vmul.f32 %v2960, %v2983
      %v2990 = vmul.f32 %v2961, %v2983
      %v2991 = vmul.f32 %v2962, %v2983
      %v2992 = vmul.f32 %v2963, %v2983
      %v2993 = vmul.f32 %v2964, %v2983
      %v2994 = vmul.f32 %v2965, %v2983
      %v2995 = vmul.f32 %v2966, %v2983
      %v2996 = vmul.f32 %v2967, %v2983
      %v2997 = vmul.f32 %v2968, %v2983
      %v2998 = vmul.f32 %v2969, %v2983
      %v2999 = vmul.f32 %v2970, %v2983
      %v3000 = vmul.f32 %v2971, %v2983
      %v3001 = vmul.f32 %v2972, %v2983
      %v3002 = vmul.f32 %v2973, %v2983
      %v3003 = vmul.f32 %v2974, %v2983
      %v3004 = vmul.f32 %v2975, %v2983
      %v3005 = vmul.f32 %v2976, %v2983
      %v3006 = vmul.f32 %v2977, %v2983
      %v3007 = vmul.f32 %v2978, %v2983
      %v3008 = vld [vmem:[#allocation4] sm:$0xff]
      %v3009 = vld [vmem:[#allocation4 + $0x8] sm:$0xff]
      %v3010 = vld [vmem:[#allocation4 + $0x10] sm:$0xff]
      %v3011 = vld [vmem:[#allocation4 + $0x18] sm:$0xff]
      %v3012 = vld [vmem:[#allocation4 + $0x20] sm:$0xff]
      %v3013 = vld [vmem:[#allocation4 + $0x28] sm:$0xff]
      %v3014 = vld [vmem:[#allocation4 + $0x30] sm:$0xff]
      %v3015 = vld [vmem:[#allocation4 + $0x38] sm:$0xff]
      %v3016 = vld [vmem:[#allocation4 + $0x40] sm:$0xff]
      %v3017 = vld [vmem:[#allocation4 + $0x48] sm:$0xff]
      %v3018 = vld [vmem:[#allocation4 + $0x50] sm:$0xff]
      %v3019 = vld [vmem:[#allocation4 + $0x58] sm:$0xff]
      %v3020 = vld [vmem:[#allocation4 + $0x60] sm:$0xff]
      %v3021 = vld [vmem:[#allocation4 + $0x68] sm:$0xff]
      %v3022 = vld [vmem:[#allocation4 + $0x70] sm:$0xff]
      %v3023 = vld [vmem:[#allocation4 + $0x78] sm:$0xff]
      %v3048 = vrot.slane %v2984, 1
      %v3049 = vrot.slane %v2985, 1
      %v3050 = vsel %vm464, %v3048, %v3049
      %v3051 = vrot.slane %v2986, 1
      %v3052 = vsel %vm464, %v3049, %v3051
      %v3053 = vrot.slane %v2987, 1
      %v3054 = vrot.slane %v2988, 1
      %v3055 = vsel %vm464, %v3053, %v3054
      %v3056 = vrot.slane %v2989, 1
      %v3057 = vsel %vm464, %v3054, %v3056
      %v3058 = vrot.slane %v2990, 1
      %v3059 = vrot.slane %v2991, 1
      %v3060 = vsel %vm464, %v3058, %v3059
      %v3061 = vrot.slane %v2992, 1
      %v3062 = vsel %vm464, %v3059, %v3061
      %v3063 = vrot.slane %v2993, 1
      %v3064 = vrot.slane %v2994, 1
      %v3065 = vsel %vm464, %v3063, %v3064
      %v3066 = vrot.slane %v2995, 1
      %v3067 = vsel %vm464, %v3064, %v3066
      %v3068 = vrot.slane %v2996, 1
      %v3069 = vrot.slane %v2997, 1
      %v3070 = vsel %vm464, %v3068, %v3069
      %v3071 = vrot.slane %v2998, 1
      %v3072 = vsel %vm464, %v3069, %v3071
      %v3073 = vrot.slane %v2999, 1
      %v3074 = vrot.slane %v3000, 1
      %v3075 = vsel %vm464, %v3073, %v3074
      %v3076 = vrot.slane %v3001, 1
      %v3077 = vsel %vm464, %v3074, %v3076
      %v3078 = vrot.slane %v3002, 1
      %v3079 = vrot.slane %v3003, 1
      %v3080 = vsel %vm464, %v3078, %v3079
      %v3081 = vrot.slane %v3004, 1
      %v3082 = vsel %vm464, %v3079, %v3081
      %v3083 = vrot.slane %v3005, 1
      %v3084 = vrot.slane %v3006, 1
      %v3085 = vsel %vm464, %v3083, %v3084
      %v3086 = vrot.slane %v3007, 1
      %v3087 = vsel %vm464, %v3084, %v3086
      %v3104 = vadd.f32 %v3008, %v3050
      %v3105 = vadd.f32 %v3009, %v3052
      %v3106 = vadd.f32 %v3010, %v3055
      %v3107 = vadd.f32 %v3011, %v3057
      %v3108 = vadd.f32 %v3012, %v3060
      %v3109 = vadd.f32 %v3013, %v3062
      %v3110 = vadd.f32 %v3014, %v3065
      %v3111 = vadd.f32 %v3015, %v3067
      %v3112 = vadd.f32 %v3016, %v3070
      %v3113 = vadd.f32 %v3017, %v3072
      %v3114 = vadd.f32 %v3018, %v3075
      %v3115 = vadd.f32 %v3019, %v3077
      %v3116 = vadd.f32 %v3020, %v3080
      %v3117 = vadd.f32 %v3021, %v3082
      %v3118 = vadd.f32 %v3022, %v3085
      %v3119 = vadd.f32 %v3023, %v3087
      %3120 = vst [vmem:[#allocation4] sm:$0xff] %v3104
      %3121 = vst [vmem:[#allocation4 + $0x8] sm:$0xff] %v3105
      %3122 = vst [vmem:[#allocation4 + $0x10] sm:$0xff] %v3106
      %3123 = vst [vmem:[#allocation4 + $0x18] sm:$0xff] %v3107
      %3124 = vst [vmem:[#allocation4 + $0x20] sm:$0xff] %v3108
      %3125 = vst [vmem:[#allocation4 + $0x28] sm:$0xff] %v3109
      %3126 = vst [vmem:[#allocation4 + $0x30] sm:$0xff] %v3110
      %3127 = vst [vmem:[#allocation4 + $0x38] sm:$0xff] %v3111
      %3128 = vst [vmem:[#allocation4 + $0x40] sm:$0xff] %v3112
      %3129 = vst [vmem:[#allocation4 + $0x48] sm:$0xff] %v3113
      %3130 = vst [vmem:[#allocation4 + $0x50] sm:$0xff] %v3114
      %3131 = vst [vmem:[#allocation4 + $0x58] sm:$0xff] %v3115
      %3132 = vst [vmem:[#allocation4 + $0x60] sm:$0xff] %v3116
      %3133 = vst [vmem:[#allocation4 + $0x68] sm:$0xff] %v3117
      %3134 = vst [vmem:[#allocation4 + $0x70] sm:$0xff] %v3118
      %3135 = vst [vmem:[#allocation4 + $0x78] sm:$0xff] %v3119
      %v3136 = vld [vmem:[%s2829] sm:$0xe]
      %v3137 = vld [vmem:[%s2829 + $0x4] sm:$0xf]
      %v3138 = vld [vmem:[%s2829 + $0x8] sm:$0x1]
      %v3139 = vld [vmem:[%s2829 + $0xc] sm:$0xe]
      %v3140 = vld [vmem:[%s2829 + $0x10] sm:$0xf]
      %v3141 = vld [vmem:[%s2829 + $0x14] sm:$0x1]
      %v3142 = vld [vmem:[%s2829 + $0x18] sm:$0xe]
      %v3143 = vld [vmem:[%s2829 + $0x1c] sm:$0xf]
      %v3144 = vld [vmem:[%s2829 + $0x20] sm:$0x1]
      %v3145 = vld [vmem:[%s2829 + $0x24] sm:$0xe]
      %v3146 = vld [vmem:[%s2829 + $0x28] sm:$0xf]
      %v3147 = vld [vmem:[%s2829 + $0x2c] sm:$0x1]
      %v3148 = vld [vmem:[%s2829 + $0x30] sm:$0xe]
      %v3149 = vld [vmem:[%s2829 + $0x34] sm:$0xf]
      %v3150 = vld [vmem:[%s2829 + $0x38] sm:$0x1]
      %v3151 = vld [vmem:[%s2829 + $0x3c] sm:$0xe]
      %v3152 = vld [vmem:[%s2829 + $0x40] sm:$0xf]
      %v3153 = vld [vmem:[%s2829 + $0x44] sm:$0x1]
      %v3154 = vld [vmem:[%s2829 + $0x48] sm:$0xe]
      %v3155 = vld [vmem:[%s2829 + $0x4c] sm:$0xf]
      %v3156 = vld [vmem:[%s2829 + $0x50] sm:$0x1]
      %v3157 = vld [vmem:[%s2829 + $0x54] sm:$0xe]
      %v3158 = vld [vmem:[%s2829 + $0x58] sm:$0xf]
      %v3159 = vld [vmem:[%s2829 + $0x5c] sm:$0x1]
      %v3160 = vunpack.c.l.bf16 %v3136
      %v3161 = vunpack.c.l.bf16 %v3137
      %v3162 = vunpack.c.l.bf16 %v3138
      %v3163 = vunpack.c.l.bf16 %v3139
      %v3164 = vunpack.c.l.bf16 %v3140
      %v3165 = vunpack.c.l.bf16 %v3141
      %v3166 = vunpack.c.l.bf16 %v3142
      %v3167 = vunpack.c.l.bf16 %v3143
      %v3168 = vunpack.c.l.bf16 %v3144
      %v3169 = vunpack.c.l.bf16 %v3145
      %v3170 = vunpack.c.l.bf16 %v3146
      %v3171 = vunpack.c.l.bf16 %v3147
      %v3172 = vunpack.c.l.bf16 %v3148
      %v3173 = vunpack.c.l.bf16 %v3149
      %v3174 = vunpack.c.l.bf16 %v3150
      %v3175 = vunpack.c.l.bf16 %v3151
      %v3176 = vunpack.c.l.bf16 %v3152
      %v3177 = vunpack.c.l.bf16 %v3153
      %v3178 = vunpack.c.l.bf16 %v3154
      %v3179 = vunpack.c.l.bf16 %v3155
      %v3180 = vunpack.c.l.bf16 %v3156
      %v3181 = vunpack.c.l.bf16 %v3157
      %v3182 = vunpack.c.l.bf16 %v3158
      %v3183 = vunpack.c.l.bf16 %v3159
      %v3184 = vld [vmem:[%s1 + $0x8] sm:$0x1]
      %v3185 = vlaneseq
      %v3186 = vshrl.u32 %v3185, 7
      %v3187 = vsub.s32 0, %v3186
      %v3188 = vrot.slane %v3184, %v3187
      %v3189 = vmul.f32 %v3160, %v3188
      %v3190 = vmul.f32 %v3161, %v3188
      %v3191 = vmul.f32 %v3162, %v3188
      %v3192 = vmul.f32 %v3163, %v3188
      %v3193 = vmul.f32 %v3164, %v3188
      %v3194 = vmul.f32 %v3165, %v3188
      %v3195 = vmul.f32 %v3166, %v3188
      %v3196 = vmul.f32 %v3167, %v3188
      %v3197 = vmul.f32 %v3168, %v3188
      %v3198 = vmul.f32 %v3169, %v3188
      %v3199 = vmul.f32 %v3170, %v3188
      %v3200 = vmul.f32 %v3171, %v3188
      %v3201 = vmul.f32 %v3172, %v3188
      %v3202 = vmul.f32 %v3173, %v3188
      %v3203 = vmul.f32 %v3174, %v3188
      %v3204 = vmul.f32 %v3175, %v3188
      %v3205 = vmul.f32 %v3176, %v3188
      %v3206 = vmul.f32 %v3177, %v3188
      %v3207 = vmul.f32 %v3178, %v3188
      %v3208 = vmul.f32 %v3179, %v3188
      %v3209 = vmul.f32 %v3180, %v3188
      %v3210 = vmul.f32 %v3181, %v3188
      %v3211 = vmul.f32 %v3182, %v3188
      %v3212 = vmul.f32 %v3183, %v3188
      %v3213 = vld [vmem:[#allocation4] sm:$0xff]
      %v3214 = vld [vmem:[#allocation4 + $0x8] sm:$0xff]
      %v3215 = vld [vmem:[#allocation4 + $0x10] sm:$0xff]
      %v3216 = vld [vmem:[#allocation4 + $0x18] sm:$0xff]
      %v3217 = vld [vmem:[#allocation4 + $0x20] sm:$0xff]
      %v3218 = vld [vmem:[#allocation4 + $0x28] sm:$0xff]
      %v3219 = vld [vmem:[#allocation4 + $0x30] sm:$0xff]
      %v3220 = vld [vmem:[#allocation4 + $0x38] sm:$0xff]
      %v3221 = vld [vmem:[#allocation4 + $0x40] sm:$0xff]
      %v3222 = vld [vmem:[#allocation4 + $0x48] sm:$0xff]
      %v3223 = vld [vmem:[#allocation4 + $0x50] sm:$0xff]
      %v3224 = vld [vmem:[#allocation4 + $0x58] sm:$0xff]
      %v3225 = vld [vmem:[#allocation4 + $0x60] sm:$0xff]
      %v3226 = vld [vmem:[#allocation4 + $0x68] sm:$0xff]
      %v3227 = vld [vmem:[#allocation4 + $0x70] sm:$0xff]
      %v3228 = vld [vmem:[#allocation4 + $0x78] sm:$0xff]
      %v3253 = vrot.slane %v3189, 2
      %v3254 = vrot.slane %v3190, 2
      %v3255 = vsel %vm670, %v3253, %v3254
      %v3256 = vrot.slane %v3191, 2
      %v3257 = vsel %vm670, %v3254, %v3256
      %v3258 = vrot.slane %v3192, 2
      %v3259 = vrot.slane %v3193, 2
      %v3260 = vsel %vm670, %v3258, %v3259
      %v3261 = vrot.slane %v3194, 2
      %v3262 = vsel %vm670, %v3259, %v3261
      %v3263 = vrot.slane %v3195, 2
      %v3264 = vrot.slane %v3196, 2
      %v3265 = vsel %vm670, %v3263, %v3264
      %v3266 = vrot.slane %v3197, 2
      %v3267 = vsel %vm670, %v3264, %v3266
      %v3268 = vrot.slane %v3198, 2
      %v3269 = vrot.slane %v3199, 2
      %v3270 = vsel %vm670, %v3268, %v3269
      %v3271 = vrot.slane %v3200, 2
      %v3272 = vsel %vm670, %v3269, %v3271
      %v3273 = vrot.slane %v3201, 2
      %v3274 = vrot.slane %v3202, 2
      %v3275 = vsel %vm670, %v3273, %v3274
      %v3276 = vrot.slane %v3203, 2
      %v3277 = vsel %vm670, %v3274, %v3276
      %v3278 = vrot.slane %v3204, 2
      %v3279 = vrot.slane %v3205, 2
      %v3280 = vsel %vm670, %v3278, %v3279
      %v3281 = vrot.slane %v3206, 2
      %v3282 = vsel %vm670, %v3279, %v3281
      %v3283 = vrot.slane %v3207, 2
      %v3284 = vrot.slane %v3208, 2
      %v3285 = vsel %vm670, %v3283, %v3284
      %v3286 = vrot.slane %v3209, 2
      %v3287 = vsel %vm670, %v3284, %v3286
      %v3288 = vrot.slane %v3210, 2
      %v3289 = vrot.slane %v3211, 2
      %v3290 = vsel %vm670, %v3288, %v3289
      %v3291 = vrot.slane %v3212, 2
      %v3292 = vsel %vm670, %v3289, %v3291
      %v3309 = vadd.f32 %v3213, %v3255
      %v3310 = vadd.f32 %v3214, %v3257
      %v3311 = vadd.f32 %v3215, %v3260
      %v3312 = vadd.f32 %v3216, %v3262
      %v3313 = vadd.f32 %v3217, %v3265
      %v3314 = vadd.f32 %v3218, %v3267
      %v3315 = vadd.f32 %v3219, %v3270
      %v3316 = vadd.f32 %v3220, %v3272
      %v3317 = vadd.f32 %v3221, %v3275
      %v3318 = vadd.f32 %v3222, %v3277
      %v3319 = vadd.f32 %v3223, %v3280
      %v3320 = vadd.f32 %v3224, %v3282
      %v3321 = vadd.f32 %v3225, %v3285
      %v3322 = vadd.f32 %v3226, %v3287
      %v3323 = vadd.f32 %v3227, %v3290
      %v3324 = vadd.f32 %v3228, %v3292
      %3325 = vst [vmem:[#allocation4] sm:$0xff] %v3309
      %3326 = vst [vmem:[#allocation4 + $0x8] sm:$0xff] %v3310
      %3327 = vst [vmem:[#allocation4 + $0x10] sm:$0xff] %v3311
      %3328 = vst [vmem:[#allocation4 + $0x18] sm:$0xff] %v3312
      %3329 = vst [vmem:[#allocation4 + $0x20] sm:$0xff] %v3313
      %3330 = vst [vmem:[#allocation4 + $0x28] sm:$0xff] %v3314
      %3331 = vst [vmem:[#allocation4 + $0x30] sm:$0xff] %v3315
      %3332 = vst [vmem:[#allocation4 + $0x38] sm:$0xff] %v3316
      %3333 = vst [vmem:[#allocation4 + $0x40] sm:$0xff] %v3317
      %3334 = vst [vmem:[#allocation4 + $0x48] sm:$0xff] %v3318
      %3335 = vst [vmem:[#allocation4 + $0x50] sm:$0xff] %v3319
      %3336 = vst [vmem:[#allocation4 + $0x58] sm:$0xff] %v3320
      %3337 = vst [vmem:[#allocation4 + $0x60] sm:$0xff] %v3321
      %3338 = vst [vmem:[#allocation4 + $0x68] sm:$0xff] %v3322
      %3339 = vst [vmem:[#allocation4 + $0x70] sm:$0xff] %v3323
      %3340 = vst [vmem:[#allocation4 + $0x78] sm:$0xff] %v3324
      %v3341 = vld [vmem:[#allocation4] sm:$0xff]
      %v3342 = vld [vmem:[#allocation4 + $0x10] sm:$0xff]
      %v3343 = vld [vmem:[#allocation4 + $0x20] sm:$0xff]
      %v3344 = vld [vmem:[#allocation4 + $0x30] sm:$0xff]
      %v3345 = vld [vmem:[#allocation4 + $0x40] sm:$0xff]
      %v3346 = vld [vmem:[#allocation4 + $0x50] sm:$0xff]
      %v3347 = vld [vmem:[#allocation4 + $0x60] sm:$0xff]
      %v3348 = vld [vmem:[#allocation4 + $0x70] sm:$0xff]
      %v3349 = vmax.f32 %v3341, %v3345
      %v3350 = vmax.f32 %v3342, %v3346
      %v3351 = vmax.f32 %v3343, %v3347
      %v3352 = vmax.f32 %v3344, %v3348
      %v3353 = vmax.f32 %v3349, %v3350
      %v3354 = vmax.f32 %v3351, %v3352
      %v3355 = vmax.f32 %v3353, %v3354
      %v3356 = vrot.slane %v3355, 4
      %v3357 = vmax.f32 %v3355, %v3356
      %v3358 = vrot.slane %v3357, 2
      %v3359 = vmax.f32 %v3357, %v3358
      %v3360 = vrot.slane %v3359, 1
      %v3361 = vmax.f32 %v3359, %v3360
      %v3362 = vld [vmem:[#allocation4 + $0x8] sm:$0xff]
      %v3363 = vld [vmem:[#allocation4 + $0x18] sm:$0xff]
      %v3364 = vld [vmem:[#allocation4 + $0x28] sm:$0xff]
      %v3365 = vld [vmem:[#allocation4 + $0x38] sm:$0xff]
      %v3366 = vld [vmem:[#allocation4 + $0x48] sm:$0xff]
      %v3367 = vld [vmem:[#allocation4 + $0x58] sm:$0xff]
      %v3368 = vld [vmem:[#allocation4 + $0x68] sm:$0xff]
      %v3369 = vld [vmem:[#allocation4 + $0x78] sm:$0xff]
      %v3370 = vmax.f32 %v3362, %v3366
      %v3371 = vmax.f32 %v3363, %v3367
      %v3372 = vmax.f32 %v3364, %v3368
      %v3373 = vmax.f32 %v3365, %v3369
      %v3374 = vmax.f32 %v3370, %v3371
      %v3375 = vmax.f32 %v3372, %v3373
      %v3376 = vmax.f32 %v3374, %v3375
      %v3377 = vrot.slane %v3376, 4
      %v3378 = vmax.f32 %v3376, %v3377
      %v3379 = vrot.slane %v3378, 2
      %v3380 = vmax.f32 %v3378, %v3379
      %v3381 = vrot.slane %v3380, 1
      %v3382 = vmax.f32 %v3380, %v3381
      %v3383 = vsel %vm1825, %v3361, %v3382
      %v3384 = vld [vmem:[%s2] sm:$0x1]
      %v3386 = vlaneseq
      %v3387 = vshrl.u32 %v3386, 7
      %v3388 = vsub.s32 0, %v3387
      %v3389 = vrot.slane %v3384, %v3388
      %v3391 = vadd.f32 %v3383, %v3389
      %s3392 = scalar_lea.vmem %s124, 2
      %3393 = vst [vmem:[%s3392] sm:$0x3] %v3391
      %p3394 = scmp.lt.s32.totalorder %s14, 1
      %s3395 = scalar_select %p3394, %s14, 1
      %s3396 = smul.addr %s3395, 2
      %s3397 = smul.addr %s3396, 2
      %s3398 = scalar_lea.vmem %s3, %s3397
      // Predicated region
      $region97: #{conv_embed_forward.3} parent=27 // pred_check
        %p3399 = pneg %p74
      $region98: #{conv_embed_forward.3} parent=27 // pred_check_branch
        %3401 = sbr.rel (%p3399) target = $region100
      $region99: #{conv_embed_forward.3} parent=27 // pred_region
        _
      $region100: #{conv_embed_forward.3} parent=27 // pred_fallthru
        _
    $region28: #{conv_embed_forward.3} parent=5 // pred_fallthru
      _
    %p3402 = scmp.le.s32.totalorder 2, %s9
    // Predicated region
    $region101: #{conv_embed_forward.3} parent=5 // pred_check
      %p3403 = pneg %p3402
    $region102: #{conv_embed_forward.3} parent=5 // pred_check_branch
      %3405 = sbr.rel (%p3403) target = $region104
    $region103: #{conv_embed_forward.3} parent=5 // pred_region
      %s3406 = ssub.s32 %s9, 2
      // Predicated region
      $region105: #{conv_embed_forward.3} parent=103 // pred_check
        %p3407 = pneg %p80
      $region106: #{conv_embed_forward.3} parent=103 // pred_check_branch
        %3409 = sbr.rel (%p3407) target = $region108
      $region107: #{conv_embed_forward.3} parent=103 // pred_region
        %p3410 = scmp.lt.s32.totalorder %s15, 1
        %s3411 = scalar_select %p3410, %s15, 1
        %s3412 = smul.addr %s3411, 2
        %s3413 = smul.addr %s3412, 2
        %s3414 = scalar_lea.vmem %s3, %s3413
      $region108: #{conv_embed_forward.3} parent=103 // pred_fallthru
        _
    $region104: #{conv_embed_forward.3} parent=5 // pred_fallthru
      _
  $region6: #{conv_embed_forward.3} parent=0 // loop_footer
    %s13 = sadd.s32 1, %s9
  $region7: #{conv_embed_forward.3} parent=0 // loop_footer_branch
    %8 = sbr.rel target = $region3
  $region8: #{conv_embed_forward.3} parent=0 // loop_exit
    _
  %3415 = vsyncmov [#allocation3]
  %s3416 = vpop.sfrf %3415
  %p3417 = scmp.eq.s32.totalorder %s3416, 0
  %p3418 = pneg %p3417
  %3420 = shalt.err (%p3418)
  %s3421 = scalar_lea.sflag [#allocation3], 1
  %3422 = vsyncmov %s3421
  %s3423 = vpop.sfrf %3422
  %p3424 = scmp.eq.s32.totalorder %s3423, 0
  %p3425 = pneg %p3424
  %3427 = shalt.err (%p3425)

// kernel: conv_embed_forward.2
$region0: #{conv_embed_forward.2}
  #allocation0 [shape = 'u32[]', space=smem, size = 0x4, offset = 0x4, fixed_abs, tag = 'smem constant byte address 0x4 - core index']
  #allocation1 [shape = 'u32[144,128]{1,0:T(1,128)}', space=vmem, size = 0x12000, scoped, tag = 'internal scratch']
  #allocation2 [shape = 'f32[256,128]{1,0:T(8,128)}', space=vmem, size = 0x20000, scoped, tag = 'scratch operand']
  %s0 = inlined_call_operand.vmem [shape: bf16[2,18,18,4], index: 0, kind: input, shape index: {}]
  %s1 = inlined_call_operand.vmem [shape: bf16[9,4,128], index: 1, kind: input, shape index: {}]
  %s2 = inlined_call_operand.vmem [shape: f32[1,128], index: 2, kind: input, shape index: {}]
  %s3 = inlined_call_operand.vmem [shape: f32[1,128], index: 3, kind: input, shape index: {}]
  %s4 = inlined_call_operand.vmem [shape: bf16[512,128], index: 4, kind: output, shape index: {}]
  %s5 = sld [smem:[#allocation0]]
  $region49: #{conv_embed_forward.2} parent=0
    _
  %s7 = ssub.s32 1, %s5
  %s8 = scalar_select 0, %s7, %s5
  loop: start=0, step=1, limit=4
  $region2: #{conv_embed_forward.2} parent=0 // loop_pre_header
    _
  $region3: #{conv_embed_forward.2} parent=0 // loop_header
    %s10 = sphi 0, %s14
    %p11 = scmp.ge.s32.totalorder %s10, 4
    %s17 = sphi 0, %s29
    %s18 = sphi 0, %s25
    %s19 = sphi 0, %s17
    %s20 = sphi 0, %s18
    %s21 = sphi 0, %s19
    %s22 = sphi 0, %s20
    %s32 = sphi 0, %s34
    %s35 = sphi 0, %s32
    %s36 = sphi 0, %s35
    %s52 = sphi 0, %s36
    %s56 = sphi 0, %s56
    %s58 = sphi 0, %s56
    %s59 = sphi 0, %s58
    %s73 = sphi 0, %s59
    %s77 = sphi 0, %s77
    %s79 = sphi 0, %s77
    %s80 = sphi 0, %s79
    %s94 = sphi 0, %s80
    %s98 = sphi 0, %s98
    %s100 = sphi 0, %s98
    %s101 = sphi 0, %s100
    %s115 = sphi 0, %s101
    %s123 = sphi 0, %s125
    %s126 = sphi 0, %s123
    %s127 = sphi 0, %s126
    %s143 = sphi 0, %s127
  $region4: #{conv_embed_forward.2} parent=0 // loop_header_branch
    %13 = sbr.rel (%p11) target = $region8
  $region5: #{conv_embed_forward.2} parent=0 // loop_body
    %s15 = ssub.s32 %s10, 1
    %s16 = ssub.s32 %s10, 2
    %s23 = sadd.s32 1, %s18
    %p24 = scmp.ge.s32.totalorder %s23, 1
    %s25 = scalar_select %p24, 0, %s23
    %s26 = sadd.s32 1, %s17
    %s27 = scalar_select %p24, %s26, %s17
    %p28 = scmp.ge.s32.totalorder %s27, 2
    %s29 = scalar_select %p28, 0, %s27
    %s30 = ssub.s32 %s17, %s29
    %p31 = scmp.eq.s32.totalorder %s30, 0
    %s33 = sadd.s32 %s32, 1
    %s34 = scalar_select %p31, %s32, %s33
    %p37 = pneg %p31
    %p38 = scmp.eq.s32.totalorder %s10, 1
    %p39 = por %p37, %p38
    %p40 = scmp.ne.s32.totalorder %s32, %s35
    %p41 = scmp.eq.s32.totalorder %s10, 0
    %p42 = por %p40, %p41
    %p43 = scmp.ne.s32.totalorder %s32, %s35
    %p44 = scmp.eq.s32.totalorder %s15, 1
    %p45 = por %p43, %p44
    %p46 = scmp.ne.s32.totalorder %s35, %s36
    %p47 = scmp.eq.s32.totalorder %s15, 0
    %p48 = por %p46, %p47
    %p49 = scmp.ne.s32.totalorder %s35, %s36
    %p50 = scmp.eq.s32.totalorder %s16, 1
    %p51 = por %p49, %p50
    %p53 = scmp.ne.s32.totalorder %s36, %s52
    %p54 = scmp.eq.s32.totalorder %s16, 0
    %p55 = por %p53, %p54
    %s57 = sadd.s32 %s56, 1
    %p60 = scmp.eq.s32.totalorder %s10, 1
    %p61 = scmp.ne.s32.totalorder %s56, %s58
    %p62 = scmp.eq.s32.totalorder %s10, 0
    %p63 = por %p61, %p62
    %p64 = scmp.ne.s32.totalorder %s56, %s58
    %p65 = scmp.eq.s32.totalorder %s15, 1
    %p66 = por %p64, %p65
    %p67 = scmp.ne.s32.totalorder %s58, %s59
    %p68 = scmp.eq.s32.totalorder %s15, 0
    %p69 = por %p67, %p68
    %p70 = scmp.ne.s32.totalorder %s58, %s59
    %p71 = scmp.eq.s32.totalorder %s16, 1
    %p72 = por %p70, %p71
    %p74 = scmp.ne.s32.totalorder %s59, %s73
    %p75 = scmp.eq.s32.totalorder %s16, 0
    %p76 = por %p74, %p75
    %s78 = sadd.s32 %s77, 1
    %p81 = scmp.eq.s32.totalorder %s10, 1
    %p82 = scmp.ne.s32.totalorder %s77, %s79
    %p83 = scmp.eq.s32.totalorder %s10, 0
    %p84 = por %p82, %p83
    %p85 = scmp.ne.s32.totalorder %s77, %s79
    %p86 = scmp.eq.s32.totalorder %s15, 1
    %p87 = por %p85, %p86
    %p88 = scmp.ne.s32.totalorder %s79, %s80
    %p89 = scmp.eq.s32.totalorder %s15, 0
    %p90 = por %p88, %p89
    %p91 = scmp.ne.s32.totalorder %s79, %s80
    %p92 = scmp.eq.s32.totalorder %s16, 1
    %p93 = por %p91, %p92
    %p95 = scmp.ne.s32.totalorder %s80, %s94
    %p96 = scmp.eq.s32.totalorder %s16, 0
    %p97 = por %p95, %p96
    %s99 = sadd.s32 %s98, 1
    %p102 = scmp.eq.s32.totalorder %s10, 1
    %p103 = scmp.ne.s32.totalorder %s98, %s100
    %p104 = scmp.eq.s32.totalorder %s10, 0
    %p105 = por %p103, %p104
    %p106 = scmp.ne.s32.totalorder %s98, %s100
    %p107 = scmp.eq.s32.totalorder %s15, 1
    %p108 = por %p106, %p107
    %p109 = scmp.ne.s32.totalorder %s100, %s101
    %p110 = scmp.eq.s32.totalorder %s15, 0
    %p111 = por %p109, %p110
    %p112 = scmp.ne.s32.totalorder %s100, %s101
    %p113 = scmp.eq.s32.totalorder %s16, 1
    %p114 = por %p112, %p113
    %p116 = scmp.ne.s32.totalorder %s101, %s115
    %p117 = scmp.eq.s32.totalorder %s16, 0
    %p118 = por %p116, %p117
    %s119 = sadd.s32 %s17, %s18
    %s120 = sadd.s32 %s29, %s25
    %s121 = ssub.s32 %s119, %s120
    %p122 = scmp.eq.s32.totalorder %s121, 0
    %s124 = sadd.s32 %s123, 1
    %s125 = scalar_select %p122, %s123, %s124
    %p128 = pneg %p122
    %p129 = scmp.eq.s32.totalorder %s10, 1
    %p130 = por %p128, %p129
    %p131 = scmp.ne.s32.totalorder %s123, %s126
    %p132 = scmp.eq.s32.totalorder %s10, 0
    %p133 = por %p131, %p132
    %p134 = scmp.ne.s32.totalorder %s123, %s126
    %p135 = scmp.eq.s32.totalorder %s15, 1
    %p136 = por %p134, %p135
    %p137 = scmp.ne.s32.totalorder %s126, %s127
    %p138 = scmp.eq.s32.totalorder %s15, 0
    %p139 = por %p137, %p138
    %p140 = scmp.ne.s32.totalorder %s126, %s127
    %p141 = scmp.eq.s32.totalorder %s16, 1
    %p142 = por %p140, %p141
    %p144 = scmp.ne.s32.totalorder %s127, %s143
    %p145 = scmp.eq.s32.totalorder %s16, 0
    %p146 = por %p144, %p145
    %p147 = scmp.le.s32.totalorder 1, %s10
    %p148 = scmp.lt.s32.totalorder %s10, 3
    %p149 = pnand %p147, %p148
    %p150 = pneg %p149
    // Predicated region
    $region9: #{conv_embed_forward.2} parent=5 // pred_check
      _
    $region10: #{conv_embed_forward.2} parent=5 // pred_check_branch
      %152 = sbr.rel (%p149) target = $region12
    $region11: #{conv_embed_forward.2} parent=5 // pred_region
      %s153 = ssub.s32 %s10, 1
      // Predicated region
      $region13: #{conv_embed_forward.2} parent=11 // pred_check
        %p154 = pneg %p69
      $region14: #{conv_embed_forward.2} parent=11 // pred_check_branch
        %156 = sbr.rel (%p154) target = $region16
      $region15: #{conv_embed_forward.2} parent=11 // pred_region
        _
      $region16: #{conv_embed_forward.2} parent=11 // pred_fallthru
        _
      // Predicated region
      $region17: #{conv_embed_forward.2} parent=11 // pred_check
        %p157 = pneg %p90
      $region18: #{conv_embed_forward.2} parent=11 // pred_check_branch
        %159 = sbr.rel (%p157) target = $region20
      $region19: #{conv_embed_forward.2} parent=11 // pred_region
        _
      $region20: #{conv_embed_forward.2} parent=11 // pred_fallthru
        _
      // Predicated region
      $region21: #{conv_embed_forward.2} parent=11 // pred_check
        %p160 = pneg %p111
      $region22: #{conv_embed_forward.2} parent=11 // pred_check_branch
        %162 = sbr.rel (%p160) target = $region24
      $region23: #{conv_embed_forward.2} parent=11 // pred_region
        _
      $region24: #{conv_embed_forward.2} parent=11 // pred_fallthru
        _
    $region12: #{conv_embed_forward.2} parent=5 // pred_fallthru
      _
    %p163 = scmp.lt.s32.totalorder %s10, 2
    // Predicated region
    $region25: #{conv_embed_forward.2} parent=5 // pred_check
      %p164 = pneg %p163
    $region26: #{conv_embed_forward.2} parent=5 // pred_check_branch
      %166 = sbr.rel (%p164) target = $region28
    $region27: #{conv_embed_forward.2} parent=5 // pred_region
      // Predicated region
      $region29: #{conv_embed_forward.2} parent=27 // pred_check
        %p167 = pneg %p42
      $region30: #{conv_embed_forward.2} parent=27 // pred_check_branch
        %169 = sbr.rel (%p167) target = $region32
      $region31: #{conv_embed_forward.2} parent=27 // pred_region
        %p170 = scmp.lt.s32.totalorder %s17, 1
        %s171 = scalar_select %p170, %s17, 1
        %s172 = smul.addr %s171, 54
        %s173 = smul.addr %s172, 4
        %s174 = scalar_lea.vmem %s0, %s173
      $region32: #{conv_embed_forward.2} parent=27 // pred_fallthru
        _
    $region28: #{conv_embed_forward.2} parent=5 // pred_fallthru
      _
    %p175 = scmp.le.s32.totalorder 1, %s10
    %p176 = scmp.lt.s32.totalorder %s10, 3
    %p177 = pnand %p175, %p176
    %p178 = pneg %p177
    // Predicated region
    $region33: #{conv_embed_forward.2} parent=5 // pred_check
      _
    $region34: #{conv_embed_forward.2} parent=5 // pred_check_branch
      %180 = sbr.rel (%p177) target = $region36
    $region35: #{conv_embed_forward.2} parent=5 // pred_region
      %s181 = ssub.s32 %s10, 1
      %p182 = scmp.lt.s32.totalorder %s19, 1
      %s183 = scalar_select %p182, %s19, 1
      %s184 = smul.addr %s183, 54
      %s185 = smul.addr %s184, 4
      %s186 = scalar_lea.vmem %s0, %s185
      %p187 = pneg %p48
      %p188 = pneg %p45
      %p189 = pneg %p69
      %p190 = pneg %p66
      %p191 = pneg %p90
      %p192 = pneg %p87
      %p193 = pneg %p111
      %p194 = pneg %p108
      %p195 = pneg %p139
      %p196 = pneg %p136
      %s197 = sadd.s32 %s19, %s20
      %s198 = smul.u32 32, %s197
      %p199 = scmp.lt.s32.totalorder %s198, 63
      %s200 = scalar_select %p199, %s198, 63
      %s201 = smul.addr %s200, 4
      %s202 = scalar_lea.vmem %s4, %s201
      %p203 = scmp.lt.s32.totalorder %s19, 1
      %s204 = scalar_select %p203, %s19, 1
      %s205 = smul.addr %s204, 54
      %s206 = smul.addr %s205, 4
      %s207 = scalar_lea.vmem %s0, %s206
      %s208 = sadd.s32 %s19, %s20
      %s209 = smul.u32 32, %s208
      %p210 = scmp.lt.s32.totalorder %s209, 63
      %s211 = scalar_select %p210, %s209, 63
      %s212 = smul.addr %s211, 4
      %s213 = scalar_lea.vmem %s4, %s212
      %s214 = sadd.s32 %s19, %s20
      %s215 = smul.u32 32, %s214
      %s217 = smul.u32 %s20, 16
      %s218 = smul.u32 %s217, 3
      %s219 = smul.addr %s218, 4
      %s220 = scalar_lea.vmem %s207, %s219
      %v221 = vld [vmem:[%s220] sm:$0xf]
      %v222 = vld [vmem:[%s220 + $0x4] sm:$0xf]
      %v223 = vld [vmem:[%s220 + $0x8] sm:$0x1]
      %v224 = vld [vmem:[%s220 + $0xc] sm:$0xf]
      %v225 = vld [vmem:[%s220 + $0x10] sm:$0xf]
      %v226 = vld [vmem:[%s220 + $0x14] sm:$0x1]
      %v227 = vld [vmem:[%s220 + $0x18] sm:$0xf]
      %v228 = vld [vmem:[%s220 + $0x1c] sm:$0xf]
      %v229 = vld [vmem:[%s220 + $0x20] sm:$0x1]
      %v230 = vld [vmem:[%s220 + $0x24] sm:$0xf]
      %v231 = vld [vmem:[%s220 + $0x28] sm:$0xf]
      %v232 = vld [vmem:[%s220 + $0x2c] sm:$0x1]
      %v233 = vld [vmem:[%s220 + $0x30] sm:$0xf]
      %v234 = vld [vmem:[%s220 + $0x34] sm:$0xf]
      %v235 = vld [vmem:[%s220 + $0x38] sm:$0x1]
      %v236 = vld [vmem:[%s220 + $0x3c] sm:$0xf]
      %v237 = vld [vmem:[%s220 + $0x40] sm:$0xf]
      %v238 = vld [vmem:[%s220 + $0x44] sm:$0x1]
      %v239 = vld [vmem:[%s220 + $0x48] sm:$0xf]
      %v240 = vld [vmem:[%s220 + $0x4c] sm:$0xf]
      %v241 = vld [vmem:[%s220 + $0x50] sm:$0x1]
      %v242 = vld [vmem:[%s220 + $0x54] sm:$0xf]
      %v243 = vld [vmem:[%s220 + $0x58] sm:$0xf]
      %v244 = vld [vmem:[%s220 + $0x5c] sm:$0x1]
      %v245 = vld [vmem:[%s220 + $0x60] sm:$0xf]
      %v246 = vld [vmem:[%s220 + $0x64] sm:$0xf]
      %v247 = vld [vmem:[%s220 + $0x68] sm:$0x1]
      %v248 = vld [vmem:[%s220 + $0x6c] sm:$0xf]
      %v249 = vld [vmem:[%s220 + $0x70] sm:$0xf]
      %v250 = vld [vmem:[%s220 + $0x74] sm:$0x1]
      %v251 = vld [vmem:[%s220 + $0x78] sm:$0xf]
      %v252 = vld [vmem:[%s220 + $0x7c] sm:$0xf]
      %v253 = vld [vmem:[%s220 + $0x80] sm:$0x1]
      %v254 = vld [vmem:[%s220 + $0x84] sm:$0xf]
      %v255 = vld [vmem:[%s220 + $0x88] sm:$0xf]
      %v256 = vld [vmem:[%s220 + $0x8c] sm:$0x1]
      %v257 = vld [vmem:[%s220 + $0x90] sm:$0xf]
      %v258 = vld [vmem:[%s220 + $0x94] sm:$0xf]
      %v259 = vld [vmem:[%s220 + $0x98] sm:$0x1]
      %v260 = vld [vmem:[%s220 + $0x9c] sm:$0xf]
      %v261 = vld [vmem:[%s220 + $0xa0] sm:$0xf]
      %v262 = vld [vmem:[%s220 + $0xa4] sm:$0x1]
      %v263 = vld [vmem:[%s220 + $0xa8] sm:$0xf]
      %v264 = vld [vmem:[%s220 + $0xac] sm:$0xf]
      %v265 = vld [vmem:[%s220 + $0xb0] sm:$0x1]
      %v266 = vld [vmem:[%s220 + $0xb4] sm:$0xf]
      %v267 = vld [vmem:[%s220 + $0xb8] sm:$0xf]
      %v268 = vld [vmem:[%s220 + $0xbc] sm:$0x1]
      %v269 = vld [vmem:[%s220 + $0xc0] sm:$0xf]
      %v270 = vld [vmem:[%s220 + $0xc4] sm:$0xf]
      %v271 = vld [vmem:[%s220 + $0xc8] sm:$0x1]
      %v272 = vld [vmem:[%s220 + $0xcc] sm:$0xf]
      %v273 = vld [vmem:[%s220 + $0xd0] sm:$0xf]
      %v274 = vld [vmem:[%s220 + $0xd4] sm:$0x1]
      %v275 = vld [vmem:[%s1] sm:$0x3]
      %v308 = vunpack.c.l.b16 %v221
      %v309 = vunpack.c.l.b16 %v222
      %v310 = vunpack.c.l.b16 %v224
      %v311 = vunpack.c.l.b16 %v225
      %v312 = vunpack.c.l.b16 %v227
      %v313 = vunpack.c.l.b16 %v228
      %v314 = vunpack.c.l.b16 %v230
      %v315 = vunpack.c.l.b16 %v231
      %v316 = vunpack.c.l.b16 %v233
      %v317 = vunpack.c.l.b16 %v234
      %v318 = vunpack.c.l.b16 %v236
      %v319 = vunpack.c.l.b16 %v237
      %v320 = vunpack.c.l.b16 %v239
      %v321 = vunpack.c.l.b16 %v240
      %v322 = vunpack.c.l.b16 %v242
      %v323 = vunpack.c.l.b16 %v243
      %v324 = vunpack.c.l.b16 %v245
      %v325 = vunpack.c.l.b16 %v246
      %v326 = vunpack.c.l.b16 %v248
      %v327 = vunpack.c.l.b16 %v249
      %v328 = vunpack.c.l.b16 %v251
      %v329 = vunpack.c.l.b16 %v252
      %v330 = vunpack.c.l.b16 %v254
      %v331 = vunpack.c.l.b16 %v255
      %v332 = vunpack.c.l.b16 %v257
      %v333 = vunpack.c.l.b16 %v258
      %v334 = vunpack.c.l.b16 %v260
      %v335 = vunpack.c.l.b16 %v261
      %v336 = vunpack.c.l.b16 %v263
      %v337 = vunpack.c.l.b16 %v264
      %v338 = vunpack.c.l.b16 %v266
      %v339 = vunpack.c.l.b16 %v267
      %v340 = vpack.c.b16 %v309, %v308
      %v341 = vpack.c.b16 %v311, %v310
      %v342 = vpack.c.b16 %v313, %v312
      %v343 = vpack.c.b16 %v315, %v314
      %v344 = vpack.c.b16 %v317, %v316
      %v345 = vpack.c.b16 %v319, %v318
      %v346 = vpack.c.b16 %v321, %v320
      %v347 = vpack.c.b16 %v323, %v322
      %v348 = vpack.c.b16 %v325, %v324
      %v349 = vpack.c.b16 %v327, %v326
      %v350 = vpack.c.b16 %v329, %v328
      %v351 = vpack.c.b16 %v331, %v330
      %v352 = vpack.c.b16 %v333, %v332
      %v353 = vpack.c.b16 %v335, %v334
      %v354 = vpack.c.b16 %v337, %v336
      %v355 = vpack.c.b16 %v339, %v338
      %vm356 = vcmask 31744
      %v358 = vsel %vm356, %v340, 0
      %v361 = vsel %vm356, %v341, 0
      %v364 = vsel %vm356, %v342, 0
      %v367 = vsel %vm356, %v343, 0
      %v370 = vsel %vm356, %v344, 0
      %v373 = vsel %vm356, %v345, 0
      %v376 = vsel %vm356, %v346, 0
      %v379 = vsel %vm356, %v347, 0
      %v382 = vsel %vm356, %v348, 0
      %v385 = vsel %vm356, %v349, 0
      %v388 = vsel %vm356, %v350, 0
      %v391 = vsel %vm356, %v351, 0
      %v394 = vsel %vm356, %v352, 0
      %v397 = vsel %vm356, %v353, 0
      %v400 = vsel %vm356, %v354, 0
      %v403 = vsel %vm356, %v355, 0
      %vm405 = vcmask 1041408
      %v407 = vsel %vm405, %v275, 0
      %409 = vmatprep.subr.bf16.mxu0 0
      %410 = vmatpush1.bf16.msra.mxu0 %v407
      %411 = vmatprep.subr.bf16.mxu0 0
      %412 = vmatpush1.bf16.msra.mxu0 0
      %413 = vmatprep.subr.bf16.mxu0 0
      %414 = vmatpush1.bf16.msra.mxu0 0
      %415 = vmatprep.subr.bf16.mxu0 0
      %416 = vmatpush1.bf16.msra.mxu0 0
      %417 = vmatprep.subr.bf16.mxu0 0
      %418 = vmatpush1.bf16.msra.mxu0 0
      %419 = vmatprep.subr.bf16.mxu0 0
      %420 = vmatpush1.bf16.msra.mxu0 0
      %421 = vmatprep.subr.bf16.mxu0 0
      %422 = vmatpush1.bf16.msra.mxu0 0
      %423 = vmatprep.subr.bf16.mxu0 0
      %424 = vmatpush1.bf16.msra.mxu0 0
      %425 = vmatprep.subr.bf16.mxu0 0
      %426 = vmatpush1.bf16.msra.mxu0 0
      %427 = vmatprep.subr.bf16.mxu0 0
      %428 = vmatpush1.bf16.msra.mxu0 0
      %429 = vmatprep.subr.bf16.mxu0 0
      %430 = vmatpush1.bf16.msra.mxu0 0
      %431 = vmatprep.subr.bf16.mxu0 0
      %432 = vmatpush1.bf16.msra.mxu0 0
      %433 = vmatprep.subr.bf16.mxu0 0
      %434 = vmatpush1.bf16.msra.mxu0 0
      %435 = vmatprep.subr.bf16.mxu0 0
      %436 = vmatpush1.bf16.msra.mxu0 0
      %437 = vmatprep.subr.bf16.mxu0 0
      %438 = vmatpush1.bf16.msra.mxu0 0
      %439 = vmatprep.subr.bf16.mxu0 0
      %440 = vmatpush1.bf16.msra.mxu0 0
      %441 = vmatprep.mubr.bf16.mxu0 0
      %442 = vmatmul.mubr.bf16.gmra.mrb[0].mxu0 %v358
      %v443 = vpop.f32.mrb[0].mxu0
      %v444 = vadd.f32 0.0, %v443
      %v445 = vpop.f32.mrb[0].mxu0
      %v446 = vpop.f32.mrb[0].mxu0
      %v447 = vadd.f32 0.0, %v446
      %v448 = vpop.f32.mrb[0].mxu0
      %449 = vmatprep.mubr.bf16.mxu0 0
      %450 = vmatmul.mubr.bf16.gmra.mrb[0].mxu0 %v361
      %v451 = vpop.f32.mrb[0].mxu0
      %v452 = vadd.f32 0.0, %v451
      %v453 = vpop.f32.mrb[0].mxu0
      %v454 = vpop.f32.mrb[0].mxu0
      %v455 = vadd.f32 0.0, %v454
      %v456 = vpop.f32.mrb[0].mxu0
      %457 = vmatprep.mubr.bf16.mxu0 0
      %458 = vmatmul.mubr.bf16.gmra.mrb[0].mxu0 %v364
      %v459 = vpop.f32.mrb[0].mxu0
      %v460 = vadd.f32 0.0, %v459
      %v461 = vpop.f32.mrb[0].mxu0
      %v462 = vpop.f32.mrb[0].mxu0
      %v463 = vadd.f32 0.0, %v462
      %v464 = vpop.f32.mrb[0].mxu0
      %465 = vmatprep.mubr.bf16.mxu0 0
      %466 = vmatmul.mubr.bf16.gmra.mrb[0].mxu0 %v367
      %v467 = vpop.f32.mrb[0].mxu0
      %v468 = vadd.f32 0.0, %v467
      %v469 = vpop.f32.mrb[0].mxu0
      %v470 = vpop.f32.mrb[0].mxu0
      %v471 = vadd.f32 0.0, %v470
      %v472 = vpop.f32.mrb[0].mxu0
      %473 = vmatprep.mubr.bf16.mxu0 0
      %474 = vmatmul.mubr.bf16.gmra.mrb[0].mxu0 %v370
      %v475 = vpop.f32.mrb[0].mxu0
      %v476 = vadd.f32 0.0, %v475
      %v477 = vpop.f32.mrb[0].mxu0
      %v478 = vpop.f32.mrb[0].mxu0
      %v479 = vadd.f32 0.0, %v478
      %v480 = vpop.f32.mrb[0].mxu0
      %481 = vmatprep.mubr.bf16.mxu0 0
      %482 = vmatmul.mubr.bf16.gmra.mrb[0].mxu0 %v373
      %v483 = vpop.f32.mrb[0].mxu0
      %v484 = vadd.f32 0.0, %v483
      %v485 = vpop.f32.mrb[0].mxu0
      %v486 = vpop.f32.mrb[0].mxu0
      %v487 = vadd.f32 0.0, %v486
      %v488 = vpop.f32.mrb[0].mxu0
      %489 = vmatprep.mubr.bf16.mxu0 0
      %490 = vmatmul.mubr.bf16.gmra.mrb[0].mxu0 %v376
      %v491 = vpop.f32.mrb[0].mxu0
      %v492 = vadd.f32 0.0, %v491
      %v493 = vpop.f32.mrb[0].mxu0
      %v494 = vpop.f32.mrb[0].mxu0
      %v495 = vadd.f32 0.0, %v494
      %v496 = vpop.f32.mrb[0].mxu0
      %497 = vmatprep.mubr.bf16.mxu0 0
      %498 = vmatmul.mubr.bf16.gmra.mrb[0].mxu0 %v379
      %v499 = vpop.f32.mrb[0].mxu0
      %v500 = vadd.f32 0.0, %v499
      %v501 = vpop.f32.mrb[0].mxu0
      %v502 = vpop.f32.mrb[0].mxu0
      %v503 = vadd.f32 0.0, %v502
      %v504 = vpop.f32.mrb[0].mxu0
      %505 = vmatprep.mubr.bf16.mxu0 0
      %506 = vmatmul.mubr.bf16.gmra.mrb[0].mxu0 %v382
      %v507 = vpop.f32.mrb[0].mxu0
      %v508 = vadd.f32 0.0, %v507
      %v509 = vpop.f32.mrb[0].mxu0
      %v510 = vpop.f32.mrb[0].mxu0
      %v511 = vadd.f32 0.0, %v510
      %v512 = vpop.f32.mrb[0].mxu0
      %513 = vmatprep.mubr.bf16.mxu0 0
      %514 = vmatmul.mubr.bf16.gmra.mrb[0].mxu0 %v385
      %v515 = vpop.f32.mrb[0].mxu0
      %v516 = vadd.f32 0.0, %v515
      %v517 = vpop.f32.mrb[0].mxu0
      %v518 = vpop.f32.mrb[0].mxu0
      %v519 = vadd.f32 0.0, %v518
      %v520 = vpop.f32.mrb[0].mxu0
      %521 = vmatprep.mubr.bf16.mxu0 0
      %522 = vmatmul.mubr.bf16.gmra.mrb[0].mxu0 %v388
      %v523 = vpop.f32.mrb[0].mxu0
      %v524 = vadd.f32 0.0, %v523
      %v525 = vpop.f32.mrb[0].mxu0
      %v526 = vpop.f32.mrb[0].mxu0
      %v527 = vadd.f32 0.0, %v526
      %v528 = vpop.f32.mrb[0].mxu0
      %529 = vmatprep.mubr.bf16.mxu0 0
      %530 = vmatmul.mubr.bf16.gmra.mrb[0].mxu0 %v391
      %v531 = vpop.f32.mrb[0].mxu0
      %v532 = vadd.f32 0.0, %v531
      %v533 = vpop.f32.mrb[0].mxu0
      %v534 = vpop.f32.mrb[0].mxu0
      %v535 = vadd.f32 0.0, %v534
      %v536 = vpop.f32.mrb[0].mxu0
      %537 = vmatprep.mubr.bf16.mxu0 0
      %538 = vmatmul.mubr.bf16.gmra.mrb[0].mxu0 %v394
      %v539 = vpop.f32.mrb[0].mxu0
      %v540 = vadd.f32 0.0, %v539
      %v541 = vpop.f32.mrb[0].mxu0
      %v542 = vpop.f32.mrb[0].mxu0
      %v543 = vadd.f32 0.0, %v542
      %v544 = vpop.f32.mrb[0].mxu0
      %545 = vmatprep.mubr.bf16.mxu0 0
      %546 = vmatmul.mubr.bf16.gmra.mrb[0].mxu0 %v397
      %v547 = vpop.f32.mrb[0].mxu0
      %v548 = vadd.f32 0.0, %v547
      %v549 = vpop.f32.mrb[0].mxu0
      %v550 = vpop.f32.mrb[0].mxu0
      %v551 = vadd.f32 0.0, %v550
      %v552 = vpop.f32.mrb[0].mxu0
      %553 = vmatprep.mubr.bf16.mxu0 0
      %554 = vmatmul.mubr.bf16.gmra.mrb[0].mxu0 %v400
      %v555 = vpop.f32.mrb[0].mxu0
      %v556 = vadd.f32 0.0, %v555
      %v557 = vpop.f32.mrb[0].mxu0
      %v558 = vpop.f32.mrb[0].mxu0
      %v559 = vadd.f32 0.0, %v558
      %v560 = vpop.f32.mrb[0].mxu0
      %561 = vmatprep.mubr.bf16.mxu0 0
      %562 = vmatmul.mubr.bf16.gmra.mrb[0].mxu0 %v403
      %v563 = vpop.f32.mrb[0].mxu0
      %v564 = vadd.f32 0.0, %v563
      %v565 = vpop.f32.mrb[0].mxu0
      %v566 = vpop.f32.mrb[0].mxu0
      %v567 = vadd.f32 0.0, %v566
      %v568 = vpop.f32.mrb[0].mxu0
      %569 = vdwg.mxu0
      %570 = vst [vmem:[#allocation2] sm:$0xff] %v444
      %571 = vst [vmem:[#allocation2 + $0x8] sm:$0xff] %v447
      %572 = vst [vmem:[#allocation2 + $0x10] sm:$0xff] %v452
      %573 = vst [vmem:[#allocation2 + $0x18] sm:$0xff] %v455
      %574 = vst [vmem:[#allocation2 + $0x20] sm:$0xff] %v460
      %575 = vst [vmem:[#allocation2 + $0x28] sm:$0xff] %v463
      %576 = vst [vmem:[#allocation2 + $0x30] sm:$0xff] %v468
      %577 = vst [vmem:[#allocation2 + $0x38] sm:$0xff] %v471
      %578 = vst [vmem:[#allocation2 + $0x40] sm:$0xff] %v476
      %579 = vst [vmem:[#allocation2 + $0x48] sm:$0xff] %v479
      %580 = vst [vmem:[#allocation2 + $0x50] sm:$0xff] %v484
      %581 = vst [vmem:[#allocation2 + $0x58] sm:$0xff] %v487
      %582 = vst [vmem:[#allocation2 + $0x60] sm:$0xff] %v492
      %583 = vst [vmem:[#allocation2 + $0x68] sm:$0xff] %v495
      %584 = vst [vmem:[#allocation2 + $0x70] sm:$0xff] %v500
      %585 = vst [vmem:[#allocation2 + $0x78] sm:$0xff] %v503
      %586 = vst [vmem:[#allocation2 + $0x80] sm:$0xff] %v508
      %587 = vst [vmem:[#allocation2 + $0x88] sm:$0xff] %v511
      %588 = vst [vmem:[#allocation2 + $0x90] sm:$0xff] %v516
      %589 = vst [vmem:[#allocation2 + $0x98] sm:$0xff] %v519
      %590 = vst [vmem:[#allocation2 + $0xa0] sm:$0xff] %v524
      %591 = vst [vmem:[#allocation2 + $0xa8] sm:$0xff] %v527
      %592 = vst [vmem:[#allocation2 + $0xb0] sm:$0xff] %v532
      %593 = vst [vmem:[#allocation2 + $0xb8] sm:$0xff] %v535
      %594 = vst [vmem:[#allocation2 + $0xc0] sm:$0xff] %v540
      %595 = vst [vmem:[#allocation2 + $0xc8] sm:$0xff] %v543
      %596 = vst [vmem:[#allocation2 + $0xd0] sm:$0xff] %v548
      %597 = vst [vmem:[#allocation2 + $0xd8] sm:$0xff] %v551
      %598 = vst [vmem:[#allocation2 + $0xe0] sm:$0xff] %v556
      %599 = vst [vmem:[#allocation2 + $0xe8] sm:$0xff] %v559
      %600 = vst [vmem:[#allocation2 + $0xf0] sm:$0xff] %v564
      %601 = vst [vmem:[#allocation2 + $0xf8] sm:$0xff] %v567
      %vm602 = vsmask.f32 3328
      %vm603 = vsmask.f32 7440
      %vm604 = vmor %vm602, %vm603
      %v606 = vshrl.u32 %v221, 16
      %v608 = vrot.slane %v606, 4
      %v609 = vshll.u32 %v221, 16
      %v611 = vrot.slane %v609, 5
      %v612 = vor.u32 %v608, %v611
      %v613 = vrot.slane %v612, 4
      %v615 = vshll.u32 %v222, 16
      %v617 = vrot.slane %v615, 5
      %v618 = vsel %vm604, %v613, %v617
      %v619 = vshrl.u32 %v222, 16
      %v621 = vrot.slane %v619, 4
      %v622 = vor.u32 %v621, %v617
      %v623 = vrot.slane %v622, 4
      %v625 = vshll.u32 %v223, 16
      %v627 = vrot.slane %v625, 5
      %v628 = vsel %vm604, %v623, %v627
      %v630 = vshrl.u32 %v224, 16
      %v632 = vrot.slane %v630, 4
      %v633 = vshll.u32 %v224, 16
      %v635 = vrot.slane %v633, 5
      %v636 = vor.u32 %v632, %v635
      %v637 = vrot.slane %v636, 4
      %v639 = vshll.u32 %v225, 16
      %v641 = vrot.slane %v639, 5
      %v642 = vsel %vm604, %v637, %v641
      %v643 = vshrl.u32 %v225, 16
      %v645 = vrot.slane %v643, 4
      %v646 = vor.u32 %v645, %v641
      %v647 = vrot.slane %v646, 4
      %v649 = vshll.u32 %v226, 16
      %v651 = vrot.slane %v649, 5
      %v652 = vsel %vm604, %v647, %v651
      %v654 = vshrl.u32 %v227, 16
      %v656 = vrot.slane %v654, 4
      %v657 = vshll.u32 %v227, 16
      %v659 = vrot.slane %v657, 5
      %v660 = vor.u32 %v656, %v659
      %v661 = vrot.slane %v660, 4
      %v663 = vshll.u32 %v228, 16
      %v665 = vrot.slane %v663, 5
      %v666 = vsel %vm604, %v661, %v665
      %v667 = vshrl.u32 %v228, 16
      %v669 = vrot.slane %v667, 4
      %v670 = vor.u32 %v669, %v665
      %v671 = vrot.slane %v670, 4
      %v673 = vshll.u32 %v229, 16
      %v675 = vrot.slane %v673, 5
      %v676 = vsel %vm604, %v671, %v675
      %v678 = vshrl.u32 %v230, 16
      %v680 = vrot.slane %v678, 4
      %v681 = vshll.u32 %v230, 16
      %v683 = vrot.slane %v681, 5
      %v684 = vor.u32 %v680, %v683
      %v685 = vrot.slane %v684, 4
      %v687 = vshll.u32 %v231, 16
      %v689 = vrot.slane %v687, 5
      %v690 = vsel %vm604, %v685, %v689
      %v691 = vshrl.u32 %v231, 16
      %v693 = vrot.slane %v691, 4
      %v694 = vor.u32 %v693, %v689
      %v695 = vrot.slane %v694, 4
      %v697 = vshll.u32 %v232, 16
      %v699 = vrot.slane %v697, 5
      %v700 = vsel %vm604, %v695, %v699
      %v702 = vshrl.u32 %v233, 16
      %v704 = vrot.slane %v702, 4
      %v705 = vshll.u32 %v233, 16
      %v707 = vrot.slane %v705, 5
      %v708 = vor.u32 %v704, %v707
      %v709 = vrot.slane %v708, 4
      %v711 = vshll.u32 %v234, 16
      %v713 = vrot.slane %v711, 5
      %v714 = vsel %vm604, %v709, %v713
      %v715 = vshrl.u32 %v234, 16
      %v717 = vrot.slane %v715, 4
      %v718 = vor.u32 %v717, %v713
      %v719 = vrot.slane %v718, 4
      %v721 = vshll.u32 %v235, 16
      %v723 = vrot.slane %v721, 5
      %v724 = vsel %vm604, %v719, %v723
      %v726 = vshrl.u32 %v236, 16
      %v728 = vrot.slane %v726, 4
      %v729 = vshll.u32 %v236, 16
      %v731 = vrot.slane %v729, 5
      %v732 = vor.u32 %v728, %v731
      %v733 = vrot.slane %v732, 4
      %v735 = vshll.u32 %v237, 16
      %v737 = vrot.slane %v735, 5
      %v738 = vsel %vm604, %v733, %v737
      %v739 = vshrl.u32 %v237, 16
      %v741 = vrot.slane %v739, 4
      %v742 = vor.u32 %v741, %v737
      %v743 = vrot.slane %v742, 4
      %v745 = vshll.u32 %v238, 16
      %v747 = vrot.slane %v745, 5
      %v748 = vsel %vm604, %v743, %v747
      %v750 = vshrl.u32 %v239, 16
      %v752 = vrot.slane %v750, 4
      %v753 = vshll.u32 %v239, 16
      %v755 = vrot.slane %v753, 5
      %v756 = vor.u32 %v752, %v755
      %v757 = vrot.slane %v756, 4
      %v759 = vshll.u32 %v240, 16
      %v761 = vrot.slane %v759, 5
      %v762 = vsel %vm604, %v757, %v761
      %v763 = vshrl.u32 %v240, 16
      %v765 = vrot.slane %v763, 4
      %v766 = vor.u32 %v765, %v761
      %v767 = vrot.slane %v766, 4
      %v769 = vshll.u32 %v241, 16
      %v771 = vrot.slane %v769, 5
      %v772 = vsel %vm604, %v767, %v771
      %v774 = vshrl.u32 %v242, 16
      %v776 = vrot.slane %v774, 4
      %v777 = vshll.u32 %v242, 16
      %v779 = vrot.slane %v777, 5
      %v780 = vor.u32 %v776, %v779
      %v781 = vrot.slane %v780, 4
      %v783 = vshll.u32 %v243, 16
      %v785 = vrot.slane %v783, 5
      %v786 = vsel %vm604, %v781, %v785
      %v787 = vshrl.u32 %v243, 16
      %v789 = vrot.slane %v787, 4
      %v790 = vor.u32 %v789, %v785
      %v791 = vrot.slane %v790, 4
      %v793 = vshll.u32 %v244, 16
      %v795 = vrot.slane %v793, 5
      %v796 = vsel %vm604, %v791, %v795
      %v798 = vshrl.u32 %v245, 16
      %v800 = vrot.slane %v798, 4
      %v801 = vshll.u32 %v245, 16
      %v803 = vrot.slane %v801, 5
      %v804 = vor.u32 %v800, %v803
      %v805 = vrot.slane %v804, 4
      %v807 = vshll.u32 %v246, 16
      %v809 = vrot.slane %v807, 5
      %v810 = vsel %vm604, %v805, %v809
      %v811 = vshrl.u32 %v246, 16
      %v813 = vrot.slane %v811, 4
      %v814 = vor.u32 %v813, %v809
      %v815 = vrot.slane %v814, 4
      %v817 = vshll.u32 %v247, 16
      %v819 = vrot.slane %v817, 5
      %v820 = vsel %vm604, %v815, %v819
      %v822 = vshrl.u32 %v248, 16
      %v824 = vrot.slane %v822, 4
      %v825 = vshll.u32 %v248, 16
      %v827 = vrot.slane %v825, 5
      %v828 = vor.u32 %v824, %v827
      %v829 = vrot.slane %v828, 4
      %v831 = vshll.u32 %v249, 16
      %v833 = vrot.slane %v831, 5
      %v834 = vsel %vm604, %v829, %v833
      %v835 = vshrl.u32 %v249, 16
      %v837 = vrot.slane %v835, 4
      %v838 = vor.u32 %v837, %v833
      %v839 = vrot.slane %v838, 4
      %v841 = vshll.u32 %v250, 16
      %v843 = vrot.slane %v841, 5
      %v844 = vsel %vm604, %v839, %v843
      %v846 = vshrl.u32 %v251, 16
      %v848 = vrot.slane %v846, 4
      %v849 = vshll.u32 %v251, 16
      %v851 = vrot.slane %v849, 5
      %v852 = vor.u32 %v848, %v851
      %v853 = vrot.slane %v852, 4
      %v855 = vshll.u32 %v252, 16
      %v857 = vrot.slane %v855, 5
      %v858 = vsel %vm604, %v853, %v857
      %v859 = vshrl.u32 %v252, 16
      %v861 = vrot.slane %v859, 4
      %v862 = vor.u32 %v861, %v857
      %v863 = vrot.slane %v862, 4
      %v865 = vshll.u32 %v253, 16
      %v867 = vrot.slane %v865, 5
      %v868 = vsel %vm604, %v863, %v867
      %v870 = vshrl.u32 %v254, 16
      %v872 = vrot.slane %v870, 4
      %v873 = vshll.u32 %v254, 16
      %v875 = vrot.slane %v873, 5
      %v876 = vor.u32 %v872, %v875
      %v877 = vrot.slane %v876, 4
      %v879 = vshll.u32 %v255, 16
      %v881 = vrot.slane %v879, 5
      %v882 = vsel %vm604, %v877, %v881
      %v883 = vshrl.u32 %v255, 16
      %v885 = vrot.slane %v883, 4
      %v886 = vor.u32 %v885, %v881
      %v887 = vrot.slane %v886, 4
      %v889 = vshll.u32 %v256, 16
      %v891 = vrot.slane %v889, 5
      %v892 = vsel %vm604, %v887, %v891
      %v894 = vshrl.u32 %v257, 16
      %v896 = vrot.slane %v894, 4
      %v897 = vshll.u32 %v257, 16
      %v899 = vrot.slane %v897, 5
      %v900 = vor.u32 %v896, %v899
      %v901 = vrot.slane %v900, 4
      %v903 = vshll.u32 %v258, 16
      %v905 = vrot.slane %v903, 5
      %v906 = vsel %vm604, %v901, %v905
      %v907 = vshrl.u32 %v258, 16
      %v909 = vrot.slane %v907, 4
      %v910 = vor.u32 %v909, %v905
      %v911 = vrot.slane %v910, 4
      %v913 = vshll.u32 %v259, 16
      %v915 = vrot.slane %v913, 5
      %v916 = vsel %vm604, %v911, %v915
      %v918 = vshrl.u32 %v260, 16
      %v920 = vrot.slane %v918, 4
      %v921 = vshll.u32 %v260, 16
      %v923 = vrot.slane %v921, 5
      %v924 = vor.u32 %v920, %v923
      %v925 = vrot.slane %v924, 4
      %v927 = vshll.u32 %v261, 16
      %v929 = vrot.slane %v927, 5
      %v930 = vsel %vm604, %v925, %v929
      %v931 = vshrl.u32 %v261, 16
      %v933 = vrot.slane %v931, 4
      %v934 = vor.u32 %v933, %v929
      %v935 = vrot.slane %v934, 4
      %v937 = vshll.u32 %v262, 16
      %v939 = vrot.slane %v937, 5
      %v940 = vsel %vm604, %v935, %v939
      %v942 = vshrl.u32 %v263, 16
      %v944 = vrot.slane %v942, 4
      %v945 = vshll.u32 %v263, 16
      %v947 = vrot.slane %v945, 5
      %v948 = vor.u32 %v944, %v947
      %v949 = vrot.slane %v948, 4
      %v951 = vshll.u32 %v264, 16
      %v953 = vrot.slane %v951, 5
      %v954 = vsel %vm604, %v949, %v953
      %v955 = vshrl.u32 %v264, 16
      %v957 = vrot.slane %v955, 4
      %v958 = vor.u32 %v957, %v953
      %v959 = vrot.slane %v958, 4
      %v961 = vshll.u32 %v265, 16
      %v963 = vrot.slane %v961, 5
      %v964 = vsel %vm604, %v959, %v963
      %v966 = vshrl.u32 %v266, 16
      %v968 = vrot.slane %v966, 4
      %v969 = vshll.u32 %v266, 16
      %v971 = vrot.slane %v969, 5
      %v972 = vor.u32 %v968, %v971
      %v973 = vrot.slane %v972, 4
      %v975 = vshll.u32 %v267, 16
      %v977 = vrot.slane %v975, 5
      %v978 = vsel %vm604, %v973, %v977
      %v979 = vshrl.u32 %v267, 16
      %v981 = vrot.slane %v979, 4
      %v982 = vor.u32 %v981, %v977
      %v983 = vrot.slane %v982, 4
      %v985 = vshll.u32 %v268, 16
      %v987 = vrot.slane %v985, 5
      %v988 = vsel %vm604, %v983, %v987
      %s989 = scalar_lea.vmem %s1, 2
      %v990 = vld [vmem:[%s989] sm:$0x3]
      %v991 = vunpack.c.l.b16 %v618
      %v992 = vunpack.c.l.b16 %v628
      %v993 = vunpack.c.l.b16 %v642
      %v994 = vunpack.c.l.b16 %v652
      %v995 = vunpack.c.l.b16 %v666
      %v996 = vunpack.c.l.b16 %v676
      %v997 = vunpack.c.l.b16 %v690
      %v998 = vunpack.c.l.b16 %v700
      %v999 = vunpack.c.l.b16 %v714
      %v1000 = vunpack.c.l.b16 %v724
      %v1001 = vunpack.c.l.b16 %v738
      %v1002 = vunpack.c.l.b16 %v748
      %v1003 = vunpack.c.l.b16 %v762
      %v1004 = vunpack.c.l.b16 %v772
      %v1005 = vunpack.c.l.b16 %v786
      %v1006 = vunpack.c.l.b16 %v796
      %v1007 = vunpack.c.l.b16 %v810
      %v1008 = vunpack.c.l.b16 %v820
      %v1009 = vunpack.c.l.b16 %v834
      %v1010 = vunpack.c.l.b16 %v844
      %v1011 = vunpack.c.l.b16 %v858
      %v1012 = vunpack.c.l.b16 %v868
      %v1013 = vunpack.c.l.b16 %v882
      %v1014 = vunpack.c.l.b16 %v892
      %v1015 = vunpack.c.l.b16 %v906
      %v1016 = vunpack.c.l.b16 %v916
      %v1017 = vunpack.c.l.b16 %v930
      %v1018 = vunpack.c.l.b16 %v940
      %v1019 = vunpack.c.l.b16 %v954
      %v1020 = vunpack.c.l.b16 %v964
      %v1021 = vunpack.c.l.b16 %v978
      %v1022 = vunpack.c.l.b16 %v988
      %v1023 = vpack.c.b16 %v992, %v991
      %v1024 = vpack.c.b16 %v994, %v993
      %v1025 = vpack.c.b16 %v996, %v995
      %v1026 = vpack.c.b16 %v998, %v997
      %v1027 = vpack.c.b16 %v1000, %v999
      %v1028 = vpack.c.b16 %v1002, %v1001
      %v1029 = vpack.c.b16 %v1004, %v1003
      %v1030 = vpack.c.b16 %v1006, %v1005
      %v1031 = vpack.c.b16 %v1008, %v1007
      %v1032 = vpack.c.b16 %v1010, %v1009
      %v1033 = vpack.c.b16 %v1012, %v1011
      %v1034 = vpack.c.b16 %v1014, %v1013
      %v1035 = vpack.c.b16 %v1016, %v1015
      %v1036 = vpack.c.b16 %v1018, %v1017
      %v1037 = vpack.c.b16 %v1020, %v1019
      %v1038 = vpack.c.b16 %v1022, %v1021
      %v1040 = vsel %vm356, %v1023, 0
      %v1043 = vsel %vm356, %v1024, 0
      %v1046 = vsel %vm356, %v1025, 0
      %v1049 = vsel %vm356, %v1026, 0
      %v1052 = vsel %vm356, %v1027, 0
      %v1055 = vsel %vm356, %v1028, 0
      %v1058 = vsel %vm356, %v1029, 0
      %v1061 = vsel %vm356, %v1030, 0
      %v1064 = vsel %vm356, %v1031, 0
      %v1067 = vsel %vm356, %v1032, 0
      %v1070 = vsel %vm356, %v1033, 0
      %v1073 = vsel %vm356, %v1034, 0
      %v1076 = vsel %vm356, %v1035, 0
      %v1079 = vsel %vm356, %v1036, 0
      %v1082 = vsel %vm356, %v1037, 0
      %v1085 = vsel %vm356, %v1038, 0
      %v1088 = vsel %vm405, %v990, 0
      %1090 = vmatprep.subr.bf16.mxu0 0
      %1091 = vmatpush1.bf16.msra.mxu0 %v1088
      %1092 = vmatprep.subr.bf16.mxu0 0
      %1093 = vmatpush1.bf16.msra.mxu0 0
      %1094 = vmatprep.subr.bf16.mxu0 0
      %1095 = vmatpush1.bf16.msra.mxu0 0
      %1096 = vmatprep.subr.bf16.mxu0 0
      %1097 = vmatpush1.bf16.msra.mxu0 0
      %1098 = vmatprep.subr.bf16.mxu0 0
      %1099 = vmatpush1.bf16.msra.mxu0 0
      %1100 = vmatprep.subr.bf16.mxu0 0
      %1101 = vmatpush1.bf16.msra.mxu0 0
      %1102 = vmatprep.subr.bf16.mxu0 0
      %1103 = vmatpush1.bf16.msra.mxu0 0
      %1104 = vmatprep.subr.bf16.mxu0 0
      %1105 = vmatpush1.bf16.msra.mxu0 0
      %1106 = vmatprep.subr.bf16.mxu0 0
      %1107 = vmatpush1.bf16.msra.mxu0 0
      %1108 = vmatprep.subr.bf16.mxu0 0
      %1109 = vmatpush1.bf16.msra.mxu0 0
      %1110 = vmatprep.subr.bf16.mxu0 0
      %1111 = vmatpush1.bf16.msra.mxu0 0
      %1112 = vmatprep.subr.bf16.mxu0 0
      %1113 = vmatpush1.bf16.msra.mxu0 0
      %1114 = vmatprep.subr.bf16.mxu0 0
      %1115 = vmatpush1.bf16.msra.mxu0 0
      %1116 = vmatprep.subr.bf16.mxu0 0
      %1117 = vmatpush1.bf16.msra.mxu0 0
      %1118 = vmatprep.subr.bf16.mxu0 0
      %1119 = vmatpush1.bf16.msra.mxu0 0
      %1120 = vmatprep.subr.bf16.mxu0 0
      %1121 = vmatpush1.bf16.msra.mxu0 0
      %1122 = vmatprep.mubr.bf16.mxu0 0
      %1123 = vmatmul.mubr.bf16.gmra.mrb[0].mxu0 %v1040
      %v1124 = vpop.f32.mrb[0].mxu0
      %v1125 = vadd.f32 0.0, %v1124
      %v1126 = vpop.f32.mrb[0].mxu0
      %v1127 = vpop.f32.mrb[0].mxu0
      %v1128 = vadd.f32 0.0, %v1127
      %v1129 = vpop.f32.mrb[0].mxu0
      %1130 = vmatprep.mubr.bf16.mxu0 0
      %1131 = vmatmul.mubr.bf16.gmra.mrb[0].mxu0 %v1043
      %v1132 = vpop.f32.mrb[0].mxu0
      %v1133 = vadd.f32 0.0, %v1132
      %v1134 = vpop.f32.mrb[0].mxu0
      %v1135 = vpop.f32.mrb[0].mxu0
      %v1136 = vadd.f32 0.0, %v1135
      %v1137 = vpop.f32.mrb[0].mxu0
      %1138 = vmatprep.mubr.bf16.mxu0 0
      %1139 = vmatmul.mubr.bf16.gmra.mrb[0].mxu0 %v1046
      %v1140 = vpop.f32.mrb[0].mxu0
      %v1141 = vadd.f32 0.0, %v1140
      %v1142 = vpop.f32.mrb[0].mxu0
      %v1143 = vpop.f32.mrb[0].mxu0
      %v1144 = vadd.f32 0.0, %v1143
      %v1145 = vpop.f32.mrb[0].mxu0
      %1146 = vmatprep.mubr.bf16.mxu0 0
      %1147 = vmatmul.mubr.bf16.gmra.mrb[0].mxu0 %v1049
      %v1148 = vpop.f32.mrb[0].mxu0
      %v1149 = vadd.f32 0.0, %v1148
      %v1150 = vpop.f32.mrb[0].mxu0
      %v1151 = vpop.f32.mrb[0].mxu0
      %v1152 = vadd.f32 0.0, %v1151
      %v1153 = vpop.f32.mrb[0].mxu0
      %1154 = vmatprep.mubr.bf16.mxu0 0
      %1155 = vmatmul.mubr.bf16.gmra.mrb[0].mxu0 %v1052
      %v1156 = vpop.f32.mrb[0].mxu0
      %v1157 = vadd.f32 0.0, %v1156
      %v1158 = vpop.f32.mrb[0].mxu0
      %v1159 = vpop.f32.mrb[0].mxu0
      %v1160 = vadd.f32 0.0, %v1159
      %v1161 = vpop.f32.mrb[0].mxu0
      %1162 = vmatprep.mubr.bf16.mxu0 0
      %1163 = vmatmul.mubr.bf16.gmra.mrb[0].mxu0 %v1055
      %v1164 = vpop.f32.mrb[0].mxu0
      %v1165 = vadd.f32 0.0, %v1164
      %v1166 = vpop.f32.mrb[0].mxu0
      %v1167 = vpop.f32.mrb[0].mxu0
      %v1168 = vadd.f32 0.0, %v1167
      %v1169 = vpop.f32.mrb[0].mxu0
      %1170 = vmatprep.mubr.bf16.mxu0 0
      %1171 = vmatmul.mubr.bf16.gmra.mrb[0].mxu0 %v1058
      %v1172 = vpop.f32.mrb[0].mxu0
      %v1173 = vadd.f32 0.0, %v1172
      %v1174 = vpop.f32.mrb[0].mxu0
      %v1175 = vpop.f32.mrb[0].mxu0
      %v1176 = vadd.f32 0.0, %v1175
      %v1177 = vpop.f32.mrb[0].mxu0
      %1178 = vmatprep.mubr.bf16.mxu0 0
      %1179 = vmatmul.mubr.bf16.gmra.mrb[0].mxu0 %v1061
      %v1180 = vpop.f32.mrb[0].mxu0
      %v1181 = vadd.f32 0.0, %v1180
      %v1182 = vpop.f32.mrb[0].mxu0
      %v1183 = vpop.f32.mrb[0].mxu0
      %v1184 = vadd.f32 0.0, %v1183
      %v1185 = vpop.f32.mrb[0].mxu0
      %1186 = vmatprep.mubr.bf16.mxu0 0
      %1187 = vmatmul.mubr.bf16.gmra.mrb[0].mxu0 %v1064
      %v1188 = vpop.f32.mrb[0].mxu0
      %v1189 = vadd.f32 0.0, %v1188
      %v1190 = vpop.f32.mrb[0].mxu0
      %v1191 = vpop.f32.mrb[0].mxu0
      %v1192 = vadd.f32 0.0, %v1191
      %v1193 = vpop.f32.mrb[0].mxu0
      %1194 = vmatprep.mubr.bf16.mxu0 0
      %1195 = vmatmul.mubr.bf16.gmra.mrb[0].mxu0 %v1067
      %v1196 = vpop.f32.mrb[0].mxu0
      %v1197 = vadd.f32 0.0, %v1196
      %v1198 = vpop.f32.mrb[0].mxu0
      %v1199 = vpop.f32.mrb[0].mxu0
      %v1200 = vadd.f32 0.0, %v1199
      %v1201 = vpop.f32.mrb[0].mxu0
      %1202 = vmatprep.mubr.bf16.mxu0 0
      %1203 = vmatmul.mubr.bf16.gmra.mrb[0].mxu0 %v1070
      %v1204 = vpop.f32.mrb[0].mxu0
      %v1205 = vadd.f32 0.0, %v1204
      %v1206 = vpop.f32.mrb[0].mxu0
      %v1207 = vpop.f32.mrb[0].mxu0
      %v1208 = vadd.f32 0.0, %v1207
      %v1209 = vpop.f32.mrb[0].mxu0
      %1210 = vmatprep.mubr.bf16.mxu0 0
      %1211 = vmatmul.mubr.bf16.gmra.mrb[0].mxu0 %v1073
      %v1212 = vpop.f32.mrb[0].mxu0
      %v1213 = vadd.f32 0.0, %v1212
      %v1214 = vpop.f32.mrb[0].mxu0
      %v1215 = vpop.f32.mrb[0].mxu0
      %v1216 = vadd.f32 0.0, %v1215
      %v1217 = vpop.f32.mrb[0].mxu0
      %1218 = vmatprep.mubr.bf16.mxu0 0
      %1219 = vmatmul.mubr.bf16.gmra.mrb[0].mxu0 %v1076
      %v1220 = vpop.f32.mrb[0].mxu0
      %v1221 = vadd.f32 0.0, %v1220
      %v1222 = vpop.f32.mrb[0].mxu0
      %v1223 = vpop.f32.mrb[0].mxu0
      %v1224 = vadd.f32 0.0, %v1223
      %v1225 = vpop.f32.mrb[0].mxu0
      %1226 = vmatprep.mubr.bf16.mxu0 0
      %1227 = vmatmul.mubr.bf16.gmra.mrb[0].mxu0 %v1079
      %v1228 = vpop.f32.mrb[0].mxu0
      %v1229 = vadd.f32 0.0, %v1228
      %v1230 = vpop.f32.mrb[0].mxu0
      %v1231 = vpop.f32.mrb[0].mxu0
      %v1232 = vadd.f32 0.0, %v1231
      %v1233 = vpop.f32.mrb[0].mxu0
      %1234 = vmatprep.mubr.bf16.mxu0 0
      %1235 = vmatmul.mubr.bf16.gmra.mrb[0].mxu0 %v1082
      %v1236 = vpop.f32.mrb[0].mxu0
      %v1237 = vadd.f32 0.0, %v1236
      %v1238 = vpop.f32.mrb[0].mxu0
      %v1239 = vpop.f32.mrb[0].mxu0
      %v1240 = vadd.f32 0.0, %v1239
      %v1241 = vpop.f32.mrb[0].mxu0
      %1242 = vmatprep.mubr.bf16.mxu0 0
      %1243 = vmatmul.mubr.bf16.gmra.mrb[0].mxu0 %v1085
      %v1244 = vpop.f32.mrb[0].mxu0
      %v1245 = vadd.f32 0.0, %v1244
      %v1246 = vpop.f32.mrb[0].mxu0
      %v1247 = vpop.f32.mrb[0].mxu0
      %v1248 = vadd.f32 0.0, %v1247
      %v1249 = vpop.f32.mrb[0].mxu0
      %1250 = vdwg.mxu0
      %v1251 = vld [vmem:[#allocation2] sm:$0xff]
      %v1252 = vld [vmem:[#allocation2 + $0x8] sm:$0xff]
      %v1253 = vld [vmem:[#allocation2 + $0x10] sm:$0xff]
      %v1254 = vld [vmem:[#allocation2 + $0x18] sm:$0xff]
      %v1255 = vld [vmem:[#allocation2 + $0x20] sm:$0xff]
      %v1256 = vld [vmem:[#allocation2 + $0x28] sm:$0xff]
      %v1257 = vld [vmem:[#allocation2 + $0x30] sm:$0xff]
      %v1258 = vld [vmem:[#allocation2 + $0x38] sm:$0xff]
      %v1259 = vld [vmem:[#allocation2 + $0x40] sm:$0xff]
      %v1260 = vld [vmem:[#allocation2 + $0x48] sm:$0xff]
      %v1261 = vld [vmem:[#allocation2 + $0x50] sm:$0xff]
      %v1262 = vld [vmem:[#allocation2 + $0x58] sm:$0xff]
      %v1263 = vld [vmem:[#allocation2 + $0x60] sm:$0xff]
      %v1264 = vld [vmem:[#allocation2 + $0x68] sm:$0xff]
      %v1265 = vld [vmem:[#allocation2 + $0x70] sm:$0xff]
      %v1266 = vld [vmem:[#allocation2 + $0x78] sm:$0xff]
      %v1267 = vld [vmem:[#allocation2 + $0x80] sm:$0xff]
      %v1268 = vld [vmem:[#allocation2 + $0x88] sm:$0xff]
      %v1269 = vld [vmem:[#allocation2 + $0x90] sm:$0xff]
      %v1270 = vld [vmem:[#allocation2 + $0x98] sm:$0xff]
      %v1271 = vld [vmem:[#allocation2 + $0xa0] sm:$0xff]
      %v1272 = vld [vmem:[#allocation2 + $0xa8] sm:$0xff]
      %v1273 = vld [vmem:[#allocation2 + $0xb0] sm:$0xff]
      %v1274 = vld [vmem:[#allocation2 + $0xb8] sm:$0xff]
      %v1275 = vld [vmem:[#allocation2 + $0xc0] sm:$0xff]
      %v1276 = vld [vmem:[#allocation2 + $0xc8] sm:$0xff]
      %v1277 = vld [vmem:[#allocation2 + $0xd0] sm:$0xff]
      %v1278 = vld [vmem:[#allocation2 + $0xd8] sm:$0xff]
      %v1279 = vld [vmem:[#allocation2 + $0xe0] sm:$0xff]
      %v1280 = vld [vmem:[#allocation2 + $0xe8] sm:$0xff]
      %v1281 = vld [vmem:[#allocation2 + $0xf0] sm:$0xff]
      %v1282 = vld [vmem:[#allocation2 + $0xf8] sm:$0xff]
      %v1283 = vadd.f32 %v1251, %v1125
      %v1284 = vadd.f32 %v1252, %v1128
      %v1285 = vadd.f32 %v1253, %v1133
      %v1286 = vadd.f32 %v1254, %v1136
      %v1287 = vadd.f32 %v1255, %v1141
      %v1288 = vadd.f32 %v1256, %v1144
      %v1289 = vadd.f32 %v1257, %v1149
      %v1290 = vadd.f32 %v1258, %v1152
      %v1291 = vadd.f32 %v1259, %v1157
      %v1292 = vadd.f32 %v1260, %v1160
      %v1293 = vadd.f32 %v1261, %v1165
      %v1294 = vadd.f32 %v1262, %v1168
      %v1295 = vadd.f32 %v1263, %v1173
      %v1296 = vadd.f32 %v1264, %v1176
      %v1297 = vadd.f32 %v1265, %v1181
      %v1298 = vadd.f32 %v1266, %v1184
      %v1299 = vadd.f32 %v1267, %v1189
      %v1300 = vadd.f32 %v1268, %v1192
      %v1301 = vadd.f32 %v1269, %v1197
      %v1302 = vadd.f32 %v1270, %v1200
      %v1303 = vadd.f32 %v1271, %v1205
      %v1304 = vadd.f32 %v1272, %v1208
      %v1305 = vadd.f32 %v1273, %v1213
      %v1306 = vadd.f32 %v1274, %v1216
      %v1307 = vadd.f32 %v1275, %v1221
      %v1308 = vadd.f32 %v1276, %v1224
      %v1309 = vadd.f32 %v1277, %v1229
      %v1310 = vadd.f32 %v1278, %v1232
      %v1311 = vadd.f32 %v1279, %v1237
      %v1312 = vadd.f32 %v1280, %v1240
      %v1313 = vadd.f32 %v1281, %v1245
      %v1314 = vadd.f32 %v1282, %v1248
      %1315 = vst [vmem:[#allocation2] sm:$0xff] %v1283
      %1316 = vst [vmem:[#allocation2 + $0x8] sm:$0xff] %v1284
      %1317 = vst [vmem:[#allocation2 + $0x10] sm:$0xff] %v1285
      %1318 = vst [vmem:[#allocation2 + $0x18] sm:$0xff] %v1286
      %1319 = vst [vmem:[#allocation2 + $0x20] sm:$0xff] %v1287
      %1320 = vst [vmem:[#allocation2 + $0x28] sm:$0xff] %v1288
      %1321 = vst [vmem:[#allocation2 + $0x30] sm:$0xff] %v1289
      %1322 = vst [vmem:[#allocation2 + $0x38] sm:$0xff] %v1290
      %1323 = vst [vmem:[#allocation2 + $0x40] sm:$0xff] %v1291
      %1324 = vst [vmem:[#allocation2 + $0x48] sm:$0xff] %v1292
      %1325 = vst [vmem:[#allocation2 + $0x50] sm:$0xff] %v1293
      %1326 = vst [vmem:[#allocation2 + $0x58] sm:$0xff] %v1294
      %1327 = vst [vmem:[#allocation2 + $0x60] sm:$0xff] %v1295
      %1328 = vst [vmem:[#allocation2 + $0x68] sm:$0xff] %v1296
      %1329 = vst [vmem:[#allocation2 + $0x70] sm:$0xff] %v1297
      %1330 = vst [vmem:[#allocation2 + $0x78] sm:$0xff] %v1298
      %1331 = vst [vmem:[#allocation2 + $0x80] sm:$0xff] %v1299
      %1332 = vst [vmem:[#allocation2 + $0x88] sm:$0xff] %v1300
      %1333 = vst [vmem:[#allocation2 + $0x90] sm:$0xff] %v1301
      %1334 = vst [vmem:[#allocation2 + $0x98] sm:$0xff] %v1302
      %1335 = vst [vmem:[#allocation2 + $0xa0] sm:$0xff] %v1303
      %1336 = vst [vmem:[#allocation2 + $0xa8] sm:$0xff] %v1304
      %1337 = vst [vmem:[#allocation2 + $0xb0] sm:$0xff] %v1305
      %1338 = vst [vmem:[#allocation2 + $0xb8] sm:$0xff] %v1306
      %1339 = vst [vmem:[#allocation2 + $0xc0] sm:$0xff] %v1307
      %1340 = vst [vmem:[#allocation2 + $0xc8] sm:$0xff] %v1308
      %1341 = vst [vmem:[#allocation2 + $0xd0] sm:$0xff] %v1309
      %1342 = vst [vmem:[#allocation2 + $0xd8] sm:$0xff] %v1310
      %1343 = vst [vmem:[#allocation2 + $0xe0] sm:$0xff] %v1311
      %1344 = vst [vmem:[#allocation2 + $0xe8] sm:$0xff] %v1312
      %1345 = vst [vmem:[#allocation2 + $0xf0] sm:$0xff] %v1313
      %1346 = vst [vmem:[#allocation2 + $0xf8] sm:$0xff] %v1314
      %vm1363 = vcmask 1042432
      %vm1364 = vcmask 1046532
      %vm1365 = vmor %vm1363, %vm1364
      %v1366 = vrot.slane %v221, 5
      %v1367 = vrot.slane %v1366, 4
      %v1368 = vrot.slane %v222, 5
      %v1369 = vsel %vm1365, %v1367, %v1368
      %v1370 = vrot.slane %v1368, 4
      %v1371 = vrot.slane %v223, 5
      %v1372 = vsel %vm1365, %v1370, %v1371
      %v1373 = vrot.slane %v224, 5
      %v1374 = vrot.slane %v1373, 4
      %v1375 = vrot.slane %v225, 5
      %v1376 = vsel %vm1365, %v1374, %v1375
      %v1377 = vrot.slane %v1375, 4
      %v1378 = vrot.slane %v226, 5
      %v1379 = vsel %vm1365, %v1377, %v1378
      %v1380 = vrot.slane %v227, 5
      %v1381 = vrot.slane %v1380, 4
      %v1382 = vrot.slane %v228, 5
      %v1383 = vsel %vm1365, %v1381, %v1382
      %v1384 = vrot.slane %v1382, 4
      %v1385 = vrot.slane %v229, 5
      %v1386 = vsel %vm1365, %v1384, %v1385
      %v1387 = vrot.slane %v230, 5
      %v1388 = vrot.slane %v1387, 4
      %v1389 = vrot.slane %v231, 5
      %v1390 = vsel %vm1365, %v1388, %v1389
      %v1391 = vrot.slane %v1389, 4
      %v1392 = vrot.slane %v232, 5
      %v1393 = vsel %vm1365, %v1391, %v1392
      %v1394 = vrot.slane %v233, 5
      %v1395 = vrot.slane %v1394, 4
      %v1396 = vrot.slane %v234, 5
      %v1397 = vsel %vm1365, %v1395, %v1396
      %v1398 = vrot.slane %v1396, 4
      %v1399 = vrot.slane %v235, 5
      %v1400 = vsel %vm1365, %v1398, %v1399
      %v1401 = vrot.slane %v236, 5
      %v1402 = vrot.slane %v1401, 4
      %v1403 = vrot.slane %v237, 5
      %v1404 = vsel %vm1365, %v1402, %v1403
      %v1405 = vrot.slane %v1403, 4
      %v1406 = vrot.slane %v238, 5
      %v1407 = vsel %vm1365, %v1405, %v1406
      %v1408 = vrot.slane %v239, 5
      %v1409 = vrot.slane %v1408, 4
      %v1410 = vrot.slane %v240, 5
      %v1411 = vsel %vm1365, %v1409, %v1410
      %v1412 = vrot.slane %v1410, 4
      %v1413 = vrot.slane %v241, 5
      %v1414 = vsel %vm1365, %v1412, %v1413
      %v1415 = vrot.slane %v242, 5
      %v1416 = vrot.slane %v1415, 4
      %v1417 = vrot.slane %v243, 5
      %v1418 = vsel %vm1365, %v1416, %v1417
      %v1419 = vrot.slane %v1417, 4
      %v1420 = vrot.slane %v244, 5
      %v1421 = vsel %vm1365, %v1419, %v1420
      %v1422 = vrot.slane %v245, 5
      %v1423 = vrot.slane %v1422, 4
      %v1424 = vrot.slane %v246, 5
      %v1425 = vsel %vm1365, %v1423, %v1424
      %v1426 = vrot.slane %v1424, 4
      %v1427 = vrot.slane %v247, 5
      %v1428 = vsel %vm1365, %v1426, %v1427
      %v1429 = vrot.slane %v248, 5
      %v1430 = vrot.slane %v1429, 4
      %v1431 = vrot.slane %v249, 5
      %v1432 = vsel %vm1365, %v1430, %v1431
      %v1433 = vrot.slane %v1431, 4
      %v1434 = vrot.slane %v250, 5
      %v1435 = vsel %vm1365, %v1433, %v1434
      %v1436 = vrot.slane %v251, 5
      %v1437 = vrot.slane %v1436, 4
      %v1438 = vrot.slane %v252, 5
      %v1439 = vsel %vm1365, %v1437, %v1438
      %v1440 = vrot.slane %v1438, 4
      %v1441 = vrot.slane %v253, 5
      %v1442 = vsel %vm1365, %v1440, %v1441
      %v1443 = vrot.slane %v254, 5
      %v1444 = vrot.slane %v1443, 4
      %v1445 = vrot.slane %v255, 5
      %v1446 = vsel %vm1365, %v1444, %v1445
      %v1447 = vrot.slane %v1445, 4
      %v1448 = vrot.slane %v256, 5
      %v1449 = vsel %vm1365, %v1447, %v1448
      %v1450 = vrot.slane %v257, 5
      %v1451 = vrot.slane %v1450, 4
      %v1452 = vrot.slane %v258, 5
      %v1453 = vsel %vm1365, %v1451, %v1452
      %v1454 = vrot.slane %v1452, 4
      %v1455 = vrot.slane %v259, 5
      %v1456 = vsel %vm1365, %v1454, %v1455
      %v1457 = vrot.slane %v260, 5
      %v1458 = vrot.slane %v1457, 4
      %v1459 = vrot.slane %v261, 5
      %v1460 = vsel %vm1365, %v1458, %v1459
      %v1461 = vrot.slane %v1459, 4
      %v1462 = vrot.slane %v262, 5
      %v1463 = vsel %vm1365, %v1461, %v1462
      %v1464 = vrot.slane %v263, 5
      %v1465 = vrot.slane %v1464, 4
      %v1466 = vrot.slane %v264, 5
      %v1467 = vsel %vm1365, %v1465, %v1466
      %v1468 = vrot.slane %v1466, 4
      %v1469 = vrot.slane %v265, 5
      %v1470 = vsel %vm1365, %v1468, %v1469
      %v1471 = vrot.slane %v266, 5
      %v1472 = vrot.slane %v1471, 4
      %v1473 = vrot.slane %v267, 5
      %v1474 = vsel %vm1365, %v1472, %v1473
      %v1475 = vrot.slane %v1473, 4
      %v1476 = vrot.slane %v268, 5
      %v1477 = vsel %vm1365, %v1475, %v1476
      %s1478 = scalar_lea.vmem %s1, 4
      %v1479 = vld [vmem:[%s1478] sm:$0x3]
      %v1480 = vunpack.c.l.b16 %v1369
      %v1481 = vunpack.c.l.b16 %v1372
      %v1482 = vunpack.c.l.b16 %v1376
      %v1483 = vunpack.c.l.b16 %v1379
      %v1484 = vunpack.c.l.b16 %v1383
      %v1485 = vunpack.c.l.b16 %v1386
      %v1486 = vunpack.c.l.b16 %v1390
      %v1487 = vunpack.c.l.b16 %v1393
      %v1488 = vunpack.c.l.b16 %v1397
      %v1489 = vunpack.c.l.b16 %v1400
      %v1490 = vunpack.c.l.b16 %v1404
      %v1491 = vunpack.c.l.b16 %v1407
      %v1492 = vunpack.c.l.b16 %v1411
      %v1493 = vunpack.c.l.b16 %v1414
      %v1494 = vunpack.c.l.b16 %v1418
      %v1495 = vunpack.c.l.b16 %v1421
      %v1496 = vunpack.c.l.b16 %v1425
      %v1497 = vunpack.c.l.b16 %v1428
      %v1498 = vunpack.c.l.b16 %v1432
      %v1499 = vunpack.c.l.b16 %v1435
      %v1500 = vunpack.c.l.b16 %v1439
      %v1501 = vunpack.c.l.b16 %v1442
      %v1502 = vunpack.c.l.b16 %v1446
      %v1503 = vunpack.c.l.b16 %v1449
      %v1504 = vunpack.c.l.b16 %v1453
      %v1505 = vunpack.c.l.b16 %v1456
      %v1506 = vunpack.c.l.b16 %v1460
      %v1507 = vunpack.c.l.b16 %v1463
      %v1508 = vunpack.c.l.b16 %v1467
      %v1509 = vunpack.c.l.b16 %v1470
      %v1510 = vunpack.c.l.b16 %v1474
      %v1511 = vunpack.c.l.b16 %v1477
      %v1512 = vpack.c.b16 %v1481, %v1480
      %v1513 = vpack.c.b16 %v1483, %v1482
      %v1514 = vpack.c.b16 %v1485, %v1484
      %v1515 = vpack.c.b16 %v1487, %v1486
      %v1516 = vpack.c.b16 %v1489, %v1488
      %v1517 = vpack.c.b16 %v1491, %v1490
      %v1518 = vpack.c.b16 %v1493, %v1492
      %v1519 = vpack.c.b16 %v1495, %v1494
      %v1520 = vpack.c.b16 %v1497, %v1496
      %v1521 = vpack.c.b16 %v1499, %v1498
      %v1522 = vpack.c.b16 %v1501, %v1500
      %v1523 = vpack.c.b16 %v1503, %v1502
      %v1524 = vpack.c.b16 %v1505, %v1504
      %v1525 = vpack.c.b16 %v1507, %v1506
      %v1526 = vpack.c.b16 %v1509, %v1508
      %v1527 = vpack.c.b16 %v1511, %v1510
      %v1529 = vsel %vm356, %v1512, 0
      %v1532 = vsel %vm356, %v1513, 0
      %v1535 = vsel %vm356, %v1514, 0
      %v1538 = vsel %vm356, %v1515, 0
      %v1541 = vsel %vm356, %v1516, 0
      %v1544 = vsel %vm356, %v1517, 0
      %v1547 = vsel %vm356, %v1518, 0
      %v1550 = vsel %vm356, %v1519, 0
      %v1553 = vsel %vm356, %v1520, 0
      %v1556 = vsel %vm356, %v1521, 0
      %v1559 = vsel %vm356, %v1522, 0
      %v1562 = vsel %vm356, %v1523, 0
      %v1565 = vsel %vm356, %v1524, 0
      %v1568 = vsel %vm356, %v1525, 0
      %v1571 = vsel %vm356, %v1526, 0
      %v1574 = vsel %vm356, %v1527, 0
      %v1577 = vsel %vm405, %v1479, 0
      %1579 = vmatprep.subr.bf16.mxu0 0
      %1580 = vmatpush1.bf16.msra.mxu0 %v1577
      %1581 = vmatprep.subr.bf16.mxu0 0
      %1582 = vmatpush1.bf16.msra.mxu0 0
      %1583 = vmatprep.subr.bf16.mxu0 0
      %1584 = vmatpush1.bf16.msra.mxu0 0
      %1585 = vmatprep.subr.bf16.mxu0 0
      %1586 = vmatpush1.bf16.msra.mxu0 0
      %1587 = vmatprep.subr.bf16.mxu0 0
      %1588 = vmatpush1.bf16.msra.mxu0 0
      %1589 = vmatprep.subr.bf16.mxu0 0
      %1590 = vmatpush1.bf16.msra.mxu0 0
      %1591 = vmatprep.subr.bf16.mxu0 0
      %1592 = vmatpush1.bf16.msra.mxu0 0
      %1593 = vmatprep.subr.bf16.mxu0 0
      %1594 = vmatpush1.bf16.msra.mxu0 0
      %1595 = vmatprep.subr.bf16.mxu0 0
      %1596 = vmatpush1.bf16.msra.mxu0 0
      %1597 = vmatprep.subr.bf16.mxu0 0
      %1598 = vmatpush1.bf16.msra.mxu0 0
      %1599 = vmatprep.subr.bf16.mxu0 0
      %1600 = vmatpush1.bf16.msra.mxu0 0
      %1601 = vmatprep.subr.bf16.mxu0 0
      %1602 = vmatpush1.bf16.msra.mxu0 0
      %1603 = vmatprep.subr.bf16.mxu0 0
      %1604 = vmatpush1.bf16.msra.mxu0 0
      %1605 = vmatprep.subr.bf16.mxu0 0
      %1606 = vmatpush1.bf16.msra.mxu0 0
      %1607 = vmatprep.subr.bf16.mxu0 0
      %1608 = vmatpush1.bf16.msra.mxu0 0
      %1609 = vmatprep.subr.bf16.mxu0 0
      %1610 = vmatpush1.bf16.msra.mxu0 0
      %1611 = vmatprep.mubr.bf16.mxu0 0
      %1612 = vmatmul.mubr.bf16.gmra.mrb[0].mxu0 %v1529
      %v1613 = vpop.f32.mrb[0].mxu0
      %v1614 = vadd.f32 0.0, %v1613
      %v1615 = vpop.f32.mrb[0].mxu0
      %v1616 = vpop.f32.mrb[0].mxu0
      %v1617 = vadd.f32 0.0, %v1616
      %v1618 = vpop.f32.mrb[0].mxu0
      %1619 = vmatprep.mubr.bf16.mxu0 0
      %1620 = vmatmul.mubr.bf16.gmra.mrb[0].mxu0 %v1532
      %v1621 = vpop.f32.mrb[0].mxu0
      %v1622 = vadd.f32 0.0, %v1621
      %v1623 = vpop.f32.mrb[0].mxu0
      %v1624 = vpop.f32.mrb[0].mxu0
      %v1625 = vadd.f32 0.0, %v1624
      %v1626 = vpop.f32.mrb[0].mxu0
      %1627 = vmatprep.mubr.bf16.mxu0 0
      %1628 = vmatmul.mubr.bf16.gmra.mrb[0].mxu0 %v1535
      %v1629 = vpop.f32.mrb[0].mxu0
      %v1630 = vadd.f32 0.0, %v1629
      %v1631 = vpop.f32.mrb[0].mxu0
      %v1632 = vpop.f32.mrb[0].mxu0
      %v1633 = vadd.f32 0.0, %v1632
      %v1634 = vpop.f32.mrb[0].mxu0
      %1635 = vmatprep.mubr.bf16.mxu0 0
      %1636 = vmatmul.mubr.bf16.gmra.mrb[0].mxu0 %v1538
      %v1637 = vpop.f32.mrb[0].mxu0
      %v1638 = vadd.f32 0.0, %v1637
      %v1639 = vpop.f32.mrb[0].mxu0
      %v1640 = vpop.f32.mrb[0].mxu0
      %v1641 = vadd.f32 0.0, %v1640
      %v1642 = vpop.f32.mrb[0].mxu0
      %1643 = vmatprep.mubr.bf16.mxu0 0
      %1644 = vmatmul.mubr.bf16.gmra.mrb[0].mxu0 %v1541
      %v1645 = vpop.f32.mrb[0].mxu0
      %v1646 = vadd.f32 0.0, %v1645
      %v1647 = vpop.f32.mrb[0].mxu0
      %v1648 = vpop.f32.mrb[0].mxu0
      %v1649 = vadd.f32 0.0, %v1648
      %v1650 = vpop.f32.mrb[0].mxu0
      %1651 = vmatprep.mubr.bf16.mxu0 0
      %1652 = vmatmul.mubr.bf16.gmra.mrb[0].mxu0 %v1544
      %v1653 = vpop.f32.mrb[0].mxu0
      %v1654 = vadd.f32 0.0, %v1653
      %v1655 = vpop.f32.mrb[0].mxu0
      %v1656 = vpop.f32.mrb[0].mxu0
      %v1657 = vadd.f32 0.0, %v1656
      %v1658 = vpop.f32.mrb[0].mxu0
      %1659 = vmatprep.mubr.bf16.mxu0 0
      %1660 = vmatmul.mubr.bf16.gmra.mrb[0].mxu0 %v1547
      %v1661 = vpop.f32.mrb[0].mxu0
      %v1662 = vadd.f32 0.0, %v1661
      %v1663 = vpop.f32.mrb[0].mxu0
      %v1664 = vpop.f32.mrb[0].mxu0
      %v1665 = vadd.f32 0.0, %v1664
      %v1666 = vpop.f32.mrb[0].mxu0
      %1667 = vmatprep.mubr.bf16.mxu0 0
      %1668 = vmatmul.mubr.bf16.gmra.mrb[0].mxu0 %v1550
      %v1669 = vpop.f32.mrb[0].mxu0
      %v1670 = vadd.f32 0.0, %v1669
      %v1671 = vpop.f32.mrb[0].mxu0
      %v1672 = vpop.f32.mrb[0].mxu0
      %v1673 = vadd.f32 0.0, %v1672
      %v1674 = vpop.f32.mrb[0].mxu0
      %1675 = vmatprep.mubr.bf16.mxu0 0
      %1676 = vmatmul.mubr.bf16.gmra.mrb[0].mxu0 %v1553
      %v1677 = vpop.f32.mrb[0].mxu0
      %v1678 = vadd.f32 0.0, %v1677
      %v1679 = vpop.f32.mrb[0].mxu0
      %v1680 = vpop.f32.mrb[0].mxu0
      %v1681 = vadd.f32 0.0, %v1680
      %v1682 = vpop.f32.mrb[0].mxu0
      %1683 = vmatprep.mubr.bf16.mxu0 0
      %1684 = vmatmul.mubr.bf16.gmra.mrb[0].mxu0 %v1556
      %v1685 = vpop.f32.mrb[0].mxu0
      %v1686 = vadd.f32 0.0, %v1685
      %v1687 = vpop.f32.mrb[0].mxu0
      %v1688 = vpop.f32.mrb[0].mxu0
      %v1689 = vadd.f32 0.0, %v1688
      %v1690 = vpop.f32.mrb[0].mxu0
      %1691 = vmatprep.mubr.bf16.mxu0 0
      %1692 = vmatmul.mubr.bf16.gmra.mrb[0].mxu0 %v1559
      %v1693 = vpop.f32.mrb[0].mxu0
      %v1694 = vadd.f32 0.0, %v1693
      %v1695 = vpop.f32.mrb[0].mxu0
      %v1696 = vpop.f32.mrb[0].mxu0
      %v1697 = vadd.f32 0.0, %v1696
      %v1698 = vpop.f32.mrb[0].mxu0
      %1699 = vmatprep.mubr.bf16.mxu0 0
      %1700 = vmatmul.mubr.bf16.gmra.mrb[0].mxu0 %v1562
      %v1701 = vpop.f32.mrb[0].mxu0
      %v1702 = vadd.f32 0.0, %v1701
      %v1703 = vpop.f32.mrb[0].mxu0
      %v1704 = vpop.f32.mrb[0].mxu0
      %v1705 = vadd.f32 0.0, %v1704
      %v1706 = vpop.f32.mrb[0].mxu0
      %1707 = vmatprep.mubr.bf16.mxu0 0
      %1708 = vmatmul.mubr.bf16.gmra.mrb[0].mxu0 %v1565
      %v1709 = vpop.f32.mrb[0].mxu0
      %v1710 = vadd.f32 0.0, %v1709
      %v1711 = vpop.f32.mrb[0].mxu0
      %v1712 = vpop.f32.mrb[0].mxu0
      %v1713 = vadd.f32 0.0, %v1712
      %v1714 = vpop.f32.mrb[0].mxu0
      %1715 = vmatprep.mubr.bf16.mxu0 0
      %1716 = vmatmul.mubr.bf16.gmra.mrb[0].mxu0 %v1568
      %v1717 = vpop.f32.mrb[0].mxu0
      %v1718 = vadd.f32 0.0, %v1717
      %v1719 = vpop.f32.mrb[0].mxu0
      %v1720 = vpop.f32.mrb[0].mxu0
      %v1721 = vadd.f32 0.0, %v1720
      %v1722 = vpop.f32.mrb[0].mxu0
      %1723 = vmatprep.mubr.bf16.mxu0 0
      %1724 = vmatmul.mubr.bf16.gmra.mrb[0].mxu0 %v1571
      %v1725 = vpop.f32.mrb[0].mxu0
      %v1726 = vadd.f32 0.0, %v1725
      %v1727 = vpop.f32.mrb[0].mxu0
      %v1728 = vpop.f32.mrb[0].mxu0
      %v1729 = vadd.f32 0.0, %v1728
      %v1730 = vpop.f32.mrb[0].mxu0
      %1731 = vmatprep.mubr.bf16.mxu0 0
      %1732 = vmatmul.mubr.bf16.gmra.mrb[0].mxu0 %v1574
      %v1733 = vpop.f32.mrb[0].mxu0
      %v1734 = vadd.f32 0.0, %v1733
      %v1735 = vpop.f32.mrb[0].mxu0
      %v1736 = vpop.f32.mrb[0].mxu0
      %v1737 = vadd.f32 0.0, %v1736
      %v1738 = vpop.f32.mrb[0].mxu0
      %1739 = vdwg.mxu0
      %v1740 = vld [vmem:[#allocation2] sm:$0xff]
      %v1741 = vld [vmem:[#allocation2 + $0x8] sm:$0xff]
      %v1742 = vld [vmem:[#allocation2 + $0x10] sm:$0xff]
      %v1743 = vld [vmem:[#allocation2 + $0x18] sm:$0xff]
      %v1744 = vld [vmem:[#allocation2 + $0x20] sm:$0xff]
      %v1745 = vld [vmem:[#allocation2 + $0x28] sm:$0xff]
      %v1746 = vld [vmem:[#allocation2 + $0x30] sm:$0xff]
      %v1747 = vld [vmem:[#allocation2 + $0x38] sm:$0xff]
      %v1748 = vld [vmem:[#allocation2 + $0x40] sm:$0xff]
      %v1749 = vld [vmem:[#allocation2 + $0x48] sm:$0xff]
      %v1750 = vld [vmem:[#allocation2 + $0x50] sm:$0xff]
      %v1751 = vld [vmem:[#allocation2 + $0x58] sm:$0xff]
      %v1752 = vld [vmem:[#allocation2 + $0x60] sm:$0xff]
      %v1753 = vld [vmem:[#allocation2 + $0x68] sm:$0xff]
      %v1754 = vld [vmem:[#allocation2 + $0x70] sm:$0xff]
      %v1755 = vld [vmem:[#allocation2 + $0x78] sm:$0xff]
      %v1756 = vld [vmem:[#allocation2 + $0x80] sm:$0xff]
      %v1757 = vld [vmem:[#allocation2 + $0x88] sm:$0xff]
      %v1758 = vld [vmem:[#allocation2 + $0x90] sm:$0xff]
      %v1759 = vld [vmem:[#allocation2 + $0x98] sm:$0xff]
      %v1760 = vld [vmem:[#allocation2 + $0xa0] sm:$0xff]
      %v1761 = vld [vmem:[#allocation2 + $0xa8] sm:$0xff]
      %v1762 = vld [vmem:[#allocation2 + $0xb0] sm:$0xff]
      %v1763 = vld [vmem:[#allocation2 + $0xb8] sm:$0xff]
      %v1764 = vld [vmem:[#allocation2 + $0xc0] sm:$0xff]
      %v1765 = vld [vmem:[#allocation2 + $0xc8] sm:$0xff]
      %v1766 = vld [vmem:[#allocation2 + $0xd0] sm:$0xff]
      %v1767 = vld [vmem:[#allocation2 + $0xd8] sm:$0xff]
      %v1768 = vld [vmem:[#allocation2 + $0xe0] sm:$0xff]
      %v1769 = vld [vmem:[#allocation2 + $0xe8] sm:$0xff]
      %v1770 = vld [vmem:[#allocation2 + $0xf0] sm:$0xff]
      %v1771 = vld [vmem:[#allocation2 + $0xf8] sm:$0xff]
      %v1772 = vadd.f32 %v1740, %v1614
      %v1773 = vadd.f32 %v1741, %v1617
      %v1774 = vadd.f32 %v1742, %v1622
      %v1775 = vadd.f32 %v1743, %v1625
      %v1776 = vadd.f32 %v1744, %v1630
      %v1777 = vadd.f32 %v1745, %v1633
      %v1778 = vadd.f32 %v1746, %v1638
      %v1779 = vadd.f32 %v1747, %v1641
      %v1780 = vadd.f32 %v1748, %v1646
      %v1781 = vadd.f32 %v1749, %v1649
      %v1782 = vadd.f32 %v1750, %v1654
      %v1783 = vadd.f32 %v1751, %v1657
      %v1784 = vadd.f32 %v1752, %v1662
      %v1785 = vadd.f32 %v1753, %v1665
      %v1786 = vadd.f32 %v1754, %v1670
      %v1787 = vadd.f32 %v1755, %v1673
      %v1788 = vadd.f32 %v1756, %v1678
      %v1789 = vadd.f32 %v1757, %v1681
      %v1790 = vadd.f32 %v1758, %v1686
      %v1791 = vadd.f32 %v1759, %v1689
      %v1792 = vadd.f32 %v1760, %v1694
      %v1793 = vadd.f32 %v1761, %v1697
      %v1794 = vadd.f32 %v1762, %v1702
      %v1795 = vadd.f32 %v1763, %v1705
      %v1796 = vadd.f32 %v1764, %v1710
      %v1797 = vadd.f32 %v1765, %v1713
      %v1798 = vadd.f32 %v1766, %v1718
      %v1799 = vadd.f32 %v1767, %v1721
      %v1800 = vadd.f32 %v1768, %v1726
      %v1801 = vadd.f32 %v1769, %v1729
      %v1802 = vadd.f32 %v1770, %v1734
      %v1803 = vadd.f32 %v1771, %v1737
      %1804 = vst [vmem:[#allocation2] sm:$0xff] %v1772
      %1805 = vst [vmem:[#allocation2 + $0x8] sm:$0xff] %v1773
      %1806 = vst [vmem:[#allocation2 + $0x10] sm:$0xff] %v1774
      %1807 = vst [vmem:[#allocation2 + $0x18] sm:$0xff] %v1775
      %1808 = vst [vmem:[#allocation2 + $0x20] sm:$0xff] %v1776
      %1809 = vst [vmem:[#allocation2 + $0x28] sm:$0xff] %v1777
      %1810 = vst [vmem:[#allocation2 + $0x30] sm:$0xff] %v1778
      %1811 = vst [vmem:[#allocation2 + $0x38] sm:$0xff] %v1779
      %1812 = vst [vmem:[#allocation2 + $0x40] sm:$0xff] %v1780
      %1813 = vst [vmem:[#allocation2 + $0x48] sm:$0xff] %v1781
      %1814 = vst [vmem:[#allocation2 + $0x50] sm:$0xff] %v1782
      %1815 = vst [vmem:[#allocation2 + $0x58] sm:$0xff] %v1783
      %1816 = vst [vmem:[#allocation2 + $0x60] sm:$0xff] %v1784
      %1817 = vst [vmem:[#allocation2 + $0x68] sm:$0xff] %v1785
      %1818 = vst [vmem:[#allocation2 + $0x70] sm:$0xff] %v1786
      %1819 = vst [vmem:[#allocation2 + $0x78] sm:$0xff] %v1787
      %1820 = vst [vmem:[#allocation2 + $0x80] sm:$0xff] %v1788
      %1821 = vst [vmem:[#allocation2 + $0x88] sm:$0xff] %v1789
      %1822 = vst [vmem:[#allocation2 + $0x90] sm:$0xff] %v1790
      %1823 = vst [vmem:[#allocation2 + $0x98] sm:$0xff] %v1791
      %1824 = vst [vmem:[#allocation2 + $0xa0] sm:$0xff] %v1792
      %1825 = vst [vmem:[#allocation2 + $0xa8] sm:$0xff] %v1793
      %1826 = vst [vmem:[#allocation2 + $0xb0] sm:$0xff] %v1794
      %1827 = vst [vmem:[#allocation2 + $0xb8] sm:$0xff] %v1795
      %1828 = vst [vmem:[#allocation2 + $0xc0] sm:$0xff] %v1796
      %1829 = vst [vmem:[#allocation2 + $0xc8] sm:$0xff] %v1797
      %1830 = vst [vmem:[#allocation2 + $0xd0] sm:$0xff] %v1798
      %1831 = vst [vmem:[#allocation2 + $0xd8] sm:$0xff] %v1799
      %1832 = vst [vmem:[#allocation2 + $0xe0] sm:$0xff] %v1800
      %1833 = vst [vmem:[#allocation2 + $0xe8] sm:$0xff] %v1801
      %1834 = vst [vmem:[#allocation2 + $0xf0] sm:$0xff] %v1802
      %1835 = vst [vmem:[#allocation2 + $0xf8] sm:$0xff] %v1803
      %s1836 = scalar_lea.vmem %s1, 6
      %v1837 = vld [vmem:[%s1836] sm:$0x3]
      %v1840 = vunpack.c.l.b16 %v269
      %v1841 = vunpack.c.l.b16 %v270
      %v1842 = vpack.c.b16 %v1841, %v1840
      %v1844 = vsel %vm356, %v1842, 0
      %v1847 = vsel %vm405, %v1837, 0
      %1849 = vmatprep.subr.bf16.mxu0 0
      %1850 = vmatpush1.bf16.msra.mxu0 %v1847
      %1851 = vmatprep.subr.bf16.mxu0 0
      %1852 = vmatpush1.bf16.msra.mxu0 0
      %1853 = vmatprep.subr.bf16.mxu0 0
      %1854 = vmatpush1.bf16.msra.mxu0 0
      %1855 = vmatprep.subr.bf16.mxu0 0
      %1856 = vmatpush1.bf16.msra.mxu0 0
      %1857 = vmatprep.subr.bf16.mxu0 0
      %1858 = vmatpush1.bf16.msra.mxu0 0
      %1859 = vmatprep.subr.bf16.mxu0 0
      %1860 = vmatpush1.bf16.msra.mxu0 0
      %1861 = vmatprep.subr.bf16.mxu0 0
      %1862 = vmatpush1.bf16.msra.mxu0 0
      %1863 = vmatprep.subr.bf16.mxu0 0
      %1864 = vmatpush1.bf16.msra.mxu0 0
      %1865 = vmatprep.subr.bf16.mxu0 0
      %1866 = vmatpush1.bf16.msra.mxu0 0
      %1867 = vmatprep.subr.bf16.mxu0 0
      %1868 = vmatpush1.bf16.msra.mxu0 0
      %1869 = vmatprep.subr.bf16.mxu0 0
      %1870 = vmatpush1.bf16.msra.mxu0 0
      %1871 = vmatprep.subr.bf16.mxu0 0
      %1872 = vmatpush1.bf16.msra.mxu0 0
      %1873 = vmatprep.subr.bf16.mxu0 0
      %1874 = vmatpush1.bf16.msra.mxu0 0
      %1875 = vmatprep.subr.bf16.mxu0 0
      %1876 = vmatpush1.bf16.msra.mxu0 0
      %1877 = vmatprep.subr.bf16.mxu0 0
      %1878 = vmatpush1.bf16.msra.mxu0 0
      %1879 = vmatprep.subr.bf16.mxu0 0
      %1880 = vmatpush1.bf16.msra.mxu0 0
      %1881 = vmatprep.mubr.bf16.mxu0 0
      %1882 = vmatmul.mubr.bf16.gmra.mrb[0].mxu0 %v361
      %v1883 = vpop.f32.mrb[0].mxu0
      %v1884 = vadd.f32 0.0, %v1883
      %v1885 = vpop.f32.mrb[0].mxu0
      %v1886 = vpop.f32.mrb[0].mxu0
      %v1887 = vadd.f32 0.0, %v1886
      %v1888 = vpop.f32.mrb[0].mxu0
      %1889 = vmatprep.mubr.bf16.mxu0 0
      %1890 = vmatmul.mubr.bf16.gmra.mrb[0].mxu0 %v364
      %v1891 = vpop.f32.mrb[0].mxu0
      %v1892 = vadd.f32 0.0, %v1891
      %v1893 = vpop.f32.mrb[0].mxu0
      %v1894 = vpop.f32.mrb[0].mxu0
      %v1895 = vadd.f32 0.0, %v1894
      %v1896 = vpop.f32.mrb[0].mxu0
      %1897 = vmatprep.mubr.bf16.mxu0 0
      %1898 = vmatmul.mubr.bf16.gmra.mrb[0].mxu0 %v367
      %v1899 = vpop.f32.mrb[0].mxu0
      %v1900 = vadd.f32 0.0, %v1899
      %v1901 = vpop.f32.mrb[0].mxu0
      %v1902 = vpop.f32.mrb[0].mxu0
      %v1903 = vadd.f32 0.0, %v1902
      %v1904 = vpop.f32.mrb[0].mxu0
      %1905 = vmatprep.mubr.bf16.mxu0 0
      %1906 = vmatmul.mubr.bf16.gmra.mrb[0].mxu0 %v370
      %v1907 = vpop.f32.mrb[0].mxu0
      %v1908 = vadd.f32 0.0, %v1907
      %v1909 = vpop.f32.mrb[0].mxu0
      %v1910 = vpop.f32.mrb[0].mxu0
      %v1911 = vadd.f32 0.0, %v1910
      %v1912 = vpop.f32.mrb[0].mxu0
      %1913 = vmatprep.mubr.bf16.mxu0 0
      %1914 = vmatmul.mubr.bf16.gmra.mrb[0].mxu0 %v373
      %v1915 = vpop.f32.mrb[0].mxu0
      %v1916 = vadd.f32 0.0, %v1915
      %v1917 = vpop.f32.mrb[0].mxu0
      %v1918 = vpop.f32.mrb[0].mxu0
      %v1919 = vadd.f32 0.0, %v1918
      %v1920 = vpop.f32.mrb[0].mxu0
      %1921 = vmatprep.mubr.bf16.mxu0 0
      %1922 = vmatmul.mubr.bf16.gmra.mrb[0].mxu0 %v376
      %v1923 = vpop.f32.mrb[0].mxu0
      %v1924 = vadd.f32 0.0, %v1923
      %v1925 = vpop.f32.mrb[0].mxu0
      %v1926 = vpop.f32.mrb[0].mxu0
      %v1927 = vadd.f32 0.0, %v1926
      %v1928 = vpop.f32.mrb[0].mxu0
      %1929 = vmatprep.mubr.bf16.mxu0 0
      %1930 = vmatmul.mubr.bf16.gmra.mrb[0].mxu0 %v379
      %v1931 = vpop.f32.mrb[0].mxu0
      %v1932 = vadd.f32 0.0, %v1931
      %v1933 = vpop.f32.mrb[0].mxu0
      %v1934 = vpop.f32.mrb[0].mxu0
      %v1935 = vadd.f32 0.0, %v1934
      %v1936 = vpop.f32.mrb[0].mxu0
      %1937 = vmatprep.mubr.bf16.mxu0 0
      %1938 = vmatmul.mubr.bf16.gmra.mrb[0].mxu0 %v382
      %v1939 = vpop.f32.mrb[0].mxu0
      %v1940 = vadd.f32 0.0, %v1939
      %v1941 = vpop.f32.mrb[0].mxu0
      %v1942 = vpop.f32.mrb[0].mxu0
      %v1943 = vadd.f32 0.0, %v1942
      %v1944 = vpop.f32.mrb[0].mxu0
      %1945 = vmatprep.mubr.bf16.mxu0 0
      %1946 = vmatmul.mubr.bf16.gmra.mrb[0].mxu0 %v385
      %v1947 = vpop.f32.mrb[0].mxu0
      %v1948 = vadd.f32 0.0, %v1947
      %v1949 = vpop.f32.mrb[0].mxu0
      %v1950 = vpop.f32.mrb[0].mxu0
      %v1951 = vadd.f32 0.0, %v1950
      %v1952 = vpop.f32.mrb[0].mxu0
      %1953 = vmatprep.mubr.bf16.mxu0 0
      %1954 = vmatmul.mubr.bf16.gmra.mrb[0].mxu0 %v388
      %v1955 = vpop.f32.mrb[0].mxu0
      %v1956 = vadd.f32 0.0, %v1955
      %v1957 = vpop.f32.mrb[0].mxu0
      %v1958 = vpop.f32.mrb[0].mxu0
      %v1959 = vadd.f32 0.0, %v1958
      %v1960 = vpop.f32.mrb[0].mxu0
      %1961 = vmatprep.mubr.bf16.mxu0 0
      %1962 = vmatmul.mubr.bf16.gmra.mrb[0].mxu0 %v391
      %v1963 = vpop.f32.mrb[0].mxu0
      %v1964 = vadd.f32 0.0, %v1963
      %v1965 = vpop.f32.mrb[0].mxu0
      %v1966 = vpop.f32.mrb[0].mxu0
      %v1967 = vadd.f32 0.0, %v1966
      %v1968 = vpop.f32.mrb[0].mxu0
      %1969 = vmatprep.mubr.bf16.mxu0 0
      %1970 = vmatmul.mubr.bf16.gmra.mrb[0].mxu0 %v394
      %v1971 = vpop.f32.mrb[0].mxu0
      %v1972 = vadd.f32 0.0, %v1971
      %v1973 = vpop.f32.mrb[0].mxu0
      %v1974 = vpop.f32.mrb[0].mxu0
      %v1975 = vadd.f32 0.0, %v1974
      %v1976 = vpop.f32.mrb[0].mxu0
      %1977 = vmatprep.mubr.bf16.mxu0 0
      %1978 = vmatmul.mubr.bf16.gmra.mrb[0].mxu0 %v397
      %v1979 = vpop.f32.mrb[0].mxu0
      %v1980 = vadd.f32 0.0, %v1979
      %v1981 = vpop.f32.mrb[0].mxu0
      %v1982 = vpop.f32.mrb[0].mxu0
      %v1983 = vadd.f32 0.0, %v1982
      %v1984 = vpop.f32.mrb[0].mxu0
      %1985 = vmatprep.mubr.bf16.mxu0 0
      %1986 = vmatmul.mubr.bf16.gmra.mrb[0].mxu0 %v400
      %v1987 = vpop.f32.mrb[0].mxu0
      %v1988 = vadd.f32 0.0, %v1987
      %v1989 = vpop.f32.mrb[0].mxu0
      %v1990 = vpop.f32.mrb[0].mxu0
      %v1991 = vadd.f32 0.0, %v1990
      %v1992 = vpop.f32.mrb[0].mxu0
      %1993 = vmatprep.mubr.bf16.mxu0 0
      %1994 = vmatmul.mubr.bf16.gmra.mrb[0].mxu0 %v403
      %v1995 = vpop.f32.mrb[0].mxu0
      %v1996 = vadd.f32 0.0, %v1995
      %v1997 = vpop.f32.mrb[0].mxu0
      %v1998 = vpop.f32.mrb[0].mxu0
      %v1999 = vadd.f32 0.0, %v1998
      %v2000 = vpop.f32.mrb[0].mxu0
      %2001 = vmatprep.mubr.bf16.mxu0 0
      %2002 = vmatmul.mubr.bf16.gmra.mrb[0].mxu0 %v1844
      %v2003 = vpop.f32.mrb[0].mxu0
      %v2004 = vadd.f32 0.0, %v2003
      %v2005 = vpop.f32.mrb[0].mxu0
      %v2006 = vpop.f32.mrb[0].mxu0
      %v2007 = vadd.f32 0.0, %v2006
      %v2008 = vpop.f32.mrb[0].mxu0
      %2009 = vdwg.mxu0
      %v2010 = vld [vmem:[#allocation2] sm:$0xff]
      %v2011 = vld [vmem:[#allocation2 + $0x8] sm:$0xff]
      %v2012 = vld [vmem:[#allocation2 + $0x10] sm:$0xff]
      %v2013 = vld [vmem:[#allocation2 + $0x18] sm:$0xff]
      %v2014 = vld [vmem:[#allocation2 + $0x20] sm:$0xff]
      %v2015 = vld [vmem:[#allocation2 + $0x28] sm:$0xff]
      %v2016 = vld [vmem:[#allocation2 + $0x30] sm:$0xff]
      %v2017 = vld [vmem:[#allocation2 + $0x38] sm:$0xff]
      %v2018 = vld [vmem:[#allocation2 + $0x40] sm:$0xff]
      %v2019 = vld [vmem:[#allocation2 + $0x48] sm:$0xff]
      %v2020 = vld [vmem:[#allocation2 + $0x50] sm:$0xff]
      %v2021 = vld [vmem:[#allocation2 + $0x58] sm:$0xff]
      %v2022 = vld [vmem:[#allocation2 + $0x60] sm:$0xff]
      %v2023 = vld [vmem:[#allocation2 + $0x68] sm:$0xff]
      %v2024 = vld [vmem:[#allocation2 + $0x70] sm:$0xff]
      %v2025 = vld [vmem:[#allocation2 + $0x78] sm:$0xff]
      %v2026 = vld [vmem:[#allocation2 + $0x80] sm:$0xff]
      %v2027 = vld [vmem:[#allocation2 + $0x88] sm:$0xff]
      %v2028 = vld [vmem:[#allocation2 + $0x90] sm:$0xff]
      %v2029 = vld [vmem:[#allocation2 + $0x98] sm:$0xff]
      %v2030 = vld [vmem:[#allocation2 + $0xa0] sm:$0xff]
      %v2031 = vld [vmem:[#allocation2 + $0xa8] sm:$0xff]
      %v2032 = vld [vmem:[#allocation2 + $0xb0] sm:$0xff]
      %v2033 = vld [vmem:[#allocation2 + $0xb8] sm:$0xff]
      %v2034 = vld [vmem:[#allocation2 + $0xc0] sm:$0xff]
      %v2035 = vld [vmem:[#allocation2 + $0xc8] sm:$0xff]
      %v2036 = vld [vmem:[#allocation2 + $0xd0] sm:$0xff]
      %v2037 = vld [vmem:[#allocation2 + $0xd8] sm:$0xff]
      %v2038 = vld [vmem:[#allocation2 + $0xe0] sm:$0xff]
      %v2039 = vld [vmem:[#allocation2 + $0xe8] sm:$0xff]
      %v2040 = vld [vmem:[#allocation2 + $0xf0] sm:$0xff]
      %v2041 = vld [vmem:[#allocation2 + $0xf8] sm:$0xff]
      %v2042 = vadd.f32 %v2010, %v1884
      %v2043 = vadd.f32 %v2011, %v1887
      %v2044 = vadd.f32 %v2012, %v1892
      %v2045 = vadd.f32 %v2013, %v1895
      %v2046 = vadd.f32 %v2014, %v1900
      %v2047 = vadd.f32 %v2015, %v1903
      %v2048 = vadd.f32 %v2016, %v1908
      %v2049 = vadd.f32 %v2017, %v1911
      %v2050 = vadd.f32 %v2018, %v1916
      %v2051 = vadd.f32 %v2019, %v1919
      %v2052 = vadd.f32 %v2020, %v1924
      %v2053 = vadd.f32 %v2021, %v1927
      %v2054 = vadd.f32 %v2022, %v1932
      %v2055 = vadd.f32 %v2023, %v1935
      %v2056 = vadd.f32 %v2024, %v1940
      %v2057 = vadd.f32 %v2025, %v1943
      %v2058 = vadd.f32 %v2026, %v1948
      %v2059 = vadd.f32 %v2027, %v1951
      %v2060 = vadd.f32 %v2028, %v1956
      %v2061 = vadd.f32 %v2029, %v1959
      %v2062 = vadd.f32 %v2030, %v1964
      %v2063 = vadd.f32 %v2031, %v1967
      %v2064 = vadd.f32 %v2032, %v1972
      %v2065 = vadd.f32 %v2033, %v1975
      %v2066 = vadd.f32 %v2034, %v1980
      %v2067 = vadd.f32 %v2035, %v1983
      %v2068 = vadd.f32 %v2036, %v1988
      %v2069 = vadd.f32 %v2037, %v1991
      %v2070 = vadd.f32 %v2038, %v1996
      %v2071 = vadd.f32 %v2039, %v1999
      %v2072 = vadd.f32 %v2040, %v2004
      %v2073 = vadd.f32 %v2041, %v2007
      %2074 = vst [vmem:[#allocation2] sm:$0xff] %v2042
      %2075 = vst [vmem:[#allocation2 + $0x8] sm:$0xff] %v2043
      %2076 = vst [vmem:[#allocation2 + $0x10] sm:$0xff] %v2044
      %2077 = vst [vmem:[#allocation2 + $0x18] sm:$0xff] %v2045
      %2078 = vst [vmem:[#allocation2 + $0x20] sm:$0xff] %v2046
      %2079 = vst [vmem:[#allocation2 + $0x28] sm:$0xff] %v2047
      %2080 = vst [vmem:[#allocation2 + $0x30] sm:$0xff] %v2048
      %2081 = vst [vmem:[#allocation2 + $0x38] sm:$0xff] %v2049
      %2082 = vst [vmem:[#allocation2 + $0x40] sm:$0xff] %v2050
      %2083 = vst [vmem:[#allocation2 + $0x48] sm:$0xff] %v2051
      %2084 = vst [vmem:[#allocation2 + $0x50] sm:$0xff] %v2052
      %2085 = vst [vmem:[#allocation2 + $0x58] sm:$0xff] %v2053
      %2086 = vst [vmem:[#allocation2 + $0x60] sm:$0xff] %v2054
      %2087 = vst [vmem:[#allocation2 + $0x68] sm:$0xff] %v2055
      %2088 = vst [vmem:[#allocation2 + $0x70] sm:$0xff] %v2056
      %2089 = vst [vmem:[#allocation2 + $0x78] sm:$0xff] %v2057
      %2090 = vst [vmem:[#allocation2 + $0x80] sm:$0xff] %v2058
      %2091 = vst [vmem:[#allocation2 + $0x88] sm:$0xff] %v2059
      %2092 = vst [vmem:[#allocation2 + $0x90] sm:$0xff] %v2060
      %2093 = vst [vmem:[#allocation2 + $0x98] sm:$0xff] %v2061
      %2094 = vst [vmem:[#allocation2 + $0xa0] sm:$0xff] %v2062
      %2095 = vst [vmem:[#allocation2 + $0xa8] sm:$0xff] %v2063
      %2096 = vst [vmem:[#allocation2 + $0xb0] sm:$0xff] %v2064
      %2097 = vst [vmem:[#allocation2 + $0xb8] sm:$0xff] %v2065
      %2098 = vst [vmem:[#allocation2 + $0xc0] sm:$0xff] %v2066
      %2099 = vst [vmem:[#allocation2 + $0xc8] sm:$0xff] %v2067
      %2100 = vst [vmem:[#allocation2 + $0xd0] sm:$0xff] %v2068
      %2101 = vst [vmem:[#allocation2 + $0xd8] sm:$0xff] %v2069
      %2102 = vst [vmem:[#allocation2 + $0xe0] sm:$0xff] %v2070
      %2103 = vst [vmem:[#allocation2 + $0xe8] sm:$0xff] %v2071
      %2104 = vst [vmem:[#allocation2 + $0xf0] sm:$0xff] %v2072
      %2105 = vst [vmem:[#allocation2 + $0xf8] sm:$0xff] %v2073
      %v2107 = vshrl.u32 %v269, 16
      %v2109 = vrot.slane %v2107, 4
      %v2110 = vshll.u32 %v269, 16
      %v2112 = vrot.slane %v2110, 5
      %v2113 = vor.u32 %v2109, %v2112
      %v2114 = vrot.slane %v2113, 4
      %v2116 = vshll.u32 %v270, 16
      %v2118 = vrot.slane %v2116, 5
      %v2119 = vsel %vm604, %v2114, %v2118
      %v2120 = vshrl.u32 %v270, 16
      %v2122 = vrot.slane %v2120, 4
      %v2123 = vor.u32 %v2122, %v2118
      %v2124 = vrot.slane %v2123, 4
      %v2126 = vshll.u32 %v271, 16
      %v2128 = vrot.slane %v2126, 5
      %v2129 = vsel %vm604, %v2124, %v2128
      %s2130 = scalar_lea.vmem %s1, 8
      %v2131 = vld [vmem:[%s2130] sm:$0x3]
      %v2132 = vunpack.c.l.b16 %v2119
      %v2133 = vunpack.c.l.b16 %v2129
      %v2134 = vpack.c.b16 %v2133, %v2132
      %v2136 = vsel %vm356, %v2134, 0
      %v2139 = vsel %vm405, %v2131, 0
      %2141 = vmatprep.subr.bf16.mxu0 0
      %2142 = vmatpush1.bf16.msra.mxu0 %v2139
      %2143 = vmatprep.subr.bf16.mxu0 0
      %2144 = vmatpush1.bf16.msra.mxu0 0
      %2145 = vmatprep.subr.bf16.mxu0 0
      %2146 = vmatpush1.bf16.msra.mxu0 0
      %2147 = vmatprep.subr.bf16.mxu0 0
      %2148 = vmatpush1.bf16.msra.mxu0 0
      %2149 = vmatprep.subr.bf16.mxu0 0
      %2150 = vmatpush1.bf16.msra.mxu0 0
      %2151 = vmatprep.subr.bf16.mxu0 0
      %2152 = vmatpush1.bf16.msra.mxu0 0
      %2153 = vmatprep.subr.bf16.mxu0 0
      %2154 = vmatpush1.bf16.msra.mxu0 0
      %2155 = vmatprep.subr.bf16.mxu0 0
      %2156 = vmatpush1.bf16.msra.mxu0 0
      %2157 = vmatprep.subr.bf16.mxu0 0
      %2158 = vmatpush1.bf16.msra.mxu0 0
      %2159 = vmatprep.subr.bf16.mxu0 0
      %2160 = vmatpush1.bf16.msra.mxu0 0
      %2161 = vmatprep.subr.bf16.mxu0 0
      %2162 = vmatpush1.bf16.msra.mxu0 0
      %2163 = vmatprep.subr.bf16.mxu0 0
      %2164 = vmatpush1.bf16.msra.mxu0 0
      %2165 = vmatprep.subr.bf16.mxu0 0
      %2166 = vmatpush1.bf16.msra.mxu0 0
      %2167 = vmatprep.subr.bf16.mxu0 0
      %2168 = vmatpush1.bf16.msra.mxu0 0
      %2169 = vmatprep.subr.bf16.mxu0 0
      %2170 = vmatpush1.bf16.msra.mxu0 0
      %2171 = vmatprep.subr.bf16.mxu0 0
      %2172 = vmatpush1.bf16.msra.mxu0 0
      %2173 = vmatprep.mubr.bf16.mxu0 0
      %2174 = vmatmul.mubr.bf16.gmra.mrb[0].mxu0 %v1043
      %v2175 = vpop.f32.mrb[0].mxu0
      %v2176 = vadd.f32 0.0, %v2175
      %v2177 = vpop.f32.mrb[0].mxu0
      %v2178 = vpop.f32.mrb[0].mxu0
      %v2179 = vadd.f32 0.0, %v2178
      %v2180 = vpop.f32.mrb[0].mxu0
      %2181 = vmatprep.mubr.bf16.mxu0 0
      %2182 = vmatmul.mubr.bf16.gmra.mrb[0].mxu0 %v1046
      %v2183 = vpop.f32.mrb[0].mxu0
      %v2184 = vadd.f32 0.0, %v2183
      %v2185 = vpop.f32.mrb[0].mxu0
      %v2186 = vpop.f32.mrb[0].mxu0
      %v2187 = vadd.f32 0.0, %v2186
      %v2188 = vpop.f32.mrb[0].mxu0
      %2189 = vmatprep.mubr.bf16.mxu0 0
      %2190 = vmatmul.mubr.bf16.gmra.mrb[0].mxu0 %v1049
      %v2191 = vpop.f32.mrb[0].mxu0
      %v2192 = vadd.f32 0.0, %v2191
      %v2193 = vpop.f32.mrb[0].mxu0
      %v2194 = vpop.f32.mrb[0].mxu0
      %v2195 = vadd.f32 0.0, %v2194
      %v2196 = vpop.f32.mrb[0].mxu0
      %2197 = vmatprep.mubr.bf16.mxu0 0
      %2198 = vmatmul.mubr.bf16.gmra.mrb[0].mxu0 %v1052
      %v2199 = vpop.f32.mrb[0].mxu0
      %v2200 = vadd.f32 0.0, %v2199
      %v2201 = vpop.f32.mrb[0].mxu0
      %v2202 = vpop.f32.mrb[0].mxu0
      %v2203 = vadd.f32 0.0, %v2202
      %v2204 = vpop.f32.mrb[0].mxu0
      %2205 = vmatprep.mubr.bf16.mxu0 0
      %2206 = vmatmul.mubr.bf16.gmra.mrb[0].mxu0 %v1055
      %v2207 = vpop.f32.mrb[0].mxu0
      %v2208 = vadd.f32 0.0, %v2207
      %v2209 = vpop.f32.mrb[0].mxu0
      %v2210 = vpop.f32.mrb[0].mxu0
      %v2211 = vadd.f32 0.0, %v2210
      %v2212 = vpop.f32.mrb[0].mxu0
      %2213 = vmatprep.mubr.bf16.mxu0 0
      %2214 = vmatmul.mubr.bf16.gmra.mrb[0].mxu0 %v1058
      %v2215 = vpop.f32.mrb[0].mxu0
      %v2216 = vadd.f32 0.0, %v2215
      %v2217 = vpop.f32.mrb[0].mxu0
      %v2218 = vpop.f32.mrb[0].mxu0
      %v2219 = vadd.f32 0.0, %v2218
      %v2220 = vpop.f32.mrb[0].mxu0
      %2221 = vmatprep.mubr.bf16.mxu0 0
      %2222 = vmatmul.mubr.bf16.gmra.mrb[0].mxu0 %v1061
      %v2223 = vpop.f32.mrb[0].mxu0
      %v2224 = vadd.f32 0.0, %v2223
      %v2225 = vpop.f32.mrb[0].mxu0
      %v2226 = vpop.f32.mrb[0].mxu0
      %v2227 = vadd.f32 0.0, %v2226
      %v2228 = vpop.f32.mrb[0].mxu0
      %2229 = vmatprep.mubr.bf16.mxu0 0
      %2230 = vmatmul.mubr.bf16.gmra.mrb[0].mxu0 %v1064
      %v2231 = vpop.f32.mrb[0].mxu0
      %v2232 = vadd.f32 0.0, %v2231
      %v2233 = vpop.f32.mrb[0].mxu0
      %v2234 = vpop.f32.mrb[0].mxu0
      %v2235 = vadd.f32 0.0, %v2234
      %v2236 = vpop.f32.mrb[0].mxu0
      %2237 = vmatprep.mubr.bf16.mxu0 0
      %2238 = vmatmul.mubr.bf16.gmra.mrb[0].mxu0 %v1067
      %v2239 = vpop.f32.mrb[0].mxu0
      %v2240 = vadd.f32 0.0, %v2239
      %v2241 = vpop.f32.mrb[0].mxu0
      %v2242 = vpop.f32.mrb[0].mxu0
      %v2243 = vadd.f32 0.0, %v2242
      %v2244 = vpop.f32.mrb[0].mxu0
      %2245 = vmatprep.mubr.bf16.mxu0 0
      %2246 = vmatmul.mubr.bf16.gmra.mrb[0].mxu0 %v1070
      %v2247 = vpop.f32.mrb[0].mxu0
      %v2248 = vadd.f32 0.0, %v2247
      %v2249 = vpop.f32.mrb[0].mxu0
      %v2250 = vpop.f32.mrb[0].mxu0
      %v2251 = vadd.f32 0.0, %v2250
      %v2252 = vpop.f32.mrb[0].mxu0
      %2253 = vmatprep.mubr.bf16.mxu0 0
      %2254 = vmatmul.mubr.bf16.gmra.mrb[0].mxu0 %v1073
      %v2255 = vpop.f32.mrb[0].mxu0
      %v2256 = vadd.f32 0.0, %v2255
      %v2257 = vpop.f32.mrb[0].mxu0
      %v2258 = vpop.f32.mrb[0].mxu0
      %v2259 = vadd.f32 0.0, %v2258
      %v2260 = vpop.f32.mrb[0].mxu0
      %2261 = vmatprep.mubr.bf16.mxu0 0
      %2262 = vmatmul.mubr.bf16.gmra.mrb[0].mxu0 %v1076
      %v2263 = vpop.f32.mrb[0].mxu0
      %v2264 = vadd.f32 0.0, %v2263
      %v2265 = vpop.f32.mrb[0].mxu0
      %v2266 = vpop.f32.mrb[0].mxu0
      %v2267 = vadd.f32 0.0, %v2266
      %v2268 = vpop.f32.mrb[0].mxu0
      %2269 = vmatprep.mubr.bf16.mxu0 0
      %2270 = vmatmul.mubr.bf16.gmra.mrb[0].mxu0 %v1079
      %v2271 = vpop.f32.mrb[0].mxu0
      %v2272 = vadd.f32 0.0, %v2271
      %v2273 = vpop.f32.mrb[0].mxu0
      %v2274 = vpop.f32.mrb[0].mxu0
      %v2275 = vadd.f32 0.0, %v2274
      %v2276 = vpop.f32.mrb[0].mxu0
      %2277 = vmatprep.mubr.bf16.mxu0 0
      %2278 = vmatmul.mubr.bf16.gmra.mrb[0].mxu0 %v1082
      %v2279 = vpop.f32.mrb[0].mxu0
      %v2280 = vadd.f32 0.0, %v2279
      %v2281 = vpop.f32.mrb[0].mxu0
      %v2282 = vpop.f32.mrb[0].mxu0
      %v2283 = vadd.f32 0.0, %v2282
      %v2284 = vpop.f32.mrb[0].mxu0
      %2285 = vmatprep.mubr.bf16.mxu0 0
      %2286 = vmatmul.mubr.bf16.gmra.mrb[0].mxu0 %v1085
      %v2287 = vpop.f32.mrb[0].mxu0
      %v2288 = vadd.f32 0.0, %v2287
      %v2289 = vpop.f32.mrb[0].mxu0
      %v2290 = vpop.f32.mrb[0].mxu0
      %v2291 = vadd.f32 0.0, %v2290
      %v2292 = vpop.f32.mrb[0].mxu0
      %2293 = vmatprep.mubr.bf16.mxu0 0
      %2294 = vmatmul.mubr.bf16.gmra.mrb[0].mxu0 %v2136
      %v2295 = vpop.f32.mrb[0].mxu0
      %v2296 = vadd.f32 0.0, %v2295
      %v2297 = vpop.f32.mrb[0].mxu0
      %v2298 = vpop.f32.mrb[0].mxu0
      %v2299 = vadd.f32 0.0, %v2298
      %v2300 = vpop.f32.mrb[0].mxu0
      %2301 = vdwg.mxu0
      %v2302 = vld [vmem:[#allocation2] sm:$0xff]
      %v2303 = vld [vmem:[#allocation2 + $0x8] sm:$0xff]
      %v2304 = vld [vmem:[#allocation2 + $0x10] sm:$0xff]
      %v2305 = vld [vmem:[#allocation2 + $0x18] sm:$0xff]
      %v2306 = vld [vmem:[#allocation2 + $0x20] sm:$0xff]
      %v2307 = vld [vmem:[#allocation2 + $0x28] sm:$0xff]
      %v2308 = vld [vmem:[#allocation2 + $0x30] sm:$0xff]
      %v2309 = vld [vmem:[#allocation2 + $0x38] sm:$0xff]
      %v2310 = vld [vmem:[#allocation2 + $0x40] sm:$0xff]
      %v2311 = vld [vmem:[#allocation2 + $0x48] sm:$0xff]
      %v2312 = vld [vmem:[#allocation2 + $0x50] sm:$0xff]
      %v2313 = vld [vmem:[#allocation2 + $0x58] sm:$0xff]
      %v2314 = vld [vmem:[#allocation2 + $0x60] sm:$0xff]
      %v2315 = vld [vmem:[#allocation2 + $0x68] sm:$0xff]
      %v2316 = vld [vmem:[#allocation2 + $0x70] sm:$0xff]
      %v2317 = vld [vmem:[#allocation2 + $0x78] sm:$0xff]
      %v2318 = vld [vmem:[#allocation2 + $0x80] sm:$0xff]
      %v2319 = vld [vmem:[#allocation2 + $0x88] sm:$0xff]
      %v2320 = vld [vmem:[#allocation2 + $0x90] sm:$0xff]
      %v2321 = vld [vmem:[#allocation2 + $0x98] sm:$0xff]
      %v2322 = vld [vmem:[#allocation2 + $0xa0] sm:$0xff]
      %v2323 = vld [vmem:[#allocation2 + $0xa8] sm:$0xff]
      %v2324 = vld [vmem:[#allocation2 + $0xb0] sm:$0xff]
      %v2325 = vld [vmem:[#allocation2 + $0xb8] sm:$0xff]
      %v2326 = vld [vmem:[#allocation2 + $0xc0] sm:$0xff]
      %v2327 = vld [vmem:[#allocation2 + $0xc8] sm:$0xff]
      %v2328 = vld [vmem:[#allocation2 + $0xd0] sm:$0xff]
      %v2329 = vld [vmem:[#allocation2 + $0xd8] sm:$0xff]
      %v2330 = vld [vmem:[#allocation2 + $0xe0] sm:$0xff]
      %v2331 = vld [vmem:[#allocation2 + $0xe8] sm:$0xff]
      %v2332 = vld [vmem:[#allocation2 + $0xf0] sm:$0xff]
      %v2333 = vld [vmem:[#allocation2 + $0xf8] sm:$0xff]
      %v2334 = vadd.f32 %v2302, %v2176
      %v2335 = vadd.f32 %v2303, %v2179
      %v2336 = vadd.f32 %v2304, %v2184
      %v2337 = vadd.f32 %v2305, %v2187
      %v2338 = vadd.f32 %v2306, %v2192
      %v2339 = vadd.f32 %v2307, %v2195
      %v2340 = vadd.f32 %v2308, %v2200
      %v2341 = vadd.f32 %v2309, %v2203
      %v2342 = vadd.f32 %v2310, %v2208
      %v2343 = vadd.f32 %v2311, %v2211
      %v2344 = vadd.f32 %v2312, %v2216
      %v2345 = vadd.f32 %v2313, %v2219
      %v2346 = vadd.f32 %v2314, %v2224
      %v2347 = vadd.f32 %v2315, %v2227
      %v2348 = vadd.f32 %v2316, %v2232
      %v2349 = vadd.f32 %v2317, %v2235
      %v2350 = vadd.f32 %v2318, %v2240
      %v2351 = vadd.f32 %v2319, %v2243
      %v2352 = vadd.f32 %v2320, %v2248
      %v2353 = vadd.f32 %v2321, %v2251
      %v2354 = vadd.f32 %v2322, %v2256
      %v2355 = vadd.f32 %v2323, %v2259
      %v2356 = vadd.f32 %v2324, %v2264
      %v2357 = vadd.f32 %v2325, %v2267
      %v2358 = vadd.f32 %v2326, %v2272
      %v2359 = vadd.f32 %v2327, %v2275
      %v2360 = vadd.f32 %v2328, %v2280
      %v2361 = vadd.f32 %v2329, %v2283
      %v2362 = vadd.f32 %v2330, %v2288
      %v2363 = vadd.f32 %v2331, %v2291
      %v2364 = vadd.f32 %v2332, %v2296
      %v2365 = vadd.f32 %v2333, %v2299
      %2366 = vst [vmem:[#allocation2] sm:$0xff] %v2334
      %2367 = vst [vmem:[#allocation2 + $0x8] sm:$0xff] %v2335
      %2368 = vst [vmem:[#allocation2 + $0x10] sm:$0xff] %v2336
      %2369 = vst [vmem:[#allocation2 + $0x18] sm:$0xff] %v2337
      %2370 = vst [vmem:[#allocation2 + $0x20] sm:$0xff] %v2338
      %2371 = vst [vmem:[#allocation2 + $0x28] sm:$0xff] %v2339
      %2372 = vst [vmem:[#allocation2 + $0x30] sm:$0xff] %v2340
      %2373 = vst [vmem:[#allocation2 + $0x38] sm:$0xff] %v2341
      %2374 = vst [vmem:[#allocation2 + $0x40] sm:$0xff] %v2342
      %2375 = vst [vmem:[#allocation2 + $0x48] sm:$0xff] %v2343
      %2376 = vst [vmem:[#allocation2 + $0x50] sm:$0xff] %v2344
      %2377 = vst [vmem:[#allocation2 + $0x58] sm:$0xff] %v2345
      %2378 = vst [vmem:[#allocation2 + $0x60] sm:$0xff] %v2346
      %2379 = vst [vmem:[#allocation2 + $0x68] sm:$0xff] %v2347
      %2380 = vst [vmem:[#allocation2 + $0x70] sm:$0xff] %v2348
      %2381 = vst [vmem:[#allocation2 + $0x78] sm:$0xff] %v2349
      %2382 = vst [vmem:[#allocation2 + $0x80] sm:$0xff] %v2350
      %2383 = vst [vmem:[#allocation2 + $0x88] sm:$0xff] %v2351
      %2384 = vst [vmem:[#allocation2 + $0x90] sm:$0xff] %v2352
      %2385 = vst [vmem:[#allocation2 + $0x98] sm:$0xff] %v2353
      %2386 = vst [vmem:[#allocation2 + $0xa0] sm:$0xff] %v2354
      %2387 = vst [vmem:[#allocation2 + $0xa8] sm:$0xff] %v2355
      %2388 = vst [vmem:[#allocation2 + $0xb0] sm:$0xff] %v2356
      %2389 = vst [vmem:[#allocation2 + $0xb8] sm:$0xff] %v2357
      %2390 = vst [vmem:[#allocation2 + $0xc0] sm:$0xff] %v2358
      %2391 = vst [vmem:[#allocation2 + $0xc8] sm:$0xff] %v2359
      %2392 = vst [vmem:[#allocation2 + $0xd0] sm:$0xff] %v2360
      %2393 = vst [vmem:[#allocation2 + $0xd8] sm:$0xff] %v2361
      %2394 = vst [vmem:[#allocation2 + $0xe0] sm:$0xff] %v2362
      %2395 = vst [vmem:[#allocation2 + $0xe8] sm:$0xff] %v2363
      %2396 = vst [vmem:[#allocation2 + $0xf0] sm:$0xff] %v2364
      %2397 = vst [vmem:[#allocation2 + $0xf8] sm:$0xff] %v2365
      %v2399 = vrot.slane %v269, 5
      %v2400 = vrot.slane %v2399, 4
      %v2401 = vrot.slane %v270, 5
      %v2402 = vsel %vm1365, %v2400, %v2401
      %v2403 = vrot.slane %v2401, 4
      %v2404 = vrot.slane %v271, 5
      %v2405 = vsel %vm1365, %v2403, %v2404
      %s2406 = scalar_lea.vmem %s1, 10
      %v2407 = vld [vmem:[%s2406] sm:$0x3]
      %v2408 = vunpack.c.l.b16 %v2402
      %v2409 = vunpack.c.l.b16 %v2405
      %v2410 = vpack.c.b16 %v2409, %v2408
      %v2412 = vsel %vm356, %v2410, 0
      %v2415 = vsel %vm405, %v2407, 0
      %2417 = vmatprep.subr.bf16.mxu0 0
      %2418 = vmatpush1.bf16.msra.mxu0 %v2415
      %2419 = vmatprep.subr.bf16.mxu0 0
      %2420 = vmatpush1.bf16.msra.mxu0 0
      %2421 = vmatprep.subr.bf16.mxu0 0
      %2422 = vmatpush1.bf16.msra.mxu0 0
      %2423 = vmatprep.subr.bf16.mxu0 0
      %2424 = vmatpush1.bf16.msra.mxu0 0
      %2425 = vmatprep.subr.bf16.mxu0 0
      %2426 = vmatpush1.bf16.msra.mxu0 0
      %2427 = vmatprep.subr.bf16.mxu0 0
      %2428 = vmatpush1.bf16.msra.mxu0 0
      %2429 = vmatprep.subr.bf16.mxu0 0
      %2430 = vmatpush1.bf16.msra.mxu0 0
      %2431 = vmatprep.subr.bf16.mxu0 0
      %2432 = vmatpush1.bf16.msra.mxu0 0
      %2433 = vmatprep.subr.bf16.mxu0 0
      %2434 = vmatpush1.bf16.msra.mxu0 0
      %2435 = vmatprep.subr.bf16.mxu0 0
      %2436 = vmatpush1.bf16.msra.mxu0 0
      %2437 = vmatprep.subr.bf16.mxu0 0
      %2438 = vmatpush1.bf16.msra.mxu0 0
      %2439 = vmatprep.subr.bf16.mxu0 0
      %2440 = vmatpush1.bf16.msra.mxu0 0
      %2441 = vmatprep.subr.bf16.mxu0 0
      %2442 = vmatpush1.bf16.msra.mxu0 0
      %2443 = vmatprep.subr.bf16.mxu0 0
      %2444 = vmatpush1.bf16.msra.mxu0 0
      %2445 = vmatprep.subr.bf16.mxu0 0
      %2446 = vmatpush1.bf16.msra.mxu0 0
      %2447 = vmatprep.subr.bf16.mxu0 0
      %2448 = vmatpush1.bf16.msra.mxu0 0
      %2449 = vmatprep.mubr.bf16.mxu0 0
      %2450 = vmatmul.mubr.bf16.gmra.mrb[0].mxu0 %v1532
      %v2451 = vpop.f32.mrb[0].mxu0
      %v2452 = vadd.f32 0.0, %v2451
      %v2453 = vpop.f32.mrb[0].mxu0
      %v2454 = vpop.f32.mrb[0].mxu0
      %v2455 = vadd.f32 0.0, %v2454
      %v2456 = vpop.f32.mrb[0].mxu0
      %2457 = vmatprep.mubr.bf16.mxu0 0
      %2458 = vmatmul.mubr.bf16.gmra.mrb[0].mxu0 %v1535
      %v2459 = vpop.f32.mrb[0].mxu0
      %v2460 = vadd.f32 0.0, %v2459
      %v2461 = vpop.f32.mrb[0].mxu0
      %v2462 = vpop.f32.mrb[0].mxu0
      %v2463 = vadd.f32 0.0, %v2462
      %v2464 = vpop.f32.mrb[0].mxu0
      %2465 = vmatprep.mubr.bf16.mxu0 0
      %2466 = vmatmul.mubr.bf16.gmra.mrb[0].mxu0 %v1538
      %v2467 = vpop.f32.mrb[0].mxu0
      %v2468 = vadd.f32 0.0, %v2467
      %v2469 = vpop.f32.mrb[0].mxu0
      %v2470 = vpop.f32.mrb[0].mxu0
      %v2471 = vadd.f32 0.0, %v2470
      %v2472 = vpop.f32.mrb[0].mxu0
      %2473 = vmatprep.mubr.bf16.mxu0 0
      %2474 = vmatmul.mubr.bf16.gmra.mrb[0].mxu0 %v1541
      %v2475 = vpop.f32.mrb[0].mxu0
      %v2476 = vadd.f32 0.0, %v2475
      %v2477 = vpop.f32.mrb[0].mxu0
      %v2478 = vpop.f32.mrb[0].mxu0
      %v2479 = vadd.f32 0.0, %v2478
      %v2480 = vpop.f32.mrb[0].mxu0
      %2481 = vmatprep.mubr.bf16.mxu0 0
      %2482 = vmatmul.mubr.bf16.gmra.mrb[0].mxu0 %v1544
      %v2483 = vpop.f32.mrb[0].mxu0
      %v2484 = vadd.f32 0.0, %v2483
      %v2485 = vpop.f32.mrb[0].mxu0
      %v2486 = vpop.f32.mrb[0].mxu0
      %v2487 = vadd.f32 0.0, %v2486
      %v2488 = vpop.f32.mrb[0].mxu0
      %2489 = vmatprep.mubr.bf16.mxu0 0
      %2490 = vmatmul.mubr.bf16.gmra.mrb[0].mxu0 %v1547
      %v2491 = vpop.f32.mrb[0].mxu0
      %v2492 = vadd.f32 0.0, %v2491
      %v2493 = vpop.f32.mrb[0].mxu0
      %v2494 = vpop.f32.mrb[0].mxu0
      %v2495 = vadd.f32 0.0, %v2494
      %v2496 = vpop.f32.mrb[0].mxu0
      %2497 = vmatprep.mubr.bf16.mxu0 0
      %2498 = vmatmul.mubr.bf16.gmra.mrb[0].mxu0 %v1550
      %v2499 = vpop.f32.mrb[0].mxu0
      %v2500 = vadd.f32 0.0, %v2499
      %v2501 = vpop.f32.mrb[0].mxu0
      %v2502 = vpop.f32.mrb[0].mxu0
      %v2503 = vadd.f32 0.0, %v2502
      %v2504 = vpop.f32.mrb[0].mxu0
      %2505 = vmatprep.mubr.bf16.mxu0 0
      %2506 = vmatmul.mubr.bf16.gmra.mrb[0].mxu0 %v1553
      %v2507 = vpop.f32.mrb[0].mxu0
      %v2508 = vadd.f32 0.0, %v2507
      %v2509 = vpop.f32.mrb[0].mxu0
      %v2510 = vpop.f32.mrb[0].mxu0
      %v2511 = vadd.f32 0.0, %v2510
      %v2512 = vpop.f32.mrb[0].mxu0
      %2513 = vmatprep.mubr.bf16.mxu0 0
      %2514 = vmatmul.mubr.bf16.gmra.mrb[0].mxu0 %v1556
      %v2515 = vpop.f32.mrb[0].mxu0
      %v2516 = vadd.f32 0.0, %v2515
      %v2517 = vpop.f32.mrb[0].mxu0
      %v2518 = vpop.f32.mrb[0].mxu0
      %v2519 = vadd.f32 0.0, %v2518
      %v2520 = vpop.f32.mrb[0].mxu0
      %2521 = vmatprep.mubr.bf16.mxu0 0
      %2522 = vmatmul.mubr.bf16.gmra.mrb[0].mxu0 %v1559
      %v2523 = vpop.f32.mrb[0].mxu0
      %v2524 = vadd.f32 0.0, %v2523
      %v2525 = vpop.f32.mrb[0].mxu0
      %v2526 = vpop.f32.mrb[0].mxu0
      %v2527 = vadd.f32 0.0, %v2526
      %v2528 = vpop.f32.mrb[0].mxu0
      %2529 = vmatprep.mubr.bf16.mxu0 0
      %2530 = vmatmul.mubr.bf16.gmra.mrb[0].mxu0 %v1562
      %v2531 = vpop.f32.mrb[0].mxu0
      %v2532 = vadd.f32 0.0, %v2531
      %v2533 = vpop.f32.mrb[0].mxu0
      %v2534 = vpop.f32.mrb[0].mxu0
      %v2535 = vadd.f32 0.0, %v2534
      %v2536 = vpop.f32.mrb[0].mxu0
      %2537 = vmatprep.mubr.bf16.mxu0 0
      %2538 = vmatmul.mubr.bf16.gmra.mrb[0].mxu0 %v1565
      %v2539 = vpop.f32.mrb[0].mxu0
      %v2540 = vadd.f32 0.0, %v2539
      %v2541 = vpop.f32.mrb[0].mxu0
      %v2542 = vpop.f32.mrb[0].mxu0
      %v2543 = vadd.f32 0.0, %v2542
      %v2544 = vpop.f32.mrb[0].mxu0
      %2545 = vmatprep.mubr.bf16.mxu0 0
      %2546 = vmatmul.mubr.bf16.gmra.mrb[0].mxu0 %v1568
      %v2547 = vpop.f32.mrb[0].mxu0
      %v2548 = vadd.f32 0.0, %v2547
      %v2549 = vpop.f32.mrb[0].mxu0
      %v2550 = vpop.f32.mrb[0].mxu0
      %v2551 = vadd.f32 0.0, %v2550
      %v2552 = vpop.f32.mrb[0].mxu0
      %2553 = vmatprep.mubr.bf16.mxu0 0
      %2554 = vmatmul.mubr.bf16.gmra.mrb[0].mxu0 %v1571
      %v2555 = vpop.f32.mrb[0].mxu0
      %v2556 = vadd.f32 0.0, %v2555
      %v2557 = vpop.f32.mrb[0].mxu0
      %v2558 = vpop.f32.mrb[0].mxu0
      %v2559 = vadd.f32 0.0, %v2558
      %v2560 = vpop.f32.mrb[0].mxu0
      %2561 = vmatprep.mubr.bf16.mxu0 0
      %2562 = vmatmul.mubr.bf16.gmra.mrb[0].mxu0 %v1574
      %v2563 = vpop.f32.mrb[0].mxu0
      %v2564 = vadd.f32 0.0, %v2563
      %v2565 = vpop.f32.mrb[0].mxu0
      %v2566 = vpop.f32.mrb[0].mxu0
      %v2567 = vadd.f32 0.0, %v2566
      %v2568 = vpop.f32.mrb[0].mxu0
      %2569 = vmatprep.mubr.bf16.mxu0 0
      %2570 = vmatmul.mubr.bf16.gmra.mrb[0].mxu0 %v2412
      %v2571 = vpop.f32.mrb[0].mxu0
      %v2572 = vadd.f32 0.0, %v2571
      %v2573 = vpop.f32.mrb[0].mxu0
      %v2574 = vpop.f32.mrb[0].mxu0
      %v2575 = vadd.f32 0.0, %v2574
      %v2576 = vpop.f32.mrb[0].mxu0
      %2577 = vdwg.mxu0
      %v2578 = vld [vmem:[#allocation2] sm:$0xff]
      %v2579 = vld [vmem:[#allocation2 + $0x8] sm:$0xff]
      %v2580 = vld [vmem:[#allocation2 + $0x10] sm:$0xff]
      %v2581 = vld [vmem:[#allocation2 + $0x18] sm:$0xff]
      %v2582 = vld [vmem:[#allocation2 + $0x20] sm:$0xff]
      %v2583 = vld [vmem:[#allocation2 + $0x28] sm:$0xff]
      %v2584 = vld [vmem:[#allocation2 + $0x30] sm:$0xff]
      %v2585 = vld [vmem:[#allocation2 + $0x38] sm:$0xff]
      %v2586 = vld [vmem:[#allocation2 + $0x40] sm:$0xff]
      %v2587 = vld [vmem:[#allocation2 + $0x48] sm:$0xff]
      %v2588 = vld [vmem:[#allocation2 + $0x50] sm:$0xff]
      %v2589 = vld [vmem:[#allocation2 + $0x58] sm:$0xff]
      %v2590 = vld [vmem:[#allocation2 + $0x60] sm:$0xff]
      %v2591 = vld [vmem:[#allocation2 + $0x68] sm:$0xff]
      %v2592 = vld [vmem:[#allocation2 + $0x70] sm:$0xff]
      %v2593 = vld [vmem:[#allocation2 + $0x78] sm:$0xff]
      %v2594 = vld [vmem:[#allocation2 + $0x80] sm:$0xff]
      %v2595 = vld [vmem:[#allocation2 + $0x88] sm:$0xff]
      %v2596 = vld [vmem:[#allocation2 + $0x90] sm:$0xff]
      %v2597 = vld [vmem:[#allocation2 + $0x98] sm:$0xff]
      %v2598 = vld [vmem:[#allocation2 + $0xa0] sm:$0xff]
      %v2599 = vld [vmem:[#allocation2 + $0xa8] sm:$0xff]
      %v2600 = vld [vmem:[#allocation2 + $0xb0] sm:$0xff]
      %v2601 = vld [vmem:[#allocation2 + $0xb8] sm:$0xff]
      %v2602 = vld [vmem:[#allocation2 + $0xc0] sm:$0xff]
      %v2603 = vld [vmem:[#allocation2 + $0xc8] sm:$0xff]
      %v2604 = vld [vmem:[#allocation2 + $0xd0] sm:$0xff]
      %v2605 = vld [vmem:[#allocation2 + $0xd8] sm:$0xff]
      %v2606 = vld [vmem:[#allocation2 + $0xe0] sm:$0xff]
      %v2607 = vld [vmem:[#allocation2 + $0xe8] sm:$0xff]
      %v2608 = vld [vmem:[#allocation2 + $0xf0] sm:$0xff]
      %v2609 = vld [vmem:[#allocation2 + $0xf8] sm:$0xff]
      %v2610 = vadd.f32 %v2578, %v2452
      %v2611 = vadd.f32 %v2579, %v2455
      %v2612 = vadd.f32 %v2580, %v2460
      %v2613 = vadd.f32 %v2581, %v2463
      %v2614 = vadd.f32 %v2582, %v2468
      %v2615 = vadd.f32 %v2583, %v2471
      %v2616 = vadd.f32 %v2584, %v2476
      %v2617 = vadd.f32 %v2585, %v2479
      %v2618 = vadd.f32 %v2586, %v2484
      %v2619 = vadd.f32 %v2587, %v2487
      %v2620 = vadd.f32 %v2588, %v2492
      %v2621 = vadd.f32 %v2589, %v2495
      %v2622 = vadd.f32 %v2590, %v2500
      %v2623 = vadd.f32 %v2591, %v2503
      %v2624 = vadd.f32 %v2592, %v2508
      %v2625 = vadd.f32 %v2593, %v2511
      %v2626 = vadd.f32 %v2594, %v2516
      %v2627 = vadd.f32 %v2595, %v2519
      %v2628 = vadd.f32 %v2596, %v2524
      %v2629 = vadd.f32 %v2597, %v2527
      %v2630 = vadd.f32 %v2598, %v2532
      %v2631 = vadd.f32 %v2599, %v2535
      %v2632 = vadd.f32 %v2600, %v2540
      %v2633 = vadd.f32 %v2601, %v2543
      %v2634 = vadd.f32 %v2602, %v2548
      %v2635 = vadd.f32 %v2603, %v2551
      %v2636 = vadd.f32 %v2604, %v2556
      %v2637 = vadd.f32 %v2605, %v2559
      %v2638 = vadd.f32 %v2606, %v2564
      %v2639 = vadd.f32 %v2607, %v2567
      %v2640 = vadd.f32 %v2608, %v2572
      %v2641 = vadd.f32 %v2609, %v2575
      %2642 = vst [vmem:[#allocation2] sm:$0xff] %v2610
      %2643 = vst [vmem:[#allocation2 + $0x8] sm:$0xff] %v2611
      %2644 = vst [vmem:[#allocation2 + $0x10] sm:$0xff] %v2612
      %2645 = vst [vmem:[#allocation2 + $0x18] sm:$0xff] %v2613
      %2646 = vst [vmem:[#allocation2 + $0x20] sm:$0xff] %v2614
      %2647 = vst [vmem:[#allocation2 + $0x28] sm:$0xff] %v2615
      %2648 = vst [vmem:[#allocation2 + $0x30] sm:$0xff] %v2616
      %2649 = vst [vmem:[#allocation2 + $0x38] sm:$0xff] %v2617
      %2650 = vst [vmem:[#allocation2 + $0x40] sm:$0xff] %v2618
      %2651 = vst [vmem:[#allocation2 + $0x48] sm:$0xff] %v2619
      %2652 = vst [vmem:[#allocation2 + $0x50] sm:$0xff] %v2620
      %2653 = vst [vmem:[#allocation2 + $0x58] sm:$0xff] %v2621
      %2654 = vst [vmem:[#allocation2 + $0x60] sm:$0xff] %v2622
      %2655 = vst [vmem:[#allocation2 + $0x68] sm:$0xff] %v2623
      %2656 = vst [vmem:[#allocation2 + $0x70] sm:$0xff] %v2624
      %2657 = vst [vmem:[#allocation2 + $0x78] sm:$0xff] %v2625
      %2658 = vst [vmem:[#allocation2 + $0x80] sm:$0xff] %v2626
      %2659 = vst [vmem:[#allocation2 + $0x88] sm:$0xff] %v2627
      %2660 = vst [vmem:[#allocation2 + $0x90] sm:$0xff] %v2628
      %2661 = vst [vmem:[#allocation2 + $0x98] sm:$0xff] %v2629
      %2662 = vst [vmem:[#allocation2 + $0xa0] sm:$0xff] %v2630
      %2663 = vst [vmem:[#allocation2 + $0xa8] sm:$0xff] %v2631
      %2664 = vst [vmem:[#allocation2 + $0xb0] sm:$0xff] %v2632
      %2665 = vst [vmem:[#allocation2 + $0xb8] sm:$0xff] %v2633
      %2666 = vst [vmem:[#allocation2 + $0xc0] sm:$0xff] %v2634
      %2667 = vst [vmem:[#allocation2 + $0xc8] sm:$0xff] %v2635
      %2668 = vst [vmem:[#allocation2 + $0xd0] sm:$0xff] %v2636
      %2669 = vst [vmem:[#allocation2 + $0xd8] sm:$0xff] %v2637
      %2670 = vst [vmem:[#allocation2 + $0xe0] sm:$0xff] %v2638
      %2671 = vst [vmem:[#allocation2 + $0xe8] sm:$0xff] %v2639
      %2672 = vst [vmem:[#allocation2 + $0xf0] sm:$0xff] %v2640
      %2673 = vst [vmem:[#allocation2 + $0xf8] sm:$0xff] %v2641
      %s2674 = scalar_lea.vmem %s1, 12
      %v2675 = vld [vmem:[%s2674] sm:$0x3]
      %v2678 = vunpack.c.l.b16 %v272
      %v2679 = vunpack.c.l.b16 %v273
      %v2680 = vpack.c.b16 %v2679, %v2678
      %v2682 = vsel %vm356, %v2680, 0
      %v2685 = vsel %vm405, %v2675, 0
      %2687 = vmatprep.subr.bf16.mxu0 0
      %2688 = vmatpush1.bf16.msra.mxu0 %v2685
      %2689 = vmatprep.subr.bf16.mxu0 0
      %2690 = vmatpush1.bf16.msra.mxu0 0
      %2691 = vmatprep.subr.bf16.mxu0 0
      %2692 = vmatpush1.bf16.msra.mxu0 0
      %2693 = vmatprep.subr.bf16.mxu0 0
      %2694 = vmatpush1.bf16.msra.mxu0 0
      %2695 = vmatprep.subr.bf16.mxu0 0
      %2696 = vmatpush1.bf16.msra.mxu0 0
      %2697 = vmatprep.subr.bf16.mxu0 0
      %2698 = vmatpush1.bf16.msra.mxu0 0
      %2699 = vmatprep.subr.bf16.mxu0 0
      %2700 = vmatpush1.bf16.msra.mxu0 0
      %2701 = vmatprep.subr.bf16.mxu0 0
      %2702 = vmatpush1.bf16.msra.mxu0 0
      %2703 = vmatprep.subr.bf16.mxu0 0
      %2704 = vmatpush1.bf16.msra.mxu0 0
      %2705 = vmatprep.subr.bf16.mxu0 0
      %2706 = vmatpush1.bf16.msra.mxu0 0
      %2707 = vmatprep.subr.bf16.mxu0 0
      %2708 = vmatpush1.bf16.msra.mxu0 0
      %2709 = vmatprep.subr.bf16.mxu0 0
      %2710 = vmatpush1.bf16.msra.mxu0 0
      %2711 = vmatprep.subr.bf16.mxu0 0
      %2712 = vmatpush1.bf16.msra.mxu0 0
      %2713 = vmatprep.subr.bf16.mxu0 0
      %2714 = vmatpush1.bf16.msra.mxu0 0
      %2715 = vmatprep.subr.bf16.mxu0 0
      %2716 = vmatpush1.bf16.msra.mxu0 0
      %2717 = vmatprep.subr.bf16.mxu0 0
      %2718 = vmatpush1.bf16.msra.mxu0 0
      %2719 = vmatprep.mubr.bf16.mxu0 0
      %2720 = vmatmul.mubr.bf16.gmra.mrb[0].mxu0 %v364
      %v2721 = vpop.f32.mrb[0].mxu0
      %v2722 = vadd.f32 0.0, %v2721
      %v2723 = vpop.f32.mrb[0].mxu0
      %v2724 = vpop.f32.mrb[0].mxu0
      %v2725 = vadd.f32 0.0, %v2724
      %v2726 = vpop.f32.mrb[0].mxu0
      %2727 = vmatprep.mubr.bf16.mxu0 0
      %2728 = vmatmul.mubr.bf16.gmra.mrb[0].mxu0 %v367
      %v2729 = vpop.f32.mrb[0].mxu0
      %v2730 = vadd.f32 0.0, %v2729
      %v2731 = vpop.f32.mrb[0].mxu0
      %v2732 = vpop.f32.mrb[0].mxu0
      %v2733 = vadd.f32 0.0, %v2732
      %v2734 = vpop.f32.mrb[0].mxu0
      %2735 = vmatprep.mubr.bf16.mxu0 0
      %2736 = vmatmul.mubr.bf16.gmra.mrb[0].mxu0 %v370
      %v2737 = vpop.f32.mrb[0].mxu0
      %v2738 = vadd.f32 0.0, %v2737
      %v2739 = vpop.f32.mrb[0].mxu0
      %v2740 = vpop.f32.mrb[0].mxu0
      %v2741 = vadd.f32 0.0, %v2740
      %v2742 = vpop.f32.mrb[0].mxu0
      %2743 = vmatprep.mubr.bf16.mxu0 0
      %2744 = vmatmul.mubr.bf16.gmra.mrb[0].mxu0 %v373
      %v2745 = vpop.f32.mrb[0].mxu0
      %v2746 = vadd.f32 0.0, %v2745
      %v2747 = vpop.f32.mrb[0].mxu0
      %v2748 = vpop.f32.mrb[0].mxu0
      %v2749 = vadd.f32 0.0, %v2748
      %v2750 = vpop.f32.mrb[0].mxu0
      %2751 = vmatprep.mubr.bf16.mxu0 0
      %2752 = vmatmul.mubr.bf16.gmra.mrb[0].mxu0 %v376
      %v2753 = vpop.f32.mrb[0].mxu0
      %v2754 = vadd.f32 0.0, %v2753
      %v2755 = vpop.f32.mrb[0].mxu0
      %v2756 = vpop.f32.mrb[0].mxu0
      %v2757 = vadd.f32 0.0, %v2756
      %v2758 = vpop.f32.mrb[0].mxu0
      %2759 = vmatprep.mubr.bf16.mxu0 0
      %2760 = vmatmul.mubr.bf16.gmra.mrb[0].mxu0 %v379
      %v2761 = vpop.f32.mrb[0].mxu0
      %v2762 = vadd.f32 0.0, %v2761
      %v2763 = vpop.f32.mrb[0].mxu0
      %v2764 = vpop.f32.mrb[0].mxu0
      %v2765 = vadd.f32 0.0, %v2764
      %v2766 = vpop.f32.mrb[0].mxu0
      %2767 = vmatprep.mubr.bf16.mxu0 0
      %2768 = vmatmul.mubr.bf16.gmra.mrb[0].mxu0 %v382
      %v2769 = vpop.f32.mrb[0].mxu0
      %v2770 = vadd.f32 0.0, %v2769
      %v2771 = vpop.f32.mrb[0].mxu0
      %v2772 = vpop.f32.mrb[0].mxu0
      %v2773 = vadd.f32 0.0, %v2772
      %v2774 = vpop.f32.mrb[0].mxu0
      %2775 = vmatprep.mubr.bf16.mxu0 0
      %2776 = vmatmul.mubr.bf16.gmra.mrb[0].mxu0 %v385
      %v2777 = vpop.f32.mrb[0].mxu0
      %v2778 = vadd.f32 0.0, %v2777
      %v2779 = vpop.f32.mrb[0].mxu0
      %v2780 = vpop.f32.mrb[0].mxu0
      %v2781 = vadd.f32 0.0, %v2780
      %v2782 = vpop.f32.mrb[0].mxu0
      %2783 = vmatprep.mubr.bf16.mxu0 0
      %2784 = vmatmul.mubr.bf16.gmra.mrb[0].mxu0 %v388
      %v2785 = vpop.f32.mrb[0].mxu0
      %v2786 = vadd.f32 0.0, %v2785
      %v2787 = vpop.f32.mrb[0].mxu0
      %v2788 = vpop.f32.mrb[0].mxu0
      %v2789 = vadd.f32 0.0, %v2788
      %v2790 = vpop.f32.mrb[0].mxu0
      %2791 = vmatprep.mubr.bf16.mxu0 0
      %2792 = vmatmul.mubr.bf16.gmra.mrb[0].mxu0 %v391
      %v2793 = vpop.f32.mrb[0].mxu0
      %v2794 = vadd.f32 0.0, %v2793
      %v2795 = vpop.f32.mrb[0].mxu0
      %v2796 = vpop.f32.mrb[0].mxu0
      %v2797 = vadd.f32 0.0, %v2796
      %v2798 = vpop.f32.mrb[0].mxu0
      %2799 = vmatprep.mubr.bf16.mxu0 0
      %2800 = vmatmul.mubr.bf16.gmra.mrb[0].mxu0 %v394
      %v2801 = vpop.f32.mrb[0].mxu0
      %v2802 = vadd.f32 0.0, %v2801
      %v2803 = vpop.f32.mrb[0].mxu0
      %v2804 = vpop.f32.mrb[0].mxu0
      %v2805 = vadd.f32 0.0, %v2804
      %v2806 = vpop.f32.mrb[0].mxu0
      %2807 = vmatprep.mubr.bf16.mxu0 0
      %2808 = vmatmul.mubr.bf16.gmra.mrb[0].mxu0 %v397
      %v2809 = vpop.f32.mrb[0].mxu0
      %v2810 = vadd.f32 0.0, %v2809
      %v2811 = vpop.f32.mrb[0].mxu0
      %v2812 = vpop.f32.mrb[0].mxu0
      %v2813 = vadd.f32 0.0, %v2812
      %v2814 = vpop.f32.mrb[0].mxu0
      %2815 = vmatprep.mubr.bf16.mxu0 0
      %2816 = vmatmul.mubr.bf16.gmra.mrb[0].mxu0 %v400
      %v2817 = vpop.f32.mrb[0].mxu0
      %v2818 = vadd.f32 0.0, %v2817
      %v2819 = vpop.f32.mrb[0].mxu0
      %v2820 = vpop.f32.mrb[0].mxu0
      %v2821 = vadd.f32 0.0, %v2820
      %v2822 = vpop.f32.mrb[0].mxu0
      %2823 = vmatprep.mubr.bf16.mxu0 0
      %2824 = vmatmul.mubr.bf16.gmra.mrb[0].mxu0 %v403
      %v2825 = vpop.f32.mrb[0].mxu0
      %v2826 = vadd.f32 0.0, %v2825
      %v2827 = vpop.f32.mrb[0].mxu0
      %v2828 = vpop.f32.mrb[0].mxu0
      %v2829 = vadd.f32 0.0, %v2828
      %v2830 = vpop.f32.mrb[0].mxu0
      %2831 = vmatprep.mubr.bf16.mxu0 0
      %2832 = vmatmul.mubr.bf16.gmra.mrb[0].mxu0 %v1844
      %v2833 = vpop.f32.mrb[0].mxu0
      %v2834 = vadd.f32 0.0, %v2833
      %v2835 = vpop.f32.mrb[0].mxu0
      %v2836 = vpop.f32.mrb[0].mxu0
      %v2837 = vadd.f32 0.0, %v2836
      %v2838 = vpop.f32.mrb[0].mxu0
      %2839 = vmatprep.mubr.bf16.mxu0 0
      %2840 = vmatmul.mubr.bf16.gmra.mrb[0].mxu0 %v2682
      %v2841 = vpop.f32.mrb[0].mxu0
      %v2842 = vadd.f32 0.0, %v2841
      %v2843 = vpop.f32.mrb[0].mxu0
      %v2844 = vpop.f32.mrb[0].mxu0
      %v2845 = vadd.f32 0.0, %v2844
      %v2846 = vpop.f32.mrb[0].mxu0
      %2847 = vdwg.mxu0
      %v2848 = vld [vmem:[#allocation2] sm:$0xff]
      %v2849 = vld [vmem:[#allocation2 + $0x8] sm:$0xff]
      %v2850 = vld [vmem:[#allocation2 + $0x10] sm:$0xff]
      %v2851 = vld [vmem:[#allocation2 + $0x18] sm:$0xff]
      %v2852 = vld [vmem:[#allocation2 + $0x20] sm:$0xff]
      %v2853 = vld [vmem:[#allocation2 + $0x28] sm:$0xff]
      %v2854 = vld [vmem:[#allocation2 + $0x30] sm:$0xff]
      %v2855 = vld [vmem:[#allocation2 + $0x38] sm:$0xff]
      %v2856 = vld [vmem:[#allocation2 + $0x40] sm:$0xff]
      %v2857 = vld [vmem:[#allocation2 + $0x48] sm:$0xff]
      %v2858 = vld [vmem:[#allocation2 + $0x50] sm:$0xff]
      %v2859 = vld [vmem:[#allocation2 + $0x58] sm:$0xff]
      %v2860 = vld [vmem:[#allocation2 + $0x60] sm:$0xff]
      %v2861 = vld [vmem:[#allocation2 + $0x68] sm:$0xff]
      %v2862 = vld [vmem:[#allocation2 + $0x70] sm:$0xff]
      %v2863 = vld [vmem:[#allocation2 + $0x78] sm:$0xff]
      %v2864 = vld [vmem:[#allocation2 + $0x80] sm:$0xff]
      %v2865 = vld [vmem:[#allocation2 + $0x88] sm:$0xff]
      %v2866 = vld [vmem:[#allocation2 + $0x90] sm:$0xff]
      %v2867 = vld [vmem:[#allocation2 + $0x98] sm:$0xff]
      %v2868 = vld [vmem:[#allocation2 + $0xa0] sm:$0xff]
      %v2869 = vld [vmem:[#allocation2 + $0xa8] sm:$0xff]
      %v2870 = vld [vmem:[#allocation2 + $0xb0] sm:$0xff]
      %v2871 = vld [vmem:[#allocation2 + $0xb8] sm:$0xff]
      %v2872 = vld [vmem:[#allocation2 + $0xc0] sm:$0xff]
      %v2873 = vld [vmem:[#allocation2 + $0xc8] sm:$0xff]
      %v2874 = vld [vmem:[#allocation2 + $0xd0] sm:$0xff]
      %v2875 = vld [vmem:[#allocation2 + $0xd8] sm:$0xff]
      %v2876 = vld [vmem:[#allocation2 + $0xe0] sm:$0xff]
      %v2877 = vld [vmem:[#allocation2 + $0xe8] sm:$0xff]
      %v2878 = vld [vmem:[#allocation2 + $0xf0] sm:$0xff]
      %v2879 = vld [vmem:[#allocation2 + $0xf8] sm:$0xff]
      %v2880 = vadd.f32 %v2848, %v2722
      %v2881 = vadd.f32 %v2849, %v2725
      %v2882 = vadd.f32 %v2850, %v2730
      %v2883 = vadd.f32 %v2851, %v2733
      %v2884 = vadd.f32 %v2852, %v2738
      %v2885 = vadd.f32 %v2853, %v2741
      %v2886 = vadd.f32 %v2854, %v2746
      %v2887 = vadd.f32 %v2855, %v2749
      %v2888 = vadd.f32 %v2856, %v2754
      %v2889 = vadd.f32 %v2857, %v2757
      %v2890 = vadd.f32 %v2858, %v2762
      %v2891 = vadd.f32 %v2859, %v2765
      %v2892 = vadd.f32 %v2860, %v2770
      %v2893 = vadd.f32 %v2861, %v2773
      %v2894 = vadd.f32 %v2862, %v2778
      %v2895 = vadd.f32 %v2863, %v2781
      %v2896 = vadd.f32 %v2864, %v2786
      %v2897 = vadd.f32 %v2865, %v2789
      %v2898 = vadd.f32 %v2866, %v2794
      %v2899 = vadd.f32 %v2867, %v2797
      %v2900 = vadd.f32 %v2868, %v2802
      %v2901 = vadd.f32 %v2869, %v2805
      %v2902 = vadd.f32 %v2870, %v2810
      %v2903 = vadd.f32 %v2871, %v2813
      %v2904 = vadd.f32 %v2872, %v2818
      %v2905 = vadd.f32 %v2873, %v2821
      %v2906 = vadd.f32 %v2874, %v2826
      %v2907 = vadd.f32 %v2875, %v2829
      %v2908 = vadd.f32 %v2876, %v2834
      %v2909 = vadd.f32 %v2877, %v2837
      %v2910 = vadd.f32 %v2878, %v2842
      %v2911 = vadd.f32 %v2879, %v2845
      %2912 = vst [vmem:[#allocation2] sm:$0xff] %v2880
      %2913 = vst [vmem:[#allocation2 + $0x8] sm:$0xff] %v2881
      %2914 = vst [vmem:[#allocation2 + $0x10] sm:$0xff] %v2882
      %2915 = vst [vmem:[#allocation2 + $0x18] sm:$0xff] %v2883
      %2916 = vst [vmem:[#allocation2 + $0x20] sm:$0xff] %v2884
      %2917 = vst [vmem:[#allocation2 + $0x28] sm:$0xff] %v2885
      %2918 = vst [vmem:[#allocation2 + $0x30] sm:$0xff] %v2886
      %2919 = vst [vmem:[#allocation2 + $0x38] sm:$0xff] %v2887
      %2920 = vst [vmem:[#allocation2 + $0x40] sm:$0xff] %v2888
      %2921 = vst [vmem:[#allocation2 + $0x48] sm:$0xff] %v2889
      %2922 = vst [vmem:[#allocation2 + $0x50] sm:$0xff] %v2890
      %2923 = vst [vmem:[#allocation2 + $0x58] sm:$0xff] %v2891
      %2924 = vst [vmem:[#allocation2 + $0x60] sm:$0xff] %v2892
      %2925 = vst [vmem:[#allocation2 + $0x68] sm:$0xff] %v2893
      %2926 = vst [vmem:[#allocation2 + $0x70] sm:$0xff] %v2894
      %2927 = vst [vmem:[#allocation2 + $0x78] sm:$0xff] %v2895
      %2928 = vst [vmem:[#allocation2 + $0x80] sm:$0xff] %v2896
      %2929 = vst [vmem:[#allocation2 + $0x88] sm:$0xff] %v2897
      %2930 = vst [vmem:[#allocation2 + $0x90] sm:$0xff] %v2898
      %2931 = vst [vmem:[#allocation2 + $0x98] sm:$0xff] %v2899
      %2932 = vst [vmem:[#allocation2 + $0xa0] sm:$0xff] %v2900
      %2933 = vst [vmem:[#allocation2 + $0xa8] sm:$0xff] %v2901
      %2934 = vst [vmem:[#allocation2 + $0xb0] sm:$0xff] %v2902
      %2935 = vst [vmem:[#allocation2 + $0xb8] sm:$0xff] %v2903
      %2936 = vst [vmem:[#allocation2 + $0xc0] sm:$0xff] %v2904
      %2937 = vst [vmem:[#allocation2 + $0xc8] sm:$0xff] %v2905
      %2938 = vst [vmem:[#allocation2 + $0xd0] sm:$0xff] %v2906
      %2939 = vst [vmem:[#allocation2 + $0xd8] sm:$0xff] %v2907
      %2940 = vst [vmem:[#allocation2 + $0xe0] sm:$0xff] %v2908
      %2941 = vst [vmem:[#allocation2 + $0xe8] sm:$0xff] %v2909
      %2942 = vst [vmem:[#allocation2 + $0xf0] sm:$0xff] %v2910
      %2943 = vst [vmem:[#allocation2 + $0xf8] sm:$0xff] %v2911
      %v2945 = vshrl.u32 %v272, 16
      %v2947 = vrot.slane %v2945, 4
      %v2948 = vshll.u32 %v272, 16
      %v2950 = vrot.slane %v2948, 5
      %v2951 = vor.u32 %v2947, %v2950
      %v2952 = vrot.slane %v2951, 4
      %v2954 = vshll.u32 %v273, 16
      %v2956 = vrot.slane %v2954, 5
      %v2957 = vsel %vm604, %v2952, %v2956
      %v2958 = vshrl.u32 %v273, 16
      %v2960 = vrot.slane %v2958, 4
      %v2961 = vor.u32 %v2960, %v2956
      %v2962 = vrot.slane %v2961, 4
      %v2964 = vshll.u32 %v274, 16
      %v2966 = vrot.slane %v2964, 5
      %v2967 = vsel %vm604, %v2962, %v2966
      %s2968 = scalar_lea.vmem %s1, 14
      %v2969 = vld [vmem:[%s2968] sm:$0x3]
      %v2970 = vunpack.c.l.b16 %v2957
      %v2971 = vunpack.c.l.b16 %v2967
      %v2972 = vpack.c.b16 %v2971, %v2970
      %v2974 = vsel %vm356, %v2972, 0
      %v2977 = vsel %vm405, %v2969, 0
      %2979 = vmatprep.subr.bf16.mxu0 0
      %2980 = vmatpush1.bf16.msra.mxu0 %v2977
      %2981 = vmatprep.subr.bf16.mxu0 0
      %2982 = vmatpush1.bf16.msra.mxu0 0
      %2983 = vmatprep.subr.bf16.mxu0 0
      %2984 = vmatpush1.bf16.msra.mxu0 0
      %2985 = vmatprep.subr.bf16.mxu0 0
      %2986 = vmatpush1.bf16.msra.mxu0 0
      %2987 = vmatprep.subr.bf16.mxu0 0
      %2988 = vmatpush1.bf16.msra.mxu0 0
      %2989 = vmatprep.subr.bf16.mxu0 0
      %2990 = vmatpush1.bf16.msra.mxu0 0
      %2991 = vmatprep.subr.bf16.mxu0 0
      %2992 = vmatpush1.bf16.msra.mxu0 0
      %2993 = vmatprep.subr.bf16.mxu0 0
      %2994 = vmatpush1.bf16.msra.mxu0 0
      %2995 = vmatprep.subr.bf16.mxu0 0
      %2996 = vmatpush1.bf16.msra.mxu0 0
      %2997 = vmatprep.subr.bf16.mxu0 0
      %2998 = vmatpush1.bf16.msra.mxu0 0
      %2999 = vmatprep.subr.bf16.mxu0 0
      %3000 = vmatpush1.bf16.msra.mxu0 0
      %3001 = vmatprep.subr.bf16.mxu0 0
      %3002 = vmatpush1.bf16.msra.mxu0 0
      %3003 = vmatprep.subr.bf16.mxu0 0
      %3004 = vmatpush1.bf16.msra.mxu0 0
      %3005 = vmatprep.subr.bf16.mxu0 0
      %3006 = vmatpush1.bf16.msra.mxu0 0
      %3007 = vmatprep.subr.bf16.mxu0 0
      %3008 = vmatpush1.bf16.msra.mxu0 0
      %3009 = vmatprep.subr.bf16.mxu0 0
      %3010 = vmatpush1.bf16.msra.mxu0 0
      %3011 = vmatprep.mubr.bf16.mxu0 0
      %3012 = vmatmul.mubr.bf16.gmra.mrb[0].mxu0 %v1046
      %v3013 = vpop.f32.mrb[0].mxu0
      %v3014 = vadd.f32 0.0, %v3013
      %v3015 = vpop.f32.mrb[0].mxu0
      %v3016 = vpop.f32.mrb[0].mxu0
      %v3017 = vadd.f32 0.0, %v3016
      %v3018 = vpop.f32.mrb[0].mxu0
      %3019 = vmatprep.mubr.bf16.mxu0 0
      %3020 = vmatmul.mubr.bf16.gmra.mrb[0].mxu0 %v1049
      %v3021 = vpop.f32.mrb[0].mxu0
      %v3022 = vadd.f32 0.0, %v3021
      %v3023 = vpop.f32.mrb[0].mxu0
      %v3024 = vpop.f32.mrb[0].mxu0
      %v3025 = vadd.f32 0.0, %v3024
      %v3026 = vpop.f32.mrb[0].mxu0
      %3027 = vmatprep.mubr.bf16.mxu0 0
      %3028 = vmatmul.mubr.bf16.gmra.mrb[0].mxu0 %v1052
      %v3029 = vpop.f32.mrb[0].mxu0
      %v3030 = vadd.f32 0.0, %v3029
      %v3031 = vpop.f32.mrb[0].mxu0
      %v3032 = vpop.f32.mrb[0].mxu0
      %v3033 = vadd.f32 0.0, %v3032
      %v3034 = vpop.f32.mrb[0].mxu0
      %3035 = vmatprep.mubr.bf16.mxu0 0
      %3036 = vmatmul.mubr.bf16.gmra.mrb[0].mxu0 %v1055
      %v3037 = vpop.f32.mrb[0].mxu0
      %v3038 = vadd.f32 0.0, %v3037
      %v3039 = vpop.f32.mrb[0].mxu0
      %v3040 = vpop.f32.mrb[0].mxu0
      %v3041 = vadd.f32 0.0, %v3040
      %v3042 = vpop.f32.mrb[0].mxu0
      %3043 = vmatprep.mubr.bf16.mxu0 0
      %3044 = vmatmul.mubr.bf16.gmra.mrb[0].mxu0 %v1058
      %v3045 = vpop.f32.mrb[0].mxu0
      %v3046 = vadd.f32 0.0, %v3045
      %v3047 = vpop.f32.mrb[0].mxu0
      %v3048 = vpop.f32.mrb[0].mxu0
      %v3049 = vadd.f32 0.0, %v3048
      %v3050 = vpop.f32.mrb[0].mxu0
      %3051 = vmatprep.mubr.bf16.mxu0 0
      %3052 = vmatmul.mubr.bf16.gmra.mrb[0].mxu0 %v1061
      %v3053 = vpop.f32.mrb[0].mxu0
      %v3054 = vadd.f32 0.0, %v3053
      %v3055 = vpop.f32.mrb[0].mxu0
      %v3056 = vpop.f32.mrb[0].mxu0
      %v3057 = vadd.f32 0.0, %v3056
      %v3058 = vpop.f32.mrb[0].mxu0
      %3059 = vmatprep.mubr.bf16.mxu0 0
      %3060 = vmatmul.mubr.bf16.gmra.mrb[0].mxu0 %v1064
      %v3061 = vpop.f32.mrb[0].mxu0
      %v3062 = vadd.f32 0.0, %v3061
      %v3063 = vpop.f32.mrb[0].mxu0
      %v3064 = vpop.f32.mrb[0].mxu0
      %v3065 = vadd.f32 0.0, %v3064
      %v3066 = vpop.f32.mrb[0].mxu0
      %3067 = vmatprep.mubr.bf16.mxu0 0
      %3068 = vmatmul.mubr.bf16.gmra.mrb[0].mxu0 %v1067
      %v3069 = vpop.f32.mrb[0].mxu0
      %v3070 = vadd.f32 0.0, %v3069
      %v3071 = vpop.f32.mrb[0].mxu0
      %v3072 = vpop.f32.mrb[0].mxu0
      %v3073 = vadd.f32 0.0, %v3072
      %v3074 = vpop.f32.mrb[0].mxu0
      %3075 = vmatprep.mubr.bf16.mxu0 0
      %3076 = vmatmul.mubr.bf16.gmra.mrb[0].mxu0 %v1070
      %v3077 = vpop.f32.mrb[0].mxu0
      %v3078 = vadd.f32 0.0, %v3077
      %v3079 = vpop.f32.mrb[0].mxu0
      %v3080 = vpop.f32.mrb[0].mxu0
      %v3081 = vadd.f32 0.0, %v3080
      %v3082 = vpop.f32.mrb[0].mxu0
      %3083 = vmatprep.mubr.bf16.mxu0 0
      %3084 = vmatmul.mubr.bf16.gmra.mrb[0].mxu0 %v1073
      %v3085 = vpop.f32.mrb[0].mxu0
      %v3086 = vadd.f32 0.0, %v3085
      %v3087 = vpop.f32.mrb[0].mxu0
      %v3088 = vpop.f32.mrb[0].mxu0
      %v3089 = vadd.f32 0.0, %v3088
      %v3090 = vpop.f32.mrb[0].mxu0
      %3091 = vmatprep.mubr.bf16.mxu0 0
      %3092 = vmatmul.mubr.bf16.gmra.mrb[0].mxu0 %v1076
      %v3093 = vpop.f32.mrb[0].mxu0
      %v3094 = vadd.f32 0.0, %v3093
      %v3095 = vpop.f32.mrb[0].mxu0
      %v3096 = vpop.f32.mrb[0].mxu0
      %v3097 = vadd.f32 0.0, %v3096
      %v3098 = vpop.f32.mrb[0].mxu0
      %3099 = vmatprep.mubr.bf16.mxu0 0
      %3100 = vmatmul.mubr.bf16.gmra.mrb[0].mxu0 %v1079
      %v3101 = vpop.f32.mrb[0].mxu0
      %v3102 = vadd.f32 0.0, %v3101
      %v3103 = vpop.f32.mrb[0].mxu0
      %v3104 = vpop.f32.mrb[0].mxu0
      %v3105 = vadd.f32 0.0, %v3104
      %v3106 = vpop.f32.mrb[0].mxu0
      %3107 = vmatprep.mubr.bf16.mxu0 0
      %3108 = vmatmul.mubr.bf16.gmra.mrb[0].mxu0 %v1082
      %v3109 = vpop.f32.mrb[0].mxu0
      %v3110 = vadd.f32 0.0, %v3109
      %v3111 = vpop.f32.mrb[0].mxu0
      %v3112 = vpop.f32.mrb[0].mxu0
      %v3113 = vadd.f32 0.0, %v3112
      %v3114 = vpop.f32.mrb[0].mxu0
      %3115 = vmatprep.mubr.bf16.mxu0 0
      %3116 = vmatmul.mubr.bf16.gmra.mrb[0].mxu0 %v1085
      %v3117 = vpop.f32.mrb[0].mxu0
      %v3118 = vadd.f32 0.0, %v3117
      %v3119 = vpop.f32.mrb[0].mxu0
      %v3120 = vpop.f32.mrb[0].mxu0
      %v3121 = vadd.f32 0.0, %v3120
      %v3122 = vpop.f32.mrb[0].mxu0
      %3123 = vmatprep.mubr.bf16.mxu0 0
      %3124 = vmatmul.mubr.bf16.gmra.mrb[0].mxu0 %v2136
      %v3125 = vpop.f32.mrb[0].mxu0
      %v3126 = vadd.f32 0.0, %v3125
      %v3127 = vpop.f32.mrb[0].mxu0
      %v3128 = vpop.f32.mrb[0].mxu0
      %v3129 = vadd.f32 0.0, %v3128
      %v3130 = vpop.f32.mrb[0].mxu0
      %3131 = vmatprep.mubr.bf16.mxu0 0
      %3132 = vmatmul.mubr.bf16.gmra.mrb[0].mxu0 %v2974
      %v3133 = vpop.f32.mrb[0].mxu0
      %v3134 = vadd.f32 0.0, %v3133
      %v3135 = vpop.f32.mrb[0].mxu0
      %v3136 = vpop.f32.mrb[0].mxu0
      %v3137 = vadd.f32 0.0, %v3136
      %v3138 = vpop.f32.mrb[0].mxu0
      %3139 = vdwg.mxu0
      %v3140 = vld [vmem:[#allocation2] sm:$0xff]
      %v3141 = vld [vmem:[#allocation2 + $0x8] sm:$0xff]
      %v3142 = vld [vmem:[#allocation2 + $0x10] sm:$0xff]
      %v3143 = vld [vmem:[#allocation2 + $0x18] sm:$0xff]
      %v3144 = vld [vmem:[#allocation2 + $0x20] sm:$0xff]
      %v3145 = vld [vmem:[#allocation2 + $0x28] sm:$0xff]
      %v3146 = vld [vmem:[#allocation2 + $0x30] sm:$0xff]
      %v3147 = vld [vmem:[#allocation2 + $0x38] sm:$0xff]
      %v3148 = vld [vmem:[#allocation2 + $0x40] sm:$0xff]
      %v3149 = vld [vmem:[#allocation2 + $0x48] sm:$0xff]
      %v3150 = vld [vmem:[#allocation2 + $0x50] sm:$0xff]
      %v3151 = vld [vmem:[#allocation2 + $0x58] sm:$0xff]
      %v3152 = vld [vmem:[#allocation2 + $0x60] sm:$0xff]
      %v3153 = vld [vmem:[#allocation2 + $0x68] sm:$0xff]
      %v3154 = vld [vmem:[#allocation2 + $0x70] sm:$0xff]
      %v3155 = vld [vmem:[#allocation2 + $0x78] sm:$0xff]
      %v3156 = vld [vmem:[#allocation2 + $0x80] sm:$0xff]
      %v3157 = vld [vmem:[#allocation2 + $0x88] sm:$0xff]
      %v3158 = vld [vmem:[#allocation2 + $0x90] sm:$0xff]
      %v3159 = vld [vmem:[#allocation2 + $0x98] sm:$0xff]
      %v3160 = vld [vmem:[#allocation2 + $0xa0] sm:$0xff]
      %v3161 = vld [vmem:[#allocation2 + $0xa8] sm:$0xff]
      %v3162 = vld [vmem:[#allocation2 + $0xb0] sm:$0xff]
      %v3163 = vld [vmem:[#allocation2 + $0xb8] sm:$0xff]
      %v3164 = vld [vmem:[#allocation2 + $0xc0] sm:$0xff]
      %v3165 = vld [vmem:[#allocation2 + $0xc8] sm:$0xff]
      %v3166 = vld [vmem:[#allocation2 + $0xd0] sm:$0xff]
      %v3167 = vld [vmem:[#allocation2 + $0xd8] sm:$0xff]
      %v3168 = vld [vmem:[#allocation2 + $0xe0] sm:$0xff]
      %v3169 = vld [vmem:[#allocation2 + $0xe8] sm:$0xff]
      %v3170 = vld [vmem:[#allocation2 + $0xf0] sm:$0xff]
      %v3171 = vld [vmem:[#allocation2 + $0xf8] sm:$0xff]
      %v3172 = vadd.f32 %v3140, %v3014
      %v3173 = vadd.f32 %v3141, %v3017
      %v3174 = vadd.f32 %v3142, %v3022
      %v3175 = vadd.f32 %v3143, %v3025
      %v3176 = vadd.f32 %v3144, %v3030
      %v3177 = vadd.f32 %v3145, %v3033
      %v3178 = vadd.f32 %v3146, %v3038
      %v3179 = vadd.f32 %v3147, %v3041
      %v3180 = vadd.f32 %v3148, %v3046
      %v3181 = vadd.f32 %v3149, %v3049
      %v3182 = vadd.f32 %v3150, %v3054
      %v3183 = vadd.f32 %v3151, %v3057
      %v3184 = vadd.f32 %v3152, %v3062
      %v3185 = vadd.f32 %v3153, %v3065
      %v3186 = vadd.f32 %v3154, %v3070
      %v3187 = vadd.f32 %v3155, %v3073
      %v3188 = vadd.f32 %v3156, %v3078
      %v3189 = vadd.f32 %v3157, %v3081
      %v3190 = vadd.f32 %v3158, %v3086
      %v3191 = vadd.f32 %v3159, %v3089
      %v3192 = vadd.f32 %v3160, %v3094
      %v3193 = vadd.f32 %v3161, %v3097
      %v3194 = vadd.f32 %v3162, %v3102
      %v3195 = vadd.f32 %v3163, %v3105
      %v3196 = vadd.f32 %v3164, %v3110
      %v3197 = vadd.f32 %v3165, %v3113
      %v3198 = vadd.f32 %v3166, %v3118
      %v3199 = vadd.f32 %v3167, %v3121
      %v3200 = vadd.f32 %v3168, %v3126
      %v3201 = vadd.f32 %v3169, %v3129
      %v3202 = vadd.f32 %v3170, %v3134
      %v3203 = vadd.f32 %v3171, %v3137
      %3204 = vst [vmem:[#allocation2] sm:$0xff] %v3172
      %3205 = vst [vmem:[#allocation2 + $0x8] sm:$0xff] %v3173
      %3206 = vst [vmem:[#allocation2 + $0x10] sm:$0xff] %v3174
      %3207 = vst [vmem:[#allocation2 + $0x18] sm:$0xff] %v3175
      %3208 = vst [vmem:[#allocation2 + $0x20] sm:$0xff] %v3176
      %3209 = vst [vmem:[#allocation2 + $0x28] sm:$0xff] %v3177
      %3210 = vst [vmem:[#allocation2 + $0x30] sm:$0xff] %v3178
      %3211 = vst [vmem:[#allocation2 + $0x38] sm:$0xff] %v3179
      %3212 = vst [vmem:[#allocation2 + $0x40] sm:$0xff] %v3180
      %3213 = vst [vmem:[#allocation2 + $0x48] sm:$0xff] %v3181
      %3214 = vst [vmem:[#allocation2 + $0x50] sm:$0xff] %v3182
      %3215 = vst [vmem:[#allocation2 + $0x58] sm:$0xff] %v3183
      %3216 = vst [vmem:[#allocation2 + $0x60] sm:$0xff] %v3184
      %3217 = vst [vmem:[#allocation2 + $0x68] sm:$0xff] %v3185
      %3218 = vst [vmem:[#allocation2 + $0x70] sm:$0xff] %v3186
      %3219 = vst [vmem:[#allocation2 + $0x78] sm:$0xff] %v3187
      %3220 = vst [vmem:[#allocation2 + $0x80] sm:$0xff] %v3188
      %3221 = vst [vmem:[#allocation2 + $0x88] sm:$0xff] %v3189
      %3222 = vst [vmem:[#allocation2 + $0x90] sm:$0xff] %v3190
      %3223 = vst [vmem:[#allocation2 + $0x98] sm:$0xff] %v3191
      %3224 = vst [vmem:[#allocation2 + $0xa0] sm:$0xff] %v3192
      %3225 = vst [vmem:[#allocation2 + $0xa8] sm:$0xff] %v3193
      %3226 = vst [vmem:[#allocation2 + $0xb0] sm:$0xff] %v3194
      %3227 = vst [vmem:[#allocation2 + $0xb8] sm:$0xff] %v3195
      %3228 = vst [vmem:[#allocation2 + $0xc0] sm:$0xff] %v3196
      %3229 = vst [vmem:[#allocation2 + $0xc8] sm:$0xff] %v3197
      %3230 = vst [vmem:[#allocation2 + $0xd0] sm:$0xff] %v3198
      %3231 = vst [vmem:[#allocation2 + $0xd8] sm:$0xff] %v3199
      %3232 = vst [vmem:[#allocation2 + $0xe0] sm:$0xff] %v3200
      %3233 = vst [vmem:[#allocation2 + $0xe8] sm:$0xff] %v3201
      %3234 = vst [vmem:[#allocation2 + $0xf0] sm:$0xff] %v3202
      %3235 = vst [vmem:[#allocation2 + $0xf8] sm:$0xff] %v3203
      %v3237 = vrot.slane %v272, 5
      %v3238 = vrot.slane %v3237, 4
      %v3239 = vrot.slane %v273, 5
      %v3240 = vsel %vm1365, %v3238, %v3239
      %v3241 = vrot.slane %v3239, 4
      %v3242 = vrot.slane %v274, 5
      %v3243 = vsel %vm1365, %v3241, %v3242
      %s3244 = scalar_lea.vmem %s1, 16
      %v3245 = vld [vmem:[%s3244] sm:$0x3]
      %v3246 = vunpack.c.l.b16 %v3240
      %v3247 = vunpack.c.l.b16 %v3243
      %v3248 = vpack.c.b16 %v3247, %v3246
      %v3250 = vsel %vm356, %v3248, 0
      %v3253 = vsel %vm405, %v3245, 0
      %3255 = vmatprep.subr.bf16.mxu0 0
      %3256 = vmatpush1.bf16.msra.mxu0 %v3253
      %3257 = vmatprep.subr.bf16.mxu0 0
      %3258 = vmatpush1.bf16.msra.mxu0 0
      %3259 = vmatprep.subr.bf16.mxu0 0
      %3260 = vmatpush1.bf16.msra.mxu0 0
      %3261 = vmatprep.subr.bf16.mxu0 0
      %3262 = vmatpush1.bf16.msra.mxu0 0
      %3263 = vmatprep.subr.bf16.mxu0 0
      %3264 = vmatpush1.bf16.msra.mxu0 0
      %3265 = vmatprep.subr.bf16.mxu0 0
      %3266 = vmatpush1.bf16.msra.mxu0 0
      %3267 = vmatprep.subr.bf16.mxu0 0
      %3268 = vmatpush1.bf16.msra.mxu0 0
      %3269 = vmatprep.subr.bf16.mxu0 0
      %3270 = vmatpush1.bf16.msra.mxu0 0
      %3271 = vmatprep.subr.bf16.mxu0 0
      %3272 = vmatpush1.bf16.msra.mxu0 0
      %3273 = vmatprep.subr.bf16.mxu0 0
      %3274 = vmatpush1.bf16.msra.mxu0 0
      %3275 = vmatprep.subr.bf16.mxu0 0
      %3276 = vmatpush1.bf16.msra.mxu0 0
      %3277 = vmatprep.subr.bf16.mxu0 0
      %3278 = vmatpush1.bf16.msra.mxu0 0
      %3279 = vmatprep.subr.bf16.mxu0 0
      %3280 = vmatpush1.bf16.msra.mxu0 0
      %3281 = vmatprep.subr.bf16.mxu0 0
      %3282 = vmatpush1.bf16.msra.mxu0 0
      %3283 = vmatprep.subr.bf16.mxu0 0
      %3284 = vmatpush1.bf16.msra.mxu0 0
      %3285 = vmatprep.subr.bf16.mxu0 0
      %3286 = vmatpush1.bf16.msra.mxu0 0
      %3287 = vmatprep.mubr.bf16.mxu0 0
      %3288 = vmatmul.mubr.bf16.gmra.mrb[0].mxu0 %v1535
      %v3289 = vpop.f32.mrb[0].mxu0
      %v3290 = vadd.f32 0.0, %v3289
      %v3291 = vpop.f32.mrb[0].mxu0
      %v3292 = vpop.f32.mrb[0].mxu0
      %v3293 = vadd.f32 0.0, %v3292
      %v3294 = vpop.f32.mrb[0].mxu0
      %3295 = vmatprep.mubr.bf16.mxu0 0
      %3296 = vmatmul.mubr.bf16.gmra.mrb[0].mxu0 %v1538
      %v3297 = vpop.f32.mrb[0].mxu0
      %v3298 = vadd.f32 0.0, %v3297
      %v3299 = vpop.f32.mrb[0].mxu0
      %v3300 = vpop.f32.mrb[0].mxu0
      %v3301 = vadd.f32 0.0, %v3300
      %v3302 = vpop.f32.mrb[0].mxu0
      %3303 = vmatprep.mubr.bf16.mxu0 0
      %3304 = vmatmul.mubr.bf16.gmra.mrb[0].mxu0 %v1541
      %v3305 = vpop.f32.mrb[0].mxu0
      %v3306 = vadd.f32 0.0, %v3305
      %v3307 = vpop.f32.mrb[0].mxu0
      %v3308 = vpop.f32.mrb[0].mxu0
      %v3309 = vadd.f32 0.0, %v3308
      %v3310 = vpop.f32.mrb[0].mxu0
      %3311 = vmatprep.mubr.bf16.mxu0 0
      %3312 = vmatmul.mubr.bf16.gmra.mrb[0].mxu0 %v1544
      %v3313 = vpop.f32.mrb[0].mxu0
      %v3314 = vadd.f32 0.0, %v3313
      %v3315 = vpop.f32.mrb[0].mxu0
      %v3316 = vpop.f32.mrb[0].mxu0
      %v3317 = vadd.f32 0.0, %v3316
      %v3318 = vpop.f32.mrb[0].mxu0
      %3319 = vmatprep.mubr.bf16.mxu0 0
      %3320 = vmatmul.mubr.bf16.gmra.mrb[0].mxu0 %v1547
      %v3321 = vpop.f32.mrb[0].mxu0
      %v3322 = vadd.f32 0.0, %v3321
      %v3323 = vpop.f32.mrb[0].mxu0
      %v3324 = vpop.f32.mrb[0].mxu0
      %v3325 = vadd.f32 0.0, %v3324
      %v3326 = vpop.f32.mrb[0].mxu0
      %3327 = vmatprep.mubr.bf16.mxu0 0
      %3328 = vmatmul.mubr.bf16.gmra.mrb[0].mxu0 %v1550
      %v3329 = vpop.f32.mrb[0].mxu0
      %v3330 = vadd.f32 0.0, %v3329
      %v3331 = vpop.f32.mrb[0].mxu0
      %v3332 = vpop.f32.mrb[0].mxu0
      %v3333 = vadd.f32 0.0, %v3332
      %v3334 = vpop.f32.mrb[0].mxu0
      %3335 = vmatprep.mubr.bf16.mxu0 0
      %3336 = vmatmul.mubr.bf16.gmra.mrb[0].mxu0 %v1553
      %v3337 = vpop.f32.mrb[0].mxu0
      %v3338 = vadd.f32 0.0, %v3337
      %v3339 = vpop.f32.mrb[0].mxu0
      %v3340 = vpop.f32.mrb[0].mxu0
      %v3341 = vadd.f32 0.0, %v3340
      %v3342 = vpop.f32.mrb[0].mxu0
      %3343 = vmatprep.mubr.bf16.mxu0 0
      %3344 = vmatmul.mubr.bf16.gmra.mrb[0].mxu0 %v1556
      %v3345 = vpop.f32.mrb[0].mxu0
      %v3346 = vadd.f32 0.0, %v3345
      %v3347 = vpop.f32.mrb[0].mxu0
      %v3348 = vpop.f32.mrb[0].mxu0
      %v3349 = vadd.f32 0.0, %v3348
      %v3350 = vpop.f32.mrb[0].mxu0
      %3351 = vmatprep.mubr.bf16.mxu0 0
      %3352 = vmatmul.mubr.bf16.gmra.mrb[0].mxu0 %v1559
      %v3353 = vpop.f32.mrb[0].mxu0
      %v3354 = vadd.f32 0.0, %v3353
      %v3355 = vpop.f32.mrb[0].mxu0
      %v3356 = vpop.f32.mrb[0].mxu0
      %v3357 = vadd.f32 0.0, %v3356
      %v3358 = vpop.f32.mrb[0].mxu0
      %3359 = vmatprep.mubr.bf16.mxu0 0
      %3360 = vmatmul.mubr.bf16.gmra.mrb[0].mxu0 %v1562
      %v3361 = vpop.f32.mrb[0].mxu0
      %v3362 = vadd.f32 0.0, %v3361
      %v3363 = vpop.f32.mrb[0].mxu0
      %v3364 = vpop.f32.mrb[0].mxu0
      %v3365 = vadd.f32 0.0, %v3364
      %v3366 = vpop.f32.mrb[0].mxu0
      %3367 = vmatprep.mubr.bf16.mxu0 0
      %3368 = vmatmul.mubr.bf16.gmra.mrb[0].mxu0 %v1565
      %v3369 = vpop.f32.mrb[0].mxu0
      %v3370 = vadd.f32 0.0, %v3369
      %v3371 = vpop.f32.mrb[0].mxu0
      %v3372 = vpop.f32.mrb[0].mxu0
      %v3373 = vadd.f32 0.0, %v3372
      %v3374 = vpop.f32.mrb[0].mxu0
      %3375 = vmatprep.mubr.bf16.mxu0 0
      %3376 = vmatmul.mubr.bf16.gmra.mrb[0].mxu0 %v1568
      %v3377 = vpop.f32.mrb[0].mxu0
      %v3378 = vadd.f32 0.0, %v3377
      %v3379 = vpop.f32.mrb[0].mxu0
      %v3380 = vpop.f32.mrb[0].mxu0
      %v3381 = vadd.f32 0.0, %v3380
      %v3382 = vpop.f32.mrb[0].mxu0
      %3383 = vmatprep.mubr.bf16.mxu0 0
      %3384 = vmatmul.mubr.bf16.gmra.mrb[0].mxu0 %v1571
      %v3385 = vpop.f32.mrb[0].mxu0
      %v3386 = vadd.f32 0.0, %v3385
      %v3387 = vpop.f32.mrb[0].mxu0
      %v3388 = vpop.f32.mrb[0].mxu0
      %v3389 = vadd.f32 0.0, %v3388
      %v3390 = vpop.f32.mrb[0].mxu0
      %3391 = vmatprep.mubr.bf16.mxu0 0
      %3392 = vmatmul.mubr.bf16.gmra.mrb[0].mxu0 %v1574
      %v3393 = vpop.f32.mrb[0].mxu0
      %v3394 = vadd.f32 0.0, %v3393
      %v3395 = vpop.f32.mrb[0].mxu0
      %v3396 = vpop.f32.mrb[0].mxu0
      %v3397 = vadd.f32 0.0, %v3396
      %v3398 = vpop.f32.mrb[0].mxu0
      %3399 = vmatprep.mubr.bf16.mxu0 0
      %3400 = vmatmul.mubr.bf16.gmra.mrb[0].mxu0 %v2412
      %v3401 = vpop.f32.mrb[0].mxu0
      %v3402 = vadd.f32 0.0, %v3401
      %v3403 = vpop.f32.mrb[0].mxu0
      %v3404 = vpop.f32.mrb[0].mxu0
      %v3405 = vadd.f32 0.0, %v3404
      %v3406 = vpop.f32.mrb[0].mxu0
      %3407 = vmatprep.mubr.bf16.mxu0 0
      %3408 = vmatmul.mubr.bf16.gmra.mrb[0].mxu0 %v3250
      %v3409 = vpop.f32.mrb[0].mxu0
      %v3410 = vadd.f32 0.0, %v3409
      %v3411 = vpop.f32.mrb[0].mxu0
      %v3412 = vpop.f32.mrb[0].mxu0
      %v3413 = vadd.f32 0.0, %v3412
      %v3414 = vpop.f32.mrb[0].mxu0
      %3415 = vdwg.mxu0
      %v3416 = vld [vmem:[#allocation2] sm:$0xff]
      %v3417 = vld [vmem:[#allocation2 + $0x8] sm:$0xff]
      %v3418 = vld [vmem:[#allocation2 + $0x10] sm:$0xff]
      %v3419 = vld [vmem:[#allocation2 + $0x18] sm:$0xff]
      %v3420 = vld [vmem:[#allocation2 + $0x20] sm:$0xff]
      %v3421 = vld [vmem:[#allocation2 + $0x28] sm:$0xff]
      %v3422 = vld [vmem:[#allocation2 + $0x30] sm:$0xff]
      %v3423 = vld [vmem:[#allocation2 + $0x38] sm:$0xff]
      %v3424 = vld [vmem:[#allocation2 + $0x40] sm:$0xff]
      %v3425 = vld [vmem:[#allocation2 + $0x48] sm:$0xff]
      %v3426 = vld [vmem:[#allocation2 + $0x50] sm:$0xff]
      %v3427 = vld [vmem:[#allocation2 + $0x58] sm:$0xff]
      %v3428 = vld [vmem:[#allocation2 + $0x60] sm:$0xff]
      %v3429 = vld [vmem:[#allocation2 + $0x68] sm:$0xff]
      %v3430 = vld [vmem:[#allocation2 + $0x70] sm:$0xff]
      %v3431 = vld [vmem:[#allocation2 + $0x78] sm:$0xff]
      %v3432 = vld [vmem:[#allocation2 + $0x80] sm:$0xff]
      %v3433 = vld [vmem:[#allocation2 + $0x88] sm:$0xff]
      %v3434 = vld [vmem:[#allocation2 + $0x90] sm:$0xff]
      %v3435 = vld [vmem:[#allocation2 + $0x98] sm:$0xff]
      %v3436 = vld [vmem:[#allocation2 + $0xa0] sm:$0xff]
      %v3437 = vld [vmem:[#allocation2 + $0xa8] sm:$0xff]
      %v3438 = vld [vmem:[#allocation2 + $0xb0] sm:$0xff]
      %v3439 = vld [vmem:[#allocation2 + $0xb8] sm:$0xff]
      %v3440 = vld [vmem:[#allocation2 + $0xc0] sm:$0xff]
      %v3441 = vld [vmem:[#allocation2 + $0xc8] sm:$0xff]
      %v3442 = vld [vmem:[#allocation2 + $0xd0] sm:$0xff]
      %v3443 = vld [vmem:[#allocation2 + $0xd8] sm:$0xff]
      %v3444 = vld [vmem:[#allocation2 + $0xe0] sm:$0xff]
      %v3445 = vld [vmem:[#allocation2 + $0xe8] sm:$0xff]
      %v3446 = vld [vmem:[#allocation2 + $0xf0] sm:$0xff]
      %v3447 = vld [vmem:[#allocation2 + $0xf8] sm:$0xff]
      %v3448 = vadd.f32 %v3416, %v3290
      %v3449 = vadd.f32 %v3417, %v3293
      %v3450 = vadd.f32 %v3418, %v3298
      %v3451 = vadd.f32 %v3419, %v3301
      %v3452 = vadd.f32 %v3420, %v3306
      %v3453 = vadd.f32 %v3421, %v3309
      %v3454 = vadd.f32 %v3422, %v3314
      %v3455 = vadd.f32 %v3423, %v3317
      %v3456 = vadd.f32 %v3424, %v3322
      %v3457 = vadd.f32 %v3425, %v3325
      %v3458 = vadd.f32 %v3426, %v3330
      %v3459 = vadd.f32 %v3427, %v3333
      %v3460 = vadd.f32 %v3428, %v3338
      %v3461 = vadd.f32 %v3429, %v3341
      %v3462 = vadd.f32 %v3430, %v3346
      %v3463 = vadd.f32 %v3431, %v3349
      %v3464 = vadd.f32 %v3432, %v3354
      %v3465 = vadd.f32 %v3433, %v3357
      %v3466 = vadd.f32 %v3434, %v3362
      %v3467 = vadd.f32 %v3435, %v3365
      %v3468 = vadd.f32 %v3436, %v3370
      %v3469 = vadd.f32 %v3437, %v3373
      %v3470 = vadd.f32 %v3438, %v3378
      %v3471 = vadd.f32 %v3439, %v3381
      %v3472 = vadd.f32 %v3440, %v3386
      %v3473 = vadd.f32 %v3441, %v3389
      %v3474 = vadd.f32 %v3442, %v3394
      %v3475 = vadd.f32 %v3443, %v3397
      %v3476 = vadd.f32 %v3444, %v3402
      %v3477 = vadd.f32 %v3445, %v3405
      %v3478 = vadd.f32 %v3446, %v3410
      %v3479 = vadd.f32 %v3447, %v3413
      %3480 = vst [vmem:[#allocation2] sm:$0xff] %v3448
      %3481 = vst [vmem:[#allocation2 + $0x8] sm:$0xff] %v3449
      %3482 = vst [vmem:[#allocation2 + $0x10] sm:$0xff] %v3450
      %3483 = vst [vmem:[#allocation2 + $0x18] sm:$0xff] %v3451
      %3484 = vst [vmem:[#allocation2 + $0x20] sm:$0xff] %v3452
      %3485 = vst [vmem:[#allocation2 + $0x28] sm:$0xff] %v3453
      %3486 = vst [vmem:[#allocation2 + $0x30] sm:$0xff] %v3454
      %3487 = vst [vmem:[#allocation2 + $0x38] sm:$0xff] %v3455
      %3488 = vst [vmem:[#allocation2 + $0x40] sm:$0xff] %v3456
      %3489 = vst [vmem:[#allocation2 + $0x48] sm:$0xff] %v3457
      %3490 = vst [vmem:[#allocation2 + $0x50] sm:$0xff] %v3458
      %3491 = vst [vmem:[#allocation2 + $0x58] sm:$0xff] %v3459
      %3492 = vst [vmem:[#allocation2 + $0x60] sm:$0xff] %v3460
      %3493 = vst [vmem:[#allocation2 + $0x68] sm:$0xff] %v3461
      %3494 = vst [vmem:[#allocation2 + $0x70] sm:$0xff] %v3462
      %3495 = vst [vmem:[#allocation2 + $0x78] sm:$0xff] %v3463
      %3496 = vst [vmem:[#allocation2 + $0x80] sm:$0xff] %v3464
      %3497 = vst [vmem:[#allocation2 + $0x88] sm:$0xff] %v3465
      %3498 = vst [vmem:[#allocation2 + $0x90] sm:$0xff] %v3466
      %3499 = vst [vmem:[#allocation2 + $0x98] sm:$0xff] %v3467
      %3500 = vst [vmem:[#allocation2 + $0xa0] sm:$0xff] %v3468
      %3501 = vst [vmem:[#allocation2 + $0xa8] sm:$0xff] %v3469
      %3502 = vst [vmem:[#allocation2 + $0xb0] sm:$0xff] %v3470
      %3503 = vst [vmem:[#allocation2 + $0xb8] sm:$0xff] %v3471
      %3504 = vst [vmem:[#allocation2 + $0xc0] sm:$0xff] %v3472
      %3505 = vst [vmem:[#allocation2 + $0xc8] sm:$0xff] %v3473
      %3506 = vst [vmem:[#allocation2 + $0xd0] sm:$0xff] %v3474
      %3507 = vst [vmem:[#allocation2 + $0xd8] sm:$0xff] %v3475
      %3508 = vst [vmem:[#allocation2 + $0xe0] sm:$0xff] %v3476
      %3509 = vst [vmem:[#allocation2 + $0xe8] sm:$0xff] %v3477
      %3510 = vst [vmem:[#allocation2 + $0xf0] sm:$0xff] %v3478
      %3511 = vst [vmem:[#allocation2 + $0xf8] sm:$0xff] %v3479
      %v3512 = vld [vmem:[#allocation2] sm:$0xff]
      %v3513 = vld [vmem:[#allocation2 + $0x8] sm:$0xff]
      %v3514 = vld [vmem:[#allocation2 + $0x10] sm:$0xff]
      %v3515 = vld [vmem:[#allocation2 + $0x18] sm:$0xff]
      %v3516 = vld [vmem:[#allocation2 + $0x20] sm:$0xff]
      %v3517 = vld [vmem:[#allocation2 + $0x28] sm:$0xff]
      %v3518 = vld [vmem:[#allocation2 + $0x30] sm:$0xff]
      %v3519 = vld [vmem:[#allocation2 + $0x38] sm:$0xff]
      %v3520 = vld [vmem:[#allocation2 + $0x40] sm:$0xff]
      %v3521 = vld [vmem:[#allocation2 + $0x48] sm:$0xff]
      %v3522 = vld [vmem:[#allocation2 + $0x50] sm:$0xff]
      %v3523 = vld [vmem:[#allocation2 + $0x58] sm:$0xff]
      %v3524 = vld [vmem:[#allocation2 + $0x60] sm:$0xff]
      %v3525 = vld [vmem:[#allocation2 + $0x68] sm:$0xff]
      %v3526 = vld [vmem:[#allocation2 + $0x70] sm:$0xff]
      %v3527 = vld [vmem:[#allocation2 + $0x78] sm:$0xff]
      %v3528 = vld [vmem:[#allocation2 + $0x80] sm:$0xff]
      %v3529 = vld [vmem:[#allocation2 + $0x88] sm:$0xff]
      %v3530 = vld [vmem:[#allocation2 + $0x90] sm:$0xff]
      %v3531 = vld [vmem:[#allocation2 + $0x98] sm:$0xff]
      %v3532 = vld [vmem:[#allocation2 + $0xa0] sm:$0xff]
      %v3533 = vld [vmem:[#allocation2 + $0xa8] sm:$0xff]
      %v3534 = vld [vmem:[#allocation2 + $0xb0] sm:$0xff]
      %v3535 = vld [vmem:[#allocation2 + $0xb8] sm:$0xff]
      %v3536 = vld [vmem:[#allocation2 + $0xc0] sm:$0xff]
      %v3537 = vld [vmem:[#allocation2 + $0xc8] sm:$0xff]
      %v3538 = vld [vmem:[#allocation2 + $0xd0] sm:$0xff]
      %v3539 = vld [vmem:[#allocation2 + $0xd8] sm:$0xff]
      %v3540 = vld [vmem:[#allocation2 + $0xe0] sm:$0xff]
      %v3541 = vld [vmem:[#allocation2 + $0xe8] sm:$0xff]
      %v3542 = vld [vmem:[#allocation2 + $0xf0] sm:$0xff]
      %v3543 = vld [vmem:[#allocation2 + $0xf8] sm:$0xff]
      %v3544 = vld [vmem:[%s2] sm:$0x1]
      %v3546 = vlaneseq
      %v3547 = vshrl.u32 %v3546, 7
      %v3548 = vsub.s32 0, %v3547
      %v3549 = vrot.slane %v3544, %v3548
      %v3551 = vmul.f32 %v3512, %v3549
      %v3552 = vmul.f32 %v3513, %v3549
      %v3553 = vmul.f32 %v3514, %v3549
      %v3554 = vmul.f32 %v3515, %v3549
      %v3555 = vmul.f32 %v3516, %v3549
      %v3556 = vmul.f32 %v3517, %v3549
      %v3557 = vmul.f32 %v3518, %v3549
      %v3558 = vmul.f32 %v3519, %v3549
      %v3559 = vmul.f32 %v3520, %v3549
      %v3560 = vmul.f32 %v3521, %v3549
      %v3561 = vmul.f32 %v3522, %v3549
      %v3562 = vmul.f32 %v3523, %v3549
      %v3563 = vmul.f32 %v3524, %v3549
      %v3564 = vmul.f32 %v3525, %v3549
      %v3565 = vmul.f32 %v3526, %v3549
      %v3566 = vmul.f32 %v3527, %v3549
      %v3567 = vmul.f32 %v3528, %v3549
      %v3568 = vmul.f32 %v3529, %v3549
      %v3569 = vmul.f32 %v3530, %v3549
      %v3570 = vmul.f32 %v3531, %v3549
      %v3571 = vmul.f32 %v3532, %v3549
      %v3572 = vmul.f32 %v3533, %v3549
      %v3573 = vmul.f32 %v3534, %v3549
      %v3574 = vmul.f32 %v3535, %v3549
      %v3575 = vmul.f32 %v3536, %v3549
      %v3576 = vmul.f32 %v3537, %v3549
      %v3577 = vmul.f32 %v3538, %v3549
      %v3578 = vmul.f32 %v3539, %v3549
      %v3579 = vmul.f32 %v3540, %v3549
      %v3580 = vmul.f32 %v3541, %v3549
      %v3581 = vmul.f32 %v3542, %v3549
      %v3582 = vmul.f32 %v3543, %v3549
      %v3583 = vld [vmem:[%s3] sm:$0x1]
      %v3585 = vlaneseq
      %v3586 = vshrl.u32 %v3585, 7
      %v3587 = vsub.s32 0, %v3586
      %v3588 = vrot.slane %v3583, %v3587
      %v3590 = vadd.f32 %v3551, %v3588
      %v3591 = vadd.f32 %v3552, %v3588
      %v3592 = vadd.f32 %v3553, %v3588
      %v3593 = vadd.f32 %v3554, %v3588
      %v3594 = vadd.f32 %v3555, %v3588
      %v3595 = vadd.f32 %v3556, %v3588
      %v3596 = vadd.f32 %v3557, %v3588
      %v3597 = vadd.f32 %v3558, %v3588
      %v3598 = vadd.f32 %v3559, %v3588
      %v3599 = vadd.f32 %v3560, %v3588
      %v3600 = vadd.f32 %v3561, %v3588
      %v3601 = vadd.f32 %v3562, %v3588
      %v3602 = vadd.f32 %v3563, %v3588
      %v3603 = vadd.f32 %v3564, %v3588
      %v3604 = vadd.f32 %v3565, %v3588
      %v3605 = vadd.f32 %v3566, %v3588
      %v3606 = vadd.f32 %v3567, %v3588
      %v3607 = vadd.f32 %v3568, %v3588
      %v3608 = vadd.f32 %v3569, %v3588
      %v3609 = vadd.f32 %v3570, %v3588
      %v3610 = vadd.f32 %v3571, %v3588
      %v3611 = vadd.f32 %v3572, %v3588
      %v3612 = vadd.f32 %v3573, %v3588
      %v3613 = vadd.f32 %v3574, %v3588
      %v3614 = vadd.f32 %v3575, %v3588
      %v3615 = vadd.f32 %v3576, %v3588
      %v3616 = vadd.f32 %v3577, %v3588
      %v3617 = vadd.f32 %v3578, %v3588
      %v3618 = vadd.f32 %v3579, %v3588
      %v3619 = vadd.f32 %v3580, %v3588
      %v3620 = vadd.f32 %v3581, %v3588
      %v3621 = vadd.f32 %v3582, %v3588
      %v3622 = vmul.f32 %v3590, 0.5
      %v3623 = vmul.f32 %v3591, 0.5
      %v3624 = vmul.f32 %v3592, 0.5
      %v3625 = vmul.f32 %v3593, 0.5
      %v3626 = vmul.f32 %v3594, 0.5
      %v3627 = vmul.f32 %v3595, 0.5
      %v3628 = vmul.f32 %v3596, 0.5
      %v3629 = vmul.f32 %v3597, 0.5
      %v3630 = vmul.f32 %v3598, 0.5
      %v3631 = vmul.f32 %v3599, 0.5
      %v3632 = vmul.f32 %v3600, 0.5
      %v3633 = vmul.f32 %v3601, 0.5
      %v3634 = vmul.f32 %v3602, 0.5
      %v3635 = vmul.f32 %v3603, 0.5
      %v3636 = vmul.f32 %v3604, 0.5
      %v3637 = vmul.f32 %v3605, 0.5
      %v3638 = vmul.f32 %v3606, 0.5
      %v3639 = vmul.f32 %v3607, 0.5
      %v3640 = vmul.f32 %v3608, 0.5
      %v3641 = vmul.f32 %v3609, 0.5
      %v3642 = vmul.f32 %v3610, 0.5
      %v3643 = vmul.f32 %v3611, 0.5
      %v3644 = vmul.f32 %v3612, 0.5
      %v3645 = vmul.f32 %v3613, 0.5
      %v3646 = vmul.f32 %v3614, 0.5
      %v3647 = vmul.f32 %v3615, 0.5
      %v3648 = vmul.f32 %v3616, 0.5
      %v3649 = vmul.f32 %v3617, 0.5
      %v3650 = vmul.f32 %v3618, 0.5
      %v3651 = vmul.f32 %v3619, 0.5
      %v3652 = vmul.f32 %v3620, 0.5
      %v3653 = vmul.f32 %v3621, 0.5
      %v3654 = vmul.f32 %v3590, 0.044715
      %v3655 = vmul.f32 %v3591, 0.044715
      %v3656 = vmul.f32 %v3592, 0.044715
      %v3657 = vmul.f32 %v3593, 0.044715
      %v3658 = vmul.f32 %v3594, 0.044715
      %v3659 = vmul.f32 %v3595, 0.044715
      %v3660 = vmul.f32 %v3596, 0.044715
      %v3661 = vmul.f32 %v3597, 0.044715
      %v3662 = vmul.f32 %v3598, 0.044715
      %v3663 = vmul.f32 %v3599, 0.044715
      %v3664 = vmul.f32 %v3600, 0.044715
      %v3665 = vmul.f32 %v3601, 0.044715
      %v3666 = vmul.f32 %v3602, 0.044715
      %v3667 = vmul.f32 %v3603, 0.044715
      %v3668 = vmul.f32 %v3604, 0.044715
      %v3669 = vmul.f32 %v3605, 0.044715
      %v3670 = vmul.f32 %v3606, 0.044715
      %v3671 = vmul.f32 %v3607, 0.044715
      %v3672 = vmul.f32 %v3608, 0.044715
      %v3673 = vmul.f32 %v3609, 0.044715
      %v3674 = vmul.f32 %v3610, 0.044715
      %v3675 = vmul.f32 %v3611, 0.044715
      %v3676 = vmul.f32 %v3612, 0.044715
      %v3677 = vmul.f32 %v3613, 0.044715
      %v3678 = vmul.f32 %v3614, 0.044715
      %v3679 = vmul.f32 %v3615, 0.044715
      %v3680 = vmul.f32 %v3616, 0.044715
      %v3681 = vmul.f32 %v3617, 0.044715
      %v3682 = vmul.f32 %v3618, 0.044715
      %v3683 = vmul.f32 %v3619, 0.044715
      %v3684 = vmul.f32 %v3620, 0.044715
      %v3685 = vmul.f32 %v3621, 0.044715
      %v3686 = vmul.f32 %v3654, %v3590
      %v3687 = vmul.f32 %v3655, %v3591
      %v3688 = vmul.f32 %v3656, %v3592
      %v3689 = vmul.f32 %v3657, %v3593
      %v3690 = vmul.f32 %v3658, %v3594
      %v3691 = vmul.f32 %v3659, %v3595
      %v3692 = vmul.f32 %v3660, %v3596
      %v3693 = vmul.f32 %v3661, %v3597
      %v3694 = vmul.f32 %v3662, %v3598
      %v3695 = vmul.f32 %v3663, %v3599
      %v3696 = vmul.f32 %v3664, %v3600
      %v3697 = vmul.f32 %v3665, %v3601
      %v3698 = vmul.f32 %v3666, %v3602
      %v3699 = vmul.f32 %v3667, %v3603
      %v3700 = vmul.f32 %v3668, %v3604
      %v3701 = vmul.f32 %v3669, %v3605
      %v3702 = vmul.f32 %v3670, %v3606
      %v3703 = vmul.f32 %v3671, %v3607
      %v3704 = vmul.f32 %v3672, %v3608
      %v3705 = vmul.f32 %v3673, %v3609
      %v3706 = vmul.f32 %v3674, %v3610
      %v3707 = vmul.f32 %v3675, %v3611
      %v3708 = vmul.f32 %v3676, %v3612
      %v3709 = vmul.f32 %v3677, %v3613
      %v3710 = vmul.f32 %v3678, %v3614
      %v3711 = vmul.f32 %v3679, %v3615
      %v3712 = vmul.f32 %v3680, %v3616
      %v3713 = vmul.f32 %v3681, %v3617
      %v3714 = vmul.f32 %v3682, %v3618
      %v3715 = vmul.f32 %v3683, %v3619
      %v3716 = vmul.f32 %v3684, %v3620
      %v3717 = vmul.f32 %v3685, %v3621
      %v3718 = vmul.f32 %v3686, %v3590
      %v3719 = vmul.f32 %v3687, %v3591
      %v3720 = vmul.f32 %v3688, %v3592
      %v3721 = vmul.f32 %v3689, %v3593
      %v3722 = vmul.f32 %v3690, %v3594
      %v3723 = vmul.f32 %v3691, %v3595
      %v3724 = vmul.f32 %v3692, %v3596
      %v3725 = vmul.f32 %v3693, %v3597
      %v3726 = vmul.f32 %v3694, %v3598
      %v3727 = vmul.f32 %v3695, %v3599
      %v3728 = vmul.f32 %v3696, %v3600
      %v3729 = vmul.f32 %v3697, %v3601
      %v3730 = vmul.f32 %v3698, %v3602
      %v3731 = vmul.f32 %v3699, %v3603
      %v3732 = vmul.f32 %v3700, %v3604
      %v3733 = vmul.f32 %v3701, %v3605
      %v3734 = vmul.f32 %v3702, %v3606
      %v3735 = vmul.f32 %v3703, %v3607
      %v3736 = vmul.f32 %v3704, %v3608
      %v3737 = vmul.f32 %v3705, %v3609
      %v3738 = vmul.f32 %v3706, %v3610
      %v3739 = vmul.f32 %v3707, %v3611
      %v3740 = vmul.f32 %v3708, %v3612
      %v3741 = vmul.f32 %v3709, %v3613
      %v3742 = vmul.f32 %v3710, %v3614
      %v3743 = vmul.f32 %v3711, %v3615
      %v3744 = vmul.f32 %v3712, %v3616
      %v3745 = vmul.f32 %v3713, %v3617
      %v3746 = vmul.f32 %v3714, %v3618
      %v3747 = vmul.f32 %v3715, %v3619
      %v3748 = vmul.f32 %v3716, %v3620
      %v3749 = vmul.f32 %v3717, %v3621
      %v3750 = vadd.f32 %v3590, %v3718
      %v3751 = vadd.f32 %v3591, %v3719
      %v3752 = vadd.f32 %v3592, %v3720
      %v3753 = vadd.f32 %v3593, %v3721
      %v3754 = vadd.f32 %v3594, %v3722
      %v3755 = vadd.f32 %v3595, %v3723
      %v3756 = vadd.f32 %v3596, %v3724
      %v3757 = vadd.f32 %v3597, %v3725
      %v3758 = vadd.f32 %v3598, %v3726
      %v3759 = vadd.f32 %v3599, %v3727
      %v3760 = vadd.f32 %v3600, %v3728
      %v3761 = vadd.f32 %v3601, %v3729
      %v3762 = vadd.f32 %v3602, %v3730
      %v3763 = vadd.f32 %v3603, %v3731
      %v3764 = vadd.f32 %v3604, %v3732
      %v3765 = vadd.f32 %v3605, %v3733
      %v3766 = vadd.f32 %v3606, %v3734
      %v3767 = vadd.f32 %v3607, %v3735
      %v3768 = vadd.f32 %v3608, %v3736
      %v3769 = vadd.f32 %v3609, %v3737
      %v3770 = vadd.f32 %v3610, %v3738
      %v3771 = vadd.f32 %v3611, %v3739
      %v3772 = vadd.f32 %v3612, %v3740
      %v3773 = vadd.f32 %v3613, %v3741
      %v3774 = vadd.f32 %v3614, %v3742
      %v3775 = vadd.f32 %v3615, %v3743
      %v3776 = vadd.f32 %v3616, %v3744
      %v3777 = vadd.f32 %v3617, %v3745
      %v3778 = vadd.f32 %v3618, %v3746
      %v3779 = vadd.f32 %v3619, %v3747
      %v3780 = vadd.f32 %v3620, %v3748
      %v3781 = vadd.f32 %v3621, %v3749
      %v3782 = vmul.f32 %v3750, 0.7978846
      %v3783 = vmul.f32 %v3751, 0.7978846
      %v3784 = vmul.f32 %v3752, 0.7978846
      %v3785 = vmul.f32 %v3753, 0.7978846
      %v3786 = vmul.f32 %v3754, 0.7978846
      %v3787 = vmul.f32 %v3755, 0.7978846
      %v3788 = vmul.f32 %v3756, 0.7978846
      %v3789 = vmul.f32 %v3757, 0.7978846
      %v3790 = vmul.f32 %v3758, 0.7978846
      %v3791 = vmul.f32 %v3759, 0.7978846
      %v3792 = vmul.f32 %v3760, 0.7978846
      %v3793 = vmul.f32 %v3761, 0.7978846
      %v3794 = vmul.f32 %v3762, 0.7978846
      %v3795 = vmul.f32 %v3763, 0.7978846
      %v3796 = vmul.f32 %v3764, 0.7978846
      %v3797 = vmul.f32 %v3765, 0.7978846
      %v3798 = vmul.f32 %v3766, 0.7978846
      %v3799 = vmul.f32 %v3767, 0.7978846
      %v3800 = vmul.f32 %v3768, 0.7978846
      %v3801 = vmul.f32 %v3769, 0.7978846
      %v3802 = vmul.f32 %v3770, 0.7978846
      %v3803 = vmul.f32 %v3771, 0.7978846
      %v3804 = vmul.f32 %v3772, 0.7978846
      %v3805 = vmul.f32 %v3773, 0.7978846
      %v3806 = vmul.f32 %v3774, 0.7978846
      %v3807 = vmul.f32 %v3775, 0.7978846
      %v3808 = vmul.f32 %v3776, 0.7978846
      %v3809 = vmul.f32 %v3777, 0.7978846
      %v3810 = vmul.f32 %v3778, 0.7978846
      %v3811 = vmul.f32 %v3779, 0.7978846
      %v3812 = vmul.f32 %v3780, 0.7978846
      %v3813 = vmul.f32 %v3781, 0.7978846
      %v3814 = vtanh.pop %v3782
      %v3815 = vtanh.pop %v3783
      %v3816 = vtanh.pop %v3784
      %v3817 = vtanh.pop %v3785
      %v3818 = vtanh.pop %v3786
      %v3819 = vtanh.pop %v3787
      %v3820 = vtanh.pop %v3788
      %v3821 = vtanh.pop %v3789
      %v3822 = vtanh.pop %v3790
      %v3823 = vtanh.pop %v3791
      %v3824 = vtanh.pop %v3792
      %v3825 = vtanh.pop %v3793
      %v3826 = vtanh.pop %v3794
      %v3827 = vtanh.pop %v3795
      %v3828 = vtanh.pop %v3796
      %v3829 = vtanh.pop %v3797
      %v3830 = vtanh.pop %v3798
      %v3831 = vtanh.pop %v3799
      %v3832 = vtanh.pop %v3800
      %v3833 = vtanh.pop %v3801
      %v3834 = vtanh.pop %v3802
      %v3835 = vtanh.pop %v3803
      %v3836 = vtanh.pop %v3804
      %v3837 = vtanh.pop %v3805
      %v3838 = vtanh.pop %v3806
      %v3839 = vtanh.pop %v3807
      %v3840 = vtanh.pop %v3808
      %v3841 = vtanh.pop %v3809
      %v3842 = vtanh.pop %v3810
      %v3843 = vtanh.pop %v3811
      %v3844 = vtanh.pop %v3812
      %v3845 = vtanh.pop %v3813
      %v3846 = vadd.f32 %v3814, 1.0
      %v3847 = vadd.f32 %v3815, 1.0
      %v3848 = vadd.f32 %v3816, 1.0
      %v3849 = vadd.f32 %v3817, 1.0
      %v3850 = vadd.f32 %v3818, 1.0
      %v3851 = vadd.f32 %v3819, 1.0
      %v3852 = vadd.f32 %v3820, 1.0
      %v3853 = vadd.f32 %v3821, 1.0
      %v3854 = vadd.f32 %v3822, 1.0
      %v3855 = vadd.f32 %v3823, 1.0
      %v3856 = vadd.f32 %v3824, 1.0
      %v3857 = vadd.f32 %v3825, 1.0
      %v3858 = vadd.f32 %v3826, 1.0
      %v3859 = vadd.f32 %v3827, 1.0
      %v3860 = vadd.f32 %v3828, 1.0
      %v3861 = vadd.f32 %v3829, 1.0
      %v3862 = vadd.f32 %v3830, 1.0
      %v3863 = vadd.f32 %v3831, 1.0
      %v3864 = vadd.f32 %v3832, 1.0
      %v3865 = vadd.f32 %v3833, 1.0
      %v3866 = vadd.f32 %v3834, 1.0
      %v3867 = vadd.f32 %v3835, 1.0
      %v3868 = vadd.f32 %v3836, 1.0
      %v3869 = vadd.f32 %v3837, 1.0
      %v3870 = vadd.f32 %v3838, 1.0
      %v3871 = vadd.f32 %v3839, 1.0
      %v3872 = vadd.f32 %v3840, 1.0
      %v3873 = vadd.f32 %v3841, 1.0
      %v3874 = vadd.f32 %v3842, 1.0
      %v3875 = vadd.f32 %v3843, 1.0
      %v3876 = vadd.f32 %v3844, 1.0
      %v3877 = vadd.f32 %v3845, 1.0
      %v3878 = vmul.f32 %v3622, %v3846
      %v3879 = vmul.f32 %v3623, %v3847
      %v3880 = vmul.f32 %v3624, %v3848
      %v3881 = vmul.f32 %v3625, %v3849
      %v3882 = vmul.f32 %v3626, %v3850
      %v3883 = vmul.f32 %v3627, %v3851
      %v3884 = vmul.f32 %v3628, %v3852
      %v3885 = vmul.f32 %v3629, %v3853
      %v3886 = vmul.f32 %v3630, %v3854
      %v3887 = vmul.f32 %v3631, %v3855
      %v3888 = vmul.f32 %v3632, %v3856
      %v3889 = vmul.f32 %v3633, %v3857
      %v3890 = vmul.f32 %v3634, %v3858
      %v3891 = vmul.f32 %v3635, %v3859
      %v3892 = vmul.f32 %v3636, %v3860
      %v3893 = vmul.f32 %v3637, %v3861
      %v3894 = vmul.f32 %v3638, %v3862
      %v3895 = vmul.f32 %v3639, %v3863
      %v3896 = vmul.f32 %v3640, %v3864
      %v3897 = vmul.f32 %v3641, %v3865
      %v3898 = vmul.f32 %v3642, %v3866
      %v3899 = vmul.f32 %v3643, %v3867
      %v3900 = vmul.f32 %v3644, %v3868
      %v3901 = vmul.f32 %v3645, %v3869
      %v3902 = vmul.f32 %v3646, %v3870
      %v3903 = vmul.f32 %v3647, %v3871
      %v3904 = vmul.f32 %v3648, %v3872
      %v3905 = vmul.f32 %v3649, %v3873
      %v3906 = vmul.f32 %v3650, %v3874
      %v3907 = vmul.f32 %v3651, %v3875
      %v3908 = vmul.f32 %v3652, %v3876
      %v3909 = vmul.f32 %v3653, %v3877
      %v3910 = vpack.c.bf16 %v3879, %v3878
      %v3911 = vpack.c.bf16 %v3881, %v3880
      %v3912 = vpack.c.bf16 %v3883, %v3882
      %v3913 = vpack.c.bf16 %v3885, %v3884
      %v3914 = vpack.c.bf16 %v3887, %v3886
      %v3915 = vpack.c.bf16 %v3889, %v3888
      %v3916 = vpack.c.bf16 %v3891, %v3890
      %v3917 = vpack.c.bf16 %v3893, %v3892
      %v3918 = vpack.c.bf16 %v3895, %v3894
      %v3919 = vpack.c.bf16 %v3897, %v3896
      %v3920 = vpack.c.bf16 %v3899, %v3898
      %v3921 = vpack.c.bf16 %v3901, %v3900
      %v3922 = vpack.c.bf16 %v3903, %v3902
      %v3923 = vpack.c.bf16 %v3905, %v3904
      %v3924 = vpack.c.bf16 %v3907, %v3906
      %v3925 = vpack.c.bf16 %v3909, %v3908
      %v3942 = vunpack.c.l.b16 %v3910
      %v3943 = vunpack.c.h.b16 %v3910
      %v3944 = vunpack.c.l.b16 %v3911
      %v3945 = vunpack.c.h.b16 %v3911
      %v3946 = vunpack.c.l.b16 %v3912
      %v3947 = vunpack.c.h.b16 %v3912
      %v3948 = vunpack.c.l.b16 %v3913
      %v3949 = vunpack.c.h.b16 %v3913
      %v3950 = vunpack.c.l.b16 %v3914
      %v3951 = vunpack.c.h.b16 %v3914
      %v3952 = vunpack.c.l.b16 %v3915
      %v3953 = vunpack.c.h.b16 %v3915
      %v3954 = vunpack.c.l.b16 %v3916
      %v3955 = vunpack.c.h.b16 %v3916
      %v3956 = vunpack.c.l.b16 %v3917
      %v3957 = vunpack.c.h.b16 %v3917
      %v3958 = vunpack.c.l.b16 %v3918
      %v3959 = vunpack.c.h.b16 %v3918
      %v3960 = vunpack.c.l.b16 %v3919
      %v3961 = vunpack.c.h.b16 %v3919
      %v3962 = vunpack.c.l.b16 %v3920
      %v3963 = vunpack.c.h.b16 %v3920
      %v3964 = vunpack.c.l.b16 %v3921
      %v3965 = vunpack.c.h.b16 %v3921
      %v3966 = vunpack.c.l.b16 %v3922
      %v3967 = vunpack.c.h.b16 %v3922
      %v3968 = vunpack.c.l.b16 %v3923
      %v3969 = vunpack.c.h.b16 %v3923
      %v3970 = vunpack.c.l.b16 %v3924
      %v3971 = vunpack.c.h.b16 %v3924
      %v3972 = vunpack.c.l.b16 %v3925
      %v3973 = vunpack.c.h.b16 %v3925
      %v3974 = vpack.c.b16 %v3942, %v3942
      %v3975 = vpack.c.b16 %v3943, %v3943
      %v3976 = vpack.c.b16 %v3944, %v3944
      %v3977 = vpack.c.b16 %v3945, %v3945
      %v3978 = vpack.c.b16 %v3946, %v3946
      %v3979 = vpack.c.b16 %v3947, %v3947
      %v3980 = vpack.c.b16 %v3948, %v3948
      %v3981 = vpack.c.b16 %v3949, %v3949
      %v3982 = vpack.c.b16 %v3950, %v3950
      %v3983 = vpack.c.b16 %v3951, %v3951
      %v3984 = vpack.c.b16 %v3952, %v3952
      %v3985 = vpack.c.b16 %v3953, %v3953
      %v3986 = vpack.c.b16 %v3954, %v3954
      %v3987 = vpack.c.b16 %v3955, %v3955
      %v3988 = vpack.c.b16 %v3956, %v3956
      %v3989 = vpack.c.b16 %v3957, %v3957
      %v3990 = vpack.c.b16 %v3958, %v3958
      %v3991 = vpack.c.b16 %v3959, %v3959
      %v3992 = vpack.c.b16 %v3960, %v3960
      %v3993 = vpack.c.b16 %v3961, %v3961
      %v3994 = vpack.c.b16 %v3962, %v3962
      %v3995 = vpack.c.b16 %v3963, %v3963
      %v3996 = vpack.c.b16 %v3964, %v3964
      %v3997 = vpack.c.b16 %v3965, %v3965
      %v3998 = vpack.c.b16 %v3966, %v3966
      %v3999 = vpack.c.b16 %v3967, %v3967
      %v4000 = vpack.c.b16 %v3968, %v3968
      %v4001 = vpack.c.b16 %v3969, %v3969
      %v4002 = vpack.c.b16 %v3970, %v3970
      %v4003 = vpack.c.b16 %v3971, %v3971
      %v4004 = vpack.c.b16 %v3972, %v3972
      %v4005 = vpack.c.b16 %v3973, %v3973
      %4038 = vst [vmem:[%s213] sm:$0xf] %v3974
      %4039 = vst [vmem:[%s213 + $0x4] sm:$0xf] %v3975
      %4040 = vst [vmem:[%s213 + $0x8] sm:$0xf] %v3976
      %4041 = vst [vmem:[%s213 + $0xc] sm:$0xf] %v3977
      %4042 = vst [vmem:[%s213 + $0x10] sm:$0xf] %v3978
      %4043 = vst [vmem:[%s213 + $0x14] sm:$0xf] %v3979
      %4044 = vst [vmem:[%s213 + $0x18] sm:$0xf] %v3980
      %4045 = vst [vmem:[%s213 + $0x1c] sm:$0xf] %v3981
      %4046 = vst [vmem:[%s213 + $0x20] sm:$0xf] %v3982
      %4047 = vst [vmem:[%s213 + $0x24] sm:$0xf] %v3983
      %4048 = vst [vmem:[%s213 + $0x28] sm:$0xf] %v3984
      %4049 = vst [vmem:[%s213 + $0x2c] sm:$0xf] %v3985
      %4050 = vst [vmem:[%s213 + $0x30] sm:$0xf] %v3986
      %4051 = vst [vmem:[%s213 + $0x34] sm:$0xf] %v3987
      %4052 = vst [vmem:[%s213 + $0x38] sm:$0xf] %v3988
      %4053 = vst [vmem:[%s213 + $0x3c] sm:$0xf] %v3989
      %4054 = vst [vmem:[%s213 + $0x40] sm:$0xf] %v3990
      %4055 = vst [vmem:[%s213 + $0x44] sm:$0xf] %v3991
      %4056 = vst [vmem:[%s213 + $0x48] sm:$0xf] %v3992
      %4057 = vst [vmem:[%s213 + $0x4c] sm:$0xf] %v3993
      %4058 = vst [vmem:[%s213 + $0x50] sm:$0xf] %v3994
      %4059 = vst [vmem:[%s213 + $0x54] sm:$0xf] %v3995
      %4060 = vst [vmem:[%s213 + $0x58] sm:$0xf] %v3996
      %4061 = vst [vmem:[%s213 + $0x5c] sm:$0xf] %v3997
      %4062 = vst [vmem:[%s213 + $0x60] sm:$0xf] %v3998
      %4063 = vst [vmem:[%s213 + $0x64] sm:$0xf] %v3999
      %4064 = vst [vmem:[%s213 + $0x68] sm:$0xf] %v4000
      %4065 = vst [vmem:[%s213 + $0x6c] sm:$0xf] %v4001
      %4066 = vst [vmem:[%s213 + $0x70] sm:$0xf] %v4002
      %4067 = vst [vmem:[%s213 + $0x74] sm:$0xf] %v4003
      %4068 = vst [vmem:[%s213 + $0x78] sm:$0xf] %v4004
      %4069 = vst [vmem:[%s213 + $0x7c] sm:$0xf] %v4005
      %s4070 = sadd.s32 %s19, %s20
      %s4071 = smul.u32 32, %s4070
      %p4072 = scmp.lt.s32.totalorder %s4071, 63
      %s4073 = scalar_select %p4072, %s4071, 63
      %s4074 = smul.addr %s4073, 4
      %s4075 = scalar_lea.vmem %s4, %s4074
      // Predicated region
      $region37: #{conv_embed_forward.2} parent=35 // pred_check
        %p4076 = pneg %p136
      $region38: #{conv_embed_forward.2} parent=35 // pred_check_branch
        %4078 = sbr.rel (%p4076) target = $region40
      $region39: #{conv_embed_forward.2} parent=35 // pred_region
        %s4079 = sadd.s32 %s19, %s20
        %s4080 = smul.u32 32, %s4079
      $region40: #{conv_embed_forward.2} parent=35 // pred_fallthru
        _
    $region36: #{conv_embed_forward.2} parent=5 // pred_fallthru
      _
    %p4081 = scmp.le.s32.totalorder 2, %s10
    // Predicated region
    $region41: #{conv_embed_forward.2} parent=5 // pred_check
      %p4082 = pneg %p4081
    $region42: #{conv_embed_forward.2} parent=5 // pred_check_branch
      %4084 = sbr.rel (%p4082) target = $region44
    $region43: #{conv_embed_forward.2} parent=5 // pred_region
      %s4085 = ssub.s32 %s10, 2
      // Predicated region
      $region45: #{conv_embed_forward.2} parent=43 // pred_check
        %p4086 = pneg %p142
      $region46: #{conv_embed_forward.2} parent=43 // pred_check_branch
        %4088 = sbr.rel (%p4086) target = $region48
      $region47: #{conv_embed_forward.2} parent=43 // pred_region
        %s4089 = sadd.s32 %s21, %s22
        %s4090 = smul.u32 32, %s4089
        %p4091 = scmp.lt.s32.totalorder %s4090, 63
        %s4092 = scalar_select %p4091, %s4090, 63
        %s4093 = smul.addr %s4092, 4
        %s4094 = scalar_lea.vmem %s4, %s4093
      $region48: #{conv_embed_forward.2} parent=43 // pred_fallthru
        _
    $region44: #{conv_embed_forward.2} parent=5 // pred_fallthru
      _
  $region6: #{conv_embed_forward.2} parent=0 // loop_footer
    %s14 = sadd.s32 1, %s10
  $region7: #{conv_embed_forward.2} parent=0 // loop_footer_branch
    %9 = sbr.rel target = $region3
  $region8: #{conv_embed_forward.2} parent=0 // loop_exit
    _

</llo_original>
